<compile_context>
chip_gen: v7x
topology: tpu7x:2x2x1
jax: 0.10.0
libtpu: 0.0.40
codegen_flags: <defaults>
</compile_context>

<pallas_src>
import functools

import jax
import jax.numpy as jnp
from jax.experimental import pallas as pl
from jax.experimental.pallas import tpu as pltpu

NEG_SLOPE = 0.01                                     # nn.LeakyReLU default
MLP_DIMS = [2048, 1024, 512, 256, 128, 64, 32, 32]   # hidden chain widths
LANE = 128                                           # lane-dense pad target


# ----------------------------------------------------------------------------
# Pallas kernel: one grid step = one full chain (7 Linear+LeakyReLU + head).
# grid=(2,) -> chain 0 = translation, chain 1 = rotation.
# ----------------------------------------------------------------------------
def _fused_mlp_head_kernel(*refs, n_layers):
    # refs = (f, [w_q, scale, bias] * n_layers, out)
    f_ref = refs[0]
    out_ref = refs[-1]
    x = f_ref[...]                                   # (B, 2048) bf16
    for i in range(n_layers):
        w_q = refs[1 + 3 * i][...]                   # (in, out) int8 (or bf16)
        s = refs[2 + 3 * i][...]                     # (1, out)  f32 per-col scale
        b = refs[3 + 3 * i][...]                     # (1, out)  f32 bias
        # Widen int8 -> bf16 on the VPU (exact for |q| <= 127), matmul on the
        # MXU with f32 accumulation, dequant-scale + bias on the accumulator.
        acc = jnp.dot(x, w_q.astype(jnp.bfloat16),
                      preferred_element_type=jnp.float32)
        y = acc * s + b
        if i < n_layers - 1:
            # LeakyReLU after every hidden Linear (head has no activation);
            # Dropout is identity in eval mode.  Kept in f32 (v5e VPU: no bf16).
            y = jnp.where(y > 0.0, y, NEG_SLOPE * y)
            x = y.astype(jnp.bfloat16)               # bf16 LHS for next MXU op
        else:
            out_ref[...] = y.astype(out_ref.dtype)   # (B, 128) lane-dense store


def fused_mlp_heads(f, wqs, scales, biases):
    """Run both [Linear+LeakyReLU]*7 -> head chains in one gridded pallas_call.

    f:      (B, 2048) float32 fused feature.
    wqs:    list of (2, in_i, out_i) int8 (or bf16) weights, chain axis first.
    scales: list of (2, 1, out_i) f32 per-output-channel dequant scales.
    biases: list of (2, 1, out_i) f32 biases.
    Returns (2, B, 128) float32; row 0 = translation, row 1 = rotation6d.
    """
    assert len(wqs) == len(scales) == len(biases)
    n_layers = len(wqs)
    B, feat = f.shape
    out_dim = wqs[-1].shape[2]                       # LANE (128)

    args = [f.astype(jnp.bfloat16)]
    in_specs = [pl.BlockSpec((B, feat), lambda h: (0, 0))]   # shared, resident
    for w, s, b in zip(wqs, scales, biases):
        args += [w, s, b]
        in_d, out_d = int(w.shape[1]), int(w.shape[2])
        in_specs.append(pl.BlockSpec((pl.Squeezed(), in_d, out_d),
                                     lambda h: (h, 0, 0)))
        in_specs.append(pl.BlockSpec((pl.Squeezed(), 1, out_d),
                                     lambda h: (h, 0, 0)))
        in_specs.append(pl.BlockSpec((pl.Squeezed(), 1, out_d),
                                     lambda h: (h, 0, 0)))

    # Advisory cost: lets XLA overlap the weight stream with upstream compute.
    flops = sum(2 * B * int(w.shape[1]) * int(w.shape[2]) * 2 for w in wqs)
    bytes_accessed = (sum(int(a.size) * int(a.dtype.itemsize) for a in args)
                      + 4 * 2 * B * out_dim)

    kernel = functools.partial(_fused_mlp_head_kernel, n_layers=n_layers)
    return pl.pallas_call(
        kernel,
        out_shape=jax.ShapeDtypeStruct((2, B, out_dim), jnp.float32),
        grid_spec=pltpu.PrefetchScalarGridSpec(
            num_scalar_prefetch=0,
            grid=(2,),
            in_specs=in_specs,
            out_specs=pl.BlockSpec((pl.Squeezed(), B, out_dim),
                                   lambda h: (h, 0, 0)),
        ),
        compiler_params=pltpu.CompilerParams(
            # one chain per TensorCore on v7x megacore; harmless on v5e/v6e.
            dimension_semantics=("parallel",),
            # ~2.85 MB int8 weights/chain double-buffered (~5.7 MB) + bf16
            # widen temporaries + activations; 2x headroom, inside v7x budget.
            vmem_limit_bytes=24 * 1024 * 1024,
        ),
        cost_estimate=pl.CostEstimate(
            flops=flops, transcendentals=0, bytes_accessed=int(bytes_accessed)),
    )(*args)


# ----------------------------------------------------------------------------
# Plain-JAX glue
# ----------------------------------------------------------------------------
def _normalize(v, eps=1e-12):
    # Matches torch.nn.functional.normalize: divide by max(norm, eps).
    n = jnp.sqrt(jnp.sum(v * v, axis=-1, keepdims=True))
    return v / jnp.maximum(n, eps)


def o6d2mat(x):
    """6D rotation representation -> rotation matrix (Zhou et al. Gram-Schmidt)."""
    a1 = x[:, 0:3]
    a2 = x[:, 3:6]
    b1 = _normalize(a1)
    b2 = _normalize(a2 - jnp.sum(b1 * a2, axis=-1, keepdims=True) * b1)
    b3 = jnp.cross(b1, b2)
    return jnp.stack([b1, b2, b3], axis=-1)          # (B, 3, 3), columns b1|b2|b3


def init_linear(key, fan_in, fan_out):
    """PyTorch-style uniform(-1/sqrt(fan_in), +1/sqrt(fan_in)) init."""
    kw, kb = jax.random.split(key)
    bound = 1.0 / jnp.sqrt(jnp.float32(fan_in))
    w = jax.random.uniform(kw, (fan_in, fan_out), jnp.float32, -bound, bound)
    b = jax.random.uniform(kb, (1, fan_out), jnp.float32, -bound, bound)
    return w, b


def init_chain(key, head_out):
    """7 hidden Linears + head Linear; all dims zero-padded up to 128 lanes."""
    dims = MLP_DIMS + [head_out]
    ws, bs = [], []
    ks = jax.random.split(key, len(dims) - 1)
    for i in range(len(dims) - 1):
        fan_in, fan_out = dims[i], dims[i + 1]
        w, b = init_linear(ks[i], fan_in, fan_out)
        in_pad, out_pad = max(fan_in, LANE), max(fan_out, LANE)
        # Zero padding is exact: padded cols give 0 outputs (LeakyReLU(0)=0)
        # and padded rows contribute nothing to the next layer.
        w = jnp.pad(w, ((0, in_pad - fan_in), (0, out_pad - fan_out)))
        b = jnp.pad(b, ((0, 0), (0, out_pad - fan_out)))
        ws.append(w)
        bs.append(b)
    return ws, bs


def quantize_per_channel(w):
    """Symmetric int8 quantization per output channel (column)."""
    amax = jnp.max(jnp.abs(w), axis=0, keepdims=True)          # (1, out)
    scale = jnp.where(amax > 0.0, amax / 127.0, 1.0)           # avoid /0 on pads
    q = jnp.clip(jnp.round(w / scale), -127.0, 127.0).astype(jnp.int8)
    return q, scale.astype(jnp.float32)


def stack_chains(ws_t, bs_t, ws_r, bs_r, quantize_weights=True):
    """Stack translation (chain 0) / rotation (chain 1) layers; int8-quantize."""
    wqs, scales, biases = [], [], []
    for wt, bt, wr, br in zip(ws_t, bs_t, ws_r, bs_r):
        if quantize_weights:
            qt, st = quantize_per_channel(wt)
            qr, sr = quantize_per_channel(wr)
        else:  # configurable fallback: bf16 weights, unit scales, same kernel
            qt, st = wt.astype(jnp.bfloat16), jnp.ones((1, wt.shape[1]), jnp.float32)
            qr, sr = wr.astype(jnp.bfloat16), jnp.ones((1, wr.shape[1]), jnp.float32)
        wqs.append(jnp.stack([qt, qr]))                         # (2, in, out)
        scales.append(jnp.stack([st, sr]))                      # (2, 1, out) f32
        biases.append(jnp.stack([bt, br]).astype(jnp.float32))  # (2, 1, out) f32
    return wqs, scales, biases


def heads_reference(f, wqs, scales, biases):
    """Pure-JAX f32 reference using the same (dequantized) weights."""
    outs = []
    for h in range(2):
        x = f.astype(jnp.float32)
        for i in range(len(wqs)):
            w = wqs[i][h].astype(jnp.float32) * scales[i][h]
            y = x @ w + biases[i][h]
            if i < len(wqs) - 1:
                y = jnp.where(y > 0.0, y, NEG_SLOPE * y)
            x = y
        outs.append(x)
    return jnp.stack(outs)


def compute_features(mkpts0, mkpts1, imgs0, imgs1, params):
    B = mkpts0.shape[0]
    # TODO(synk): pfe/ife/fa backbones are not defined in the provided source.
    # Deterministic stand-in fusion producing the (B, 2048) feature `f`.
    pts_feat = jnp.concatenate(
        [mkpts0.reshape(B, -1), mkpts1.reshape(B, -1)], axis=-1)
    img_feat = jnp.concatenate(
        [imgs0.mean(axis=(2, 3)), imgs1.mean(axis=(2, 3))], axis=-1)  # NCHW pool
    return jnp.concatenate(
        [pts_feat @ params["w_pts"], img_feat @ params["w_img"]], axis=-1)


def mpilope_forward(mkpts0, mkpts1, imgs0, imgs1, params):
    """Forward: feature-fusion stub -> fused Pallas MLP heads -> (trans, rot)."""
    f = compute_features(mkpts0, mkpts1, imgs0, imgs1, params)       # (B, 2048)
    heads = fused_mlp_heads(f, params["wqs"], params["scales"],
                            params["biases"])                        # (2, B, 128)
    trans = heads[0, :, :3]                                          # (B, 3)
    rot6d = heads[1, :, :6]                                          # (B, 6)
    rot = o6d2mat(rot6d)                                             # (B, 3, 3)
    return trans, rot


if __name__ == "__main__":
    key = jax.random.PRNGKey(0)
    keys = jax.random.split(key, 8)

    B, N_PTS = 2, 8
    mkpts0 = jax.random.normal(keys[0], (B, N_PTS, 2), jnp.float32)
    mkpts1 = jax.random.normal(keys[1], (B, N_PTS, 2), jnp.float32)
    imgs0 = jax.random.normal(keys[2], (B, 3, 16, 16), jnp.float32)  # NCHW
    imgs1 = jax.random.normal(keys[3], (B, 3, 16, 16), jnp.float32)  # NCHW

    ws_t, bs_t = init_chain(keys[4], 3)   # mlr_t + translation_head
    ws_r, bs_r = init_chain(keys[5], 6)   # mlp_r + rotation_head ('6d')
    wqs, scales, biases = stack_chains(ws_t, bs_t, ws_r, bs_r,
                                       quantize_weights=True)

    pts_dim = 2 * N_PTS * 2
    img_dim = 2 * 3
    params = {
        "wqs": wqs, "scales": scales, "biases": biases,
        "w_pts": jax.random.normal(keys[6], (pts_dim, 1024), jnp.float32) * 0.02,
        "w_img": jax.random.normal(keys[7], (img_dim, 1024), jnp.float32) * 0.02,
    }

    trans, rot = jax.jit(mpilope_forward)(mkpts0, mkpts1, imgs0, imgs1, params)
    jax.block_until_ready((trans, rot))
    assert trans.shape == (B, 3)
    assert rot.shape == (B, 3, 3)
    assert bool(jnp.all(jnp.isfinite(trans))) and bool(jnp.all(jnp.isfinite(rot)))

    # Correctness check: Pallas heads vs. pure-JAX f32 reference with the same
    # quantized weights (only bf16 activation rounding should differ).
    f = compute_features(mkpts0, mkpts1, imgs0, imgs1, params)
    heads_kernel = fused_mlp_heads(f, wqs, scales, biases)
    heads_ref = heads_reference(f, wqs, scales, biases)
    err = float(jnp.max(jnp.abs(heads_kernel - heads_ref)))
    assert err < 5e-2, f"max abs error vs f32 reference: {err}"

    print("KERNEL_OK")
</pallas_src>

<mosaic_0001>
module attributes {stable_mosaic.version = 11 : i64} {
  func.func @_fused_mlp_head_kernel(%arg0: i32, %arg1: memref<2x2048xbf16, #tpu.memory_space<vmem>>, %arg2: memref<1x2048x1024xi8, #tpu.memory_space<vmem>>, %arg3: memref<1x1x1024xf32, #tpu.memory_space<vmem>>, %arg4: memref<1x1x1024xf32, #tpu.memory_space<vmem>>, %arg5: memref<1x1024x512xi8, #tpu.memory_space<vmem>>, %arg6: memref<1x1x512xf32, #tpu.memory_space<vmem>>, %arg7: memref<1x1x512xf32, #tpu.memory_space<vmem>>, %arg8: memref<1x512x256xi8, #tpu.memory_space<vmem>>, %arg9: memref<1x1x256xf32, #tpu.memory_space<vmem>>, %arg10: memref<1x1x256xf32, #tpu.memory_space<vmem>>, %arg11: memref<1x256x128xi8, #tpu.memory_space<vmem>>, %arg12: memref<1x1x128xf32, #tpu.memory_space<vmem>>, %arg13: memref<1x1x128xf32, #tpu.memory_space<vmem>>, %arg14: memref<1x128x128xi8, #tpu.memory_space<vmem>>, %arg15: memref<1x1x128xf32, #tpu.memory_space<vmem>>, %arg16: memref<1x1x128xf32, #tpu.memory_space<vmem>>, %arg17: memref<1x128x128xi8, #tpu.memory_space<vmem>>, %arg18: memref<1x1x128xf32, #tpu.memory_space<vmem>>, %arg19: memref<1x1x128xf32, #tpu.memory_space<vmem>>, %arg20: memref<1x128x128xi8, #tpu.memory_space<vmem>>, %arg21: memref<1x1x128xf32, #tpu.memory_space<vmem>>, %arg22: memref<1x1x128xf32, #tpu.memory_space<vmem>>, %arg23: memref<1x128x128xi8, #tpu.memory_space<vmem>>, %arg24: memref<1x1x128xf32, #tpu.memory_space<vmem>>, %arg25: memref<1x1x128xf32, #tpu.memory_space<vmem>>, %arg26: memref<1x2x128xf32, #tpu.memory_space<vmem>>) attributes {dimension_semantics = [#tpu.dimension_semantics<parallel>], iteration_bounds = array<i64: 2>, scalar_prefetch = 0 : i64, scratch_operands = 0 : i64, tpu.core_type = #tpu.core_type<tc>, window_params = [{pipeline_mode = #tpu.pipeline_mode<synchronous>, transform_indices = @transform_0, window_bounds = array<i64: 2, 2048>}, {transform_indices = @transform_1, window_bounds = array<i64: 1, 2048, 1024>}, {transform_indices = @transform_2, window_bounds = array<i64: 1, 1, 1024>}, {transform_indices = @transform_3, window_bounds = array<i64: 1, 1, 1024>}, {transform_indices = @transform_4, window_bounds = array<i64: 1, 1024, 512>}, {transform_indices = @transform_5, window_bounds = array<i64: 1, 1, 512>}, {transform_indices = @transform_6, window_bounds = array<i64: 1, 1, 512>}, {transform_indices = @transform_7, window_bounds = array<i64: 1, 512, 256>}, {transform_indices = @transform_8, window_bounds = array<i64: 1, 1, 256>}, {transform_indices = @transform_9, window_bounds = array<i64: 1, 1, 256>}, {transform_indices = @transform_10, window_bounds = array<i64: 1, 256, 128>}, {transform_indices = @transform_11, window_bounds = array<i64: 1, 1, 128>}, {transform_indices = @transform_12, window_bounds = array<i64: 1, 1, 128>}, {transform_indices = @transform_13, window_bounds = array<i64: 1, 128, 128>}, {transform_indices = @transform_14, window_bounds = array<i64: 1, 1, 128>}, {transform_indices = @transform_15, window_bounds = array<i64: 1, 1, 128>}, {transform_indices = @transform_16, window_bounds = array<i64: 1, 128, 128>}, {transform_indices = @transform_17, window_bounds = array<i64: 1, 1, 128>}, {transform_indices = @transform_18, window_bounds = array<i64: 1, 1, 128>}, {transform_indices = @transform_19, window_bounds = array<i64: 1, 128, 128>}, {transform_indices = @transform_20, window_bounds = array<i64: 1, 1, 128>}, {transform_indices = @transform_21, window_bounds = array<i64: 1, 1, 128>}, {transform_indices = @transform_22, window_bounds = array<i64: 1, 128, 128>}, {transform_indices = @transform_23, window_bounds = array<i64: 1, 1, 128>}, {transform_indices = @transform_24, window_bounds = array<i64: 1, 1, 128>}, {transform_indices = @transform_25, window_bounds = array<i64: 1, 2, 128>}]} {
    %c0 = arith.constant 0 : index
    %c0_0 = arith.constant 0 : index
    %0 = vector.load %arg1[%c0, %c0_0] : memref<2x2048xbf16, #tpu.memory_space<vmem>>, vector<2x2048xbf16>
    %c0_1 = arith.constant 0 : index
    %c0_2 = arith.constant 0 : index
    %c0_3 = arith.constant 0 : index
    %1 = vector.load %arg2[%c0_1, %c0_2, %c0_3] : memref<1x2048x1024xi8, #tpu.memory_space<vmem>>, vector<1x2048x1024xi8>
    %2 = vector.shape_cast %1 : vector<1x2048x1024xi8> to vector<2048x1024xi8>
    %c0_4 = arith.constant 0 : index
    %c0_5 = arith.constant 0 : index
    %c0_6 = arith.constant 0 : index
    %3 = vector.load %arg3[%c0_4, %c0_5, %c0_6] : memref<1x1x1024xf32, #tpu.memory_space<vmem>>, vector<1x1x1024xf32>
    %4 = vector.shape_cast %3 : vector<1x1x1024xf32> to vector<1x1024xf32>
    %c0_7 = arith.constant 0 : index
    %c0_8 = arith.constant 0 : index
    %c0_9 = arith.constant 0 : index
    %5 = vector.load %arg4[%c0_7, %c0_8, %c0_9] : memref<1x1x1024xf32, #tpu.memory_space<vmem>>, vector<1x1x1024xf32>
    %6 = vector.shape_cast %5 : vector<1x1x1024xf32> to vector<1x1024xf32>
    %7 = arith.sitofp %2 : vector<2048x1024xi8> to vector<2048x1024xbf16>
    %cst = arith.constant dense<0.000000e+00> : vector<2x1024xf32>
    %8 = tpu.matmul %0, %7, %cst {dimension_numbers = #tpu.dot_dimension_numbers<[1], [0], [0], [1], [0, 0, 1, 1], [], []>} : vector<2x2048xbf16>, vector<2048x1024xbf16>, vector<2x1024xf32> -> vector<2x1024xf32>
    %9 = vector.broadcast %4 : vector<1x1024xf32> to vector<2x1024xf32>
    %10 = arith.mulf %8, %9 : vector<2x1024xf32>
    %11 = vector.broadcast %6 : vector<1x1024xf32> to vector<2x1024xf32>
    %12 = arith.addf %10, %11 : vector<2x1024xf32>
    %cst_10 = arith.constant 0.000000e+00 : f32
    %13 = vector.broadcast %cst_10 : f32 to vector<2x1024xf32>
    %14 = arith.cmpf ogt, %12, %13 : vector<2x1024xf32>
    %cst_11 = arith.constant 0.00999999977 : f32
    %15 = vector.broadcast %cst_11 : f32 to vector<2x1024xf32>
    %16 = arith.mulf %15, %12 : vector<2x1024xf32>
    %17 = arith.select %14, %12, %16 : vector<2x1024xi1>, vector<2x1024xf32>
    %18 = arith.truncf %17 : vector<2x1024xf32> to vector<2x1024xbf16>
    %c0_12 = arith.constant 0 : index
    %c0_13 = arith.constant 0 : index
    %c0_14 = arith.constant 0 : index
    %19 = vector.load %arg5[%c0_12, %c0_13, %c0_14] : memref<1x1024x512xi8, #tpu.memory_space<vmem>>, vector<1x1024x512xi8>
    %20 = vector.shape_cast %19 : vector<1x1024x512xi8> to vector<1024x512xi8>
    %c0_15 = arith.constant 0 : index
    %c0_16 = arith.constant 0 : index
    %c0_17 = arith.constant 0 : index
    %21 = vector.load %arg6[%c0_15, %c0_16, %c0_17] : memref<1x1x512xf32, #tpu.memory_space<vmem>>, vector<1x1x512xf32>
    %22 = vector.shape_cast %21 : vector<1x1x512xf32> to vector<1x512xf32>
    %c0_18 = arith.constant 0 : index
    %c0_19 = arith.constant 0 : index
    %c0_20 = arith.constant 0 : index
    %23 = vector.load %arg7[%c0_18, %c0_19, %c0_20] : memref<1x1x512xf32, #tpu.memory_space<vmem>>, vector<1x1x512xf32>
    %24 = vector.shape_cast %23 : vector<1x1x512xf32> to vector<1x512xf32>
    %25 = arith.sitofp %20 : vector<1024x512xi8> to vector<1024x512xbf16>
    %cst_21 = arith.constant dense<0.000000e+00> : vector<2x512xf32>
    %26 = tpu.matmul %18, %25, %cst_21 {dimension_numbers = #tpu.dot_dimension_numbers<[1], [0], [0], [1], [0, 0, 1, 1], [], []>} : vector<2x1024xbf16>, vector<1024x512xbf16>, vector<2x512xf32> -> vector<2x512xf32>
    %27 = vector.broadcast %22 : vector<1x512xf32> to vector<2x512xf32>
    %28 = arith.mulf %26, %27 : vector<2x512xf32>
    %29 = vector.broadcast %24 : vector<1x512xf32> to vector<2x512xf32>
    %30 = arith.addf %28, %29 : vector<2x512xf32>
    %cst_22 = arith.constant 0.000000e+00 : f32
    %31 = vector.broadcast %cst_22 : f32 to vector<2x512xf32>
    %32 = arith.cmpf ogt, %30, %31 : vector<2x512xf32>
    %cst_23 = arith.constant 0.00999999977 : f32
    %33 = vector.broadcast %cst_23 : f32 to vector<2x512xf32>
    %34 = arith.mulf %33, %30 : vector<2x512xf32>
    %35 = arith.select %32, %30, %34 : vector<2x512xi1>, vector<2x512xf32>
    %36 = arith.truncf %35 : vector<2x512xf32> to vector<2x512xbf16>
    %c0_24 = arith.constant 0 : index
    %c0_25 = arith.constant 0 : index
    %c0_26 = arith.constant 0 : index
    %37 = vector.load %arg8[%c0_24, %c0_25, %c0_26] : memref<1x512x256xi8, #tpu.memory_space<vmem>>, vector<1x512x256xi8>
    %38 = vector.shape_cast %37 : vector<1x512x256xi8> to vector<512x256xi8>
    %c0_27 = arith.constant 0 : index
    %c0_28 = arith.constant 0 : index
    %c0_29 = arith.constant 0 : index
    %39 = vector.load %arg9[%c0_27, %c0_28, %c0_29] : memref<1x1x256xf32, #tpu.memory_space<vmem>>, vector<1x1x256xf32>
    %40 = vector.shape_cast %39 : vector<1x1x256xf32> to vector<1x256xf32>
    %c0_30 = arith.constant 0 : index
    %c0_31 = arith.constant 0 : index
    %c0_32 = arith.constant 0 : index
    %41 = vector.load %arg10[%c0_30, %c0_31, %c0_32] : memref<1x1x256xf32, #tpu.memory_space<vmem>>, vector<1x1x256xf32>
    %42 = vector.shape_cast %41 : vector<1x1x256xf32> to vector<1x256xf32>
    %43 = arith.sitofp %38 : vector<512x256xi8> to vector<512x256xbf16>
    %cst_33 = arith.constant dense<0.000000e+00> : vector<2x256xf32>
    %44 = tpu.matmul %36, %43, %cst_33 {dimension_numbers = #tpu.dot_dimension_numbers<[1], [0], [0], [1], [0, 0, 1, 1], [], []>} : vector<2x512xbf16>, vector<512x256xbf16>, vector<2x256xf32> -> vector<2x256xf32>
    %45 = vector.broadcast %40 : vector<1x256xf32> to vector<2x256xf32>
    %46 = arith.mulf %44, %45 : vector<2x256xf32>
    %47 = vector.broadcast %42 : vector<1x256xf32> to vector<2x256xf32>
    %48 = arith.addf %46, %47 : vector<2x256xf32>
    %cst_34 = arith.constant 0.000000e+00 : f32
    %49 = vector.broadcast %cst_34 : f32 to vector<2x256xf32>
    %50 = arith.cmpf ogt, %48, %49 : vector<2x256xf32>
    %cst_35 = arith.constant 0.00999999977 : f32
    %51 = vector.broadcast %cst_35 : f32 to vector<2x256xf32>
    %52 = arith.mulf %51, %48 : vector<2x256xf32>
    %53 = arith.select %50, %48, %52 : vector<2x256xi1>, vector<2x256xf32>
    %54 = arith.truncf %53 : vector<2x256xf32> to vector<2x256xbf16>
    %c0_36 = arith.constant 0 : index
    %c0_37 = arith.constant 0 : index
    %c0_38 = arith.constant 0 : index
    %55 = vector.load %arg11[%c0_36, %c0_37, %c0_38] : memref<1x256x128xi8, #tpu.memory_space<vmem>>, vector<1x256x128xi8>
    %56 = vector.shape_cast %55 : vector<1x256x128xi8> to vector<256x128xi8>
    %c0_39 = arith.constant 0 : index
    %c0_40 = arith.constant 0 : index
    %c0_41 = arith.constant 0 : index
    %57 = vector.load %arg12[%c0_39, %c0_40, %c0_41] : memref<1x1x128xf32, #tpu.memory_space<vmem>>, vector<1x1x128xf32>
    %58 = vector.shape_cast %57 : vector<1x1x128xf32> to vector<1x128xf32>
    %c0_42 = arith.constant 0 : index
    %c0_43 = arith.constant 0 : index
    %c0_44 = arith.constant 0 : index
    %59 = vector.load %arg13[%c0_42, %c0_43, %c0_44] : memref<1x1x128xf32, #tpu.memory_space<vmem>>, vector<1x1x128xf32>
    %60 = vector.shape_cast %59 : vector<1x1x128xf32> to vector<1x128xf32>
    %61 = arith.sitofp %56 : vector<256x128xi8> to vector<256x128xbf16>
    %cst_45 = arith.constant dense<0.000000e+00> : vector<2x128xf32>
    %62 = tpu.matmul %54, %61, %cst_45 {dimension_numbers = #tpu.dot_dimension_numbers<[1], [0], [0], [1], [0, 0, 1, 1], [], []>} : vector<2x256xbf16>, vector<256x128xbf16>, vector<2x128xf32> -> vector<2x128xf32>
    %63 = vector.broadcast %58 : vector<1x128xf32> to vector<2x128xf32>
    %64 = arith.mulf %62, %63 : vector<2x128xf32>
    %65 = vector.broadcast %60 : vector<1x128xf32> to vector<2x128xf32>
    %66 = arith.addf %64, %65 : vector<2x128xf32>
    %cst_46 = arith.constant 0.000000e+00 : f32
    %67 = vector.broadcast %cst_46 : f32 to vector<2x128xf32>
    %68 = arith.cmpf ogt, %66, %67 : vector<2x128xf32>
    %cst_47 = arith.constant 0.00999999977 : f32
    %69 = vector.broadcast %cst_47 : f32 to vector<2x128xf32>
    %70 = arith.mulf %69, %66 : vector<2x128xf32>
    %71 = arith.select %68, %66, %70 : vector<2x128xi1>, vector<2x128xf32>
    %72 = arith.truncf %71 : vector<2x128xf32> to vector<2x128xbf16>
    %c0_48 = arith.constant 0 : index
    %c0_49 = arith.constant 0 : index
    %c0_50 = arith.constant 0 : index
    %73 = vector.load %arg14[%c0_48, %c0_49, %c0_50] : memref<1x128x128xi8, #tpu.memory_space<vmem>>, vector<1x128x128xi8>
    %74 = vector.shape_cast %73 : vector<1x128x128xi8> to vector<128x128xi8>
    %c0_51 = arith.constant 0 : index
    %c0_52 = arith.constant 0 : index
    %c0_53 = arith.constant 0 : index
    %75 = vector.load %arg15[%c0_51, %c0_52, %c0_53] : memref<1x1x128xf32, #tpu.memory_space<vmem>>, vector<1x1x128xf32>
    %76 = vector.shape_cast %75 : vector<1x1x128xf32> to vector<1x128xf32>
    %c0_54 = arith.constant 0 : index
    %c0_55 = arith.constant 0 : index
    %c0_56 = arith.constant 0 : index
    %77 = vector.load %arg16[%c0_54, %c0_55, %c0_56] : memref<1x1x128xf32, #tpu.memory_space<vmem>>, vector<1x1x128xf32>
    %78 = vector.shape_cast %77 : vector<1x1x128xf32> to vector<1x128xf32>
    %79 = arith.sitofp %74 : vector<128x128xi8> to vector<128x128xbf16>
    %cst_57 = arith.constant dense<0.000000e+00> : vector<2x128xf32>
    %80 = tpu.matmul %72, %79, %cst_57 {dimension_numbers = #tpu.dot_dimension_numbers<[1], [0], [0], [1], [0, 0, 1, 1], [], []>} : vector<2x128xbf16>, vector<128x128xbf16>, vector<2x128xf32> -> vector<2x128xf32>
    %81 = vector.broadcast %76 : vector<1x128xf32> to vector<2x128xf32>
    %82 = arith.mulf %80, %81 : vector<2x128xf32>
    %83 = vector.broadcast %78 : vector<1x128xf32> to vector<2x128xf32>
    %84 = arith.addf %82, %83 : vector<2x128xf32>
    %cst_58 = arith.constant 0.000000e+00 : f32
    %85 = vector.broadcast %cst_58 : f32 to vector<2x128xf32>
    %86 = arith.cmpf ogt, %84, %85 : vector<2x128xf32>
    %cst_59 = arith.constant 0.00999999977 : f32
    %87 = vector.broadcast %cst_59 : f32 to vector<2x128xf32>
    %88 = arith.mulf %87, %84 : vector<2x128xf32>
    %89 = arith.select %86, %84, %88 : vector<2x128xi1>, vector<2x128xf32>
    %90 = arith.truncf %89 : vector<2x128xf32> to vector<2x128xbf16>
    %c0_60 = arith.constant 0 : index
    %c0_61 = arith.constant 0 : index
    %c0_62 = arith.constant 0 : index
    %91 = vector.load %arg17[%c0_60, %c0_61, %c0_62] : memref<1x128x128xi8, #tpu.memory_space<vmem>>, vector<1x128x128xi8>
    %92 = vector.shape_cast %91 : vector<1x128x128xi8> to vector<128x128xi8>
    %c0_63 = arith.constant 0 : index
    %c0_64 = arith.constant 0 : index
    %c0_65 = arith.constant 0 : index
    %93 = vector.load %arg18[%c0_63, %c0_64, %c0_65] : memref<1x1x128xf32, #tpu.memory_space<vmem>>, vector<1x1x128xf32>
    %94 = vector.shape_cast %93 : vector<1x1x128xf32> to vector<1x128xf32>
    %c0_66 = arith.constant 0 : index
    %c0_67 = arith.constant 0 : index
    %c0_68 = arith.constant 0 : index
    %95 = vector.load %arg19[%c0_66, %c0_67, %c0_68] : memref<1x1x128xf32, #tpu.memory_space<vmem>>, vector<1x1x128xf32>
    %96 = vector.shape_cast %95 : vector<1x1x128xf32> to vector<1x128xf32>
    %97 = arith.sitofp %92 : vector<128x128xi8> to vector<128x128xbf16>
    %cst_69 = arith.constant dense<0.000000e+00> : vector<2x128xf32>
    %98 = tpu.matmul %90, %97, %cst_69 {dimension_numbers = #tpu.dot_dimension_numbers<[1], [0], [0], [1], [0, 0, 1, 1], [], []>} : vector<2x128xbf16>, vector<128x128xbf16>, vector<2x128xf32> -> vector<2x128xf32>
    %99 = vector.broadcast %94 : vector<1x128xf32> to vector<2x128xf32>
    %100 = arith.mulf %98, %99 : vector<2x128xf32>
    %101 = vector.broadcast %96 : vector<1x128xf32> to vector<2x128xf32>
    %102 = arith.addf %100, %101 : vector<2x128xf32>
    %cst_70 = arith.constant 0.000000e+00 : f32
    %103 = vector.broadcast %cst_70 : f32 to vector<2x128xf32>
    %104 = arith.cmpf ogt, %102, %103 : vector<2x128xf32>
    %cst_71 = arith.constant 0.00999999977 : f32
    %105 = vector.broadcast %cst_71 : f32 to vector<2x128xf32>
    %106 = arith.mulf %105, %102 : vector<2x128xf32>
    %107 = arith.select %104, %102, %106 : vector<2x128xi1>, vector<2x128xf32>
    %108 = arith.truncf %107 : vector<2x128xf32> to vector<2x128xbf16>
    %c0_72 = arith.constant 0 : index
    %c0_73 = arith.constant 0 : index
    %c0_74 = arith.constant 0 : index
    %109 = vector.load %arg20[%c0_72, %c0_73, %c0_74] : memref<1x128x128xi8, #tpu.memory_space<vmem>>, vector<1x128x128xi8>
    %110 = vector.shape_cast %109 : vector<1x128x128xi8> to vector<128x128xi8>
    %c0_75 = arith.constant 0 : index
    %c0_76 = arith.constant 0 : index
    %c0_77 = arith.constant 0 : index
    %111 = vector.load %arg21[%c0_75, %c0_76, %c0_77] : memref<1x1x128xf32, #tpu.memory_space<vmem>>, vector<1x1x128xf32>
    %112 = vector.shape_cast %111 : vector<1x1x128xf32> to vector<1x128xf32>
    %c0_78 = arith.constant 0 : index
    %c0_79 = arith.constant 0 : index
    %c0_80 = arith.constant 0 : index
    %113 = vector.load %arg22[%c0_78, %c0_79, %c0_80] : memref<1x1x128xf32, #tpu.memory_space<vmem>>, vector<1x1x128xf32>
    %114 = vector.shape_cast %113 : vector<1x1x128xf32> to vector<1x128xf32>
    %115 = arith.sitofp %110 : vector<128x128xi8> to vector<128x128xbf16>
    %cst_81 = arith.constant dense<0.000000e+00> : vector<2x128xf32>
    %116 = tpu.matmul %108, %115, %cst_81 {dimension_numbers = #tpu.dot_dimension_numbers<[1], [0], [0], [1], [0, 0, 1, 1], [], []>} : vector<2x128xbf16>, vector<128x128xbf16>, vector<2x128xf32> -> vector<2x128xf32>
    %117 = vector.broadcast %112 : vector<1x128xf32> to vector<2x128xf32>
    %118 = arith.mulf %116, %117 : vector<2x128xf32>
    %119 = vector.broadcast %114 : vector<1x128xf32> to vector<2x128xf32>
    %120 = arith.addf %118, %119 : vector<2x128xf32>
    %cst_82 = arith.constant 0.000000e+00 : f32
    %121 = vector.broadcast %cst_82 : f32 to vector<2x128xf32>
    %122 = arith.cmpf ogt, %120, %121 : vector<2x128xf32>
    %cst_83 = arith.constant 0.00999999977 : f32
    %123 = vector.broadcast %cst_83 : f32 to vector<2x128xf32>
    %124 = arith.mulf %123, %120 : vector<2x128xf32>
    %125 = arith.select %122, %120, %124 : vector<2x128xi1>, vector<2x128xf32>
    %126 = arith.truncf %125 : vector<2x128xf32> to vector<2x128xbf16>
    %c0_84 = arith.constant 0 : index
    %c0_85 = arith.constant 0 : index
    %c0_86 = arith.constant 0 : index
    %127 = vector.load %arg23[%c0_84, %c0_85, %c0_86] : memref<1x128x128xi8, #tpu.memory_space<vmem>>, vector<1x128x128xi8>
    %128 = vector.shape_cast %127 : vector<1x128x128xi8> to vector<128x128xi8>
    %c0_87 = arith.constant 0 : index
    %c0_88 = arith.constant 0 : index
    %c0_89 = arith.constant 0 : index
    %129 = vector.load %arg24[%c0_87, %c0_88, %c0_89] : memref<1x1x128xf32, #tpu.memory_space<vmem>>, vector<1x1x128xf32>
    %130 = vector.shape_cast %129 : vector<1x1x128xf32> to vector<1x128xf32>
    %c0_90 = arith.constant 0 : index
    %c0_91 = arith.constant 0 : index
    %c0_92 = arith.constant 0 : index
    %131 = vector.load %arg25[%c0_90, %c0_91, %c0_92] : memref<1x1x128xf32, #tpu.memory_space<vmem>>, vector<1x1x128xf32>
    %132 = vector.shape_cast %131 : vector<1x1x128xf32> to vector<1x128xf32>
    %133 = arith.sitofp %128 : vector<128x128xi8> to vector<128x128xbf16>
    %cst_93 = arith.constant dense<0.000000e+00> : vector<2x128xf32>
    %134 = tpu.matmul %126, %133, %cst_93 {dimension_numbers = #tpu.dot_dimension_numbers<[1], [0], [0], [1], [0, 0, 1, 1], [], []>} : vector<2x128xbf16>, vector<128x128xbf16>, vector<2x128xf32> -> vector<2x128xf32>
    %135 = vector.broadcast %130 : vector<1x128xf32> to vector<2x128xf32>
    %136 = arith.mulf %134, %135 : vector<2x128xf32>
    %137 = vector.broadcast %132 : vector<1x128xf32> to vector<2x128xf32>
    %138 = arith.addf %136, %137 : vector<2x128xf32>
    %c0_94 = arith.constant 0 : index
    %c0_95 = arith.constant 0 : index
    %c0_96 = arith.constant 0 : index
    %139 = vector.load %arg26[%c0_94, %c0_95, %c0_96] : memref<1x2x128xf32, #tpu.memory_space<vmem>>, vector<1x2x128xf32>
    %140 = vector.shape_cast %139 : vector<1x2x128xf32> to vector<2x128xf32>
    %141 = vector.shape_cast %138 : vector<2x128xf32> to vector<1x2x128xf32>
    tpu.vector_store %arg26[%c0_94, %c0_95, %c0_96], %141 {strides = array<i32>} : memref<1x2x128xf32, #tpu.memory_space<vmem>>, vector<1x2x128xf32>,
    return
  }
  func.func @transform_0(%arg0: i32) -> (i32, i32) {
    %c0_i32 = arith.constant 0 : i32
    %c0_i32_0 = arith.constant 0 : i32
    %c0_i32_1 = arith.constant 0 : i32
    return %c0_i32, %c0_i32_0 : i32, i32
  }
  func.func @transform_1(%arg0: i32) -> (i32, i32, i32) {
    %c0_i32 = arith.constant 0 : i32
    %c0_i32_0 = arith.constant 0 : i32
    %c0_i32_1 = arith.constant 0 : i32
    return %arg0, %c0_i32, %c0_i32_0 : i32, i32, i32
  }
  func.func @transform_2(%arg0: i32) -> (i32, i32, i32) {
    %c0_i32 = arith.constant 0 : i32
    %c0_i32_0 = arith.constant 0 : i32
    %c0_i32_1 = arith.constant 0 : i32
    return %arg0, %c0_i32, %c0_i32_0 : i32, i32, i32
  }
  func.func @transform_3(%arg0: i32) -> (i32, i32, i32) {
    %c0_i32 = arith.constant 0 : i32
    %c0_i32_0 = arith.constant 0 : i32
    %c0_i32_1 = arith.constant 0 : i32
    return %arg0, %c0_i32, %c0_i32_0 : i32, i32, i32
  }
  func.func @transform_4(%arg0: i32) -> (i32, i32, i32) {
    %c0_i32 = arith.constant 0 : i32
    %c0_i32_0 = arith.constant 0 : i32
    %c0_i32_1 = arith.constant 0 : i32
    return %arg0, %c0_i32, %c0_i32_0 : i32, i32, i32
  }
  func.func @transform_5(%arg0: i32) -> (i32, i32, i32) {
    %c0_i32 = arith.constant 0 : i32
    %c0_i32_0 = arith.constant 0 : i32
    %c0_i32_1 = arith.constant 0 : i32
    return %arg0, %c0_i32, %c0_i32_0 : i32, i32, i32
  }
  func.func @transform_6(%arg0: i32) -> (i32, i32, i32) {
    %c0_i32 = arith.constant 0 : i32
    %c0_i32_0 = arith.constant 0 : i32
    %c0_i32_1 = arith.constant 0 : i32
    return %arg0, %c0_i32, %c0_i32_0 : i32, i32, i32
  }
  func.func @transform_7(%arg0: i32) -> (i32, i32, i32) {
    %c0_i32 = arith.constant 0 : i32
    %c0_i32_0 = arith.constant 0 : i32
    %c0_i32_1 = arith.constant 0 : i32
    return %arg0, %c0_i32, %c0_i32_0 : i32, i32, i32
  }
  func.func @transform_8(%arg0: i32) -> (i32, i32, i32) {
    %c0_i32 = arith.constant 0 : i32
    %c0_i32_0 = arith.constant 0 : i32
    %c0_i32_1 = arith.constant 0 : i32
    return %arg0, %c0_i32, %c0_i32_0 : i32, i32, i32
  }
  func.func @transform_9(%arg0: i32) -> (i32, i32, i32) {
    %c0_i32 = arith.constant 0 : i32
    %c0_i32_0 = arith.constant 0 : i32
    %c0_i32_1 = arith.constant 0 : i32
    return %arg0, %c0_i32, %c0_i32_0 : i32, i32, i32
  }
  func.func @transform_10(%arg0: i32) -> (i32, i32, i32) {
    %c0_i32 = arith.constant 0 : i32
    %c0_i32_0 = arith.constant 0 : i32
    %c0_i32_1 = arith.constant 0 : i32
    return %arg0, %c0_i32, %c0_i32_0 : i32, i32, i32
  }
  func.func @transform_11(%arg0: i32) -> (i32, i32, i32) {
    %c0_i32 = arith.constant 0 : i32
    %c0_i32_0 = arith.constant 0 : i32
    %c0_i32_1 = arith.constant 0 : i32
    return %arg0, %c0_i32, %c0_i32_0 : i32, i32, i32
  }
  func.func @transform_12(%arg0: i32) -> (i32, i32, i32) {
    %c0_i32 = arith.constant 0 : i32
    %c0_i32_0 = arith.constant 0 : i32
    %c0_i32_1 = arith.constant 0 : i32
    return %arg0, %c0_i32, %c0_i32_0 : i32, i32, i32
  }
  func.func @transform_13(%arg0: i32) -> (i32, i32, i32) {
    %c0_i32 = arith.constant 0 : i32
    %c0_i32_0 = arith.constant 0 : i32
    %c0_i32_1 = arith.constant 0 : i32
    return %arg0, %c0_i32, %c0_i32_0 : i32, i32, i32
  }
  func.func @transform_14(%arg0: i32) -> (i32, i32, i32) {
    %c0_i32 = arith.constant 0 : i32
    %c0_i32_0 = arith.constant 0 : i32
    %c0_i32_1 = arith.constant 0 : i32
    return %arg0, %c0_i32, %c0_i32_0 : i32, i32, i32
  }
  func.func @transform_15(%arg0: i32) -> (i32, i32, i32) {
    %c0_i32 = arith.constant 0 : i32
    %c0_i32_0 = arith.constant 0 : i32
    %c0_i32_1 = arith.constant 0 : i32
    return %arg0, %c0_i32, %c0_i32_0 : i32, i32, i32
  }
  func.func @transform_16(%arg0: i32) -> (i32, i32, i32) {
    %c0_i32 = arith.constant 0 : i32
    %c0_i32_0 = arith.constant 0 : i32
    %c0_i32_1 = arith.constant 0 : i32
    return %arg0, %c0_i32, %c0_i32_0 : i32, i32, i32
  }
  func.func @transform_17(%arg0: i32) -> (i32, i32, i32) {
    %c0_i32 = arith.constant 0 : i32
    %c0_i32_0 = arith.constant 0 : i32
    %c0_i32_1 = arith.constant 0 : i32
    return %arg0, %c0_i32, %c0_i32_0 : i32, i32, i32
  }
  func.func @transform_18(%arg0: i32) -> (i32, i32, i32) {
    %c0_i32 = arith.constant 0 : i32
    %c0_i32_0 = arith.constant 0 : i32
    %c0_i32_1 = arith.constant 0 : i32
    return %arg0, %c0_i32, %c0_i32_0 : i32, i32, i32
  }
  func.func @transform_19(%arg0: i32) -> (i32, i32, i32) {
    %c0_i32 = arith.constant 0 : i32
    %c0_i32_0 = arith.constant 0 : i32
    %c0_i32_1 = arith.constant 0 : i32
    return %arg0, %c0_i32, %c0_i32_0 : i32, i32, i32
  }
  func.func @transform_20(%arg0: i32) -> (i32, i32, i32) {
    %c0_i32 = arith.constant 0 : i32
    %c0_i32_0 = arith.constant 0 : i32
    %c0_i32_1 = arith.constant 0 : i32
    return %arg0, %c0_i32, %c0_i32_0 : i32, i32, i32
  }
  func.func @transform_21(%arg0: i32) -> (i32, i32, i32) {
    %c0_i32 = arith.constant 0 : i32
    %c0_i32_0 = arith.constant 0 : i32
    %c0_i32_1 = arith.constant 0 : i32
    return %arg0, %c0_i32, %c0_i32_0 : i32, i32, i32
  }
  func.func @transform_22(%arg0: i32) -> (i32, i32, i32) {
    %c0_i32 = arith.constant 0 : i32
    %c0_i32_0 = arith.constant 0 : i32
    %c0_i32_1 = arith.constant 0 : i32
    return %arg0, %c0_i32, %c0_i32_0 : i32, i32, i32
  }
  func.func @transform_23(%arg0: i32) -> (i32, i32, i32) {
    %c0_i32 = arith.constant 0 : i32
    %c0_i32_0 = arith.constant 0 : i32
    %c0_i32_1 = arith.constant 0 : i32
    return %arg0, %c0_i32, %c0_i32_0 : i32, i32, i32
  }
  func.func @transform_24(%arg0: i32) -> (i32, i32, i32) {
    %c0_i32 = arith.constant 0 : i32
    %c0_i32_0 = arith.constant 0 : i32
    %c0_i32_1 = arith.constant 0 : i32
    return %arg0, %c0_i32, %c0_i32_0 : i32, i32, i32
  }
  func.func @transform_25(%arg0: i32) -> (i32, i32, i32) {
    %c0_i32 = arith.constant 0 : i32
    %c0_i32_0 = arith.constant 0 : i32
    %c0_i32_1 = arith.constant 0 : i32
    return %arg0, %c0_i32, %c0_i32_0 : i32, i32, i32
  }
}

</mosaic_0001>

<llo_original>
// kernel: mpilope_forward.1
$region0: #{mpilope_forward.1}
  #allocation0 [shape = 'u32[]', space=smem, size = 0x4, offset = 0x4, fixed_abs, tag = 'smem constant byte address 0x4 - core index']
  #allocation1 [shape = 'u32[144,128]{1,0:T(1,128)}', space=vmem, size = 0x12000, scoped, tag = 'internal scratch']
  %s0 = inlined_call_operand.vmem [shape: bf16[2,2048], index: 0, kind: input, shape index: {}]
  %s1 = inlined_call_operand.hbm [shape: s8[2,2048,1024], index: 1, kind: input, shape index: {}]
  %s2 = inlined_call_operand.hbm [shape: f32[2,1,1024], index: 2, kind: input, shape index: {}]
  %s3 = inlined_call_operand.hbm [shape: f32[2,1,1024], index: 3, kind: input, shape index: {}]
  %s4 = inlined_call_operand.hbm [shape: s8[2,1024,512], index: 4, kind: input, shape index: {}]
  %s5 = inlined_call_operand.hbm [shape: f32[2,1,512], index: 5, kind: input, shape index: {}]
  %s6 = inlined_call_operand.hbm [shape: f32[2,1,512], index: 6, kind: input, shape index: {}]
  %s7 = inlined_call_operand.hbm [shape: s8[2,512,256], index: 7, kind: input, shape index: {}]
  %s8 = inlined_call_operand.hbm [shape: f32[2,1,256], index: 8, kind: input, shape index: {}]
  %s9 = inlined_call_operand.hbm [shape: f32[2,1,256], index: 9, kind: input, shape index: {}]
  %s10 = inlined_call_operand.hbm [shape: s8[2,256,128], index: 10, kind: input, shape index: {}]
  %s11 = inlined_call_operand.hbm [shape: f32[2,1,128], index: 11, kind: input, shape index: {}]
  %s12 = inlined_call_operand.hbm [shape: f32[2,1,128], index: 12, kind: input, shape index: {}]
  %s13 = inlined_call_operand.hbm [shape: s8[2,128,128], index: 13, kind: input, shape index: {}]
  %s14 = inlined_call_operand.hbm [shape: f32[2,1,128], index: 14, kind: input, shape index: {}]
  %s15 = inlined_call_operand.hbm [shape: f32[2,1,128], index: 15, kind: input, shape index: {}]
  %s16 = inlined_call_operand.hbm [shape: s8[2,128,128], index: 16, kind: input, shape index: {}]
  %s17 = inlined_call_operand.hbm [shape: f32[2,1,128], index: 17, kind: input, shape index: {}]
  %s18 = inlined_call_operand.hbm [shape: f32[2,1,128], index: 18, kind: input, shape index: {}]
  %s19 = inlined_call_operand.hbm [shape: s8[2,128,128], index: 19, kind: input, shape index: {}]
  %s20 = inlined_call_operand.hbm [shape: f32[2,1,128], index: 20, kind: input, shape index: {}]
  %s21 = inlined_call_operand.hbm [shape: f32[2,1,128], index: 21, kind: input, shape index: {}]
  %s22 = inlined_call_operand.hbm [shape: s8[2,128,128], index: 22, kind: input, shape index: {}]
  %s23 = inlined_call_operand.hbm [shape: f32[2,1,128], index: 23, kind: input, shape index: {}]
  %s24 = inlined_call_operand.hbm [shape: f32[2,1,128], index: 24, kind: input, shape index: {}]
  %s25 = inlined_call_operand.vmem [shape: f32[2,2,128], index: 25, kind: output, shape index: {}]
  %s26 = sld [smem:[#allocation0]]
  $region229: #{mpilope_forward.1} parent=0
    _
  %s28 = ssub.s32 1, %s26
  %s29 = scalar_select 0, %s28, %s26
  $region1: #{mpilope_forward.1} parent=0
    #allocation2 [shape = 'u8[4194304]{0}', space=vmem, size = 0x400000, scoped, tag = 'input window, operand 1']
    #allocation3 [shape = 's32[2]{0}', space=sflag, size = 0x8, scoped, tag = 'scoped memory for mpilope_forward.1']
    #allocation4 [shape = 'u8[8192]{0}', space=vmem, size = 0x2000, scoped, tag = 'input window, operand 2']
    #allocation5 [shape = 's32[2]{0}', space=sflag, size = 0x8, scoped, tag = 'scoped memory for mpilope_forward.1']
    #allocation6 [shape = 'u8[8192]{0}', space=vmem, size = 0x2000, scoped, tag = 'input window, operand 3']
    #allocation7 [shape = 'u8[1048576]{0}', space=vmem, size = 0x100000, scoped, tag = 'input window, operand 4']
    #allocation8 [shape = 's32[2]{0}', space=sflag, size = 0x8, scoped, tag = 'scoped memory for mpilope_forward.1']
    #allocation9 [shape = 'u8[4096]{0}', space=vmem, size = 0x1000, scoped, tag = 'input window, operand 5']
    #allocation10 [shape = 'u8[4096]{0}', space=vmem, size = 0x1000, scoped, tag = 'input window, operand 6']
    #allocation11 [shape = 's32[2]{0}', space=sflag, size = 0x8, scoped, tag = 'scoped memory for mpilope_forward.1']
    #allocation12 [shape = 'u8[262144]{0}', space=vmem, size = 0x40000, scoped, tag = 'input window, operand 7']
    #allocation13 [shape = 'u8[2048]{0}', space=vmem, size = 0x800, scoped, tag = 'input window, operand 8']
    #allocation14 [shape = 's32[2]{0}', space=sflag, size = 0x8, scoped, tag = 'scoped memory for mpilope_forward.1']
    #allocation15 [shape = 'u8[2048]{0}', space=vmem, size = 0x800, scoped, tag = 'input window, operand 9']
    #allocation16 [shape = 'u8[65536]{0}', space=vmem, size = 0x10000, scoped, tag = 'input window, operand 10']
    #allocation17 [shape = 's32[2]{0}', space=sflag, size = 0x8, scoped, tag = 'scoped memory for mpilope_forward.1']
    #allocation18 [shape = 'u8[1024]{0}', space=vmem, size = 0x400, scoped, tag = 'input window, operand 11']
    #allocation19 [shape = 'u8[1024]{0}', space=vmem, size = 0x400, scoped, tag = 'input window, operand 12']
    #allocation20 [shape = 's32[2]{0}', space=sflag, size = 0x8, scoped, tag = 'scoped memory for mpilope_forward.1']
    #allocation21 [shape = 'u8[32768]{0}', space=vmem, size = 0x8000, scoped, tag = 'input window, operand 13']
    #allocation22 [shape = 'u8[1024]{0}', space=vmem, size = 0x400, scoped, tag = 'input window, operand 14']
    #allocation23 [shape = 's32[2]{0}', space=sflag, size = 0x8, scoped, tag = 'scoped memory for mpilope_forward.1']
    #allocation24 [shape = 'u8[1024]{0}', space=vmem, size = 0x400, scoped, tag = 'input window, operand 15']
    #allocation25 [shape = 'u8[32768]{0}', space=vmem, size = 0x8000, scoped, tag = 'input window, operand 16']
    #allocation26 [shape = 's32[2]{0}', space=sflag, size = 0x8, scoped, tag = 'scoped memory for mpilope_forward.1']
    #allocation27 [shape = 'u8[1024]{0}', space=vmem, size = 0x400, scoped, tag = 'input window, operand 17']
    #allocation28 [shape = 'u8[1024]{0}', space=vmem, size = 0x400, scoped, tag = 'input window, operand 18']
    #allocation29 [shape = 's32[2]{0}', space=sflag, size = 0x8, scoped, tag = 'scoped memory for mpilope_forward.1']
    #allocation30 [shape = 'u8[32768]{0}', space=vmem, size = 0x8000, scoped, tag = 'input window, operand 19']
    #allocation31 [shape = 'u8[1024]{0}', space=vmem, size = 0x400, scoped, tag = 'input window, operand 20']
    #allocation32 [shape = 's32[2]{0}', space=sflag, size = 0x8, scoped, tag = 'scoped memory for mpilope_forward.1']
    #allocation33 [shape = 'u8[1024]{0}', space=vmem, size = 0x400, scoped, tag = 'input window, operand 21']
    #allocation34 [shape = 'u8[32768]{0}', space=vmem, size = 0x8000, scoped, tag = 'input window, operand 22']
    #allocation35 [shape = 's32[2]{0}', space=sflag, size = 0x8, scoped, tag = 'scoped memory for mpilope_forward.1']
    #allocation36 [shape = 'u8[1024]{0}', space=vmem, size = 0x400, scoped, tag = 'input window, operand 23']
    #allocation37 [shape = 'u8[1024]{0}', space=vmem, size = 0x400, scoped, tag = 'input window, operand 24']
    #allocation38 [shape = 's32[2]{0}', space=sflag, size = 0x8, scoped, tag = 'scoped memory for mpilope_forward.1']
    %30 = vsyncpa [#allocation3], 0
    %s31 = scalar_lea.sflag [#allocation3], 1
    %32 = vsyncpa %s31, 0
    %33 = vsyncpa [#allocation5], 0
    %s34 = scalar_lea.sflag [#allocation5], 1
    %35 = vsyncpa %s34, 0
    %36 = vsyncpa [#allocation8], 0
    %s37 = scalar_lea.sflag [#allocation8], 1
    %38 = vsyncpa %s37, 0
    %39 = vsyncpa [#allocation11], 0
    %s40 = scalar_lea.sflag [#allocation11], 1
    %41 = vsyncpa %s40, 0
    %42 = vsyncpa [#allocation14], 0
    %s43 = scalar_lea.sflag [#allocation14], 1
    %44 = vsyncpa %s43, 0
    %45 = vsyncpa [#allocation17], 0
    %s46 = scalar_lea.sflag [#allocation17], 1
    %47 = vsyncpa %s46, 0
    %48 = vsyncpa [#allocation20], 0
    %s49 = scalar_lea.sflag [#allocation20], 1
    %50 = vsyncpa %s49, 0
    %51 = vsyncpa [#allocation23], 0
    %s52 = scalar_lea.sflag [#allocation23], 1
    %53 = vsyncpa %s52, 0
    %54 = vsyncpa [#allocation26], 0
    %s55 = scalar_lea.sflag [#allocation26], 1
    %56 = vsyncpa %s55, 0
    %57 = vsyncpa [#allocation29], 0
    %s58 = scalar_lea.sflag [#allocation29], 1
    %59 = vsyncpa %s58, 0
    %60 = vsyncpa [#allocation32], 0
    %s61 = scalar_lea.sflag [#allocation32], 1
    %62 = vsyncpa %s61, 0
    %63 = vsyncpa [#allocation35], 0
    %s64 = scalar_lea.sflag [#allocation35], 1
    %65 = vsyncpa %s64, 0
    %66 = vsyncpa [#allocation38], 0
    %s67 = scalar_lea.sflag [#allocation38], 1
    %68 = vsyncpa %s67, 0
    loop: start=0, step=1, limit=4
    $region2: #{mpilope_forward.1} parent=1 // loop_pre_header
      _
    $region3: #{mpilope_forward.1} parent=1 // loop_header
      %s70 = sphi 0, %s74
      %p71 = scmp.ge.s32.totalorder %s70, 4
      %s78 = sphi 0, %s78
      %s80 = sphi 0, %s78
      %s81 = sphi 0, %s80
      %s95 = sphi 0, %s81
      %s101 = sphi 0, %s103
      %s104 = sphi 0, %s101
      %s105 = sphi 0, %s104
      %s121 = sphi 0, %s105
      %s127 = sphi 0, %s129
      %s130 = sphi 0, %s127
      %s131 = sphi 0, %s130
      %s147 = sphi 0, %s131
      %s153 = sphi 0, %s155
      %s156 = sphi 0, %s153
      %s157 = sphi 0, %s156
      %s173 = sphi 0, %s157
      %s179 = sphi 0, %s181
      %s182 = sphi 0, %s179
      %s183 = sphi 0, %s182
      %s199 = sphi 0, %s183
      %s205 = sphi 0, %s207
      %s208 = sphi 0, %s205
      %s209 = sphi 0, %s208
      %s225 = sphi 0, %s209
      %s231 = sphi 0, %s233
      %s234 = sphi 0, %s231
      %s235 = sphi 0, %s234
      %s251 = sphi 0, %s235
      %s257 = sphi 0, %s259
      %s260 = sphi 0, %s257
      %s261 = sphi 0, %s260
      %s277 = sphi 0, %s261
      %s283 = sphi 0, %s285
      %s286 = sphi 0, %s283
      %s287 = sphi 0, %s286
      %s303 = sphi 0, %s287
      %s309 = sphi 0, %s311
      %s312 = sphi 0, %s309
      %s313 = sphi 0, %s312
      %s329 = sphi 0, %s313
      %s335 = sphi 0, %s337
      %s338 = sphi 0, %s335
      %s339 = sphi 0, %s338
      %s355 = sphi 0, %s339
      %s361 = sphi 0, %s363
      %s364 = sphi 0, %s361
      %s365 = sphi 0, %s364
      %s381 = sphi 0, %s365
      %s387 = sphi 0, %s389
      %s390 = sphi 0, %s387
      %s391 = sphi 0, %s390
      %s407 = sphi 0, %s391
      %s413 = sphi 0, %s415
      %s416 = sphi 0, %s413
      %s417 = sphi 0, %s416
      %s433 = sphi 0, %s417
      %s439 = sphi 0, %s441
      %s442 = sphi 0, %s439
      %s443 = sphi 0, %s442
      %s459 = sphi 0, %s443
      %s465 = sphi 0, %s467
      %s468 = sphi 0, %s465
      %s469 = sphi 0, %s468
      %s485 = sphi 0, %s469
      %s491 = sphi 0, %s493
      %s494 = sphi 0, %s491
      %s495 = sphi 0, %s494
      %s511 = sphi 0, %s495
      %s517 = sphi 0, %s519
      %s520 = sphi 0, %s517
      %s521 = sphi 0, %s520
      %s537 = sphi 0, %s521
      %s543 = sphi 0, %s545
      %s546 = sphi 0, %s543
      %s547 = sphi 0, %s546
      %s563 = sphi 0, %s547
      %s569 = sphi 0, %s571
      %s572 = sphi 0, %s569
      %s573 = sphi 0, %s572
      %s589 = sphi 0, %s573
      %s595 = sphi 0, %s597
      %s598 = sphi 0, %s595
      %s599 = sphi 0, %s598
      %s615 = sphi 0, %s599
      %s621 = sphi 0, %s623
      %s624 = sphi 0, %s621
      %s625 = sphi 0, %s624
      %s641 = sphi 0, %s625
      %s647 = sphi 0, %s649
      %s650 = sphi 0, %s647
      %s651 = sphi 0, %s650
      %s667 = sphi 0, %s651
      %s673 = sphi 0, %s675
      %s676 = sphi 0, %s673
      %s677 = sphi 0, %s676
      %s693 = sphi 0, %s677
      %s699 = sphi 0, %s701
      %s702 = sphi 0, %s699
      %s703 = sphi 0, %s702
      %s719 = sphi 0, %s703
      %s725 = sphi 0, %s727
      %s728 = sphi 0, %s725
      %s729 = sphi 0, %s728
      %s745 = sphi 0, %s729
    $region4: #{mpilope_forward.1} parent=1 // loop_header_branch
      %73 = sbr.rel (%p71) target = $region8
    $region5: #{mpilope_forward.1} parent=1 // loop_body
      %s75 = ssub.s32 %s70, 1
      %s76 = ssub.s32 %s70, 2
      %s77 = sadd.s32 %s70, 1
      %s79 = sadd.s32 %s78, 1
      %p82 = scmp.eq.s32.totalorder %s70, 1
      %p83 = scmp.ne.s32.totalorder %s78, %s80
      %p84 = scmp.eq.s32.totalorder %s70, 0
      %p85 = por %p83, %p84
      %p86 = scmp.ne.s32.totalorder %s78, %s80
      %p87 = scmp.eq.s32.totalorder %s75, 1
      %p88 = por %p86, %p87
      %p89 = scmp.ne.s32.totalorder %s80, %s81
      %p90 = scmp.eq.s32.totalorder %s75, 0
      %p91 = por %p89, %p90
      %p92 = scmp.ne.s32.totalorder %s80, %s81
      %p93 = scmp.eq.s32.totalorder %s76, 1
      %p94 = por %p92, %p93
      %p96 = scmp.ne.s32.totalorder %s81, %s95
      %p97 = scmp.eq.s32.totalorder %s76, 0
      %p98 = por %p96, %p97
      %s99 = ssub.s32 %s70, %s77
      %p100 = scmp.eq.s32.totalorder %s99, 0
      %s102 = sadd.s32 %s101, 1
      %s103 = scalar_select %p100, %s101, %s102
      %p106 = pneg %p100
      %p107 = scmp.eq.s32.totalorder %s70, 1
      %p108 = por %p106, %p107
      %p109 = scmp.ne.s32.totalorder %s101, %s104
      %p110 = scmp.eq.s32.totalorder %s70, 0
      %p111 = por %p109, %p110
      %p112 = scmp.ne.s32.totalorder %s101, %s104
      %p113 = scmp.eq.s32.totalorder %s75, 1
      %p114 = por %p112, %p113
      %p115 = scmp.ne.s32.totalorder %s104, %s105
      %p116 = scmp.eq.s32.totalorder %s75, 0
      %p117 = por %p115, %p116
      %p118 = scmp.ne.s32.totalorder %s104, %s105
      %p119 = scmp.eq.s32.totalorder %s76, 1
      %p120 = por %p118, %p119
      %p122 = scmp.ne.s32.totalorder %s105, %s121
      %p123 = scmp.eq.s32.totalorder %s76, 0
      %p124 = por %p122, %p123
      %s125 = ssub.s32 %s70, %s77
      %p126 = scmp.eq.s32.totalorder %s125, 0
      %s128 = sadd.s32 %s127, 1
      %s129 = scalar_select %p126, %s127, %s128
      %p132 = pneg %p126
      %p133 = scmp.eq.s32.totalorder %s70, 1
      %p134 = por %p132, %p133
      %p135 = scmp.ne.s32.totalorder %s127, %s130
      %p136 = scmp.eq.s32.totalorder %s70, 0
      %p137 = por %p135, %p136
      %p138 = scmp.ne.s32.totalorder %s127, %s130
      %p139 = scmp.eq.s32.totalorder %s75, 1
      %p140 = por %p138, %p139
      %p141 = scmp.ne.s32.totalorder %s130, %s131
      %p142 = scmp.eq.s32.totalorder %s75, 0
      %p143 = por %p141, %p142
      %p144 = scmp.ne.s32.totalorder %s130, %s131
      %p145 = scmp.eq.s32.totalorder %s76, 1
      %p146 = por %p144, %p145
      %p148 = scmp.ne.s32.totalorder %s131, %s147
      %p149 = scmp.eq.s32.totalorder %s76, 0
      %p150 = por %p148, %p149
      %s151 = ssub.s32 %s70, %s77
      %p152 = scmp.eq.s32.totalorder %s151, 0
      %s154 = sadd.s32 %s153, 1
      %s155 = scalar_select %p152, %s153, %s154
      %p158 = pneg %p152
      %p159 = scmp.eq.s32.totalorder %s70, 1
      %p160 = por %p158, %p159
      %p161 = scmp.ne.s32.totalorder %s153, %s156
      %p162 = scmp.eq.s32.totalorder %s70, 0
      %p163 = por %p161, %p162
      %p164 = scmp.ne.s32.totalorder %s153, %s156
      %p165 = scmp.eq.s32.totalorder %s75, 1
      %p166 = por %p164, %p165
      %p167 = scmp.ne.s32.totalorder %s156, %s157
      %p168 = scmp.eq.s32.totalorder %s75, 0
      %p169 = por %p167, %p168
      %p170 = scmp.ne.s32.totalorder %s156, %s157
      %p171 = scmp.eq.s32.totalorder %s76, 1
      %p172 = por %p170, %p171
      %p174 = scmp.ne.s32.totalorder %s157, %s173
      %p175 = scmp.eq.s32.totalorder %s76, 0
      %p176 = por %p174, %p175
      %s177 = ssub.s32 %s70, %s77
      %p178 = scmp.eq.s32.totalorder %s177, 0
      %s180 = sadd.s32 %s179, 1
      %s181 = scalar_select %p178, %s179, %s180
      %p184 = pneg %p178
      %p185 = scmp.eq.s32.totalorder %s70, 1
      %p186 = por %p184, %p185
      %p187 = scmp.ne.s32.totalorder %s179, %s182
      %p188 = scmp.eq.s32.totalorder %s70, 0
      %p189 = por %p187, %p188
      %p190 = scmp.ne.s32.totalorder %s179, %s182
      %p191 = scmp.eq.s32.totalorder %s75, 1
      %p192 = por %p190, %p191
      %p193 = scmp.ne.s32.totalorder %s182, %s183
      %p194 = scmp.eq.s32.totalorder %s75, 0
      %p195 = por %p193, %p194
      %p196 = scmp.ne.s32.totalorder %s182, %s183
      %p197 = scmp.eq.s32.totalorder %s76, 1
      %p198 = por %p196, %p197
      %p200 = scmp.ne.s32.totalorder %s183, %s199
      %p201 = scmp.eq.s32.totalorder %s76, 0
      %p202 = por %p200, %p201
      %s203 = ssub.s32 %s70, %s77
      %p204 = scmp.eq.s32.totalorder %s203, 0
      %s206 = sadd.s32 %s205, 1
      %s207 = scalar_select %p204, %s205, %s206
      %p210 = pneg %p204
      %p211 = scmp.eq.s32.totalorder %s70, 1
      %p212 = por %p210, %p211
      %p213 = scmp.ne.s32.totalorder %s205, %s208
      %p214 = scmp.eq.s32.totalorder %s70, 0
      %p215 = por %p213, %p214
      %p216 = scmp.ne.s32.totalorder %s205, %s208
      %p217 = scmp.eq.s32.totalorder %s75, 1
      %p218 = por %p216, %p217
      %p219 = scmp.ne.s32.totalorder %s208, %s209
      %p220 = scmp.eq.s32.totalorder %s75, 0
      %p221 = por %p219, %p220
      %p222 = scmp.ne.s32.totalorder %s208, %s209
      %p223 = scmp.eq.s32.totalorder %s76, 1
      %p224 = por %p222, %p223
      %p226 = scmp.ne.s32.totalorder %s209, %s225
      %p227 = scmp.eq.s32.totalorder %s76, 0
      %p228 = por %p226, %p227
      %s229 = ssub.s32 %s70, %s77
      %p230 = scmp.eq.s32.totalorder %s229, 0
      %s232 = sadd.s32 %s231, 1
      %s233 = scalar_select %p230, %s231, %s232
      %p236 = pneg %p230
      %p237 = scmp.eq.s32.totalorder %s70, 1
      %p238 = por %p236, %p237
      %p239 = scmp.ne.s32.totalorder %s231, %s234
      %p240 = scmp.eq.s32.totalorder %s70, 0
      %p241 = por %p239, %p240
      %p242 = scmp.ne.s32.totalorder %s231, %s234
      %p243 = scmp.eq.s32.totalorder %s75, 1
      %p244 = por %p242, %p243
      %p245 = scmp.ne.s32.totalorder %s234, %s235
      %p246 = scmp.eq.s32.totalorder %s75, 0
      %p247 = por %p245, %p246
      %p248 = scmp.ne.s32.totalorder %s234, %s235
      %p249 = scmp.eq.s32.totalorder %s76, 1
      %p250 = por %p248, %p249
      %p252 = scmp.ne.s32.totalorder %s235, %s251
      %p253 = scmp.eq.s32.totalorder %s76, 0
      %p254 = por %p252, %p253
      %s255 = ssub.s32 %s70, %s77
      %p256 = scmp.eq.s32.totalorder %s255, 0
      %s258 = sadd.s32 %s257, 1
      %s259 = scalar_select %p256, %s257, %s258
      %p262 = pneg %p256
      %p263 = scmp.eq.s32.totalorder %s70, 1
      %p264 = por %p262, %p263
      %p265 = scmp.ne.s32.totalorder %s257, %s260
      %p266 = scmp.eq.s32.totalorder %s70, 0
      %p267 = por %p265, %p266
      %p268 = scmp.ne.s32.totalorder %s257, %s260
      %p269 = scmp.eq.s32.totalorder %s75, 1
      %p270 = por %p268, %p269
      %p271 = scmp.ne.s32.totalorder %s260, %s261
      %p272 = scmp.eq.s32.totalorder %s75, 0
      %p273 = por %p271, %p272
      %p274 = scmp.ne.s32.totalorder %s260, %s261
      %p275 = scmp.eq.s32.totalorder %s76, 1
      %p276 = por %p274, %p275
      %p278 = scmp.ne.s32.totalorder %s261, %s277
      %p279 = scmp.eq.s32.totalorder %s76, 0
      %p280 = por %p278, %p279
      %s281 = ssub.s32 %s70, %s77
      %p282 = scmp.eq.s32.totalorder %s281, 0
      %s284 = sadd.s32 %s283, 1
      %s285 = scalar_select %p282, %s283, %s284
      %p288 = pneg %p282
      %p289 = scmp.eq.s32.totalorder %s70, 1
      %p290 = por %p288, %p289
      %p291 = scmp.ne.s32.totalorder %s283, %s286
      %p292 = scmp.eq.s32.totalorder %s70, 0
      %p293 = por %p291, %p292
      %p294 = scmp.ne.s32.totalorder %s283, %s286
      %p295 = scmp.eq.s32.totalorder %s75, 1
      %p296 = por %p294, %p295
      %p297 = scmp.ne.s32.totalorder %s286, %s287
      %p298 = scmp.eq.s32.totalorder %s75, 0
      %p299 = por %p297, %p298
      %p300 = scmp.ne.s32.totalorder %s286, %s287
      %p301 = scmp.eq.s32.totalorder %s76, 1
      %p302 = por %p300, %p301
      %p304 = scmp.ne.s32.totalorder %s287, %s303
      %p305 = scmp.eq.s32.totalorder %s76, 0
      %p306 = por %p304, %p305
      %s307 = ssub.s32 %s70, %s77
      %p308 = scmp.eq.s32.totalorder %s307, 0
      %s310 = sadd.s32 %s309, 1
      %s311 = scalar_select %p308, %s309, %s310
      %p314 = pneg %p308
      %p315 = scmp.eq.s32.totalorder %s70, 1
      %p316 = por %p314, %p315
      %p317 = scmp.ne.s32.totalorder %s309, %s312
      %p318 = scmp.eq.s32.totalorder %s70, 0
      %p319 = por %p317, %p318
      %p320 = scmp.ne.s32.totalorder %s309, %s312
      %p321 = scmp.eq.s32.totalorder %s75, 1
      %p322 = por %p320, %p321
      %p323 = scmp.ne.s32.totalorder %s312, %s313
      %p324 = scmp.eq.s32.totalorder %s75, 0
      %p325 = por %p323, %p324
      %p326 = scmp.ne.s32.totalorder %s312, %s313
      %p327 = scmp.eq.s32.totalorder %s76, 1
      %p328 = por %p326, %p327
      %p330 = scmp.ne.s32.totalorder %s313, %s329
      %p331 = scmp.eq.s32.totalorder %s76, 0
      %p332 = por %p330, %p331
      %s333 = ssub.s32 %s70, %s77
      %p334 = scmp.eq.s32.totalorder %s333, 0
      %s336 = sadd.s32 %s335, 1
      %s337 = scalar_select %p334, %s335, %s336
      %p340 = pneg %p334
      %p341 = scmp.eq.s32.totalorder %s70, 1
      %p342 = por %p340, %p341
      %p343 = scmp.ne.s32.totalorder %s335, %s338
      %p344 = scmp.eq.s32.totalorder %s70, 0
      %p345 = por %p343, %p344
      %p346 = scmp.ne.s32.totalorder %s335, %s338
      %p347 = scmp.eq.s32.totalorder %s75, 1
      %p348 = por %p346, %p347
      %p349 = scmp.ne.s32.totalorder %s338, %s339
      %p350 = scmp.eq.s32.totalorder %s75, 0
      %p351 = por %p349, %p350
      %p352 = scmp.ne.s32.totalorder %s338, %s339
      %p353 = scmp.eq.s32.totalorder %s76, 1
      %p354 = por %p352, %p353
      %p356 = scmp.ne.s32.totalorder %s339, %s355
      %p357 = scmp.eq.s32.totalorder %s76, 0
      %p358 = por %p356, %p357
      %s359 = ssub.s32 %s70, %s77
      %p360 = scmp.eq.s32.totalorder %s359, 0
      %s362 = sadd.s32 %s361, 1
      %s363 = scalar_select %p360, %s361, %s362
      %p366 = pneg %p360
      %p367 = scmp.eq.s32.totalorder %s70, 1
      %p368 = por %p366, %p367
      %p369 = scmp.ne.s32.totalorder %s361, %s364
      %p370 = scmp.eq.s32.totalorder %s70, 0
      %p371 = por %p369, %p370
      %p372 = scmp.ne.s32.totalorder %s361, %s364
      %p373 = scmp.eq.s32.totalorder %s75, 1
      %p374 = por %p372, %p373
      %p375 = scmp.ne.s32.totalorder %s364, %s365
      %p376 = scmp.eq.s32.totalorder %s75, 0
      %p377 = por %p375, %p376
      %p378 = scmp.ne.s32.totalorder %s364, %s365
      %p379 = scmp.eq.s32.totalorder %s76, 1
      %p380 = por %p378, %p379
      %p382 = scmp.ne.s32.totalorder %s365, %s381
      %p383 = scmp.eq.s32.totalorder %s76, 0
      %p384 = por %p382, %p383
      %s385 = ssub.s32 %s70, %s77
      %p386 = scmp.eq.s32.totalorder %s385, 0
      %s388 = sadd.s32 %s387, 1
      %s389 = scalar_select %p386, %s387, %s388
      %p392 = pneg %p386
      %p393 = scmp.eq.s32.totalorder %s70, 1
      %p394 = por %p392, %p393
      %p395 = scmp.ne.s32.totalorder %s387, %s390
      %p396 = scmp.eq.s32.totalorder %s70, 0
      %p397 = por %p395, %p396
      %p398 = scmp.ne.s32.totalorder %s387, %s390
      %p399 = scmp.eq.s32.totalorder %s75, 1
      %p400 = por %p398, %p399
      %p401 = scmp.ne.s32.totalorder %s390, %s391
      %p402 = scmp.eq.s32.totalorder %s75, 0
      %p403 = por %p401, %p402
      %p404 = scmp.ne.s32.totalorder %s390, %s391
      %p405 = scmp.eq.s32.totalorder %s76, 1
      %p406 = por %p404, %p405
      %p408 = scmp.ne.s32.totalorder %s391, %s407
      %p409 = scmp.eq.s32.totalorder %s76, 0
      %p410 = por %p408, %p409
      %s411 = ssub.s32 %s70, %s77
      %p412 = scmp.eq.s32.totalorder %s411, 0
      %s414 = sadd.s32 %s413, 1
      %s415 = scalar_select %p412, %s413, %s414
      %p418 = pneg %p412
      %p419 = scmp.eq.s32.totalorder %s70, 1
      %p420 = por %p418, %p419
      %p421 = scmp.ne.s32.totalorder %s413, %s416
      %p422 = scmp.eq.s32.totalorder %s70, 0
      %p423 = por %p421, %p422
      %p424 = scmp.ne.s32.totalorder %s413, %s416
      %p425 = scmp.eq.s32.totalorder %s75, 1
      %p426 = por %p424, %p425
      %p427 = scmp.ne.s32.totalorder %s416, %s417
      %p428 = scmp.eq.s32.totalorder %s75, 0
      %p429 = por %p427, %p428
      %p430 = scmp.ne.s32.totalorder %s416, %s417
      %p431 = scmp.eq.s32.totalorder %s76, 1
      %p432 = por %p430, %p431
      %p434 = scmp.ne.s32.totalorder %s417, %s433
      %p435 = scmp.eq.s32.totalorder %s76, 0
      %p436 = por %p434, %p435
      %s437 = ssub.s32 %s70, %s77
      %p438 = scmp.eq.s32.totalorder %s437, 0
      %s440 = sadd.s32 %s439, 1
      %s441 = scalar_select %p438, %s439, %s440
      %p444 = pneg %p438
      %p445 = scmp.eq.s32.totalorder %s70, 1
      %p446 = por %p444, %p445
      %p447 = scmp.ne.s32.totalorder %s439, %s442
      %p448 = scmp.eq.s32.totalorder %s70, 0
      %p449 = por %p447, %p448
      %p450 = scmp.ne.s32.totalorder %s439, %s442
      %p451 = scmp.eq.s32.totalorder %s75, 1
      %p452 = por %p450, %p451
      %p453 = scmp.ne.s32.totalorder %s442, %s443
      %p454 = scmp.eq.s32.totalorder %s75, 0
      %p455 = por %p453, %p454
      %p456 = scmp.ne.s32.totalorder %s442, %s443
      %p457 = scmp.eq.s32.totalorder %s76, 1
      %p458 = por %p456, %p457
      %p460 = scmp.ne.s32.totalorder %s443, %s459
      %p461 = scmp.eq.s32.totalorder %s76, 0
      %p462 = por %p460, %p461
      %s463 = ssub.s32 %s70, %s77
      %p464 = scmp.eq.s32.totalorder %s463, 0
      %s466 = sadd.s32 %s465, 1
      %s467 = scalar_select %p464, %s465, %s466
      %p470 = pneg %p464
      %p471 = scmp.eq.s32.totalorder %s70, 1
      %p472 = por %p470, %p471
      %p473 = scmp.ne.s32.totalorder %s465, %s468
      %p474 = scmp.eq.s32.totalorder %s70, 0
      %p475 = por %p473, %p474
      %p476 = scmp.ne.s32.totalorder %s465, %s468
      %p477 = scmp.eq.s32.totalorder %s75, 1
      %p478 = por %p476, %p477
      %p479 = scmp.ne.s32.totalorder %s468, %s469
      %p480 = scmp.eq.s32.totalorder %s75, 0
      %p481 = por %p479, %p480
      %p482 = scmp.ne.s32.totalorder %s468, %s469
      %p483 = scmp.eq.s32.totalorder %s76, 1
      %p484 = por %p482, %p483
      %p486 = scmp.ne.s32.totalorder %s469, %s485
      %p487 = scmp.eq.s32.totalorder %s76, 0
      %p488 = por %p486, %p487
      %s489 = ssub.s32 %s70, %s77
      %p490 = scmp.eq.s32.totalorder %s489, 0
      %s492 = sadd.s32 %s491, 1
      %s493 = scalar_select %p490, %s491, %s492
      %p496 = pneg %p490
      %p497 = scmp.eq.s32.totalorder %s70, 1
      %p498 = por %p496, %p497
      %p499 = scmp.ne.s32.totalorder %s491, %s494
      %p500 = scmp.eq.s32.totalorder %s70, 0
      %p501 = por %p499, %p500
      %p502 = scmp.ne.s32.totalorder %s491, %s494
      %p503 = scmp.eq.s32.totalorder %s75, 1
      %p504 = por %p502, %p503
      %p505 = scmp.ne.s32.totalorder %s494, %s495
      %p506 = scmp.eq.s32.totalorder %s75, 0
      %p507 = por %p505, %p506
      %p508 = scmp.ne.s32.totalorder %s494, %s495
      %p509 = scmp.eq.s32.totalorder %s76, 1
      %p510 = por %p508, %p509
      %p512 = scmp.ne.s32.totalorder %s495, %s511
      %p513 = scmp.eq.s32.totalorder %s76, 0
      %p514 = por %p512, %p513
      %s515 = ssub.s32 %s70, %s77
      %p516 = scmp.eq.s32.totalorder %s515, 0
      %s518 = sadd.s32 %s517, 1
      %s519 = scalar_select %p516, %s517, %s518
      %p522 = pneg %p516
      %p523 = scmp.eq.s32.totalorder %s70, 1
      %p524 = por %p522, %p523
      %p525 = scmp.ne.s32.totalorder %s517, %s520
      %p526 = scmp.eq.s32.totalorder %s70, 0
      %p527 = por %p525, %p526
      %p528 = scmp.ne.s32.totalorder %s517, %s520
      %p529 = scmp.eq.s32.totalorder %s75, 1
      %p530 = por %p528, %p529
      %p531 = scmp.ne.s32.totalorder %s520, %s521
      %p532 = scmp.eq.s32.totalorder %s75, 0
      %p533 = por %p531, %p532
      %p534 = scmp.ne.s32.totalorder %s520, %s521
      %p535 = scmp.eq.s32.totalorder %s76, 1
      %p536 = por %p534, %p535
      %p538 = scmp.ne.s32.totalorder %s521, %s537
      %p539 = scmp.eq.s32.totalorder %s76, 0
      %p540 = por %p538, %p539
      %s541 = ssub.s32 %s70, %s77
      %p542 = scmp.eq.s32.totalorder %s541, 0
      %s544 = sadd.s32 %s543, 1
      %s545 = scalar_select %p542, %s543, %s544
      %p548 = pneg %p542
      %p549 = scmp.eq.s32.totalorder %s70, 1
      %p550 = por %p548, %p549
      %p551 = scmp.ne.s32.totalorder %s543, %s546
      %p552 = scmp.eq.s32.totalorder %s70, 0
      %p553 = por %p551, %p552
      %p554 = scmp.ne.s32.totalorder %s543, %s546
      %p555 = scmp.eq.s32.totalorder %s75, 1
      %p556 = por %p554, %p555
      %p557 = scmp.ne.s32.totalorder %s546, %s547
      %p558 = scmp.eq.s32.totalorder %s75, 0
      %p559 = por %p557, %p558
      %p560 = scmp.ne.s32.totalorder %s546, %s547
      %p561 = scmp.eq.s32.totalorder %s76, 1
      %p562 = por %p560, %p561
      %p564 = scmp.ne.s32.totalorder %s547, %s563
      %p565 = scmp.eq.s32.totalorder %s76, 0
      %p566 = por %p564, %p565
      %s567 = ssub.s32 %s70, %s77
      %p568 = scmp.eq.s32.totalorder %s567, 0
      %s570 = sadd.s32 %s569, 1
      %s571 = scalar_select %p568, %s569, %s570
      %p574 = pneg %p568
      %p575 = scmp.eq.s32.totalorder %s70, 1
      %p576 = por %p574, %p575
      %p577 = scmp.ne.s32.totalorder %s569, %s572
      %p578 = scmp.eq.s32.totalorder %s70, 0
      %p579 = por %p577, %p578
      %p580 = scmp.ne.s32.totalorder %s569, %s572
      %p581 = scmp.eq.s32.totalorder %s75, 1
      %p582 = por %p580, %p581
      %p583 = scmp.ne.s32.totalorder %s572, %s573
      %p584 = scmp.eq.s32.totalorder %s75, 0
      %p585 = por %p583, %p584
      %p586 = scmp.ne.s32.totalorder %s572, %s573
      %p587 = scmp.eq.s32.totalorder %s76, 1
      %p588 = por %p586, %p587
      %p590 = scmp.ne.s32.totalorder %s573, %s589
      %p591 = scmp.eq.s32.totalorder %s76, 0
      %p592 = por %p590, %p591
      %s593 = ssub.s32 %s70, %s77
      %p594 = scmp.eq.s32.totalorder %s593, 0
      %s596 = sadd.s32 %s595, 1
      %s597 = scalar_select %p594, %s595, %s596
      %p600 = pneg %p594
      %p601 = scmp.eq.s32.totalorder %s70, 1
      %p602 = por %p600, %p601
      %p603 = scmp.ne.s32.totalorder %s595, %s598
      %p604 = scmp.eq.s32.totalorder %s70, 0
      %p605 = por %p603, %p604
      %p606 = scmp.ne.s32.totalorder %s595, %s598
      %p607 = scmp.eq.s32.totalorder %s75, 1
      %p608 = por %p606, %p607
      %p609 = scmp.ne.s32.totalorder %s598, %s599
      %p610 = scmp.eq.s32.totalorder %s75, 0
      %p611 = por %p609, %p610
      %p612 = scmp.ne.s32.totalorder %s598, %s599
      %p613 = scmp.eq.s32.totalorder %s76, 1
      %p614 = por %p612, %p613
      %p616 = scmp.ne.s32.totalorder %s599, %s615
      %p617 = scmp.eq.s32.totalorder %s76, 0
      %p618 = por %p616, %p617
      %s619 = ssub.s32 %s70, %s77
      %p620 = scmp.eq.s32.totalorder %s619, 0
      %s622 = sadd.s32 %s621, 1
      %s623 = scalar_select %p620, %s621, %s622
      %p626 = pneg %p620
      %p627 = scmp.eq.s32.totalorder %s70, 1
      %p628 = por %p626, %p627
      %p629 = scmp.ne.s32.totalorder %s621, %s624
      %p630 = scmp.eq.s32.totalorder %s70, 0
      %p631 = por %p629, %p630
      %p632 = scmp.ne.s32.totalorder %s621, %s624
      %p633 = scmp.eq.s32.totalorder %s75, 1
      %p634 = por %p632, %p633
      %p635 = scmp.ne.s32.totalorder %s624, %s625
      %p636 = scmp.eq.s32.totalorder %s75, 0
      %p637 = por %p635, %p636
      %p638 = scmp.ne.s32.totalorder %s624, %s625
      %p639 = scmp.eq.s32.totalorder %s76, 1
      %p640 = por %p638, %p639
      %p642 = scmp.ne.s32.totalorder %s625, %s641
      %p643 = scmp.eq.s32.totalorder %s76, 0
      %p644 = por %p642, %p643
      %s645 = ssub.s32 %s70, %s77
      %p646 = scmp.eq.s32.totalorder %s645, 0
      %s648 = sadd.s32 %s647, 1
      %s649 = scalar_select %p646, %s647, %s648
      %p652 = pneg %p646
      %p653 = scmp.eq.s32.totalorder %s70, 1
      %p654 = por %p652, %p653
      %p655 = scmp.ne.s32.totalorder %s647, %s650
      %p656 = scmp.eq.s32.totalorder %s70, 0
      %p657 = por %p655, %p656
      %p658 = scmp.ne.s32.totalorder %s647, %s650
      %p659 = scmp.eq.s32.totalorder %s75, 1
      %p660 = por %p658, %p659
      %p661 = scmp.ne.s32.totalorder %s650, %s651
      %p662 = scmp.eq.s32.totalorder %s75, 0
      %p663 = por %p661, %p662
      %p664 = scmp.ne.s32.totalorder %s650, %s651
      %p665 = scmp.eq.s32.totalorder %s76, 1
      %p666 = por %p664, %p665
      %p668 = scmp.ne.s32.totalorder %s651, %s667
      %p669 = scmp.eq.s32.totalorder %s76, 0
      %p670 = por %p668, %p669
      %s671 = ssub.s32 %s70, %s77
      %p672 = scmp.eq.s32.totalorder %s671, 0
      %s674 = sadd.s32 %s673, 1
      %s675 = scalar_select %p672, %s673, %s674
      %p678 = pneg %p672
      %p679 = scmp.eq.s32.totalorder %s70, 1
      %p680 = por %p678, %p679
      %p681 = scmp.ne.s32.totalorder %s673, %s676
      %p682 = scmp.eq.s32.totalorder %s70, 0
      %p683 = por %p681, %p682
      %p684 = scmp.ne.s32.totalorder %s673, %s676
      %p685 = scmp.eq.s32.totalorder %s75, 1
      %p686 = por %p684, %p685
      %p687 = scmp.ne.s32.totalorder %s676, %s677
      %p688 = scmp.eq.s32.totalorder %s75, 0
      %p689 = por %p687, %p688
      %p690 = scmp.ne.s32.totalorder %s676, %s677
      %p691 = scmp.eq.s32.totalorder %s76, 1
      %p692 = por %p690, %p691
      %p694 = scmp.ne.s32.totalorder %s677, %s693
      %p695 = scmp.eq.s32.totalorder %s76, 0
      %p696 = por %p694, %p695
      %s697 = ssub.s32 %s70, %s77
      %p698 = scmp.eq.s32.totalorder %s697, 0
      %s700 = sadd.s32 %s699, 1
      %s701 = scalar_select %p698, %s699, %s700
      %p704 = pneg %p698
      %p705 = scmp.eq.s32.totalorder %s70, 1
      %p706 = por %p704, %p705
      %p707 = scmp.ne.s32.totalorder %s699, %s702
      %p708 = scmp.eq.s32.totalorder %s70, 0
      %p709 = por %p707, %p708
      %p710 = scmp.ne.s32.totalorder %s699, %s702
      %p711 = scmp.eq.s32.totalorder %s75, 1
      %p712 = por %p710, %p711
      %p713 = scmp.ne.s32.totalorder %s702, %s703
      %p714 = scmp.eq.s32.totalorder %s75, 0
      %p715 = por %p713, %p714
      %p716 = scmp.ne.s32.totalorder %s702, %s703
      %p717 = scmp.eq.s32.totalorder %s76, 1
      %p718 = por %p716, %p717
      %p720 = scmp.ne.s32.totalorder %s703, %s719
      %p721 = scmp.eq.s32.totalorder %s76, 0
      %p722 = por %p720, %p721
      %s723 = ssub.s32 %s70, %s77
      %p724 = scmp.eq.s32.totalorder %s723, 0
      %s726 = sadd.s32 %s725, 1
      %s727 = scalar_select %p724, %s725, %s726
      %p730 = pneg %p724
      %p731 = scmp.eq.s32.totalorder %s70, 1
      %p732 = por %p730, %p731
      %p733 = scmp.ne.s32.totalorder %s725, %s728
      %p734 = scmp.eq.s32.totalorder %s70, 0
      %p735 = por %p733, %p734
      %p736 = scmp.ne.s32.totalorder %s725, %s728
      %p737 = scmp.eq.s32.totalorder %s75, 1
      %p738 = por %p736, %p737
      %p739 = scmp.ne.s32.totalorder %s728, %s729
      %p740 = scmp.eq.s32.totalorder %s75, 0
      %p741 = por %p739, %p740
      %p742 = scmp.ne.s32.totalorder %s728, %s729
      %p743 = scmp.eq.s32.totalorder %s76, 1
      %p744 = por %p742, %p743
      %p746 = scmp.ne.s32.totalorder %s729, %s745
      %p747 = scmp.eq.s32.totalorder %s76, 0
      %p748 = por %p746, %p747
      %p749 = scmp.le.s32.totalorder 1, %s70
      %p750 = scmp.lt.s32.totalorder %s70, 3
      %p751 = pnand %p749, %p750
      %p752 = pneg %p751
      // Predicated region
      $region9: #{mpilope_forward.1} parent=5 // pred_check
        _
      $region10: #{mpilope_forward.1} parent=5 // pred_check_branch
        %754 = sbr.rel (%p751) target = $region12
      $region11: #{mpilope_forward.1} parent=5 // pred_region
        %s755 = ssub.s32 %s70, 1
        // Predicated region
        $region13: #{mpilope_forward.1} parent=11 // pred_check
          %p756 = pneg %p91
        $region14: #{mpilope_forward.1} parent=11 // pred_check_branch
          %758 = sbr.rel (%p756) target = $region16
        $region15: #{mpilope_forward.1} parent=11 // pred_region
          _
        $region16: #{mpilope_forward.1} parent=11 // pred_fallthru
          _
      $region12: #{mpilope_forward.1} parent=5 // pred_fallthru
        _
      %p759 = scmp.lt.s32.totalorder %s70, 2
      // Predicated region
      $region17: #{mpilope_forward.1} parent=5 // pred_check
        %p760 = pneg %p759
      $region18: #{mpilope_forward.1} parent=5 // pred_check_branch
        %762 = sbr.rel (%p760) target = $region20
      $region19: #{mpilope_forward.1} parent=5 // pred_region
        // Predicated region
        $region21: #{mpilope_forward.1} parent=19 // pred_check
          %p763 = pneg %p111
        $region22: #{mpilope_forward.1} parent=19 // pred_check_branch
          %765 = sbr.rel (%p763) target = $region24
        $region23: #{mpilope_forward.1} parent=19 // pred_region
          %s766 = sand.u32 %s101, 1
          %s767 = scalar_lea.sflag [#allocation3], %s766
          %s768 = sand.u32 %s101, 1
          %s769 = smul.addr %s768, 4096
          %s770 = scalar_lea.vmem [#allocation2], %s769
          %s772 = ssub.s32 65536, 65536
          %773 = vsyncadd %s767, %s772
          %s774 = smul.addr %s70, 512
          %s775 = smul.addr %s774, 128
          %s776 = scalar_lea.hbm %s1, %s775
          %s777 = sshll.u32 %s770, 4
          %s778 = int_to_ptr.vmem [resolvable:$true] %s777
          %783 = dma.hbm_to_vmem [thread:$0]  %s776, 65536, %s778, %s767, 1024, 1024, 64
        $region24: #{mpilope_forward.1} parent=19 // pred_fallthru
          _
        // Predicated region
        $region25: #{mpilope_forward.1} parent=19 // pred_check
          %p784 = pneg %p137
        $region26: #{mpilope_forward.1} parent=19 // pred_check_branch
          %786 = sbr.rel (%p784) target = $region28
        $region27: #{mpilope_forward.1} parent=19 // pred_region
          %s787 = sand.u32 %s70, 1
          %s788 = scalar_lea.sflag [#allocation5], %s787
          %s789 = sand.u32 %s127, 1
          %s790 = smul.addr %s789, 8
          %s791 = scalar_lea.vmem [#allocation4], %s790
          %s793 = ssub.s32 128, 128
          %794 = vsyncadd %s788, %s793
          %s795 = smul.addr %s70, 8
          %s796 = smul.addr %s795, 16
          %s797 = scalar_lea.hbm %s2, %s796
          %s799 = sshll.u32 %s791, 4
          %s800 = int_to_ptr.vmem [resolvable:$true] %s799
          %802 = dma.hbm_to_vmem [thread:$0]  %s797, 128, %s800, %s788
        $region28: #{mpilope_forward.1} parent=19 // pred_fallthru
          _
        // Predicated region
        $region29: #{mpilope_forward.1} parent=19 // pred_check
          %p803 = pneg %p163
        $region30: #{mpilope_forward.1} parent=19 // pred_check_branch
          %805 = sbr.rel (%p803) target = $region32
        $region31: #{mpilope_forward.1} parent=19 // pred_region
          %s806 = sand.u32 %s70, 1
          %s807 = scalar_lea.sflag [#allocation5], %s806
          %s808 = sand.u32 %s153, 1
          %s809 = smul.addr %s808, 8
          %s810 = scalar_lea.vmem [#allocation6], %s809
          %s812 = ssub.s32 128, 128
          %813 = vsyncadd %s807, %s812
          %s814 = smul.addr %s70, 8
          %s815 = smul.addr %s814, 16
          %s816 = scalar_lea.hbm %s3, %s815
          %s818 = sshll.u32 %s810, 4
          %s819 = int_to_ptr.vmem [resolvable:$true] %s818
          %821 = dma.hbm_to_vmem [thread:$0]  %s816, 128, %s819, %s807
        $region32: #{mpilope_forward.1} parent=19 // pred_fallthru
          _
        // Predicated region
        $region33: #{mpilope_forward.1} parent=19 // pred_check
          %p822 = pneg %p189
        $region34: #{mpilope_forward.1} parent=19 // pred_check_branch
          %824 = sbr.rel (%p822) target = $region36
        $region35: #{mpilope_forward.1} parent=19 // pred_region
          %s825 = sand.u32 %s70, 1
          %s826 = scalar_lea.sflag [#allocation8], %s825
          %s827 = sand.u32 %s179, 1
          %s828 = smul.addr %s827, 1024
          %s829 = scalar_lea.vmem [#allocation7], %s828
          %s831 = ssub.s32 16384, 16384
          %832 = vsyncadd %s826, %s831
          %s833 = smul.addr %s70, 128
          %s834 = smul.addr %s833, 128
          %s835 = scalar_lea.hbm %s4, %s834
          %s836 = sshll.u32 %s829, 4
          %s837 = int_to_ptr.vmem [resolvable:$true] %s836
          %842 = dma.hbm_to_vmem [thread:$0]  %s835, 16384, %s837, %s826, 512, 512, 32
        $region36: #{mpilope_forward.1} parent=19 // pred_fallthru
          _
        // Predicated region
        $region37: #{mpilope_forward.1} parent=19 // pred_check
          %p843 = pneg %p215
        $region38: #{mpilope_forward.1} parent=19 // pred_check_branch
          %845 = sbr.rel (%p843) target = $region40
        $region39: #{mpilope_forward.1} parent=19 // pred_region
          %s846 = sand.u32 %s70, 1
          %s847 = scalar_lea.sflag [#allocation8], %s846
          %s848 = sand.u32 %s205, 1
          %s849 = smul.addr %s848, 4
          %s850 = scalar_lea.vmem [#allocation9], %s849
          %s852 = ssub.s32 64, 64
          %853 = vsyncadd %s847, %s852
          %s854 = smul.addr %s70, 4
          %s855 = smul.addr %s854, 16
          %s856 = scalar_lea.hbm %s5, %s855
          %s858 = sshll.u32 %s850, 4
          %s859 = int_to_ptr.vmem [resolvable:$true] %s858
          %861 = dma.hbm_to_vmem [thread:$0]  %s856, 64, %s859, %s847
        $region40: #{mpilope_forward.1} parent=19 // pred_fallthru
          _
        // Predicated region
        $region41: #{mpilope_forward.1} parent=19 // pred_check
          %p862 = pneg %p241
        $region42: #{mpilope_forward.1} parent=19 // pred_check_branch
          %864 = sbr.rel (%p862) target = $region44
        $region43: #{mpilope_forward.1} parent=19 // pred_region
          %s865 = sand.u32 %s70, 1
          %s866 = scalar_lea.sflag [#allocation11], %s865
          %s867 = sand.u32 %s231, 1
          %s868 = smul.addr %s867, 4
          %s869 = scalar_lea.vmem [#allocation10], %s868
          %s871 = ssub.s32 64, 64
          %872 = vsyncadd %s866, %s871
          %s873 = smul.addr %s70, 4
          %s874 = smul.addr %s873, 16
          %s875 = scalar_lea.hbm %s6, %s874
          %s877 = sshll.u32 %s869, 4
          %s878 = int_to_ptr.vmem [resolvable:$true] %s877
          %880 = dma.hbm_to_vmem [thread:$0]  %s875, 64, %s878, %s866
        $region44: #{mpilope_forward.1} parent=19 // pred_fallthru
          _
        // Predicated region
        $region45: #{mpilope_forward.1} parent=19 // pred_check
          %p881 = pneg %p267
        $region46: #{mpilope_forward.1} parent=19 // pred_check_branch
          %883 = sbr.rel (%p881) target = $region48
        $region47: #{mpilope_forward.1} parent=19 // pred_region
          %s884 = sand.u32 %s70, 1
          %s885 = scalar_lea.sflag [#allocation11], %s884
          %s886 = sand.u32 %s257, 1
          %s887 = smul.addr %s886, 256
          %s888 = scalar_lea.vmem [#allocation12], %s887
          %s890 = ssub.s32 4096, 4096
          %891 = vsyncadd %s885, %s890
          %s892 = smul.addr %s70, 32
          %s893 = smul.addr %s892, 128
          %s894 = scalar_lea.hbm %s7, %s893
          %s895 = sshll.u32 %s888, 4
          %s896 = int_to_ptr.vmem [resolvable:$true] %s895
          %901 = dma.hbm_to_vmem [thread:$0]  %s894, 4096, %s896, %s885, 256, 256, 16
        $region48: #{mpilope_forward.1} parent=19 // pred_fallthru
          _
        // Predicated region
        $region49: #{mpilope_forward.1} parent=19 // pred_check
          %p902 = pneg %p293
        $region50: #{mpilope_forward.1} parent=19 // pred_check_branch
          %904 = sbr.rel (%p902) target = $region52
        $region51: #{mpilope_forward.1} parent=19 // pred_region
          %s905 = sand.u32 %s70, 1
          %s906 = scalar_lea.sflag [#allocation14], %s905
          %s907 = sand.u32 %s283, 1
          %s908 = smul.addr %s907, 2
          %s909 = scalar_lea.vmem [#allocation13], %s908
          %s911 = ssub.s32 32, 32
          %912 = vsyncadd %s906, %s911
          %s913 = smul.addr %s70, 2
          %s914 = smul.addr %s913, 16
          %s915 = scalar_lea.hbm %s8, %s914
          %s917 = sshll.u32 %s909, 4
          %s918 = int_to_ptr.vmem [resolvable:$true] %s917
          %920 = dma.hbm_to_vmem [thread:$0]  %s915, 32, %s918, %s906
        $region52: #{mpilope_forward.1} parent=19 // pred_fallthru
          _
        // Predicated region
        $region53: #{mpilope_forward.1} parent=19 // pred_check
          %p921 = pneg %p319
        $region54: #{mpilope_forward.1} parent=19 // pred_check_branch
          %923 = sbr.rel (%p921) target = $region56
        $region55: #{mpilope_forward.1} parent=19 // pred_region
          %s924 = sand.u32 %s70, 1
          %s925 = scalar_lea.sflag [#allocation14], %s924
          %s926 = sand.u32 %s309, 1
          %s927 = smul.addr %s926, 2
          %s928 = scalar_lea.vmem [#allocation15], %s927
          %s930 = ssub.s32 32, 32
          %931 = vsyncadd %s925, %s930
          %s932 = smul.addr %s70, 2
          %s933 = smul.addr %s932, 16
          %s934 = scalar_lea.hbm %s9, %s933
          %s936 = sshll.u32 %s928, 4
          %s937 = int_to_ptr.vmem [resolvable:$true] %s936
          %939 = dma.hbm_to_vmem [thread:$0]  %s934, 32, %s937, %s925
        $region56: #{mpilope_forward.1} parent=19 // pred_fallthru
          _
        // Predicated region
        $region57: #{mpilope_forward.1} parent=19 // pred_check
          %p940 = pneg %p345
        $region58: #{mpilope_forward.1} parent=19 // pred_check_branch
          %942 = sbr.rel (%p940) target = $region60
        $region59: #{mpilope_forward.1} parent=19 // pred_region
          %s943 = sand.u32 %s70, 1
          %s944 = scalar_lea.sflag [#allocation17], %s943
          %s945 = sand.u32 %s335, 1
          %s946 = smul.addr %s945, 64
          %s947 = scalar_lea.vmem [#allocation16], %s946
          %s949 = ssub.s32 1024, 1024
          %950 = vsyncadd %s944, %s949
          %s951 = smul.addr %s70, 8
          %s952 = smul.addr %s951, 128
          %s953 = scalar_lea.hbm %s10, %s952
          %s954 = sshll.u32 %s947, 4
          %s955 = int_to_ptr.vmem [resolvable:$true] %s954
          %960 = dma.hbm_to_vmem [thread:$0]  %s953, 1024, %s955, %s944, 128, 128, 8
        $region60: #{mpilope_forward.1} parent=19 // pred_fallthru
          _
        // Predicated region
        $region61: #{mpilope_forward.1} parent=19 // pred_check
          %p961 = pneg %p371
        $region62: #{mpilope_forward.1} parent=19 // pred_check_branch
          %963 = sbr.rel (%p961) target = $region64
        $region63: #{mpilope_forward.1} parent=19 // pred_region
          %s964 = sand.u32 %s70, 1
          %s965 = scalar_lea.sflag [#allocation17], %s964
          %s966 = sand.u32 %s361, 1
          %s967 = scalar_lea.vmem [#allocation18], %s966
          %s969 = ssub.s32 16, 16
          %970 = vsyncadd %s965, %s969
          %s971 = smul.addr %s70, 16
          %s972 = scalar_lea.hbm %s11, %s971
          %s974 = sshll.u32 %s967, 4
          %s975 = int_to_ptr.vmem [resolvable:$true] %s974
          %977 = dma.hbm_to_vmem [thread:$0]  %s972, 16, %s975, %s965
        $region64: #{mpilope_forward.1} parent=19 // pred_fallthru
          _
        // Predicated region
        $region65: #{mpilope_forward.1} parent=19 // pred_check
          %p978 = pneg %p397
        $region66: #{mpilope_forward.1} parent=19 // pred_check_branch
          %980 = sbr.rel (%p978) target = $region68
        $region67: #{mpilope_forward.1} parent=19 // pred_region
          %s981 = sand.u32 %s70, 1
          %s982 = scalar_lea.sflag [#allocation20], %s981
          %s983 = sand.u32 %s387, 1
          %s984 = scalar_lea.vmem [#allocation19], %s983
          %s986 = ssub.s32 16, 16
          %987 = vsyncadd %s982, %s986
          %s988 = smul.addr %s70, 16
          %s989 = scalar_lea.hbm %s12, %s988
          %s991 = sshll.u32 %s984, 4
          %s992 = int_to_ptr.vmem [resolvable:$true] %s991
          %994 = dma.hbm_to_vmem [thread:$0]  %s989, 16, %s992, %s982
        $region68: #{mpilope_forward.1} parent=19 // pred_fallthru
          _
        // Predicated region
        $region69: #{mpilope_forward.1} parent=19 // pred_check
          %p995 = pneg %p423
        $region70: #{mpilope_forward.1} parent=19 // pred_check_branch
          %997 = sbr.rel (%p995) target = $region72
        $region71: #{mpilope_forward.1} parent=19 // pred_region
          %s998 = sand.u32 %s70, 1
          %s999 = scalar_lea.sflag [#allocation20], %s998
          %s1000 = sand.u32 %s413, 1
          %s1001 = smul.addr %s1000, 32
          %s1002 = scalar_lea.vmem [#allocation21], %s1001
          %s1004 = ssub.s32 512, 512
          %1005 = vsyncadd %s999, %s1004
          %s1006 = smul.addr %s70, 4
          %s1007 = smul.addr %s1006, 128
          %s1008 = scalar_lea.hbm %s13, %s1007
          %s1009 = sshll.u32 %s1002, 4
          %s1010 = int_to_ptr.vmem [resolvable:$true] %s1009
          %1015 = dma.hbm_to_vmem [thread:$0]  %s1008, 512, %s1010, %s999, 128, 128, 8
        $region72: #{mpilope_forward.1} parent=19 // pred_fallthru
          _
        // Predicated region
        $region73: #{mpilope_forward.1} parent=19 // pred_check
          %p1016 = pneg %p449
        $region74: #{mpilope_forward.1} parent=19 // pred_check_branch
          %1018 = sbr.rel (%p1016) target = $region76
        $region75: #{mpilope_forward.1} parent=19 // pred_region
          %s1019 = sand.u32 %s70, 1
          %s1020 = scalar_lea.sflag [#allocation23], %s1019
          %s1021 = sand.u32 %s439, 1
          %s1022 = scalar_lea.vmem [#allocation22], %s1021
          %s1024 = ssub.s32 16, 16
          %1025 = vsyncadd %s1020, %s1024
          %s1026 = smul.addr %s70, 16
          %s1027 = scalar_lea.hbm %s14, %s1026
          %s1029 = sshll.u32 %s1022, 4
          %s1030 = int_to_ptr.vmem [resolvable:$true] %s1029
          %1032 = dma.hbm_to_vmem [thread:$0]  %s1027, 16, %s1030, %s1020
        $region76: #{mpilope_forward.1} parent=19 // pred_fallthru
          _
        // Predicated region
        $region77: #{mpilope_forward.1} parent=19 // pred_check
          %p1033 = pneg %p475
        $region78: #{mpilope_forward.1} parent=19 // pred_check_branch
          %1035 = sbr.rel (%p1033) target = $region80
        $region79: #{mpilope_forward.1} parent=19 // pred_region
          %s1036 = sand.u32 %s70, 1
          %s1037 = scalar_lea.sflag [#allocation23], %s1036
          %s1038 = sand.u32 %s465, 1
          %s1039 = scalar_lea.vmem [#allocation24], %s1038
          %s1041 = ssub.s32 16, 16
          %1042 = vsyncadd %s1037, %s1041
          %s1043 = smul.addr %s70, 16
          %s1044 = scalar_lea.hbm %s15, %s1043
          %s1046 = sshll.u32 %s1039, 4
          %s1047 = int_to_ptr.vmem [resolvable:$true] %s1046
          %1049 = dma.hbm_to_vmem [thread:$0]  %s1044, 16, %s1047, %s1037
        $region80: #{mpilope_forward.1} parent=19 // pred_fallthru
          _
        // Predicated region
        $region81: #{mpilope_forward.1} parent=19 // pred_check
          %p1050 = pneg %p501
        $region82: #{mpilope_forward.1} parent=19 // pred_check_branch
          %1052 = sbr.rel (%p1050) target = $region84
        $region83: #{mpilope_forward.1} parent=19 // pred_region
          %s1053 = sand.u32 %s70, 1
          %s1054 = scalar_lea.sflag [#allocation26], %s1053
          %s1055 = sand.u32 %s491, 1
          %s1056 = smul.addr %s1055, 32
          %s1057 = scalar_lea.vmem [#allocation25], %s1056
          %s1059 = ssub.s32 512, 512
          %1060 = vsyncadd %s1054, %s1059
          %s1061 = smul.addr %s70, 4
          %s1062 = smul.addr %s1061, 128
          %s1063 = scalar_lea.hbm %s16, %s1062
          %s1064 = sshll.u32 %s1057, 4
          %s1065 = int_to_ptr.vmem [resolvable:$true] %s1064
          %1070 = dma.hbm_to_vmem [thread:$0]  %s1063, 512, %s1065, %s1054, 128, 128, 8
        $region84: #{mpilope_forward.1} parent=19 // pred_fallthru
          _
        // Predicated region
        $region85: #{mpilope_forward.1} parent=19 // pred_check
          %p1071 = pneg %p527
        $region86: #{mpilope_forward.1} parent=19 // pred_check_branch
          %1073 = sbr.rel (%p1071) target = $region88
        $region87: #{mpilope_forward.1} parent=19 // pred_region
          %s1074 = sand.u32 %s70, 1
          %s1075 = scalar_lea.sflag [#allocation26], %s1074
          %s1076 = sand.u32 %s517, 1
          %s1077 = scalar_lea.vmem [#allocation27], %s1076
          %s1079 = ssub.s32 16, 16
          %1080 = vsyncadd %s1075, %s1079
          %s1081 = smul.addr %s70, 16
          %s1082 = scalar_lea.hbm %s17, %s1081
          %s1084 = sshll.u32 %s1077, 4
          %s1085 = int_to_ptr.vmem [resolvable:$true] %s1084
          %1087 = dma.hbm_to_vmem [thread:$0]  %s1082, 16, %s1085, %s1075
        $region88: #{mpilope_forward.1} parent=19 // pred_fallthru
          _
        // Predicated region
        $region89: #{mpilope_forward.1} parent=19 // pred_check
          %p1088 = pneg %p553
        $region90: #{mpilope_forward.1} parent=19 // pred_check_branch
          %1090 = sbr.rel (%p1088) target = $region92
        $region91: #{mpilope_forward.1} parent=19 // pred_region
          %s1091 = sand.u32 %s70, 1
          %s1092 = scalar_lea.sflag [#allocation29], %s1091
          %s1093 = sand.u32 %s543, 1
          %s1094 = scalar_lea.vmem [#allocation28], %s1093
          %s1096 = ssub.s32 16, 16
          %1097 = vsyncadd %s1092, %s1096
          %s1098 = smul.addr %s70, 16
          %s1099 = scalar_lea.hbm %s18, %s1098
          %s1101 = sshll.u32 %s1094, 4
          %s1102 = int_to_ptr.vmem [resolvable:$true] %s1101
          %1104 = dma.hbm_to_vmem [thread:$0]  %s1099, 16, %s1102, %s1092
        $region92: #{mpilope_forward.1} parent=19 // pred_fallthru
          _
        // Predicated region
        $region93: #{mpilope_forward.1} parent=19 // pred_check
          %p1105 = pneg %p579
        $region94: #{mpilope_forward.1} parent=19 // pred_check_branch
          %1107 = sbr.rel (%p1105) target = $region96
        $region95: #{mpilope_forward.1} parent=19 // pred_region
          %s1108 = sand.u32 %s70, 1
          %s1109 = scalar_lea.sflag [#allocation29], %s1108
          %s1110 = sand.u32 %s569, 1
          %s1111 = smul.addr %s1110, 32
          %s1112 = scalar_lea.vmem [#allocation30], %s1111
          %s1114 = ssub.s32 512, 512
          %1115 = vsyncadd %s1109, %s1114
          %s1116 = smul.addr %s70, 4
          %s1117 = smul.addr %s1116, 128
          %s1118 = scalar_lea.hbm %s19, %s1117
          %s1119 = sshll.u32 %s1112, 4
          %s1120 = int_to_ptr.vmem [resolvable:$true] %s1119
          %1125 = dma.hbm_to_vmem [thread:$0]  %s1118, 512, %s1120, %s1109, 128, 128, 8
        $region96: #{mpilope_forward.1} parent=19 // pred_fallthru
          _
        // Predicated region
        $region97: #{mpilope_forward.1} parent=19 // pred_check
          %p1126 = pneg %p605
        $region98: #{mpilope_forward.1} parent=19 // pred_check_branch
          %1128 = sbr.rel (%p1126) target = $region100
        $region99: #{mpilope_forward.1} parent=19 // pred_region
          %s1129 = sand.u32 %s70, 1
          %s1130 = scalar_lea.sflag [#allocation32], %s1129
          %s1131 = sand.u32 %s595, 1
          %s1132 = scalar_lea.vmem [#allocation31], %s1131
          %s1134 = ssub.s32 16, 16
          %1135 = vsyncadd %s1130, %s1134
          %s1136 = smul.addr %s70, 16
          %s1137 = scalar_lea.hbm %s20, %s1136
          %s1139 = sshll.u32 %s1132, 4
          %s1140 = int_to_ptr.vmem [resolvable:$true] %s1139
          %1142 = dma.hbm_to_vmem [thread:$0]  %s1137, 16, %s1140, %s1130
        $region100: #{mpilope_forward.1} parent=19 // pred_fallthru
          _
        // Predicated region
        $region101: #{mpilope_forward.1} parent=19 // pred_check
          %p1143 = pneg %p631
        $region102: #{mpilope_forward.1} parent=19 // pred_check_branch
          %1145 = sbr.rel (%p1143) target = $region104
        $region103: #{mpilope_forward.1} parent=19 // pred_region
          %s1146 = sand.u32 %s70, 1
          %s1147 = scalar_lea.sflag [#allocation32], %s1146
          %s1148 = sand.u32 %s621, 1
          %s1149 = scalar_lea.vmem [#allocation33], %s1148
          %s1151 = ssub.s32 16, 16
          %1152 = vsyncadd %s1147, %s1151
          %s1153 = smul.addr %s70, 16
          %s1154 = scalar_lea.hbm %s21, %s1153
          %s1156 = sshll.u32 %s1149, 4
          %s1157 = int_to_ptr.vmem [resolvable:$true] %s1156
          %1159 = dma.hbm_to_vmem [thread:$0]  %s1154, 16, %s1157, %s1147
        $region104: #{mpilope_forward.1} parent=19 // pred_fallthru
          _
        // Predicated region
        $region105: #{mpilope_forward.1} parent=19 // pred_check
          %p1160 = pneg %p657
        $region106: #{mpilope_forward.1} parent=19 // pred_check_branch
          %1162 = sbr.rel (%p1160) target = $region108
        $region107: #{mpilope_forward.1} parent=19 // pred_region
          %s1163 = sand.u32 %s70, 1
          %s1164 = scalar_lea.sflag [#allocation35], %s1163
          %s1165 = sand.u32 %s647, 1
          %s1166 = smul.addr %s1165, 32
          %s1167 = scalar_lea.vmem [#allocation34], %s1166
          %s1169 = ssub.s32 512, 512
          %1170 = vsyncadd %s1164, %s1169
          %s1171 = smul.addr %s70, 4
          %s1172 = smul.addr %s1171, 128
          %s1173 = scalar_lea.hbm %s22, %s1172
          %s1174 = sshll.u32 %s1167, 4
          %s1175 = int_to_ptr.vmem [resolvable:$true] %s1174
          %1180 = dma.hbm_to_vmem [thread:$0]  %s1173, 512, %s1175, %s1164, 128, 128, 8
        $region108: #{mpilope_forward.1} parent=19 // pred_fallthru
          _
        // Predicated region
        $region109: #{mpilope_forward.1} parent=19 // pred_check
          %p1181 = pneg %p683
        $region110: #{mpilope_forward.1} parent=19 // pred_check_branch
          %1183 = sbr.rel (%p1181) target = $region112
        $region111: #{mpilope_forward.1} parent=19 // pred_region
          %s1184 = sand.u32 %s70, 1
          %s1185 = scalar_lea.sflag [#allocation35], %s1184
          %s1186 = sand.u32 %s673, 1
          %s1187 = scalar_lea.vmem [#allocation36], %s1186
          %s1189 = ssub.s32 16, 16
          %1190 = vsyncadd %s1185, %s1189
          %s1191 = smul.addr %s70, 16
          %s1192 = scalar_lea.hbm %s23, %s1191
          %s1194 = sshll.u32 %s1187, 4
          %s1195 = int_to_ptr.vmem [resolvable:$true] %s1194
          %1197 = dma.hbm_to_vmem [thread:$0]  %s1192, 16, %s1195, %s1185
        $region112: #{mpilope_forward.1} parent=19 // pred_fallthru
          _
        // Predicated region
        $region113: #{mpilope_forward.1} parent=19 // pred_check
          %p1198 = pneg %p709
        $region114: #{mpilope_forward.1} parent=19 // pred_check_branch
          %1200 = sbr.rel (%p1198) target = $region116
        $region115: #{mpilope_forward.1} parent=19 // pred_region
          %s1201 = sand.u32 %s699, 1
          %s1202 = scalar_lea.sflag [#allocation38], %s1201
          %s1203 = sand.u32 %s699, 1
          %s1204 = scalar_lea.vmem [#allocation37], %s1203
          %s1206 = ssub.s32 16, 16
          %1207 = vsyncadd %s1202, %s1206
          %s1208 = smul.addr %s70, 16
          %s1209 = scalar_lea.hbm %s24, %s1208
          %s1211 = sshll.u32 %s1204, 4
          %s1212 = int_to_ptr.vmem [resolvable:$true] %s1211
          %1214 = dma.hbm_to_vmem [thread:$0]  %s1209, 16, %s1212, %s1202
        $region116: #{mpilope_forward.1} parent=19 // pred_fallthru
          _
      $region20: #{mpilope_forward.1} parent=5 // pred_fallthru
        _
      %p1215 = scmp.le.s32.totalorder 1, %s70
      %p1216 = scmp.lt.s32.totalorder %s70, 3
      %p1217 = pnand %p1215, %p1216
      %p1218 = pneg %p1217
      // Predicated region
      $region117: #{mpilope_forward.1} parent=5 // pred_check
        _
      $region118: #{mpilope_forward.1} parent=5 // pred_check_branch
        %1220 = sbr.rel (%p1217) target = $region120
      $region119: #{mpilope_forward.1} parent=5 // pred_region
        %s1221 = ssub.s32 %s70, 1
        %s1222 = sand.u32 %s104, 1
        %s1223 = scalar_lea.sflag [#allocation3], %s1222
        %s1224 = sand.u32 %s104, 1
        %s1225 = smul.addr %s1224, 4096
        %s1226 = scalar_lea.vmem [#allocation2], %s1225
        // Predicated region
        $region121: #{mpilope_forward.1} parent=119 // pred_check
          %p1227 = pneg %p117
        $region122: #{mpilope_forward.1} parent=119 // pred_check_branch
          %1229 = sbr.rel (%p1227) target = $region124
        $region123: #{mpilope_forward.1} parent=119 // pred_region
          %1230 = dma.done %s1223, 65536
        $region124: #{mpilope_forward.1} parent=119 // pred_fallthru
          _
        %s1231 = sand.u32 %s75, 1
        %s1232 = scalar_lea.sflag [#allocation5], %s1231
        %s1233 = sand.u32 %s130, 1
        %s1234 = smul.addr %s1233, 8
        %s1235 = scalar_lea.vmem [#allocation4], %s1234
        // Predicated region
        $region125: #{mpilope_forward.1} parent=119 // pred_check
          %p1236 = pneg %p143
        $region126: #{mpilope_forward.1} parent=119 // pred_check_branch
          %1238 = sbr.rel (%p1236) target = $region128
        $region127: #{mpilope_forward.1} parent=119 // pred_region
          %1239 = dma.done %s1232, 128
        $region128: #{mpilope_forward.1} parent=119 // pred_fallthru
          _
        %s1240 = sand.u32 %s75, 1
        %s1241 = scalar_lea.sflag [#allocation5], %s1240
        %s1242 = sand.u32 %s156, 1
        %s1243 = smul.addr %s1242, 8
        %s1244 = scalar_lea.vmem [#allocation6], %s1243
        // Predicated region
        $region129: #{mpilope_forward.1} parent=119 // pred_check
          %p1245 = pneg %p169
        $region130: #{mpilope_forward.1} parent=119 // pred_check_branch
          %1247 = sbr.rel (%p1245) target = $region132
        $region131: #{mpilope_forward.1} parent=119 // pred_region
          %1248 = dma.done %s1241, 128
        $region132: #{mpilope_forward.1} parent=119 // pred_fallthru
          _
        %s1249 = sand.u32 %s75, 1
        %s1250 = scalar_lea.sflag [#allocation8], %s1249
        %s1251 = sand.u32 %s182, 1
        %s1252 = smul.addr %s1251, 1024
        %s1253 = scalar_lea.vmem [#allocation7], %s1252
        // Predicated region
        $region133: #{mpilope_forward.1} parent=119 // pred_check
          %p1254 = pneg %p195
        $region134: #{mpilope_forward.1} parent=119 // pred_check_branch
          %1256 = sbr.rel (%p1254) target = $region136
        $region135: #{mpilope_forward.1} parent=119 // pred_region
          %1257 = dma.done %s1250, 16384
        $region136: #{mpilope_forward.1} parent=119 // pred_fallthru
          _
        %s1258 = sand.u32 %s75, 1
        %s1259 = scalar_lea.sflag [#allocation8], %s1258
        %s1260 = sand.u32 %s208, 1
        %s1261 = smul.addr %s1260, 4
        %s1262 = scalar_lea.vmem [#allocation9], %s1261
        // Predicated region
        $region137: #{mpilope_forward.1} parent=119 // pred_check
          %p1263 = pneg %p221
        $region138: #{mpilope_forward.1} parent=119 // pred_check_branch
          %1265 = sbr.rel (%p1263) target = $region140
        $region139: #{mpilope_forward.1} parent=119 // pred_region
          %1266 = dma.done %s1259, 64
        $region140: #{mpilope_forward.1} parent=119 // pred_fallthru
          _
        %s1267 = sand.u32 %s75, 1
        %s1268 = scalar_lea.sflag [#allocation11], %s1267
        %s1269 = sand.u32 %s234, 1
        %s1270 = smul.addr %s1269, 4
        %s1271 = scalar_lea.vmem [#allocation10], %s1270
        // Predicated region
        $region141: #{mpilope_forward.1} parent=119 // pred_check
          %p1272 = pneg %p247
        $region142: #{mpilope_forward.1} parent=119 // pred_check_branch
          %1274 = sbr.rel (%p1272) target = $region144
        $region143: #{mpilope_forward.1} parent=119 // pred_region
          %1275 = dma.done %s1268, 64
        $region144: #{mpilope_forward.1} parent=119 // pred_fallthru
          _
        %s1276 = sand.u32 %s75, 1
        %s1277 = scalar_lea.sflag [#allocation11], %s1276
        %s1278 = sand.u32 %s260, 1
        %s1279 = smul.addr %s1278, 256
        %s1280 = scalar_lea.vmem [#allocation12], %s1279
        // Predicated region
        $region145: #{mpilope_forward.1} parent=119 // pred_check
          %p1281 = pneg %p273
        $region146: #{mpilope_forward.1} parent=119 // pred_check_branch
          %1283 = sbr.rel (%p1281) target = $region148
        $region147: #{mpilope_forward.1} parent=119 // pred_region
          %1284 = dma.done %s1277, 4096
        $region148: #{mpilope_forward.1} parent=119 // pred_fallthru
          _
        %s1285 = sand.u32 %s75, 1
        %s1286 = scalar_lea.sflag [#allocation14], %s1285
        %s1287 = sand.u32 %s286, 1
        %s1288 = smul.addr %s1287, 2
        %s1289 = scalar_lea.vmem [#allocation13], %s1288
        // Predicated region
        $region149: #{mpilope_forward.1} parent=119 // pred_check
          %p1290 = pneg %p299
        $region150: #{mpilope_forward.1} parent=119 // pred_check_branch
          %1292 = sbr.rel (%p1290) target = $region152
        $region151: #{mpilope_forward.1} parent=119 // pred_region
          %1293 = dma.done %s1286, 32
        $region152: #{mpilope_forward.1} parent=119 // pred_fallthru
          _
        %s1294 = sand.u32 %s75, 1
        %s1295 = scalar_lea.sflag [#allocation14], %s1294
        %s1296 = sand.u32 %s312, 1
        %s1297 = smul.addr %s1296, 2
        %s1298 = scalar_lea.vmem [#allocation15], %s1297
        // Predicated region
        $region153: #{mpilope_forward.1} parent=119 // pred_check
          %p1299 = pneg %p325
        $region154: #{mpilope_forward.1} parent=119 // pred_check_branch
          %1301 = sbr.rel (%p1299) target = $region156
        $region155: #{mpilope_forward.1} parent=119 // pred_region
          %1302 = dma.done %s1295, 32
        $region156: #{mpilope_forward.1} parent=119 // pred_fallthru
          _
        %s1303 = sand.u32 %s75, 1
        %s1304 = scalar_lea.sflag [#allocation17], %s1303
        %s1305 = sand.u32 %s338, 1
        %s1306 = smul.addr %s1305, 64
        %s1307 = scalar_lea.vmem [#allocation16], %s1306
        // Predicated region
        $region157: #{mpilope_forward.1} parent=119 // pred_check
          %p1308 = pneg %p351
        $region158: #{mpilope_forward.1} parent=119 // pred_check_branch
          %1310 = sbr.rel (%p1308) target = $region160
        $region159: #{mpilope_forward.1} parent=119 // pred_region
          %1311 = dma.done %s1304, 1024
        $region160: #{mpilope_forward.1} parent=119 // pred_fallthru
          _
        %s1312 = sand.u32 %s75, 1
        %s1313 = scalar_lea.sflag [#allocation17], %s1312
        %s1314 = sand.u32 %s364, 1
        %s1315 = scalar_lea.vmem [#allocation18], %s1314
        // Predicated region
        $region161: #{mpilope_forward.1} parent=119 // pred_check
          %p1316 = pneg %p377
        $region162: #{mpilope_forward.1} parent=119 // pred_check_branch
          %1318 = sbr.rel (%p1316) target = $region164
        $region163: #{mpilope_forward.1} parent=119 // pred_region
          %1319 = dma.done %s1313, 16
        $region164: #{mpilope_forward.1} parent=119 // pred_fallthru
          _
        %s1320 = sand.u32 %s75, 1
        %s1321 = scalar_lea.sflag [#allocation20], %s1320
        %s1322 = sand.u32 %s390, 1
        %s1323 = scalar_lea.vmem [#allocation19], %s1322
        // Predicated region
        $region165: #{mpilope_forward.1} parent=119 // pred_check
          %p1324 = pneg %p403
        $region166: #{mpilope_forward.1} parent=119 // pred_check_branch
          %1326 = sbr.rel (%p1324) target = $region168
        $region167: #{mpilope_forward.1} parent=119 // pred_region
          %1327 = dma.done %s1321, 16
        $region168: #{mpilope_forward.1} parent=119 // pred_fallthru
          _
        %s1328 = sand.u32 %s75, 1
        %s1329 = scalar_lea.sflag [#allocation20], %s1328
        %s1330 = sand.u32 %s416, 1
        %s1331 = smul.addr %s1330, 32
        %s1332 = scalar_lea.vmem [#allocation21], %s1331
        // Predicated region
        $region169: #{mpilope_forward.1} parent=119 // pred_check
          %p1333 = pneg %p429
        $region170: #{mpilope_forward.1} parent=119 // pred_check_branch
          %1335 = sbr.rel (%p1333) target = $region172
        $region171: #{mpilope_forward.1} parent=119 // pred_region
          %1336 = dma.done %s1329, 512
        $region172: #{mpilope_forward.1} parent=119 // pred_fallthru
          _
        %s1337 = sand.u32 %s75, 1
        %s1338 = scalar_lea.sflag [#allocation23], %s1337
        %s1339 = sand.u32 %s442, 1
        %s1340 = scalar_lea.vmem [#allocation22], %s1339
        // Predicated region
        $region173: #{mpilope_forward.1} parent=119 // pred_check
          %p1341 = pneg %p455
        $region174: #{mpilope_forward.1} parent=119 // pred_check_branch
          %1343 = sbr.rel (%p1341) target = $region176
        $region175: #{mpilope_forward.1} parent=119 // pred_region
          %1344 = dma.done %s1338, 16
        $region176: #{mpilope_forward.1} parent=119 // pred_fallthru
          _
        %s1345 = sand.u32 %s75, 1
        %s1346 = scalar_lea.sflag [#allocation23], %s1345
        %s1347 = sand.u32 %s468, 1
        %s1348 = scalar_lea.vmem [#allocation24], %s1347
        // Predicated region
        $region177: #{mpilope_forward.1} parent=119 // pred_check
          %p1349 = pneg %p481
        $region178: #{mpilope_forward.1} parent=119 // pred_check_branch
          %1351 = sbr.rel (%p1349) target = $region180
        $region179: #{mpilope_forward.1} parent=119 // pred_region
          %1352 = dma.done %s1346, 16
        $region180: #{mpilope_forward.1} parent=119 // pred_fallthru
          _
        %s1353 = sand.u32 %s75, 1
        %s1354 = scalar_lea.sflag [#allocation26], %s1353
        %s1355 = sand.u32 %s494, 1
        %s1356 = smul.addr %s1355, 32
        %s1357 = scalar_lea.vmem [#allocation25], %s1356
        // Predicated region
        $region181: #{mpilope_forward.1} parent=119 // pred_check
          %p1358 = pneg %p507
        $region182: #{mpilope_forward.1} parent=119 // pred_check_branch
          %1360 = sbr.rel (%p1358) target = $region184
        $region183: #{mpilope_forward.1} parent=119 // pred_region
          %1361 = dma.done %s1354, 512
        $region184: #{mpilope_forward.1} parent=119 // pred_fallthru
          _
        %s1362 = sand.u32 %s75, 1
        %s1363 = scalar_lea.sflag [#allocation26], %s1362
        %s1364 = sand.u32 %s520, 1
        %s1365 = scalar_lea.vmem [#allocation27], %s1364
        // Predicated region
        $region185: #{mpilope_forward.1} parent=119 // pred_check
          %p1366 = pneg %p533
        $region186: #{mpilope_forward.1} parent=119 // pred_check_branch
          %1368 = sbr.rel (%p1366) target = $region188
        $region187: #{mpilope_forward.1} parent=119 // pred_region
          %1369 = dma.done %s1363, 16
        $region188: #{mpilope_forward.1} parent=119 // pred_fallthru
          _
        %s1370 = sand.u32 %s75, 1
        %s1371 = scalar_lea.sflag [#allocation29], %s1370
        %s1372 = sand.u32 %s546, 1
        %s1373 = scalar_lea.vmem [#allocation28], %s1372
        // Predicated region
        $region189: #{mpilope_forward.1} parent=119 // pred_check
          %p1374 = pneg %p559
        $region190: #{mpilope_forward.1} parent=119 // pred_check_branch
          %1376 = sbr.rel (%p1374) target = $region192
        $region191: #{mpilope_forward.1} parent=119 // pred_region
          %1377 = dma.done %s1371, 16
        $region192: #{mpilope_forward.1} parent=119 // pred_fallthru
          _
        %s1378 = sand.u32 %s75, 1
        %s1379 = scalar_lea.sflag [#allocation29], %s1378
        %s1380 = sand.u32 %s572, 1
        %s1381 = smul.addr %s1380, 32
        %s1382 = scalar_lea.vmem [#allocation30], %s1381
        // Predicated region
        $region193: #{mpilope_forward.1} parent=119 // pred_check
          %p1383 = pneg %p585
        $region194: #{mpilope_forward.1} parent=119 // pred_check_branch
          %1385 = sbr.rel (%p1383) target = $region196
        $region195: #{mpilope_forward.1} parent=119 // pred_region
          %1386 = dma.done %s1379, 512
        $region196: #{mpilope_forward.1} parent=119 // pred_fallthru
          _
        %s1387 = sand.u32 %s75, 1
        %s1388 = scalar_lea.sflag [#allocation32], %s1387
        %s1389 = sand.u32 %s598, 1
        %s1390 = scalar_lea.vmem [#allocation31], %s1389
        // Predicated region
        $region197: #{mpilope_forward.1} parent=119 // pred_check
          %p1391 = pneg %p611
        $region198: #{mpilope_forward.1} parent=119 // pred_check_branch
          %1393 = sbr.rel (%p1391) target = $region200
        $region199: #{mpilope_forward.1} parent=119 // pred_region
          %1394 = dma.done %s1388, 16
        $region200: #{mpilope_forward.1} parent=119 // pred_fallthru
          _
        %s1395 = sand.u32 %s75, 1
        %s1396 = scalar_lea.sflag [#allocation32], %s1395
        %s1397 = sand.u32 %s624, 1
        %s1398 = scalar_lea.vmem [#allocation33], %s1397
        // Predicated region
        $region201: #{mpilope_forward.1} parent=119 // pred_check
          %p1399 = pneg %p637
        $region202: #{mpilope_forward.1} parent=119 // pred_check_branch
          %1401 = sbr.rel (%p1399) target = $region204
        $region203: #{mpilope_forward.1} parent=119 // pred_region
          %1402 = dma.done %s1396, 16
        $region204: #{mpilope_forward.1} parent=119 // pred_fallthru
          _
        %s1403 = sand.u32 %s75, 1
        %s1404 = scalar_lea.sflag [#allocation35], %s1403
        %s1405 = sand.u32 %s650, 1
        %s1406 = smul.addr %s1405, 32
        %s1407 = scalar_lea.vmem [#allocation34], %s1406
        // Predicated region
        $region205: #{mpilope_forward.1} parent=119 // pred_check
          %p1408 = pneg %p663
        $region206: #{mpilope_forward.1} parent=119 // pred_check_branch
          %1410 = sbr.rel (%p1408) target = $region208
        $region207: #{mpilope_forward.1} parent=119 // pred_region
          %1411 = dma.done %s1404, 512
        $region208: #{mpilope_forward.1} parent=119 // pred_fallthru
          _
        %s1412 = sand.u32 %s75, 1
        %s1413 = scalar_lea.sflag [#allocation35], %s1412
        %s1414 = sand.u32 %s676, 1
        %s1415 = scalar_lea.vmem [#allocation36], %s1414
        // Predicated region
        $region209: #{mpilope_forward.1} parent=119 // pred_check
          %p1416 = pneg %p689
        $region210: #{mpilope_forward.1} parent=119 // pred_check_branch
          %1418 = sbr.rel (%p1416) target = $region212
        $region211: #{mpilope_forward.1} parent=119 // pred_region
          %1419 = dma.done %s1413, 16
        $region212: #{mpilope_forward.1} parent=119 // pred_fallthru
          _
        %s1420 = sand.u32 %s702, 1
        %s1421 = scalar_lea.sflag [#allocation38], %s1420
        %s1422 = sand.u32 %s702, 1
        %s1423 = scalar_lea.vmem [#allocation37], %s1422
        // Predicated region
        $region213: #{mpilope_forward.1} parent=119 // pred_check
          %p1424 = pneg %p715
        $region214: #{mpilope_forward.1} parent=119 // pred_check_branch
          %1426 = sbr.rel (%p1424) target = $region216
        $region215: #{mpilope_forward.1} parent=119 // pred_region
          %1427 = dma.done %s1421, 16
        $region216: #{mpilope_forward.1} parent=119 // pred_fallthru
          _
        %p1428 = pneg %p91
        %p1429 = pneg %p88
        %s1430 = sand.u32 %s104, 1
        %s1431 = scalar_lea.sflag [#allocation3], %s1430
        %s1432 = sand.u32 %s104, 1
        %s1433 = smul.addr %s1432, 4096
        %s1434 = scalar_lea.vmem [#allocation2], %s1433
        %p1435 = pneg %p117
        %p1436 = pneg %p114
        %s1437 = sand.u32 %s75, 1
        %s1438 = scalar_lea.sflag [#allocation5], %s1437
        %s1439 = sand.u32 %s130, 1
        %s1440 = smul.addr %s1439, 8
        %s1441 = scalar_lea.vmem [#allocation4], %s1440
        %p1442 = pneg %p143
        %p1443 = pneg %p140
        %s1444 = sand.u32 %s75, 1
        %s1445 = scalar_lea.sflag [#allocation5], %s1444
        %s1446 = sand.u32 %s156, 1
        %s1447 = smul.addr %s1446, 8
        %s1448 = scalar_lea.vmem [#allocation6], %s1447
        %p1449 = pneg %p169
        %p1450 = pneg %p166
        %s1451 = sand.u32 %s75, 1
        %s1452 = scalar_lea.sflag [#allocation8], %s1451
        %s1453 = sand.u32 %s182, 1
        %s1454 = smul.addr %s1453, 1024
        %s1455 = scalar_lea.vmem [#allocation7], %s1454
        %p1456 = pneg %p195
        %p1457 = pneg %p192
        %s1458 = sand.u32 %s75, 1
        %s1459 = scalar_lea.sflag [#allocation8], %s1458
        %s1460 = sand.u32 %s208, 1
        %s1461 = smul.addr %s1460, 4
        %s1462 = scalar_lea.vmem [#allocation9], %s1461
        %p1463 = pneg %p221
        %p1464 = pneg %p218
        %s1465 = sand.u32 %s75, 1
        %s1466 = scalar_lea.sflag [#allocation11], %s1465
        %s1467 = sand.u32 %s234, 1
        %s1468 = smul.addr %s1467, 4
        %s1469 = scalar_lea.vmem [#allocation10], %s1468
        %p1470 = pneg %p247
        %p1471 = pneg %p244
        %s1472 = sand.u32 %s75, 1
        %s1473 = scalar_lea.sflag [#allocation11], %s1472
        %s1474 = sand.u32 %s260, 1
        %s1475 = smul.addr %s1474, 256
        %s1476 = scalar_lea.vmem [#allocation12], %s1475
        %p1477 = pneg %p273
        %p1478 = pneg %p270
        %s1479 = sand.u32 %s75, 1
        %s1480 = scalar_lea.sflag [#allocation14], %s1479
        %s1481 = sand.u32 %s286, 1
        %s1482 = smul.addr %s1481, 2
        %s1483 = scalar_lea.vmem [#allocation13], %s1482
        %p1484 = pneg %p299
        %p1485 = pneg %p296
        %s1486 = sand.u32 %s75, 1
        %s1487 = scalar_lea.sflag [#allocation14], %s1486
        %s1488 = sand.u32 %s312, 1
        %s1489 = smul.addr %s1488, 2
        %s1490 = scalar_lea.vmem [#allocation15], %s1489
        %p1491 = pneg %p325
        %p1492 = pneg %p322
        %s1493 = sand.u32 %s75, 1
        %s1494 = scalar_lea.sflag [#allocation17], %s1493
        %s1495 = sand.u32 %s338, 1
        %s1496 = smul.addr %s1495, 64
        %s1497 = scalar_lea.vmem [#allocation16], %s1496
        %p1498 = pneg %p351
        %p1499 = pneg %p348
        %s1500 = sand.u32 %s75, 1
        %s1501 = scalar_lea.sflag [#allocation17], %s1500
        %s1502 = sand.u32 %s364, 1
        %s1503 = scalar_lea.vmem [#allocation18], %s1502
        %p1504 = pneg %p377
        %p1505 = pneg %p374
        %s1506 = sand.u32 %s75, 1
        %s1507 = scalar_lea.sflag [#allocation20], %s1506
        %s1508 = sand.u32 %s390, 1
        %s1509 = scalar_lea.vmem [#allocation19], %s1508
        %p1510 = pneg %p403
        %p1511 = pneg %p400
        %s1512 = sand.u32 %s75, 1
        %s1513 = scalar_lea.sflag [#allocation20], %s1512
        %s1514 = sand.u32 %s416, 1
        %s1515 = smul.addr %s1514, 32
        %s1516 = scalar_lea.vmem [#allocation21], %s1515
        %p1517 = pneg %p429
        %p1518 = pneg %p426
        %s1519 = sand.u32 %s75, 1
        %s1520 = scalar_lea.sflag [#allocation23], %s1519
        %s1521 = sand.u32 %s442, 1
        %s1522 = scalar_lea.vmem [#allocation22], %s1521
        %p1523 = pneg %p455
        %p1524 = pneg %p452
        %s1525 = sand.u32 %s75, 1
        %s1526 = scalar_lea.sflag [#allocation23], %s1525
        %s1527 = sand.u32 %s468, 1
        %s1528 = scalar_lea.vmem [#allocation24], %s1527
        %p1529 = pneg %p481
        %p1530 = pneg %p478
        %s1531 = sand.u32 %s75, 1
        %s1532 = scalar_lea.sflag [#allocation26], %s1531
        %s1533 = sand.u32 %s494, 1
        %s1534 = smul.addr %s1533, 32
        %s1535 = scalar_lea.vmem [#allocation25], %s1534
        %p1536 = pneg %p507
        %p1537 = pneg %p504
        %s1538 = sand.u32 %s75, 1
        %s1539 = scalar_lea.sflag [#allocation26], %s1538
        %s1540 = sand.u32 %s520, 1
        %s1541 = scalar_lea.vmem [#allocation27], %s1540
        %p1542 = pneg %p533
        %p1543 = pneg %p530
        %s1544 = sand.u32 %s75, 1
        %s1545 = scalar_lea.sflag [#allocation29], %s1544
        %s1546 = sand.u32 %s546, 1
        %s1547 = scalar_lea.vmem [#allocation28], %s1546
        %p1548 = pneg %p559
        %p1549 = pneg %p556
        %s1550 = sand.u32 %s75, 1
        %s1551 = scalar_lea.sflag [#allocation29], %s1550
        %s1552 = sand.u32 %s572, 1
        %s1553 = smul.addr %s1552, 32
        %s1554 = scalar_lea.vmem [#allocation30], %s1553
        %p1555 = pneg %p585
        %p1556 = pneg %p582
        %s1557 = sand.u32 %s75, 1
        %s1558 = scalar_lea.sflag [#allocation32], %s1557
        %s1559 = sand.u32 %s598, 1
        %s1560 = scalar_lea.vmem [#allocation31], %s1559
        %p1561 = pneg %p611
        %p1562 = pneg %p608
        %s1563 = sand.u32 %s75, 1
        %s1564 = scalar_lea.sflag [#allocation32], %s1563
        %s1565 = sand.u32 %s624, 1
        %s1566 = scalar_lea.vmem [#allocation33], %s1565
        %p1567 = pneg %p637
        %p1568 = pneg %p634
        %s1569 = sand.u32 %s75, 1
        %s1570 = scalar_lea.sflag [#allocation35], %s1569
        %s1571 = sand.u32 %s650, 1
        %s1572 = smul.addr %s1571, 32
        %s1573 = scalar_lea.vmem [#allocation34], %s1572
        %p1574 = pneg %p663
        %p1575 = pneg %p660
        %s1576 = sand.u32 %s75, 1
        %s1577 = scalar_lea.sflag [#allocation35], %s1576
        %s1578 = sand.u32 %s676, 1
        %s1579 = scalar_lea.vmem [#allocation36], %s1578
        %p1580 = pneg %p689
        %p1581 = pneg %p686
        %s1582 = sand.u32 %s702, 1
        %s1583 = scalar_lea.sflag [#allocation38], %s1582
        %s1584 = sand.u32 %s702, 1
        %s1585 = scalar_lea.vmem [#allocation37], %s1584
        %p1586 = pneg %p715
        %p1587 = pneg %p712
        %p1588 = pneg %p741
        %p1589 = pneg %p738
        %p1590 = scmp.lt.s32.totalorder %s75, 1
        %s1591 = scalar_select %p1590, %s75, 1
        %s1592 = smul.addr %s1591, 2
        %s1593 = scalar_lea.vmem %s25, %s1592
        %p1594 = scmp.lt.s32.totalorder %s75, 1
        %s1595 = scalar_select %p1594, %s75, 1
        %s1596 = smul.addr %s1595, 2
        %s1597 = scalar_lea.vmem %s25, %s1596
        %v1599 = vld [vmem:[%s0] sm:$0xff]
        %v1600 = vld [vmem:[%s0 + $0x8] sm:$0xff]
        %v1601 = vld [vmem:[%s1226] sm:$0xff]
        %v1602 = vld [vmem:[%s1226 + $0x8] sm:$0xff]
        %v1603 = vld [vmem:[%s1226 + $0x10] sm:$0xff]
        %v1604 = vld [vmem:[%s1226 + $0x18] sm:$0xff]
        %v1605 = vld [vmem:[%s1226 + $0x20] sm:$0xff]
        %v1606 = vld [vmem:[%s1226 + $0x28] sm:$0xff]
        %v1607 = vld [vmem:[%s1226 + $0x30] sm:$0xff]
        %v1608 = vld [vmem:[%s1226 + $0x38] sm:$0xff]
        %v1609 = vld [vmem:[%s1226 + $0x40] sm:$0xff]
        %v1610 = vld [vmem:[%s1226 + $0x48] sm:$0xff]
        %v1611 = vld [vmem:[%s1226 + $0x50] sm:$0xff]
        %v1612 = vld [vmem:[%s1226 + $0x58] sm:$0xff]
        %v1613 = vld [vmem:[%s1226 + $0x60] sm:$0xff]
        %v1614 = vld [vmem:[%s1226 + $0x68] sm:$0xff]
        %v1615 = vld [vmem:[%s1226 + $0x70] sm:$0xff]
        %v1616 = vld [vmem:[%s1226 + $0x78] sm:$0xff]
        %v1617 = vld [vmem:[%s1226 + $0x80] sm:$0xff]
        %v1618 = vld [vmem:[%s1226 + $0x88] sm:$0xff]
        %v1619 = vld [vmem:[%s1226 + $0x90] sm:$0xff]
        %v1620 = vld [vmem:[%s1226 + $0x98] sm:$0xff]
        %v1621 = vld [vmem:[%s1226 + $0xa0] sm:$0xff]
        %v1622 = vld [vmem:[%s1226 + $0xa8] sm:$0xff]
        %v1623 = vld [vmem:[%s1226 + $0xb0] sm:$0xff]
        %v1624 = vld [vmem:[%s1226 + $0xb8] sm:$0xff]
        %v1625 = vld [vmem:[%s1226 + $0xc0] sm:$0xff]
        %v1626 = vld [vmem:[%s1226 + $0xc8] sm:$0xff]
        %v1627 = vld [vmem:[%s1226 + $0xd0] sm:$0xff]
        %v1628 = vld [vmem:[%s1226 + $0xd8] sm:$0xff]
        %v1629 = vld [vmem:[%s1226 + $0xe0] sm:$0xff]
        %v1630 = vld [vmem:[%s1226 + $0xe8] sm:$0xff]
        %v1631 = vld [vmem:[%s1226 + $0xf0] sm:$0xff]
        %v1632 = vld [vmem:[%s1226 + $0xf8] sm:$0xff]
        %v1633 = vld [vmem:[%s1226 + $0x100] sm:$0xff]
        %v1634 = vld [vmem:[%s1226 + $0x108] sm:$0xff]
        %v1635 = vld [vmem:[%s1226 + $0x110] sm:$0xff]
        %v1636 = vld [vmem:[%s1226 + $0x118] sm:$0xff]
        %v1637 = vld [vmem:[%s1226 + $0x120] sm:$0xff]
        %v1638 = vld [vmem:[%s1226 + $0x128] sm:$0xff]
        %v1639 = vld [vmem:[%s1226 + $0x130] sm:$0xff]
        %v1640 = vld [vmem:[%s1226 + $0x138] sm:$0xff]
        %v1641 = vld [vmem:[%s1226 + $0x140] sm:$0xff]
        %v1642 = vld [vmem:[%s1226 + $0x148] sm:$0xff]
        %v1643 = vld [vmem:[%s1226 + $0x150] sm:$0xff]
        %v1644 = vld [vmem:[%s1226 + $0x158] sm:$0xff]
        %v1645 = vld [vmem:[%s1226 + $0x160] sm:$0xff]
        %v1646 = vld [vmem:[%s1226 + $0x168] sm:$0xff]
        %v1647 = vld [vmem:[%s1226 + $0x170] sm:$0xff]
        %v1648 = vld [vmem:[%s1226 + $0x178] sm:$0xff]
        %v1649 = vld [vmem:[%s1226 + $0x180] sm:$0xff]
        %v1650 = vld [vmem:[%s1226 + $0x188] sm:$0xff]
        %v1651 = vld [vmem:[%s1226 + $0x190] sm:$0xff]
        %v1652 = vld [vmem:[%s1226 + $0x198] sm:$0xff]
        %v1653 = vld [vmem:[%s1226 + $0x1a0] sm:$0xff]
        %v1654 = vld [vmem:[%s1226 + $0x1a8] sm:$0xff]
        %v1655 = vld [vmem:[%s1226 + $0x1b0] sm:$0xff]
        %v1656 = vld [vmem:[%s1226 + $0x1b8] sm:$0xff]
        %v1657 = vld [vmem:[%s1226 + $0x1c0] sm:$0xff]
        %v1658 = vld [vmem:[%s1226 + $0x1c8] sm:$0xff]
        %v1659 = vld [vmem:[%s1226 + $0x1d0] sm:$0xff]
        %v1660 = vld [vmem:[%s1226 + $0x1d8] sm:$0xff]
        %v1661 = vld [vmem:[%s1226 + $0x1e0] sm:$0xff]
        %v1662 = vld [vmem:[%s1226 + $0x1e8] sm:$0xff]
        %v1663 = vld [vmem:[%s1226 + $0x1f0] sm:$0xff]
        %v1664 = vld [vmem:[%s1226 + $0x1f8] sm:$0xff]
        %v1665 = vld [vmem:[%s1226 + $0x200] sm:$0xff]
        %v1666 = vld [vmem:[%s1226 + $0x208] sm:$0xff]
        %v1667 = vld [vmem:[%s1226 + $0x210] sm:$0xff]
        %v1668 = vld [vmem:[%s1226 + $0x218] sm:$0xff]
        %v1669 = vld [vmem:[%s1226 + $0x220] sm:$0xff]
        %v1670 = vld [vmem:[%s1226 + $0x228] sm:$0xff]
        %v1671 = vld [vmem:[%s1226 + $0x230] sm:$0xff]
        %v1672 = vld [vmem:[%s1226 + $0x238] sm:$0xff]
        %v1673 = vld [vmem:[%s1226 + $0x240] sm:$0xff]
        %v1674 = vld [vmem:[%s1226 + $0x248] sm:$0xff]
        %v1675 = vld [vmem:[%s1226 + $0x250] sm:$0xff]
        %v1676 = vld [vmem:[%s1226 + $0x258] sm:$0xff]
        %v1677 = vld [vmem:[%s1226 + $0x260] sm:$0xff]
        %v1678 = vld [vmem:[%s1226 + $0x268] sm:$0xff]
        %v1679 = vld [vmem:[%s1226 + $0x270] sm:$0xff]
        %v1680 = vld [vmem:[%s1226 + $0x278] sm:$0xff]
        %v1681 = vld [vmem:[%s1226 + $0x280] sm:$0xff]
        %v1682 = vld [vmem:[%s1226 + $0x288] sm:$0xff]
        %v1683 = vld [vmem:[%s1226 + $0x290] sm:$0xff]
        %v1684 = vld [vmem:[%s1226 + $0x298] sm:$0xff]
        %v1685 = vld [vmem:[%s1226 + $0x2a0] sm:$0xff]
        %v1686 = vld [vmem:[%s1226 + $0x2a8] sm:$0xff]
        %v1687 = vld [vmem:[%s1226 + $0x2b0] sm:$0xff]
        %v1688 = vld [vmem:[%s1226 + $0x2b8] sm:$0xff]
        %v1689 = vld [vmem:[%s1226 + $0x2c0] sm:$0xff]
        %v1690 = vld [vmem:[%s1226 + $0x2c8] sm:$0xff]
        %v1691 = vld [vmem:[%s1226 + $0x2d0] sm:$0xff]
        %v1692 = vld [vmem:[%s1226 + $0x2d8] sm:$0xff]
        %v1693 = vld [vmem:[%s1226 + $0x2e0] sm:$0xff]
        %v1694 = vld [vmem:[%s1226 + $0x2e8] sm:$0xff]
        %v1695 = vld [vmem:[%s1226 + $0x2f0] sm:$0xff]
        %v1696 = vld [vmem:[%s1226 + $0x2f8] sm:$0xff]
        %v1697 = vld [vmem:[%s1226 + $0x300] sm:$0xff]
        %v1698 = vld [vmem:[%s1226 + $0x308] sm:$0xff]
        %v1699 = vld [vmem:[%s1226 + $0x310] sm:$0xff]
        %v1700 = vld [vmem:[%s1226 + $0x318] sm:$0xff]
        %v1701 = vld [vmem:[%s1226 + $0x320] sm:$0xff]
        %v1702 = vld [vmem:[%s1226 + $0x328] sm:$0xff]
        %v1703 = vld [vmem:[%s1226 + $0x330] sm:$0xff]
        %v1704 = vld [vmem:[%s1226 + $0x338] sm:$0xff]
        %v1705 = vld [vmem:[%s1226 + $0x340] sm:$0xff]
        %v1706 = vld [vmem:[%s1226 + $0x348] sm:$0xff]
        %v1707 = vld [vmem:[%s1226 + $0x350] sm:$0xff]
        %v1708 = vld [vmem:[%s1226 + $0x358] sm:$0xff]
        %v1709 = vld [vmem:[%s1226 + $0x360] sm:$0xff]
        %v1710 = vld [vmem:[%s1226 + $0x368] sm:$0xff]
        %v1711 = vld [vmem:[%s1226 + $0x370] sm:$0xff]
        %v1712 = vld [vmem:[%s1226 + $0x378] sm:$0xff]
        %v1713 = vld [vmem:[%s1226 + $0x380] sm:$0xff]
        %v1714 = vld [vmem:[%s1226 + $0x388] sm:$0xff]
        %v1715 = vld [vmem:[%s1226 + $0x390] sm:$0xff]
        %v1716 = vld [vmem:[%s1226 + $0x398] sm:$0xff]
        %v1717 = vld [vmem:[%s1226 + $0x3a0] sm:$0xff]
        %v1718 = vld [vmem:[%s1226 + $0x3a8] sm:$0xff]
        %v1719 = vld [vmem:[%s1226 + $0x3b0] sm:$0xff]
        %v1720 = vld [vmem:[%s1226 + $0x3b8] sm:$0xff]
        %v1721 = vld [vmem:[%s1226 + $0x3c0] sm:$0xff]
        %v1722 = vld [vmem:[%s1226 + $0x3c8] sm:$0xff]
        %v1723 = vld [vmem:[%s1226 + $0x3d0] sm:$0xff]
        %v1724 = vld [vmem:[%s1226 + $0x3d8] sm:$0xff]
        %v1725 = vld [vmem:[%s1226 + $0x3e0] sm:$0xff]
        %v1726 = vld [vmem:[%s1226 + $0x3e8] sm:$0xff]
        %v1727 = vld [vmem:[%s1226 + $0x3f0] sm:$0xff]
        %v1728 = vld [vmem:[%s1226 + $0x3f8] sm:$0xff]
        %v1729 = vld [vmem:[%s1226 + $0x400] sm:$0xff]
        %v1730 = vld [vmem:[%s1226 + $0x408] sm:$0xff]
        %v1731 = vld [vmem:[%s1226 + $0x410] sm:$0xff]
        %v1732 = vld [vmem:[%s1226 + $0x418] sm:$0xff]
        %v1733 = vld [vmem:[%s1226 + $0x420] sm:$0xff]
        %v1734 = vld [vmem:[%s1226 + $0x428] sm:$0xff]
        %v1735 = vld [vmem:[%s1226 + $0x430] sm:$0xff]
        %v1736 = vld [vmem:[%s1226 + $0x438] sm:$0xff]
        %v1737 = vld [vmem:[%s1226 + $0x440] sm:$0xff]
        %v1738 = vld [vmem:[%s1226 + $0x448] sm:$0xff]
        %v1739 = vld [vmem:[%s1226 + $0x450] sm:$0xff]
        %v1740 = vld [vmem:[%s1226 + $0x458] sm:$0xff]
        %v1741 = vld [vmem:[%s1226 + $0x460] sm:$0xff]
        %v1742 = vld [vmem:[%s1226 + $0x468] sm:$0xff]
        %v1743 = vld [vmem:[%s1226 + $0x470] sm:$0xff]
        %v1744 = vld [vmem:[%s1226 + $0x478] sm:$0xff]
        %v1745 = vld [vmem:[%s1226 + $0x480] sm:$0xff]
        %v1746 = vld [vmem:[%s1226 + $0x488] sm:$0xff]
        %v1747 = vld [vmem:[%s1226 + $0x490] sm:$0xff]
        %v1748 = vld [vmem:[%s1226 + $0x498] sm:$0xff]
        %v1749 = vld [vmem:[%s1226 + $0x4a0] sm:$0xff]
        %v1750 = vld [vmem:[%s1226 + $0x4a8] sm:$0xff]
        %v1751 = vld [vmem:[%s1226 + $0x4b0] sm:$0xff]
        %v1752 = vld [vmem:[%s1226 + $0x4b8] sm:$0xff]
        %v1753 = vld [vmem:[%s1226 + $0x4c0] sm:$0xff]
        %v1754 = vld [vmem:[%s1226 + $0x4c8] sm:$0xff]
        %v1755 = vld [vmem:[%s1226 + $0x4d0] sm:$0xff]
        %v1756 = vld [vmem:[%s1226 + $0x4d8] sm:$0xff]
        %v1757 = vld [vmem:[%s1226 + $0x4e0] sm:$0xff]
        %v1758 = vld [vmem:[%s1226 + $0x4e8] sm:$0xff]
        %v1759 = vld [vmem:[%s1226 + $0x4f0] sm:$0xff]
        %v1760 = vld [vmem:[%s1226 + $0x4f8] sm:$0xff]
        %v1761 = vld [vmem:[%s1226 + $0x500] sm:$0xff]
        %v1762 = vld [vmem:[%s1226 + $0x508] sm:$0xff]
        %v1763 = vld [vmem:[%s1226 + $0x510] sm:$0xff]
        %v1764 = vld [vmem:[%s1226 + $0x518] sm:$0xff]
        %v1765 = vld [vmem:[%s1226 + $0x520] sm:$0xff]
        %v1766 = vld [vmem:[%s1226 + $0x528] sm:$0xff]
        %v1767 = vld [vmem:[%s1226 + $0x530] sm:$0xff]
        %v1768 = vld [vmem:[%s1226 + $0x538] sm:$0xff]
        %v1769 = vld [vmem:[%s1226 + $0x540] sm:$0xff]
        %v1770 = vld [vmem:[%s1226 + $0x548] sm:$0xff]
        %v1771 = vld [vmem:[%s1226 + $0x550] sm:$0xff]
        %v1772 = vld [vmem:[%s1226 + $0x558] sm:$0xff]
        %v1773 = vld [vmem:[%s1226 + $0x560] sm:$0xff]
        %v1774 = vld [vmem:[%s1226 + $0x568] sm:$0xff]
        %v1775 = vld [vmem:[%s1226 + $0x570] sm:$0xff]
        %v1776 = vld [vmem:[%s1226 + $0x578] sm:$0xff]
        %v1777 = vld [vmem:[%s1226 + $0x580] sm:$0xff]
        %v1778 = vld [vmem:[%s1226 + $0x588] sm:$0xff]
        %v1779 = vld [vmem:[%s1226 + $0x590] sm:$0xff]
        %v1780 = vld [vmem:[%s1226 + $0x598] sm:$0xff]
        %v1781 = vld [vmem:[%s1226 + $0x5a0] sm:$0xff]
        %v1782 = vld [vmem:[%s1226 + $0x5a8] sm:$0xff]
        %v1783 = vld [vmem:[%s1226 + $0x5b0] sm:$0xff]
        %v1784 = vld [vmem:[%s1226 + $0x5b8] sm:$0xff]
        %v1785 = vld [vmem:[%s1226 + $0x5c0] sm:$0xff]
        %v1786 = vld [vmem:[%s1226 + $0x5c8] sm:$0xff]
        %v1787 = vld [vmem:[%s1226 + $0x5d0] sm:$0xff]
        %v1788 = vld [vmem:[%s1226 + $0x5d8] sm:$0xff]
        %v1789 = vld [vmem:[%s1226 + $0x5e0] sm:$0xff]
        %v1790 = vld [vmem:[%s1226 + $0x5e8] sm:$0xff]
        %v1791 = vld [vmem:[%s1226 + $0x5f0] sm:$0xff]
        %v1792 = vld [vmem:[%s1226 + $0x5f8] sm:$0xff]
        %v1793 = vld [vmem:[%s1226 + $0x600] sm:$0xff]
        %v1794 = vld [vmem:[%s1226 + $0x608] sm:$0xff]
        %v1795 = vld [vmem:[%s1226 + $0x610] sm:$0xff]
        %v1796 = vld [vmem:[%s1226 + $0x618] sm:$0xff]
        %v1797 = vld [vmem:[%s1226 + $0x620] sm:$0xff]
        %v1798 = vld [vmem:[%s1226 + $0x628] sm:$0xff]
        %v1799 = vld [vmem:[%s1226 + $0x630] sm:$0xff]
        %v1800 = vld [vmem:[%s1226 + $0x638] sm:$0xff]
        %v1801 = vld [vmem:[%s1226 + $0x640] sm:$0xff]
        %v1802 = vld [vmem:[%s1226 + $0x648] sm:$0xff]
        %v1803 = vld [vmem:[%s1226 + $0x650] sm:$0xff]
        %v1804 = vld [vmem:[%s1226 + $0x658] sm:$0xff]
        %v1805 = vld [vmem:[%s1226 + $0x660] sm:$0xff]
        %v1806 = vld [vmem:[%s1226 + $0x668] sm:$0xff]
        %v1807 = vld [vmem:[%s1226 + $0x670] sm:$0xff]
        %v1808 = vld [vmem:[%s1226 + $0x678] sm:$0xff]
        %v1809 = vld [vmem:[%s1226 + $0x680] sm:$0xff]
        %v1810 = vld [vmem:[%s1226 + $0x688] sm:$0xff]
        %v1811 = vld [vmem:[%s1226 + $0x690] sm:$0xff]
        %v1812 = vld [vmem:[%s1226 + $0x698] sm:$0xff]
        %v1813 = vld [vmem:[%s1226 + $0x6a0] sm:$0xff]
        %v1814 = vld [vmem:[%s1226 + $0x6a8] sm:$0xff]
        %v1815 = vld [vmem:[%s1226 + $0x6b0] sm:$0xff]
        %v1816 = vld [vmem:[%s1226 + $0x6b8] sm:$0xff]
        %v1817 = vld [vmem:[%s1226 + $0x6c0] sm:$0xff]
        %v1818 = vld [vmem:[%s1226 + $0x6c8] sm:$0xff]
        %v1819 = vld [vmem:[%s1226 + $0x6d0] sm:$0xff]
        %v1820 = vld [vmem:[%s1226 + $0x6d8] sm:$0xff]
        %v1821 = vld [vmem:[%s1226 + $0x6e0] sm:$0xff]
        %v1822 = vld [vmem:[%s1226 + $0x6e8] sm:$0xff]
        %v1823 = vld [vmem:[%s1226 + $0x6f0] sm:$0xff]
        %v1824 = vld [vmem:[%s1226 + $0x6f8] sm:$0xff]
        %v1825 = vld [vmem:[%s1226 + $0x700] sm:$0xff]
        %v1826 = vld [vmem:[%s1226 + $0x708] sm:$0xff]
        %v1827 = vld [vmem:[%s1226 + $0x710] sm:$0xff]
        %v1828 = vld [vmem:[%s1226 + $0x718] sm:$0xff]
        %v1829 = vld [vmem:[%s1226 + $0x720] sm:$0xff]
        %v1830 = vld [vmem:[%s1226 + $0x728] sm:$0xff]
        %v1831 = vld [vmem:[%s1226 + $0x730] sm:$0xff]
        %v1832 = vld [vmem:[%s1226 + $0x738] sm:$0xff]
        %v1833 = vld [vmem:[%s1226 + $0x740] sm:$0xff]
        %v1834 = vld [vmem:[%s1226 + $0x748] sm:$0xff]
        %v1835 = vld [vmem:[%s1226 + $0x750] sm:$0xff]
        %v1836 = vld [vmem:[%s1226 + $0x758] sm:$0xff]
        %v1837 = vld [vmem:[%s1226 + $0x760] sm:$0xff]
        %v1838 = vld [vmem:[%s1226 + $0x768] sm:$0xff]
        %v1839 = vld [vmem:[%s1226 + $0x770] sm:$0xff]
        %v1840 = vld [vmem:[%s1226 + $0x778] sm:$0xff]
        %v1841 = vld [vmem:[%s1226 + $0x780] sm:$0xff]
        %v1842 = vld [vmem:[%s1226 + $0x788] sm:$0xff]
        %v1843 = vld [vmem:[%s1226 + $0x790] sm:$0xff]
        %v1844 = vld [vmem:[%s1226 + $0x798] sm:$0xff]
        %v1845 = vld [vmem:[%s1226 + $0x7a0] sm:$0xff]
        %v1846 = vld [vmem:[%s1226 + $0x7a8] sm:$0xff]
        %v1847 = vld [vmem:[%s1226 + $0x7b0] sm:$0xff]
        %v1848 = vld [vmem:[%s1226 + $0x7b8] sm:$0xff]
        %v1849 = vld [vmem:[%s1226 + $0x7c0] sm:$0xff]
        %v1850 = vld [vmem:[%s1226 + $0x7c8] sm:$0xff]
        %v1851 = vld [vmem:[%s1226 + $0x7d0] sm:$0xff]
        %v1852 = vld [vmem:[%s1226 + $0x7d8] sm:$0xff]
        %v1853 = vld [vmem:[%s1226 + $0x7e0] sm:$0xff]
        %v1854 = vld [vmem:[%s1226 + $0x7e8] sm:$0xff]
        %v1855 = vld [vmem:[%s1226 + $0x7f0] sm:$0xff]
        %v1856 = vld [vmem:[%s1226 + $0x7f8] sm:$0xff]
        %v1857 = vld [vmem:[%s1226 + $0x800] sm:$0xff]
        %v1858 = vld [vmem:[%s1226 + $0x808] sm:$0xff]
        %v1859 = vld [vmem:[%s1226 + $0x810] sm:$0xff]
        %v1860 = vld [vmem:[%s1226 + $0x818] sm:$0xff]
        %v1861 = vld [vmem:[%s1226 + $0x820] sm:$0xff]
        %v1862 = vld [vmem:[%s1226 + $0x828] sm:$0xff]
        %v1863 = vld [vmem:[%s1226 + $0x830] sm:$0xff]
        %v1864 = vld [vmem:[%s1226 + $0x838] sm:$0xff]
        %v1865 = vld [vmem:[%s1226 + $0x840] sm:$0xff]
        %v1866 = vld [vmem:[%s1226 + $0x848] sm:$0xff]
        %v1867 = vld [vmem:[%s1226 + $0x850] sm:$0xff]
        %v1868 = vld [vmem:[%s1226 + $0x858] sm:$0xff]
        %v1869 = vld [vmem:[%s1226 + $0x860] sm:$0xff]
        %v1870 = vld [vmem:[%s1226 + $0x868] sm:$0xff]
        %v1871 = vld [vmem:[%s1226 + $0x870] sm:$0xff]
        %v1872 = vld [vmem:[%s1226 + $0x878] sm:$0xff]
        %v1873 = vld [vmem:[%s1226 + $0x880] sm:$0xff]
        %v1874 = vld [vmem:[%s1226 + $0x888] sm:$0xff]
        %v1875 = vld [vmem:[%s1226 + $0x890] sm:$0xff]
        %v1876 = vld [vmem:[%s1226 + $0x898] sm:$0xff]
        %v1877 = vld [vmem:[%s1226 + $0x8a0] sm:$0xff]
        %v1878 = vld [vmem:[%s1226 + $0x8a8] sm:$0xff]
        %v1879 = vld [vmem:[%s1226 + $0x8b0] sm:$0xff]
        %v1880 = vld [vmem:[%s1226 + $0x8b8] sm:$0xff]
        %v1881 = vld [vmem:[%s1226 + $0x8c0] sm:$0xff]
        %v1882 = vld [vmem:[%s1226 + $0x8c8] sm:$0xff]
        %v1883 = vld [vmem:[%s1226 + $0x8d0] sm:$0xff]
        %v1884 = vld [vmem:[%s1226 + $0x8d8] sm:$0xff]
        %v1885 = vld [vmem:[%s1226 + $0x8e0] sm:$0xff]
        %v1886 = vld [vmem:[%s1226 + $0x8e8] sm:$0xff]
        %v1887 = vld [vmem:[%s1226 + $0x8f0] sm:$0xff]
        %v1888 = vld [vmem:[%s1226 + $0x8f8] sm:$0xff]
        %v1889 = vld [vmem:[%s1226 + $0x900] sm:$0xff]
        %v1890 = vld [vmem:[%s1226 + $0x908] sm:$0xff]
        %v1891 = vld [vmem:[%s1226 + $0x910] sm:$0xff]
        %v1892 = vld [vmem:[%s1226 + $0x918] sm:$0xff]
        %v1893 = vld [vmem:[%s1226 + $0x920] sm:$0xff]
        %v1894 = vld [vmem:[%s1226 + $0x928] sm:$0xff]
        %v1895 = vld [vmem:[%s1226 + $0x930] sm:$0xff]
        %v1896 = vld [vmem:[%s1226 + $0x938] sm:$0xff]
        %v1897 = vld [vmem:[%s1226 + $0x940] sm:$0xff]
        %v1898 = vld [vmem:[%s1226 + $0x948] sm:$0xff]
        %v1899 = vld [vmem:[%s1226 + $0x950] sm:$0xff]
        %v1900 = vld [vmem:[%s1226 + $0x958] sm:$0xff]
        %v1901 = vld [vmem:[%s1226 + $0x960] sm:$0xff]
        %v1902 = vld [vmem:[%s1226 + $0x968] sm:$0xff]
        %v1903 = vld [vmem:[%s1226 + $0x970] sm:$0xff]
        %v1904 = vld [vmem:[%s1226 + $0x978] sm:$0xff]
        %v1905 = vld [vmem:[%s1226 + $0x980] sm:$0xff]
        %v1906 = vld [vmem:[%s1226 + $0x988] sm:$0xff]
        %v1907 = vld [vmem:[%s1226 + $0x990] sm:$0xff]
        %v1908 = vld [vmem:[%s1226 + $0x998] sm:$0xff]
        %v1909 = vld [vmem:[%s1226 + $0x9a0] sm:$0xff]
        %v1910 = vld [vmem:[%s1226 + $0x9a8] sm:$0xff]
        %v1911 = vld [vmem:[%s1226 + $0x9b0] sm:$0xff]
        %v1912 = vld [vmem:[%s1226 + $0x9b8] sm:$0xff]
        %v1913 = vld [vmem:[%s1226 + $0x9c0] sm:$0xff]
        %v1914 = vld [vmem:[%s1226 + $0x9c8] sm:$0xff]
        %v1915 = vld [vmem:[%s1226 + $0x9d0] sm:$0xff]
        %v1916 = vld [vmem:[%s1226 + $0x9d8] sm:$0xff]
        %v1917 = vld [vmem:[%s1226 + $0x9e0] sm:$0xff]
        %v1918 = vld [vmem:[%s1226 + $0x9e8] sm:$0xff]
        %v1919 = vld [vmem:[%s1226 + $0x9f0] sm:$0xff]
        %v1920 = vld [vmem:[%s1226 + $0x9f8] sm:$0xff]
        %v1921 = vld [vmem:[%s1226 + $0xa00] sm:$0xff]
        %v1922 = vld [vmem:[%s1226 + $0xa08] sm:$0xff]
        %v1923 = vld [vmem:[%s1226 + $0xa10] sm:$0xff]
        %v1924 = vld [vmem:[%s1226 + $0xa18] sm:$0xff]
        %v1925 = vld [vmem:[%s1226 + $0xa20] sm:$0xff]
        %v1926 = vld [vmem:[%s1226 + $0xa28] sm:$0xff]
        %v1927 = vld [vmem:[%s1226 + $0xa30] sm:$0xff]
        %v1928 = vld [vmem:[%s1226 + $0xa38] sm:$0xff]
        %v1929 = vld [vmem:[%s1226 + $0xa40] sm:$0xff]
        %v1930 = vld [vmem:[%s1226 + $0xa48] sm:$0xff]
        %v1931 = vld [vmem:[%s1226 + $0xa50] sm:$0xff]
        %v1932 = vld [vmem:[%s1226 + $0xa58] sm:$0xff]
        %v1933 = vld [vmem:[%s1226 + $0xa60] sm:$0xff]
        %v1934 = vld [vmem:[%s1226 + $0xa68] sm:$0xff]
        %v1935 = vld [vmem:[%s1226 + $0xa70] sm:$0xff]
        %v1936 = vld [vmem:[%s1226 + $0xa78] sm:$0xff]
        %v1937 = vld [vmem:[%s1226 + $0xa80] sm:$0xff]
        %v1938 = vld [vmem:[%s1226 + $0xa88] sm:$0xff]
        %v1939 = vld [vmem:[%s1226 + $0xa90] sm:$0xff]
        %v1940 = vld [vmem:[%s1226 + $0xa98] sm:$0xff]
        %v1941 = vld [vmem:[%s1226 + $0xaa0] sm:$0xff]
        %v1942 = vld [vmem:[%s1226 + $0xaa8] sm:$0xff]
        %v1943 = vld [vmem:[%s1226 + $0xab0] sm:$0xff]
        %v1944 = vld [vmem:[%s1226 + $0xab8] sm:$0xff]
        %v1945 = vld [vmem:[%s1226 + $0xac0] sm:$0xff]
        %v1946 = vld [vmem:[%s1226 + $0xac8] sm:$0xff]
        %v1947 = vld [vmem:[%s1226 + $0xad0] sm:$0xff]
        %v1948 = vld [vmem:[%s1226 + $0xad8] sm:$0xff]
        %v1949 = vld [vmem:[%s1226 + $0xae0] sm:$0xff]
        %v1950 = vld [vmem:[%s1226 + $0xae8] sm:$0xff]
        %v1951 = vld [vmem:[%s1226 + $0xaf0] sm:$0xff]
        %v1952 = vld [vmem:[%s1226 + $0xaf8] sm:$0xff]
        %v1953 = vld [vmem:[%s1226 + $0xb00] sm:$0xff]
        %v1954 = vld [vmem:[%s1226 + $0xb08] sm:$0xff]
        %v1955 = vld [vmem:[%s1226 + $0xb10] sm:$0xff]
        %v1956 = vld [vmem:[%s1226 + $0xb18] sm:$0xff]
        %v1957 = vld [vmem:[%s1226 + $0xb20] sm:$0xff]
        %v1958 = vld [vmem:[%s1226 + $0xb28] sm:$0xff]
        %v1959 = vld [vmem:[%s1226 + $0xb30] sm:$0xff]
        %v1960 = vld [vmem:[%s1226 + $0xb38] sm:$0xff]
        %v1961 = vld [vmem:[%s1226 + $0xb40] sm:$0xff]
        %v1962 = vld [vmem:[%s1226 + $0xb48] sm:$0xff]
        %v1963 = vld [vmem:[%s1226 + $0xb50] sm:$0xff]
        %v1964 = vld [vmem:[%s1226 + $0xb58] sm:$0xff]
        %v1965 = vld [vmem:[%s1226 + $0xb60] sm:$0xff]
        %v1966 = vld [vmem:[%s1226 + $0xb68] sm:$0xff]
        %v1967 = vld [vmem:[%s1226 + $0xb70] sm:$0xff]
        %v1968 = vld [vmem:[%s1226 + $0xb78] sm:$0xff]
        %v1969 = vld [vmem:[%s1226 + $0xb80] sm:$0xff]
        %v1970 = vld [vmem:[%s1226 + $0xb88] sm:$0xff]
        %v1971 = vld [vmem:[%s1226 + $0xb90] sm:$0xff]
        %v1972 = vld [vmem:[%s1226 + $0xb98] sm:$0xff]
        %v1973 = vld [vmem:[%s1226 + $0xba0] sm:$0xff]
        %v1974 = vld [vmem:[%s1226 + $0xba8] sm:$0xff]
        %v1975 = vld [vmem:[%s1226 + $0xbb0] sm:$0xff]
        %v1976 = vld [vmem:[%s1226 + $0xbb8] sm:$0xff]
        %v1977 = vld [vmem:[%s1226 + $0xbc0] sm:$0xff]
        %v1978 = vld [vmem:[%s1226 + $0xbc8] sm:$0xff]
        %v1979 = vld [vmem:[%s1226 + $0xbd0] sm:$0xff]
        %v1980 = vld [vmem:[%s1226 + $0xbd8] sm:$0xff]
        %v1981 = vld [vmem:[%s1226 + $0xbe0] sm:$0xff]
        %v1982 = vld [vmem:[%s1226 + $0xbe8] sm:$0xff]
        %v1983 = vld [vmem:[%s1226 + $0xbf0] sm:$0xff]
        %v1984 = vld [vmem:[%s1226 + $0xbf8] sm:$0xff]
        %v1985 = vld [vmem:[%s1226 + $0xc00] sm:$0xff]
        %v1986 = vld [vmem:[%s1226 + $0xc08] sm:$0xff]
        %v1987 = vld [vmem:[%s1226 + $0xc10] sm:$0xff]
        %v1988 = vld [vmem:[%s1226 + $0xc18] sm:$0xff]
        %v1989 = vld [vmem:[%s1226 + $0xc20] sm:$0xff]
        %v1990 = vld [vmem:[%s1226 + $0xc28] sm:$0xff]
        %v1991 = vld [vmem:[%s1226 + $0xc30] sm:$0xff]
        %v1992 = vld [vmem:[%s1226 + $0xc38] sm:$0xff]
        %v1993 = vld [vmem:[%s1226 + $0xc40] sm:$0xff]
        %v1994 = vld [vmem:[%s1226 + $0xc48] sm:$0xff]
        %v1995 = vld [vmem:[%s1226 + $0xc50] sm:$0xff]
        %v1996 = vld [vmem:[%s1226 + $0xc58] sm:$0xff]
        %v1997 = vld [vmem:[%s1226 + $0xc60] sm:$0xff]
        %v1998 = vld [vmem:[%s1226 + $0xc68] sm:$0xff]
        %v1999 = vld [vmem:[%s1226 + $0xc70] sm:$0xff]
        %v2000 = vld [vmem:[%s1226 + $0xc78] sm:$0xff]
        %v2001 = vld [vmem:[%s1226 + $0xc80] sm:$0xff]
        %v2002 = vld [vmem:[%s1226 + $0xc88] sm:$0xff]
        %v2003 = vld [vmem:[%s1226 + $0xc90] sm:$0xff]
        %v2004 = vld [vmem:[%s1226 + $0xc98] sm:$0xff]
        %v2005 = vld [vmem:[%s1226 + $0xca0] sm:$0xff]
        %v2006 = vld [vmem:[%s1226 + $0xca8] sm:$0xff]
        %v2007 = vld [vmem:[%s1226 + $0xcb0] sm:$0xff]
        %v2008 = vld [vmem:[%s1226 + $0xcb8] sm:$0xff]
        %v2009 = vld [vmem:[%s1226 + $0xcc0] sm:$0xff]
        %v2010 = vld [vmem:[%s1226 + $0xcc8] sm:$0xff]
        %v2011 = vld [vmem:[%s1226 + $0xcd0] sm:$0xff]
        %v2012 = vld [vmem:[%s1226 + $0xcd8] sm:$0xff]
        %v2013 = vld [vmem:[%s1226 + $0xce0] sm:$0xff]
        %v2014 = vld [vmem:[%s1226 + $0xce8] sm:$0xff]
        %v2015 = vld [vmem:[%s1226 + $0xcf0] sm:$0xff]
        %v2016 = vld [vmem:[%s1226 + $0xcf8] sm:$0xff]
        %v2017 = vld [vmem:[%s1226 + $0xd00] sm:$0xff]
        %v2018 = vld [vmem:[%s1226 + $0xd08] sm:$0xff]
        %v2019 = vld [vmem:[%s1226 + $0xd10] sm:$0xff]
        %v2020 = vld [vmem:[%s1226 + $0xd18] sm:$0xff]
        %v2021 = vld [vmem:[%s1226 + $0xd20] sm:$0xff]
        %v2022 = vld [vmem:[%s1226 + $0xd28] sm:$0xff]
        %v2023 = vld [vmem:[%s1226 + $0xd30] sm:$0xff]
        %v2024 = vld [vmem:[%s1226 + $0xd38] sm:$0xff]
        %v2025 = vld [vmem:[%s1226 + $0xd40] sm:$0xff]
        %v2026 = vld [vmem:[%s1226 + $0xd48] sm:$0xff]
        %v2027 = vld [vmem:[%s1226 + $0xd50] sm:$0xff]
        %v2028 = vld [vmem:[%s1226 + $0xd58] sm:$0xff]
        %v2029 = vld [vmem:[%s1226 + $0xd60] sm:$0xff]
        %v2030 = vld [vmem:[%s1226 + $0xd68] sm:$0xff]
        %v2031 = vld [vmem:[%s1226 + $0xd70] sm:$0xff]
        %v2032 = vld [vmem:[%s1226 + $0xd78] sm:$0xff]
        %v2033 = vld [vmem:[%s1226 + $0xd80] sm:$0xff]
        %v2034 = vld [vmem:[%s1226 + $0xd88] sm:$0xff]
        %v2035 = vld [vmem:[%s1226 + $0xd90] sm:$0xff]
        %v2036 = vld [vmem:[%s1226 + $0xd98] sm:$0xff]
        %v2037 = vld [vmem:[%s1226 + $0xda0] sm:$0xff]
        %v2038 = vld [vmem:[%s1226 + $0xda8] sm:$0xff]
        %v2039 = vld [vmem:[%s1226 + $0xdb0] sm:$0xff]
        %v2040 = vld [vmem:[%s1226 + $0xdb8] sm:$0xff]
        %v2041 = vld [vmem:[%s1226 + $0xdc0] sm:$0xff]
        %v2042 = vld [vmem:[%s1226 + $0xdc8] sm:$0xff]
        %v2043 = vld [vmem:[%s1226 + $0xdd0] sm:$0xff]
        %v2044 = vld [vmem:[%s1226 + $0xdd8] sm:$0xff]
        %v2045 = vld [vmem:[%s1226 + $0xde0] sm:$0xff]
        %v2046 = vld [vmem:[%s1226 + $0xde8] sm:$0xff]
        %v2047 = vld [vmem:[%s1226 + $0xdf0] sm:$0xff]
        %v2048 = vld [vmem:[%s1226 + $0xdf8] sm:$0xff]
        %v2049 = vld [vmem:[%s1226 + $0xe00] sm:$0xff]
        %v2050 = vld [vmem:[%s1226 + $0xe08] sm:$0xff]
        %v2051 = vld [vmem:[%s1226 + $0xe10] sm:$0xff]
        %v2052 = vld [vmem:[%s1226 + $0xe18] sm:$0xff]
        %v2053 = vld [vmem:[%s1226 + $0xe20] sm:$0xff]
        %v2054 = vld [vmem:[%s1226 + $0xe28] sm:$0xff]
        %v2055 = vld [vmem:[%s1226 + $0xe30] sm:$0xff]
        %v2056 = vld [vmem:[%s1226 + $0xe38] sm:$0xff]
        %v2057 = vld [vmem:[%s1226 + $0xe40] sm:$0xff]
        %v2058 = vld [vmem:[%s1226 + $0xe48] sm:$0xff]
        %v2059 = vld [vmem:[%s1226 + $0xe50] sm:$0xff]
        %v2060 = vld [vmem:[%s1226 + $0xe58] sm:$0xff]
        %v2061 = vld [vmem:[%s1226 + $0xe60] sm:$0xff]
        %v2062 = vld [vmem:[%s1226 + $0xe68] sm:$0xff]
        %v2063 = vld [vmem:[%s1226 + $0xe70] sm:$0xff]
        %v2064 = vld [vmem:[%s1226 + $0xe78] sm:$0xff]
        %v2065 = vld [vmem:[%s1226 + $0xe80] sm:$0xff]
        %v2066 = vld [vmem:[%s1226 + $0xe88] sm:$0xff]
        %v2067 = vld [vmem:[%s1226 + $0xe90] sm:$0xff]
        %v2068 = vld [vmem:[%s1226 + $0xe98] sm:$0xff]
        %v2069 = vld [vmem:[%s1226 + $0xea0] sm:$0xff]
        %v2070 = vld [vmem:[%s1226 + $0xea8] sm:$0xff]
        %v2071 = vld [vmem:[%s1226 + $0xeb0] sm:$0xff]
        %v2072 = vld [vmem:[%s1226 + $0xeb8] sm:$0xff]
        %v2073 = vld [vmem:[%s1226 + $0xec0] sm:$0xff]
        %v2074 = vld [vmem:[%s1226 + $0xec8] sm:$0xff]
        %v2075 = vld [vmem:[%s1226 + $0xed0] sm:$0xff]
        %v2076 = vld [vmem:[%s1226 + $0xed8] sm:$0xff]
        %v2077 = vld [vmem:[%s1226 + $0xee0] sm:$0xff]
        %v2078 = vld [vmem:[%s1226 + $0xee8] sm:$0xff]
        %v2079 = vld [vmem:[%s1226 + $0xef0] sm:$0xff]
        %v2080 = vld [vmem:[%s1226 + $0xef8] sm:$0xff]
        %v2081 = vld [vmem:[%s1226 + $0xf00] sm:$0xff]
        %v2082 = vld [vmem:[%s1226 + $0xf08] sm:$0xff]
        %v2083 = vld [vmem:[%s1226 + $0xf10] sm:$0xff]
        %v2084 = vld [vmem:[%s1226 + $0xf18] sm:$0xff]
        %v2085 = vld [vmem:[%s1226 + $0xf20] sm:$0xff]
        %v2086 = vld [vmem:[%s1226 + $0xf28] sm:$0xff]
        %v2087 = vld [vmem:[%s1226 + $0xf30] sm:$0xff]
        %v2088 = vld [vmem:[%s1226 + $0xf38] sm:$0xff]
        %v2089 = vld [vmem:[%s1226 + $0xf40] sm:$0xff]
        %v2090 = vld [vmem:[%s1226 + $0xf48] sm:$0xff]
        %v2091 = vld [vmem:[%s1226 + $0xf50] sm:$0xff]
        %v2092 = vld [vmem:[%s1226 + $0xf58] sm:$0xff]
        %v2093 = vld [vmem:[%s1226 + $0xf60] sm:$0xff]
        %v2094 = vld [vmem:[%s1226 + $0xf68] sm:$0xff]
        %v2095 = vld [vmem:[%s1226 + $0xf70] sm:$0xff]
        %v2096 = vld [vmem:[%s1226 + $0xf78] sm:$0xff]
        %v2097 = vld [vmem:[%s1226 + $0xf80] sm:$0xff]
        %v2098 = vld [vmem:[%s1226 + $0xf88] sm:$0xff]
        %v2099 = vld [vmem:[%s1226 + $0xf90] sm:$0xff]
        %v2100 = vld [vmem:[%s1226 + $0xf98] sm:$0xff]
        %v2101 = vld [vmem:[%s1226 + $0xfa0] sm:$0xff]
        %v2102 = vld [vmem:[%s1226 + $0xfa8] sm:$0xff]
        %v2103 = vld [vmem:[%s1226 + $0xfb0] sm:$0xff]
        %v2104 = vld [vmem:[%s1226 + $0xfb8] sm:$0xff]
        %v2105 = vld [vmem:[%s1226 + $0xfc0] sm:$0xff]
        %v2106 = vld [vmem:[%s1226 + $0xfc8] sm:$0xff]
        %v2107 = vld [vmem:[%s1226 + $0xfd0] sm:$0xff]
        %v2108 = vld [vmem:[%s1226 + $0xfd8] sm:$0xff]
        %v2109 = vld [vmem:[%s1226 + $0xfe0] sm:$0xff]
        %v2110 = vld [vmem:[%s1226 + $0xfe8] sm:$0xff]
        %v2111 = vld [vmem:[%s1226 + $0xff0] sm:$0xff]
        %v2112 = vld [vmem:[%s1226 + $0xff8] sm:$0xff]
        %v2113 = vld [vmem:[%s1235] sm:$0xff]
        %v2114 = vld [vmem:[%s1244] sm:$0xff]
        %v2115 = vunpack.c.l.s8.bf16 %v1601
        %v2116 = vunpack.c.l.s8.bf16 %v1602
        %v2117 = vunpack.c.l.s8.bf16 %v1603
        %v2118 = vunpack.c.l.s8.bf16 %v1604
        %v2119 = vunpack.c.l.s8.bf16 %v1605
        %v2120 = vunpack.c.l.s8.bf16 %v1606
        %v2121 = vunpack.c.l.s8.bf16 %v1607
        %v2122 = vunpack.c.l.s8.bf16 %v1608
        %v2123 = vunpack.c.h.s8.bf16 %v1601
        %v2124 = vunpack.c.h.s8.bf16 %v1602
        %v2125 = vunpack.c.h.s8.bf16 %v1603
        %v2126 = vunpack.c.h.s8.bf16 %v1604
        %v2127 = vunpack.c.h.s8.bf16 %v1605
        %v2128 = vunpack.c.h.s8.bf16 %v1606
        %v2129 = vunpack.c.h.s8.bf16 %v1607
        %v2130 = vunpack.c.h.s8.bf16 %v1608
        %v2131 = vunpack.c.l.s8.bf16 %v1609
        %v2132 = vunpack.c.l.s8.bf16 %v1610
        %v2133 = vunpack.c.l.s8.bf16 %v1611
        %v2134 = vunpack.c.l.s8.bf16 %v1612
        %v2135 = vunpack.c.l.s8.bf16 %v1613
        %v2136 = vunpack.c.l.s8.bf16 %v1614
        %v2137 = vunpack.c.l.s8.bf16 %v1615
        %v2138 = vunpack.c.l.s8.bf16 %v1616
        %v2139 = vunpack.c.h.s8.bf16 %v1609
        %v2140 = vunpack.c.h.s8.bf16 %v1610
        %v2141 = vunpack.c.h.s8.bf16 %v1611
        %v2142 = vunpack.c.h.s8.bf16 %v1612
        %v2143 = vunpack.c.h.s8.bf16 %v1613
        %v2144 = vunpack.c.h.s8.bf16 %v1614
        %v2145 = vunpack.c.h.s8.bf16 %v1615
        %v2146 = vunpack.c.h.s8.bf16 %v1616
        %v2147 = vunpack.c.l.s8.bf16 %v1617
        %v2148 = vunpack.c.l.s8.bf16 %v1618
        %v2149 = vunpack.c.l.s8.bf16 %v1619
        %v2150 = vunpack.c.l.s8.bf16 %v1620
        %v2151 = vunpack.c.l.s8.bf16 %v1621
        %v2152 = vunpack.c.l.s8.bf16 %v1622
        %v2153 = vunpack.c.l.s8.bf16 %v1623
        %v2154 = vunpack.c.l.s8.bf16 %v1624
        %v2155 = vunpack.c.h.s8.bf16 %v1617
        %v2156 = vunpack.c.h.s8.bf16 %v1618
        %v2157 = vunpack.c.h.s8.bf16 %v1619
        %v2158 = vunpack.c.h.s8.bf16 %v1620
        %v2159 = vunpack.c.h.s8.bf16 %v1621
        %v2160 = vunpack.c.h.s8.bf16 %v1622
        %v2161 = vunpack.c.h.s8.bf16 %v1623
        %v2162 = vunpack.c.h.s8.bf16 %v1624
        %v2163 = vunpack.c.l.s8.bf16 %v1625
        %v2164 = vunpack.c.l.s8.bf16 %v1626
        %v2165 = vunpack.c.l.s8.bf16 %v1627
        %v2166 = vunpack.c.l.s8.bf16 %v1628
        %v2167 = vunpack.c.l.s8.bf16 %v1629
        %v2168 = vunpack.c.l.s8.bf16 %v1630
        %v2169 = vunpack.c.l.s8.bf16 %v1631
        %v2170 = vunpack.c.l.s8.bf16 %v1632
        %v2171 = vunpack.c.h.s8.bf16 %v1625
        %v2172 = vunpack.c.h.s8.bf16 %v1626
        %v2173 = vunpack.c.h.s8.bf16 %v1627
        %v2174 = vunpack.c.h.s8.bf16 %v1628
        %v2175 = vunpack.c.h.s8.bf16 %v1629
        %v2176 = vunpack.c.h.s8.bf16 %v1630
        %v2177 = vunpack.c.h.s8.bf16 %v1631
        %v2178 = vunpack.c.h.s8.bf16 %v1632
        %v2179 = vunpack.c.l.s8.bf16 %v1633
        %v2180 = vunpack.c.l.s8.bf16 %v1634
        %v2181 = vunpack.c.l.s8.bf16 %v1635
        %v2182 = vunpack.c.l.s8.bf16 %v1636
        %v2183 = vunpack.c.l.s8.bf16 %v1637
        %v2184 = vunpack.c.l.s8.bf16 %v1638
        %v2185 = vunpack.c.l.s8.bf16 %v1639
        %v2186 = vunpack.c.l.s8.bf16 %v1640
        %v2187 = vunpack.c.h.s8.bf16 %v1633
        %v2188 = vunpack.c.h.s8.bf16 %v1634
        %v2189 = vunpack.c.h.s8.bf16 %v1635
        %v2190 = vunpack.c.h.s8.bf16 %v1636
        %v2191 = vunpack.c.h.s8.bf16 %v1637
        %v2192 = vunpack.c.h.s8.bf16 %v1638
        %v2193 = vunpack.c.h.s8.bf16 %v1639
        %v2194 = vunpack.c.h.s8.bf16 %v1640
        %v2195 = vunpack.c.l.s8.bf16 %v1641
        %v2196 = vunpack.c.l.s8.bf16 %v1642
        %v2197 = vunpack.c.l.s8.bf16 %v1643
        %v2198 = vunpack.c.l.s8.bf16 %v1644
        %v2199 = vunpack.c.l.s8.bf16 %v1645
        %v2200 = vunpack.c.l.s8.bf16 %v1646
        %v2201 = vunpack.c.l.s8.bf16 %v1647
        %v2202 = vunpack.c.l.s8.bf16 %v1648
        %v2203 = vunpack.c.h.s8.bf16 %v1641
        %v2204 = vunpack.c.h.s8.bf16 %v1642
        %v2205 = vunpack.c.h.s8.bf16 %v1643
        %v2206 = vunpack.c.h.s8.bf16 %v1644
        %v2207 = vunpack.c.h.s8.bf16 %v1645
        %v2208 = vunpack.c.h.s8.bf16 %v1646
        %v2209 = vunpack.c.h.s8.bf16 %v1647
        %v2210 = vunpack.c.h.s8.bf16 %v1648
        %v2211 = vunpack.c.l.s8.bf16 %v1649
        %v2212 = vunpack.c.l.s8.bf16 %v1650
        %v2213 = vunpack.c.l.s8.bf16 %v1651
        %v2214 = vunpack.c.l.s8.bf16 %v1652
        %v2215 = vunpack.c.l.s8.bf16 %v1653
        %v2216 = vunpack.c.l.s8.bf16 %v1654
        %v2217 = vunpack.c.l.s8.bf16 %v1655
        %v2218 = vunpack.c.l.s8.bf16 %v1656
        %v2219 = vunpack.c.h.s8.bf16 %v1649
        %v2220 = vunpack.c.h.s8.bf16 %v1650
        %v2221 = vunpack.c.h.s8.bf16 %v1651
        %v2222 = vunpack.c.h.s8.bf16 %v1652
        %v2223 = vunpack.c.h.s8.bf16 %v1653
        %v2224 = vunpack.c.h.s8.bf16 %v1654
        %v2225 = vunpack.c.h.s8.bf16 %v1655
        %v2226 = vunpack.c.h.s8.bf16 %v1656
        %v2227 = vunpack.c.l.s8.bf16 %v1657
        %v2228 = vunpack.c.l.s8.bf16 %v1658
        %v2229 = vunpack.c.l.s8.bf16 %v1659
        %v2230 = vunpack.c.l.s8.bf16 %v1660
        %v2231 = vunpack.c.l.s8.bf16 %v1661
        %v2232 = vunpack.c.l.s8.bf16 %v1662
        %v2233 = vunpack.c.l.s8.bf16 %v1663
        %v2234 = vunpack.c.l.s8.bf16 %v1664
        %v2235 = vunpack.c.h.s8.bf16 %v1657
        %v2236 = vunpack.c.h.s8.bf16 %v1658
        %v2237 = vunpack.c.h.s8.bf16 %v1659
        %v2238 = vunpack.c.h.s8.bf16 %v1660
        %v2239 = vunpack.c.h.s8.bf16 %v1661
        %v2240 = vunpack.c.h.s8.bf16 %v1662
        %v2241 = vunpack.c.h.s8.bf16 %v1663
        %v2242 = vunpack.c.h.s8.bf16 %v1664
        %v2243 = vunpack.c.l.s8.bf16 %v1665
        %v2244 = vunpack.c.l.s8.bf16 %v1666
        %v2245 = vunpack.c.l.s8.bf16 %v1667
        %v2246 = vunpack.c.l.s8.bf16 %v1668
        %v2247 = vunpack.c.l.s8.bf16 %v1669
        %v2248 = vunpack.c.l.s8.bf16 %v1670
        %v2249 = vunpack.c.l.s8.bf16 %v1671
        %v2250 = vunpack.c.l.s8.bf16 %v1672
        %v2251 = vunpack.c.h.s8.bf16 %v1665
        %v2252 = vunpack.c.h.s8.bf16 %v1666
        %v2253 = vunpack.c.h.s8.bf16 %v1667
        %v2254 = vunpack.c.h.s8.bf16 %v1668
        %v2255 = vunpack.c.h.s8.bf16 %v1669
        %v2256 = vunpack.c.h.s8.bf16 %v1670
        %v2257 = vunpack.c.h.s8.bf16 %v1671
        %v2258 = vunpack.c.h.s8.bf16 %v1672
        %v2259 = vunpack.c.l.s8.bf16 %v1673
        %v2260 = vunpack.c.l.s8.bf16 %v1674
        %v2261 = vunpack.c.l.s8.bf16 %v1675
        %v2262 = vunpack.c.l.s8.bf16 %v1676
        %v2263 = vunpack.c.l.s8.bf16 %v1677
        %v2264 = vunpack.c.l.s8.bf16 %v1678
        %v2265 = vunpack.c.l.s8.bf16 %v1679
        %v2266 = vunpack.c.l.s8.bf16 %v1680
        %v2267 = vunpack.c.h.s8.bf16 %v1673
        %v2268 = vunpack.c.h.s8.bf16 %v1674
        %v2269 = vunpack.c.h.s8.bf16 %v1675
        %v2270 = vunpack.c.h.s8.bf16 %v1676
        %v2271 = vunpack.c.h.s8.bf16 %v1677
        %v2272 = vunpack.c.h.s8.bf16 %v1678
        %v2273 = vunpack.c.h.s8.bf16 %v1679
        %v2274 = vunpack.c.h.s8.bf16 %v1680
        %v2275 = vunpack.c.l.s8.bf16 %v1681
        %v2276 = vunpack.c.l.s8.bf16 %v1682
        %v2277 = vunpack.c.l.s8.bf16 %v1683
        %v2278 = vunpack.c.l.s8.bf16 %v1684
        %v2279 = vunpack.c.l.s8.bf16 %v1685
        %v2280 = vunpack.c.l.s8.bf16 %v1686
        %v2281 = vunpack.c.l.s8.bf16 %v1687
        %v2282 = vunpack.c.l.s8.bf16 %v1688
        %v2283 = vunpack.c.h.s8.bf16 %v1681
        %v2284 = vunpack.c.h.s8.bf16 %v1682
        %v2285 = vunpack.c.h.s8.bf16 %v1683
        %v2286 = vunpack.c.h.s8.bf16 %v1684
        %v2287 = vunpack.c.h.s8.bf16 %v1685
        %v2288 = vunpack.c.h.s8.bf16 %v1686
        %v2289 = vunpack.c.h.s8.bf16 %v1687
        %v2290 = vunpack.c.h.s8.bf16 %v1688
        %v2291 = vunpack.c.l.s8.bf16 %v1689
        %v2292 = vunpack.c.l.s8.bf16 %v1690
        %v2293 = vunpack.c.l.s8.bf16 %v1691
        %v2294 = vunpack.c.l.s8.bf16 %v1692
        %v2295 = vunpack.c.l.s8.bf16 %v1693
        %v2296 = vunpack.c.l.s8.bf16 %v1694
        %v2297 = vunpack.c.l.s8.bf16 %v1695
        %v2298 = vunpack.c.l.s8.bf16 %v1696
        %v2299 = vunpack.c.h.s8.bf16 %v1689
        %v2300 = vunpack.c.h.s8.bf16 %v1690
        %v2301 = vunpack.c.h.s8.bf16 %v1691
        %v2302 = vunpack.c.h.s8.bf16 %v1692
        %v2303 = vunpack.c.h.s8.bf16 %v1693
        %v2304 = vunpack.c.h.s8.bf16 %v1694
        %v2305 = vunpack.c.h.s8.bf16 %v1695
        %v2306 = vunpack.c.h.s8.bf16 %v1696
        %v2307 = vunpack.c.l.s8.bf16 %v1697
        %v2308 = vunpack.c.l.s8.bf16 %v1698
        %v2309 = vunpack.c.l.s8.bf16 %v1699
        %v2310 = vunpack.c.l.s8.bf16 %v1700
        %v2311 = vunpack.c.l.s8.bf16 %v1701
        %v2312 = vunpack.c.l.s8.bf16 %v1702
        %v2313 = vunpack.c.l.s8.bf16 %v1703
        %v2314 = vunpack.c.l.s8.bf16 %v1704
        %v2315 = vunpack.c.h.s8.bf16 %v1697
        %v2316 = vunpack.c.h.s8.bf16 %v1698
        %v2317 = vunpack.c.h.s8.bf16 %v1699
        %v2318 = vunpack.c.h.s8.bf16 %v1700
        %v2319 = vunpack.c.h.s8.bf16 %v1701
        %v2320 = vunpack.c.h.s8.bf16 %v1702
        %v2321 = vunpack.c.h.s8.bf16 %v1703
        %v2322 = vunpack.c.h.s8.bf16 %v1704
        %v2323 = vunpack.c.l.s8.bf16 %v1705
        %v2324 = vunpack.c.l.s8.bf16 %v1706
        %v2325 = vunpack.c.l.s8.bf16 %v1707
        %v2326 = vunpack.c.l.s8.bf16 %v1708
        %v2327 = vunpack.c.l.s8.bf16 %v1709
        %v2328 = vunpack.c.l.s8.bf16 %v1710
        %v2329 = vunpack.c.l.s8.bf16 %v1711
        %v2330 = vunpack.c.l.s8.bf16 %v1712
        %v2331 = vunpack.c.h.s8.bf16 %v1705
        %v2332 = vunpack.c.h.s8.bf16 %v1706
        %v2333 = vunpack.c.h.s8.bf16 %v1707
        %v2334 = vunpack.c.h.s8.bf16 %v1708
        %v2335 = vunpack.c.h.s8.bf16 %v1709
        %v2336 = vunpack.c.h.s8.bf16 %v1710
        %v2337 = vunpack.c.h.s8.bf16 %v1711
        %v2338 = vunpack.c.h.s8.bf16 %v1712
        %v2339 = vunpack.c.l.s8.bf16 %v1713
        %v2340 = vunpack.c.l.s8.bf16 %v1714
        %v2341 = vunpack.c.l.s8.bf16 %v1715
        %v2342 = vunpack.c.l.s8.bf16 %v1716
        %v2343 = vunpack.c.l.s8.bf16 %v1717
        %v2344 = vunpack.c.l.s8.bf16 %v1718
        %v2345 = vunpack.c.l.s8.bf16 %v1719
        %v2346 = vunpack.c.l.s8.bf16 %v1720
        %v2347 = vunpack.c.h.s8.bf16 %v1713
        %v2348 = vunpack.c.h.s8.bf16 %v1714
        %v2349 = vunpack.c.h.s8.bf16 %v1715
        %v2350 = vunpack.c.h.s8.bf16 %v1716
        %v2351 = vunpack.c.h.s8.bf16 %v1717
        %v2352 = vunpack.c.h.s8.bf16 %v1718
        %v2353 = vunpack.c.h.s8.bf16 %v1719
        %v2354 = vunpack.c.h.s8.bf16 %v1720
        %v2355 = vunpack.c.l.s8.bf16 %v1721
        %v2356 = vunpack.c.l.s8.bf16 %v1722
        %v2357 = vunpack.c.l.s8.bf16 %v1723
        %v2358 = vunpack.c.l.s8.bf16 %v1724
        %v2359 = vunpack.c.l.s8.bf16 %v1725
        %v2360 = vunpack.c.l.s8.bf16 %v1726
        %v2361 = vunpack.c.l.s8.bf16 %v1727
        %v2362 = vunpack.c.l.s8.bf16 %v1728
        %v2363 = vunpack.c.h.s8.bf16 %v1721
        %v2364 = vunpack.c.h.s8.bf16 %v1722
        %v2365 = vunpack.c.h.s8.bf16 %v1723
        %v2366 = vunpack.c.h.s8.bf16 %v1724
        %v2367 = vunpack.c.h.s8.bf16 %v1725
        %v2368 = vunpack.c.h.s8.bf16 %v1726
        %v2369 = vunpack.c.h.s8.bf16 %v1727
        %v2370 = vunpack.c.h.s8.bf16 %v1728
        %v2371 = vunpack.c.l.s8.bf16 %v1729
        %v2372 = vunpack.c.l.s8.bf16 %v1730
        %v2373 = vunpack.c.l.s8.bf16 %v1731
        %v2374 = vunpack.c.l.s8.bf16 %v1732
        %v2375 = vunpack.c.l.s8.bf16 %v1733
        %v2376 = vunpack.c.l.s8.bf16 %v1734
        %v2377 = vunpack.c.l.s8.bf16 %v1735
        %v2378 = vunpack.c.l.s8.bf16 %v1736
        %v2379 = vunpack.c.h.s8.bf16 %v1729
        %v2380 = vunpack.c.h.s8.bf16 %v1730
        %v2381 = vunpack.c.h.s8.bf16 %v1731
        %v2382 = vunpack.c.h.s8.bf16 %v1732
        %v2383 = vunpack.c.h.s8.bf16 %v1733
        %v2384 = vunpack.c.h.s8.bf16 %v1734
        %v2385 = vunpack.c.h.s8.bf16 %v1735
        %v2386 = vunpack.c.h.s8.bf16 %v1736
        %v2387 = vunpack.c.l.s8.bf16 %v1737
        %v2388 = vunpack.c.l.s8.bf16 %v1738
        %v2389 = vunpack.c.l.s8.bf16 %v1739
        %v2390 = vunpack.c.l.s8.bf16 %v1740
        %v2391 = vunpack.c.l.s8.bf16 %v1741
        %v2392 = vunpack.c.l.s8.bf16 %v1742
        %v2393 = vunpack.c.l.s8.bf16 %v1743
        %v2394 = vunpack.c.l.s8.bf16 %v1744
        %v2395 = vunpack.c.h.s8.bf16 %v1737
        %v2396 = vunpack.c.h.s8.bf16 %v1738
        %v2397 = vunpack.c.h.s8.bf16 %v1739
        %v2398 = vunpack.c.h.s8.bf16 %v1740
        %v2399 = vunpack.c.h.s8.bf16 %v1741
        %v2400 = vunpack.c.h.s8.bf16 %v1742
        %v2401 = vunpack.c.h.s8.bf16 %v1743
        %v2402 = vunpack.c.h.s8.bf16 %v1744
        %v2403 = vunpack.c.l.s8.bf16 %v1745
        %v2404 = vunpack.c.l.s8.bf16 %v1746
        %v2405 = vunpack.c.l.s8.bf16 %v1747
        %v2406 = vunpack.c.l.s8.bf16 %v1748
        %v2407 = vunpack.c.l.s8.bf16 %v1749
        %v2408 = vunpack.c.l.s8.bf16 %v1750
        %v2409 = vunpack.c.l.s8.bf16 %v1751
        %v2410 = vunpack.c.l.s8.bf16 %v1752
        %v2411 = vunpack.c.h.s8.bf16 %v1745
        %v2412 = vunpack.c.h.s8.bf16 %v1746
        %v2413 = vunpack.c.h.s8.bf16 %v1747
        %v2414 = vunpack.c.h.s8.bf16 %v1748
        %v2415 = vunpack.c.h.s8.bf16 %v1749
        %v2416 = vunpack.c.h.s8.bf16 %v1750
        %v2417 = vunpack.c.h.s8.bf16 %v1751
        %v2418 = vunpack.c.h.s8.bf16 %v1752
        %v2419 = vunpack.c.l.s8.bf16 %v1753
        %v2420 = vunpack.c.l.s8.bf16 %v1754
        %v2421 = vunpack.c.l.s8.bf16 %v1755
        %v2422 = vunpack.c.l.s8.bf16 %v1756
        %v2423 = vunpack.c.l.s8.bf16 %v1757
        %v2424 = vunpack.c.l.s8.bf16 %v1758
        %v2425 = vunpack.c.l.s8.bf16 %v1759
        %v2426 = vunpack.c.l.s8.bf16 %v1760
        %v2427 = vunpack.c.h.s8.bf16 %v1753
        %v2428 = vunpack.c.h.s8.bf16 %v1754
        %v2429 = vunpack.c.h.s8.bf16 %v1755
        %v2430 = vunpack.c.h.s8.bf16 %v1756
        %v2431 = vunpack.c.h.s8.bf16 %v1757
        %v2432 = vunpack.c.h.s8.bf16 %v1758
        %v2433 = vunpack.c.h.s8.bf16 %v1759
        %v2434 = vunpack.c.h.s8.bf16 %v1760
        %v2435 = vunpack.c.l.s8.bf16 %v1761
        %v2436 = vunpack.c.l.s8.bf16 %v1762
        %v2437 = vunpack.c.l.s8.bf16 %v1763
        %v2438 = vunpack.c.l.s8.bf16 %v1764
        %v2439 = vunpack.c.l.s8.bf16 %v1765
        %v2440 = vunpack.c.l.s8.bf16 %v1766
        %v2441 = vunpack.c.l.s8.bf16 %v1767
        %v2442 = vunpack.c.l.s8.bf16 %v1768
        %v2443 = vunpack.c.h.s8.bf16 %v1761
        %v2444 = vunpack.c.h.s8.bf16 %v1762
        %v2445 = vunpack.c.h.s8.bf16 %v1763
        %v2446 = vunpack.c.h.s8.bf16 %v1764
        %v2447 = vunpack.c.h.s8.bf16 %v1765
        %v2448 = vunpack.c.h.s8.bf16 %v1766
        %v2449 = vunpack.c.h.s8.bf16 %v1767
        %v2450 = vunpack.c.h.s8.bf16 %v1768
        %v2451 = vunpack.c.l.s8.bf16 %v1769
        %v2452 = vunpack.c.l.s8.bf16 %v1770
        %v2453 = vunpack.c.l.s8.bf16 %v1771
        %v2454 = vunpack.c.l.s8.bf16 %v1772
        %v2455 = vunpack.c.l.s8.bf16 %v1773
        %v2456 = vunpack.c.l.s8.bf16 %v1774
        %v2457 = vunpack.c.l.s8.bf16 %v1775
        %v2458 = vunpack.c.l.s8.bf16 %v1776
        %v2459 = vunpack.c.h.s8.bf16 %v1769
        %v2460 = vunpack.c.h.s8.bf16 %v1770
        %v2461 = vunpack.c.h.s8.bf16 %v1771
        %v2462 = vunpack.c.h.s8.bf16 %v1772
        %v2463 = vunpack.c.h.s8.bf16 %v1773
        %v2464 = vunpack.c.h.s8.bf16 %v1774
        %v2465 = vunpack.c.h.s8.bf16 %v1775
        %v2466 = vunpack.c.h.s8.bf16 %v1776
        %v2467 = vunpack.c.l.s8.bf16 %v1777
        %v2468 = vunpack.c.l.s8.bf16 %v1778
        %v2469 = vunpack.c.l.s8.bf16 %v1779
        %v2470 = vunpack.c.l.s8.bf16 %v1780
        %v2471 = vunpack.c.l.s8.bf16 %v1781
        %v2472 = vunpack.c.l.s8.bf16 %v1782
        %v2473 = vunpack.c.l.s8.bf16 %v1783
        %v2474 = vunpack.c.l.s8.bf16 %v1784
        %v2475 = vunpack.c.h.s8.bf16 %v1777
        %v2476 = vunpack.c.h.s8.bf16 %v1778
        %v2477 = vunpack.c.h.s8.bf16 %v1779
        %v2478 = vunpack.c.h.s8.bf16 %v1780
        %v2479 = vunpack.c.h.s8.bf16 %v1781
        %v2480 = vunpack.c.h.s8.bf16 %v1782
        %v2481 = vunpack.c.h.s8.bf16 %v1783
        %v2482 = vunpack.c.h.s8.bf16 %v1784
        %v2483 = vunpack.c.l.s8.bf16 %v1785
        %v2484 = vunpack.c.l.s8.bf16 %v1786
        %v2485 = vunpack.c.l.s8.bf16 %v1787
        %v2486 = vunpack.c.l.s8.bf16 %v1788
        %v2487 = vunpack.c.l.s8.bf16 %v1789
        %v2488 = vunpack.c.l.s8.bf16 %v1790
        %v2489 = vunpack.c.l.s8.bf16 %v1791
        %v2490 = vunpack.c.l.s8.bf16 %v1792
        %v2491 = vunpack.c.h.s8.bf16 %v1785
        %v2492 = vunpack.c.h.s8.bf16 %v1786
        %v2493 = vunpack.c.h.s8.bf16 %v1787
        %v2494 = vunpack.c.h.s8.bf16 %v1788
        %v2495 = vunpack.c.h.s8.bf16 %v1789
        %v2496 = vunpack.c.h.s8.bf16 %v1790
        %v2497 = vunpack.c.h.s8.bf16 %v1791
        %v2498 = vunpack.c.h.s8.bf16 %v1792
        %v2499 = vunpack.c.l.s8.bf16 %v1793
        %v2500 = vunpack.c.l.s8.bf16 %v1794
        %v2501 = vunpack.c.l.s8.bf16 %v1795
        %v2502 = vunpack.c.l.s8.bf16 %v1796
        %v2503 = vunpack.c.l.s8.bf16 %v1797
        %v2504 = vunpack.c.l.s8.bf16 %v1798
        %v2505 = vunpack.c.l.s8.bf16 %v1799
        %v2506 = vunpack.c.l.s8.bf16 %v1800
        %v2507 = vunpack.c.h.s8.bf16 %v1793
        %v2508 = vunpack.c.h.s8.bf16 %v1794
        %v2509 = vunpack.c.h.s8.bf16 %v1795
        %v2510 = vunpack.c.h.s8.bf16 %v1796
        %v2511 = vunpack.c.h.s8.bf16 %v1797
        %v2512 = vunpack.c.h.s8.bf16 %v1798
        %v2513 = vunpack.c.h.s8.bf16 %v1799
        %v2514 = vunpack.c.h.s8.bf16 %v1800
        %v2515 = vunpack.c.l.s8.bf16 %v1801
        %v2516 = vunpack.c.l.s8.bf16 %v1802
        %v2517 = vunpack.c.l.s8.bf16 %v1803
        %v2518 = vunpack.c.l.s8.bf16 %v1804
        %v2519 = vunpack.c.l.s8.bf16 %v1805
        %v2520 = vunpack.c.l.s8.bf16 %v1806
        %v2521 = vunpack.c.l.s8.bf16 %v1807
        %v2522 = vunpack.c.l.s8.bf16 %v1808
        %v2523 = vunpack.c.h.s8.bf16 %v1801
        %v2524 = vunpack.c.h.s8.bf16 %v1802
        %v2525 = vunpack.c.h.s8.bf16 %v1803
        %v2526 = vunpack.c.h.s8.bf16 %v1804
        %v2527 = vunpack.c.h.s8.bf16 %v1805
        %v2528 = vunpack.c.h.s8.bf16 %v1806
        %v2529 = vunpack.c.h.s8.bf16 %v1807
        %v2530 = vunpack.c.h.s8.bf16 %v1808
        %v2531 = vunpack.c.l.s8.bf16 %v1809
        %v2532 = vunpack.c.l.s8.bf16 %v1810
        %v2533 = vunpack.c.l.s8.bf16 %v1811
        %v2534 = vunpack.c.l.s8.bf16 %v1812
        %v2535 = vunpack.c.l.s8.bf16 %v1813
        %v2536 = vunpack.c.l.s8.bf16 %v1814
        %v2537 = vunpack.c.l.s8.bf16 %v1815
        %v2538 = vunpack.c.l.s8.bf16 %v1816
        %v2539 = vunpack.c.h.s8.bf16 %v1809
        %v2540 = vunpack.c.h.s8.bf16 %v1810
        %v2541 = vunpack.c.h.s8.bf16 %v1811
        %v2542 = vunpack.c.h.s8.bf16 %v1812
        %v2543 = vunpack.c.h.s8.bf16 %v1813
        %v2544 = vunpack.c.h.s8.bf16 %v1814
        %v2545 = vunpack.c.h.s8.bf16 %v1815
        %v2546 = vunpack.c.h.s8.bf16 %v1816
        %v2547 = vunpack.c.l.s8.bf16 %v1817
        %v2548 = vunpack.c.l.s8.bf16 %v1818
        %v2549 = vunpack.c.l.s8.bf16 %v1819
        %v2550 = vunpack.c.l.s8.bf16 %v1820
        %v2551 = vunpack.c.l.s8.bf16 %v1821
        %v2552 = vunpack.c.l.s8.bf16 %v1822
        %v2553 = vunpack.c.l.s8.bf16 %v1823
        %v2554 = vunpack.c.l.s8.bf16 %v1824
        %v2555 = vunpack.c.h.s8.bf16 %v1817
        %v2556 = vunpack.c.h.s8.bf16 %v1818
        %v2557 = vunpack.c.h.s8.bf16 %v1819
        %v2558 = vunpack.c.h.s8.bf16 %v1820
        %v2559 = vunpack.c.h.s8.bf16 %v1821
        %v2560 = vunpack.c.h.s8.bf16 %v1822
        %v2561 = vunpack.c.h.s8.bf16 %v1823
        %v2562 = vunpack.c.h.s8.bf16 %v1824
        %v2563 = vunpack.c.l.s8.bf16 %v1825
        %v2564 = vunpack.c.l.s8.bf16 %v1826
        %v2565 = vunpack.c.l.s8.bf16 %v1827
        %v2566 = vunpack.c.l.s8.bf16 %v1828
        %v2567 = vunpack.c.l.s8.bf16 %v1829
        %v2568 = vunpack.c.l.s8.bf16 %v1830
        %v2569 = vunpack.c.l.s8.bf16 %v1831
        %v2570 = vunpack.c.l.s8.bf16 %v1832
        %v2571 = vunpack.c.h.s8.bf16 %v1825
        %v2572 = vunpack.c.h.s8.bf16 %v1826
        %v2573 = vunpack.c.h.s8.bf16 %v1827
        %v2574 = vunpack.c.h.s8.bf16 %v1828
        %v2575 = vunpack.c.h.s8.bf16 %v1829
        %v2576 = vunpack.c.h.s8.bf16 %v1830
        %v2577 = vunpack.c.h.s8.bf16 %v1831
        %v2578 = vunpack.c.h.s8.bf16 %v1832
        %v2579 = vunpack.c.l.s8.bf16 %v1833
        %v2580 = vunpack.c.l.s8.bf16 %v1834
        %v2581 = vunpack.c.l.s8.bf16 %v1835
        %v2582 = vunpack.c.l.s8.bf16 %v1836
        %v2583 = vunpack.c.l.s8.bf16 %v1837
        %v2584 = vunpack.c.l.s8.bf16 %v1838
        %v2585 = vunpack.c.l.s8.bf16 %v1839
        %v2586 = vunpack.c.l.s8.bf16 %v1840
        %v2587 = vunpack.c.h.s8.bf16 %v1833
        %v2588 = vunpack.c.h.s8.bf16 %v1834
        %v2589 = vunpack.c.h.s8.bf16 %v1835
        %v2590 = vunpack.c.h.s8.bf16 %v1836
        %v2591 = vunpack.c.h.s8.bf16 %v1837
        %v2592 = vunpack.c.h.s8.bf16 %v1838
        %v2593 = vunpack.c.h.s8.bf16 %v1839
        %v2594 = vunpack.c.h.s8.bf16 %v1840
        %v2595 = vunpack.c.l.s8.bf16 %v1841
        %v2596 = vunpack.c.l.s8.bf16 %v1842
        %v2597 = vunpack.c.l.s8.bf16 %v1843
        %v2598 = vunpack.c.l.s8.bf16 %v1844
        %v2599 = vunpack.c.l.s8.bf16 %v1845
        %v2600 = vunpack.c.l.s8.bf16 %v1846
        %v2601 = vunpack.c.l.s8.bf16 %v1847
        %v2602 = vunpack.c.l.s8.bf16 %v1848
        %v2603 = vunpack.c.h.s8.bf16 %v1841
        %v2604 = vunpack.c.h.s8.bf16 %v1842
        %v2605 = vunpack.c.h.s8.bf16 %v1843
        %v2606 = vunpack.c.h.s8.bf16 %v1844
        %v2607 = vunpack.c.h.s8.bf16 %v1845
        %v2608 = vunpack.c.h.s8.bf16 %v1846
        %v2609 = vunpack.c.h.s8.bf16 %v1847
        %v2610 = vunpack.c.h.s8.bf16 %v1848
        %v2611 = vunpack.c.l.s8.bf16 %v1849
        %v2612 = vunpack.c.l.s8.bf16 %v1850
        %v2613 = vunpack.c.l.s8.bf16 %v1851
        %v2614 = vunpack.c.l.s8.bf16 %v1852
        %v2615 = vunpack.c.l.s8.bf16 %v1853
        %v2616 = vunpack.c.l.s8.bf16 %v1854
        %v2617 = vunpack.c.l.s8.bf16 %v1855
        %v2618 = vunpack.c.l.s8.bf16 %v1856
        %v2619 = vunpack.c.h.s8.bf16 %v1849
        %v2620 = vunpack.c.h.s8.bf16 %v1850
        %v2621 = vunpack.c.h.s8.bf16 %v1851
        %v2622 = vunpack.c.h.s8.bf16 %v1852
        %v2623 = vunpack.c.h.s8.bf16 %v1853
        %v2624 = vunpack.c.h.s8.bf16 %v1854
        %v2625 = vunpack.c.h.s8.bf16 %v1855
        %v2626 = vunpack.c.h.s8.bf16 %v1856
        %v2627 = vunpack.c.l.s8.bf16 %v1857
        %v2628 = vunpack.c.l.s8.bf16 %v1858
        %v2629 = vunpack.c.l.s8.bf16 %v1859
        %v2630 = vunpack.c.l.s8.bf16 %v1860
        %v2631 = vunpack.c.l.s8.bf16 %v1861
        %v2632 = vunpack.c.l.s8.bf16 %v1862
        %v2633 = vunpack.c.l.s8.bf16 %v1863
        %v2634 = vunpack.c.l.s8.bf16 %v1864
        %v2635 = vunpack.c.h.s8.bf16 %v1857
        %v2636 = vunpack.c.h.s8.bf16 %v1858
        %v2637 = vunpack.c.h.s8.bf16 %v1859
        %v2638 = vunpack.c.h.s8.bf16 %v1860
        %v2639 = vunpack.c.h.s8.bf16 %v1861
        %v2640 = vunpack.c.h.s8.bf16 %v1862
        %v2641 = vunpack.c.h.s8.bf16 %v1863
        %v2642 = vunpack.c.h.s8.bf16 %v1864
        %v2643 = vunpack.c.l.s8.bf16 %v1865
        %v2644 = vunpack.c.l.s8.bf16 %v1866
        %v2645 = vunpack.c.l.s8.bf16 %v1867
        %v2646 = vunpack.c.l.s8.bf16 %v1868
        %v2647 = vunpack.c.l.s8.bf16 %v1869
        %v2648 = vunpack.c.l.s8.bf16 %v1870
        %v2649 = vunpack.c.l.s8.bf16 %v1871
        %v2650 = vunpack.c.l.s8.bf16 %v1872
        %v2651 = vunpack.c.h.s8.bf16 %v1865
        %v2652 = vunpack.c.h.s8.bf16 %v1866
        %v2653 = vunpack.c.h.s8.bf16 %v1867
        %v2654 = vunpack.c.h.s8.bf16 %v1868
        %v2655 = vunpack.c.h.s8.bf16 %v1869
        %v2656 = vunpack.c.h.s8.bf16 %v1870
        %v2657 = vunpack.c.h.s8.bf16 %v1871
        %v2658 = vunpack.c.h.s8.bf16 %v1872
        %v2659 = vunpack.c.l.s8.bf16 %v1873
        %v2660 = vunpack.c.l.s8.bf16 %v1874
        %v2661 = vunpack.c.l.s8.bf16 %v1875
        %v2662 = vunpack.c.l.s8.bf16 %v1876
        %v2663 = vunpack.c.l.s8.bf16 %v1877
        %v2664 = vunpack.c.l.s8.bf16 %v1878
        %v2665 = vunpack.c.l.s8.bf16 %v1879
        %v2666 = vunpack.c.l.s8.bf16 %v1880
        %v2667 = vunpack.c.h.s8.bf16 %v1873
        %v2668 = vunpack.c.h.s8.bf16 %v1874
        %v2669 = vunpack.c.h.s8.bf16 %v1875
        %v2670 = vunpack.c.h.s8.bf16 %v1876
        %v2671 = vunpack.c.h.s8.bf16 %v1877
        %v2672 = vunpack.c.h.s8.bf16 %v1878
        %v2673 = vunpack.c.h.s8.bf16 %v1879
        %v2674 = vunpack.c.h.s8.bf16 %v1880
        %v2675 = vunpack.c.l.s8.bf16 %v1881
        %v2676 = vunpack.c.l.s8.bf16 %v1882
        %v2677 = vunpack.c.l.s8.bf16 %v1883
        %v2678 = vunpack.c.l.s8.bf16 %v1884
        %v2679 = vunpack.c.l.s8.bf16 %v1885
        %v2680 = vunpack.c.l.s8.bf16 %v1886
        %v2681 = vunpack.c.l.s8.bf16 %v1887
        %v2682 = vunpack.c.l.s8.bf16 %v1888
        %v2683 = vunpack.c.h.s8.bf16 %v1881
        %v2684 = vunpack.c.h.s8.bf16 %v1882
        %v2685 = vunpack.c.h.s8.bf16 %v1883
        %v2686 = vunpack.c.h.s8.bf16 %v1884
        %v2687 = vunpack.c.h.s8.bf16 %v1885
        %v2688 = vunpack.c.h.s8.bf16 %v1886
        %v2689 = vunpack.c.h.s8.bf16 %v1887
        %v2690 = vunpack.c.h.s8.bf16 %v1888
        %v2691 = vunpack.c.l.s8.bf16 %v1889
        %v2692 = vunpack.c.l.s8.bf16 %v1890
        %v2693 = vunpack.c.l.s8.bf16 %v1891
        %v2694 = vunpack.c.l.s8.bf16 %v1892
        %v2695 = vunpack.c.l.s8.bf16 %v1893
        %v2696 = vunpack.c.l.s8.bf16 %v1894
        %v2697 = vunpack.c.l.s8.bf16 %v1895
        %v2698 = vunpack.c.l.s8.bf16 %v1896
        %v2699 = vunpack.c.h.s8.bf16 %v1889
        %v2700 = vunpack.c.h.s8.bf16 %v1890
        %v2701 = vunpack.c.h.s8.bf16 %v1891
        %v2702 = vunpack.c.h.s8.bf16 %v1892
        %v2703 = vunpack.c.h.s8.bf16 %v1893
        %v2704 = vunpack.c.h.s8.bf16 %v1894
        %v2705 = vunpack.c.h.s8.bf16 %v1895
        %v2706 = vunpack.c.h.s8.bf16 %v1896
        %v2707 = vunpack.c.l.s8.bf16 %v1897
        %v2708 = vunpack.c.l.s8.bf16 %v1898
        %v2709 = vunpack.c.l.s8.bf16 %v1899
        %v2710 = vunpack.c.l.s8.bf16 %v1900
        %v2711 = vunpack.c.l.s8.bf16 %v1901
        %v2712 = vunpack.c.l.s8.bf16 %v1902
        %v2713 = vunpack.c.l.s8.bf16 %v1903
        %v2714 = vunpack.c.l.s8.bf16 %v1904
        %v2715 = vunpack.c.h.s8.bf16 %v1897
        %v2716 = vunpack.c.h.s8.bf16 %v1898
        %v2717 = vunpack.c.h.s8.bf16 %v1899
        %v2718 = vunpack.c.h.s8.bf16 %v1900
        %v2719 = vunpack.c.h.s8.bf16 %v1901
        %v2720 = vunpack.c.h.s8.bf16 %v1902
        %v2721 = vunpack.c.h.s8.bf16 %v1903
        %v2722 = vunpack.c.h.s8.bf16 %v1904
        %v2723 = vunpack.c.l.s8.bf16 %v1905
        %v2724 = vunpack.c.l.s8.bf16 %v1906
        %v2725 = vunpack.c.l.s8.bf16 %v1907
        %v2726 = vunpack.c.l.s8.bf16 %v1908
        %v2727 = vunpack.c.l.s8.bf16 %v1909
        %v2728 = vunpack.c.l.s8.bf16 %v1910
        %v2729 = vunpack.c.l.s8.bf16 %v1911
        %v2730 = vunpack.c.l.s8.bf16 %v1912
        %v2731 = vunpack.c.h.s8.bf16 %v1905
        %v2732 = vunpack.c.h.s8.bf16 %v1906
        %v2733 = vunpack.c.h.s8.bf16 %v1907
        %v2734 = vunpack.c.h.s8.bf16 %v1908
        %v2735 = vunpack.c.h.s8.bf16 %v1909
        %v2736 = vunpack.c.h.s8.bf16 %v1910
        %v2737 = vunpack.c.h.s8.bf16 %v1911
        %v2738 = vunpack.c.h.s8.bf16 %v1912
        %v2739 = vunpack.c.l.s8.bf16 %v1913
        %v2740 = vunpack.c.l.s8.bf16 %v1914
        %v2741 = vunpack.c.l.s8.bf16 %v1915
        %v2742 = vunpack.c.l.s8.bf16 %v1916
        %v2743 = vunpack.c.l.s8.bf16 %v1917
        %v2744 = vunpack.c.l.s8.bf16 %v1918
        %v2745 = vunpack.c.l.s8.bf16 %v1919
        %v2746 = vunpack.c.l.s8.bf16 %v1920
        %v2747 = vunpack.c.h.s8.bf16 %v1913
        %v2748 = vunpack.c.h.s8.bf16 %v1914
        %v2749 = vunpack.c.h.s8.bf16 %v1915
        %v2750 = vunpack.c.h.s8.bf16 %v1916
        %v2751 = vunpack.c.h.s8.bf16 %v1917
        %v2752 = vunpack.c.h.s8.bf16 %v1918
        %v2753 = vunpack.c.h.s8.bf16 %v1919
        %v2754 = vunpack.c.h.s8.bf16 %v1920
        %v2755 = vunpack.c.l.s8.bf16 %v1921
        %v2756 = vunpack.c.l.s8.bf16 %v1922
        %v2757 = vunpack.c.l.s8.bf16 %v1923
        %v2758 = vunpack.c.l.s8.bf16 %v1924
        %v2759 = vunpack.c.l.s8.bf16 %v1925
        %v2760 = vunpack.c.l.s8.bf16 %v1926
        %v2761 = vunpack.c.l.s8.bf16 %v1927
        %v2762 = vunpack.c.l.s8.bf16 %v1928
        %v2763 = vunpack.c.h.s8.bf16 %v1921
        %v2764 = vunpack.c.h.s8.bf16 %v1922
        %v2765 = vunpack.c.h.s8.bf16 %v1923
        %v2766 = vunpack.c.h.s8.bf16 %v1924
        %v2767 = vunpack.c.h.s8.bf16 %v1925
        %v2768 = vunpack.c.h.s8.bf16 %v1926
        %v2769 = vunpack.c.h.s8.bf16 %v1927
        %v2770 = vunpack.c.h.s8.bf16 %v1928
        %v2771 = vunpack.c.l.s8.bf16 %v1929
        %v2772 = vunpack.c.l.s8.bf16 %v1930
        %v2773 = vunpack.c.l.s8.bf16 %v1931
        %v2774 = vunpack.c.l.s8.bf16 %v1932
        %v2775 = vunpack.c.l.s8.bf16 %v1933
        %v2776 = vunpack.c.l.s8.bf16 %v1934
        %v2777 = vunpack.c.l.s8.bf16 %v1935
        %v2778 = vunpack.c.l.s8.bf16 %v1936
        %v2779 = vunpack.c.h.s8.bf16 %v1929
        %v2780 = vunpack.c.h.s8.bf16 %v1930
        %v2781 = vunpack.c.h.s8.bf16 %v1931
        %v2782 = vunpack.c.h.s8.bf16 %v1932
        %v2783 = vunpack.c.h.s8.bf16 %v1933
        %v2784 = vunpack.c.h.s8.bf16 %v1934
        %v2785 = vunpack.c.h.s8.bf16 %v1935
        %v2786 = vunpack.c.h.s8.bf16 %v1936
        %v2787 = vunpack.c.l.s8.bf16 %v1937
        %v2788 = vunpack.c.l.s8.bf16 %v1938
        %v2789 = vunpack.c.l.s8.bf16 %v1939
        %v2790 = vunpack.c.l.s8.bf16 %v1940
        %v2791 = vunpack.c.l.s8.bf16 %v1941
        %v2792 = vunpack.c.l.s8.bf16 %v1942
        %v2793 = vunpack.c.l.s8.bf16 %v1943
        %v2794 = vunpack.c.l.s8.bf16 %v1944
        %v2795 = vunpack.c.h.s8.bf16 %v1937
        %v2796 = vunpack.c.h.s8.bf16 %v1938
        %v2797 = vunpack.c.h.s8.bf16 %v1939
        %v2798 = vunpack.c.h.s8.bf16 %v1940
        %v2799 = vunpack.c.h.s8.bf16 %v1941
        %v2800 = vunpack.c.h.s8.bf16 %v1942
        %v2801 = vunpack.c.h.s8.bf16 %v1943
        %v2802 = vunpack.c.h.s8.bf16 %v1944
        %v2803 = vunpack.c.l.s8.bf16 %v1945
        %v2804 = vunpack.c.l.s8.bf16 %v1946
        %v2805 = vunpack.c.l.s8.bf16 %v1947
        %v2806 = vunpack.c.l.s8.bf16 %v1948
        %v2807 = vunpack.c.l.s8.bf16 %v1949
        %v2808 = vunpack.c.l.s8.bf16 %v1950
        %v2809 = vunpack.c.l.s8.bf16 %v1951
        %v2810 = vunpack.c.l.s8.bf16 %v1952
        %v2811 = vunpack.c.h.s8.bf16 %v1945
        %v2812 = vunpack.c.h.s8.bf16 %v1946
        %v2813 = vunpack.c.h.s8.bf16 %v1947
        %v2814 = vunpack.c.h.s8.bf16 %v1948
        %v2815 = vunpack.c.h.s8.bf16 %v1949
        %v2816 = vunpack.c.h.s8.bf16 %v1950
        %v2817 = vunpack.c.h.s8.bf16 %v1951
        %v2818 = vunpack.c.h.s8.bf16 %v1952
        %v2819 = vunpack.c.l.s8.bf16 %v1953
        %v2820 = vunpack.c.l.s8.bf16 %v1954
        %v2821 = vunpack.c.l.s8.bf16 %v1955
        %v2822 = vunpack.c.l.s8.bf16 %v1956
        %v2823 = vunpack.c.l.s8.bf16 %v1957
        %v2824 = vunpack.c.l.s8.bf16 %v1958
        %v2825 = vunpack.c.l.s8.bf16 %v1959
        %v2826 = vunpack.c.l.s8.bf16 %v1960
        %v2827 = vunpack.c.h.s8.bf16 %v1953
        %v2828 = vunpack.c.h.s8.bf16 %v1954
        %v2829 = vunpack.c.h.s8.bf16 %v1955
        %v2830 = vunpack.c.h.s8.bf16 %v1956
        %v2831 = vunpack.c.h.s8.bf16 %v1957
        %v2832 = vunpack.c.h.s8.bf16 %v1958
        %v2833 = vunpack.c.h.s8.bf16 %v1959
        %v2834 = vunpack.c.h.s8.bf16 %v1960
        %v2835 = vunpack.c.l.s8.bf16 %v1961
        %v2836 = vunpack.c.l.s8.bf16 %v1962
        %v2837 = vunpack.c.l.s8.bf16 %v1963
        %v2838 = vunpack.c.l.s8.bf16 %v1964
        %v2839 = vunpack.c.l.s8.bf16 %v1965
        %v2840 = vunpack.c.l.s8.bf16 %v1966
        %v2841 = vunpack.c.l.s8.bf16 %v1967
        %v2842 = vunpack.c.l.s8.bf16 %v1968
        %v2843 = vunpack.c.h.s8.bf16 %v1961
        %v2844 = vunpack.c.h.s8.bf16 %v1962
        %v2845 = vunpack.c.h.s8.bf16 %v1963
        %v2846 = vunpack.c.h.s8.bf16 %v1964
        %v2847 = vunpack.c.h.s8.bf16 %v1965
        %v2848 = vunpack.c.h.s8.bf16 %v1966
        %v2849 = vunpack.c.h.s8.bf16 %v1967
        %v2850 = vunpack.c.h.s8.bf16 %v1968
        %v2851 = vunpack.c.l.s8.bf16 %v1969
        %v2852 = vunpack.c.l.s8.bf16 %v1970
        %v2853 = vunpack.c.l.s8.bf16 %v1971
        %v2854 = vunpack.c.l.s8.bf16 %v1972
        %v2855 = vunpack.c.l.s8.bf16 %v1973
        %v2856 = vunpack.c.l.s8.bf16 %v1974
        %v2857 = vunpack.c.l.s8.bf16 %v1975
        %v2858 = vunpack.c.l.s8.bf16 %v1976
        %v2859 = vunpack.c.h.s8.bf16 %v1969
        %v2860 = vunpack.c.h.s8.bf16 %v1970
        %v2861 = vunpack.c.h.s8.bf16 %v1971
        %v2862 = vunpack.c.h.s8.bf16 %v1972
        %v2863 = vunpack.c.h.s8.bf16 %v1973
        %v2864 = vunpack.c.h.s8.bf16 %v1974
        %v2865 = vunpack.c.h.s8.bf16 %v1975
        %v2866 = vunpack.c.h.s8.bf16 %v1976
        %v2867 = vunpack.c.l.s8.bf16 %v1977
        %v2868 = vunpack.c.l.s8.bf16 %v1978
        %v2869 = vunpack.c.l.s8.bf16 %v1979
        %v2870 = vunpack.c.l.s8.bf16 %v1980
        %v2871 = vunpack.c.l.s8.bf16 %v1981
        %v2872 = vunpack.c.l.s8.bf16 %v1982
        %v2873 = vunpack.c.l.s8.bf16 %v1983
        %v2874 = vunpack.c.l.s8.bf16 %v1984
        %v2875 = vunpack.c.h.s8.bf16 %v1977
        %v2876 = vunpack.c.h.s8.bf16 %v1978
        %v2877 = vunpack.c.h.s8.bf16 %v1979
        %v2878 = vunpack.c.h.s8.bf16 %v1980
        %v2879 = vunpack.c.h.s8.bf16 %v1981
        %v2880 = vunpack.c.h.s8.bf16 %v1982
        %v2881 = vunpack.c.h.s8.bf16 %v1983
        %v2882 = vunpack.c.h.s8.bf16 %v1984
        %v2883 = vunpack.c.l.s8.bf16 %v1985
        %v2884 = vunpack.c.l.s8.bf16 %v1986
        %v2885 = vunpack.c.l.s8.bf16 %v1987
        %v2886 = vunpack.c.l.s8.bf16 %v1988
        %v2887 = vunpack.c.l.s8.bf16 %v1989
        %v2888 = vunpack.c.l.s8.bf16 %v1990
        %v2889 = vunpack.c.l.s8.bf16 %v1991
        %v2890 = vunpack.c.l.s8.bf16 %v1992
        %v2891 = vunpack.c.h.s8.bf16 %v1985
        %v2892 = vunpack.c.h.s8.bf16 %v1986
        %v2893 = vunpack.c.h.s8.bf16 %v1987
        %v2894 = vunpack.c.h.s8.bf16 %v1988
        %v2895 = vunpack.c.h.s8.bf16 %v1989
        %v2896 = vunpack.c.h.s8.bf16 %v1990
        %v2897 = vunpack.c.h.s8.bf16 %v1991
        %v2898 = vunpack.c.h.s8.bf16 %v1992
        %v2899 = vunpack.c.l.s8.bf16 %v1993
        %v2900 = vunpack.c.l.s8.bf16 %v1994
        %v2901 = vunpack.c.l.s8.bf16 %v1995
        %v2902 = vunpack.c.l.s8.bf16 %v1996
        %v2903 = vunpack.c.l.s8.bf16 %v1997
        %v2904 = vunpack.c.l.s8.bf16 %v1998
        %v2905 = vunpack.c.l.s8.bf16 %v1999
        %v2906 = vunpack.c.l.s8.bf16 %v2000
        %v2907 = vunpack.c.h.s8.bf16 %v1993
        %v2908 = vunpack.c.h.s8.bf16 %v1994
        %v2909 = vunpack.c.h.s8.bf16 %v1995
        %v2910 = vunpack.c.h.s8.bf16 %v1996
        %v2911 = vunpack.c.h.s8.bf16 %v1997
        %v2912 = vunpack.c.h.s8.bf16 %v1998
        %v2913 = vunpack.c.h.s8.bf16 %v1999
        %v2914 = vunpack.c.h.s8.bf16 %v2000
        %v2915 = vunpack.c.l.s8.bf16 %v2001
        %v2916 = vunpack.c.l.s8.bf16 %v2002
        %v2917 = vunpack.c.l.s8.bf16 %v2003
        %v2918 = vunpack.c.l.s8.bf16 %v2004
        %v2919 = vunpack.c.l.s8.bf16 %v2005
        %v2920 = vunpack.c.l.s8.bf16 %v2006
        %v2921 = vunpack.c.l.s8.bf16 %v2007
        %v2922 = vunpack.c.l.s8.bf16 %v2008
        %v2923 = vunpack.c.h.s8.bf16 %v2001
        %v2924 = vunpack.c.h.s8.bf16 %v2002
        %v2925 = vunpack.c.h.s8.bf16 %v2003
        %v2926 = vunpack.c.h.s8.bf16 %v2004
        %v2927 = vunpack.c.h.s8.bf16 %v2005
        %v2928 = vunpack.c.h.s8.bf16 %v2006
        %v2929 = vunpack.c.h.s8.bf16 %v2007
        %v2930 = vunpack.c.h.s8.bf16 %v2008
        %v2931 = vunpack.c.l.s8.bf16 %v2009
        %v2932 = vunpack.c.l.s8.bf16 %v2010
        %v2933 = vunpack.c.l.s8.bf16 %v2011
        %v2934 = vunpack.c.l.s8.bf16 %v2012
        %v2935 = vunpack.c.l.s8.bf16 %v2013
        %v2936 = vunpack.c.l.s8.bf16 %v2014
        %v2937 = vunpack.c.l.s8.bf16 %v2015
        %v2938 = vunpack.c.l.s8.bf16 %v2016
        %v2939 = vunpack.c.h.s8.bf16 %v2009
        %v2940 = vunpack.c.h.s8.bf16 %v2010
        %v2941 = vunpack.c.h.s8.bf16 %v2011
        %v2942 = vunpack.c.h.s8.bf16 %v2012
        %v2943 = vunpack.c.h.s8.bf16 %v2013
        %v2944 = vunpack.c.h.s8.bf16 %v2014
        %v2945 = vunpack.c.h.s8.bf16 %v2015
        %v2946 = vunpack.c.h.s8.bf16 %v2016
        %v2947 = vunpack.c.l.s8.bf16 %v2017
        %v2948 = vunpack.c.l.s8.bf16 %v2018
        %v2949 = vunpack.c.l.s8.bf16 %v2019
        %v2950 = vunpack.c.l.s8.bf16 %v2020
        %v2951 = vunpack.c.l.s8.bf16 %v2021
        %v2952 = vunpack.c.l.s8.bf16 %v2022
        %v2953 = vunpack.c.l.s8.bf16 %v2023
        %v2954 = vunpack.c.l.s8.bf16 %v2024
        %v2955 = vunpack.c.h.s8.bf16 %v2017
        %v2956 = vunpack.c.h.s8.bf16 %v2018
        %v2957 = vunpack.c.h.s8.bf16 %v2019
        %v2958 = vunpack.c.h.s8.bf16 %v2020
        %v2959 = vunpack.c.h.s8.bf16 %v2021
        %v2960 = vunpack.c.h.s8.bf16 %v2022
        %v2961 = vunpack.c.h.s8.bf16 %v2023
        %v2962 = vunpack.c.h.s8.bf16 %v2024
        %v2963 = vunpack.c.l.s8.bf16 %v2025
        %v2964 = vunpack.c.l.s8.bf16 %v2026
        %v2965 = vunpack.c.l.s8.bf16 %v2027
        %v2966 = vunpack.c.l.s8.bf16 %v2028
        %v2967 = vunpack.c.l.s8.bf16 %v2029
        %v2968 = vunpack.c.l.s8.bf16 %v2030
        %v2969 = vunpack.c.l.s8.bf16 %v2031
        %v2970 = vunpack.c.l.s8.bf16 %v2032
        %v2971 = vunpack.c.h.s8.bf16 %v2025
        %v2972 = vunpack.c.h.s8.bf16 %v2026
        %v2973 = vunpack.c.h.s8.bf16 %v2027
        %v2974 = vunpack.c.h.s8.bf16 %v2028
        %v2975 = vunpack.c.h.s8.bf16 %v2029
        %v2976 = vunpack.c.h.s8.bf16 %v2030
        %v2977 = vunpack.c.h.s8.bf16 %v2031
        %v2978 = vunpack.c.h.s8.bf16 %v2032
        %v2979 = vunpack.c.l.s8.bf16 %v2033
        %v2980 = vunpack.c.l.s8.bf16 %v2034
        %v2981 = vunpack.c.l.s8.bf16 %v2035
        %v2982 = vunpack.c.l.s8.bf16 %v2036
        %v2983 = vunpack.c.l.s8.bf16 %v2037
        %v2984 = vunpack.c.l.s8.bf16 %v2038
        %v2985 = vunpack.c.l.s8.bf16 %v2039
        %v2986 = vunpack.c.l.s8.bf16 %v2040
        %v2987 = vunpack.c.h.s8.bf16 %v2033
        %v2988 = vunpack.c.h.s8.bf16 %v2034
        %v2989 = vunpack.c.h.s8.bf16 %v2035
        %v2990 = vunpack.c.h.s8.bf16 %v2036
        %v2991 = vunpack.c.h.s8.bf16 %v2037
        %v2992 = vunpack.c.h.s8.bf16 %v2038
        %v2993 = vunpack.c.h.s8.bf16 %v2039
        %v2994 = vunpack.c.h.s8.bf16 %v2040
        %v2995 = vunpack.c.l.s8.bf16 %v2041
        %v2996 = vunpack.c.l.s8.bf16 %v2042
        %v2997 = vunpack.c.l.s8.bf16 %v2043
        %v2998 = vunpack.c.l.s8.bf16 %v2044
        %v2999 = vunpack.c.l.s8.bf16 %v2045
        %v3000 = vunpack.c.l.s8.bf16 %v2046
        %v3001 = vunpack.c.l.s8.bf16 %v2047
        %v3002 = vunpack.c.l.s8.bf16 %v2048
        %v3003 = vunpack.c.h.s8.bf16 %v2041
        %v3004 = vunpack.c.h.s8.bf16 %v2042
        %v3005 = vunpack.c.h.s8.bf16 %v2043
        %v3006 = vunpack.c.h.s8.bf16 %v2044
        %v3007 = vunpack.c.h.s8.bf16 %v2045
        %v3008 = vunpack.c.h.s8.bf16 %v2046
        %v3009 = vunpack.c.h.s8.bf16 %v2047
        %v3010 = vunpack.c.h.s8.bf16 %v2048
        %v3011 = vunpack.c.l.s8.bf16 %v2049
        %v3012 = vunpack.c.l.s8.bf16 %v2050
        %v3013 = vunpack.c.l.s8.bf16 %v2051
        %v3014 = vunpack.c.l.s8.bf16 %v2052
        %v3015 = vunpack.c.l.s8.bf16 %v2053
        %v3016 = vunpack.c.l.s8.bf16 %v2054
        %v3017 = vunpack.c.l.s8.bf16 %v2055
        %v3018 = vunpack.c.l.s8.bf16 %v2056
        %v3019 = vunpack.c.h.s8.bf16 %v2049
        %v3020 = vunpack.c.h.s8.bf16 %v2050
        %v3021 = vunpack.c.h.s8.bf16 %v2051
        %v3022 = vunpack.c.h.s8.bf16 %v2052
        %v3023 = vunpack.c.h.s8.bf16 %v2053
        %v3024 = vunpack.c.h.s8.bf16 %v2054
        %v3025 = vunpack.c.h.s8.bf16 %v2055
        %v3026 = vunpack.c.h.s8.bf16 %v2056
        %v3027 = vunpack.c.l.s8.bf16 %v2057
        %v3028 = vunpack.c.l.s8.bf16 %v2058
        %v3029 = vunpack.c.l.s8.bf16 %v2059
        %v3030 = vunpack.c.l.s8.bf16 %v2060
        %v3031 = vunpack.c.l.s8.bf16 %v2061
        %v3032 = vunpack.c.l.s8.bf16 %v2062
        %v3033 = vunpack.c.l.s8.bf16 %v2063
        %v3034 = vunpack.c.l.s8.bf16 %v2064
        %v3035 = vunpack.c.h.s8.bf16 %v2057
        %v3036 = vunpack.c.h.s8.bf16 %v2058
        %v3037 = vunpack.c.h.s8.bf16 %v2059
        %v3038 = vunpack.c.h.s8.bf16 %v2060
        %v3039 = vunpack.c.h.s8.bf16 %v2061
        %v3040 = vunpack.c.h.s8.bf16 %v2062
        %v3041 = vunpack.c.h.s8.bf16 %v2063
        %v3042 = vunpack.c.h.s8.bf16 %v2064
        %v3043 = vunpack.c.l.s8.bf16 %v2065
        %v3044 = vunpack.c.l.s8.bf16 %v2066
        %v3045 = vunpack.c.l.s8.bf16 %v2067
        %v3046 = vunpack.c.l.s8.bf16 %v2068
        %v3047 = vunpack.c.l.s8.bf16 %v2069
        %v3048 = vunpack.c.l.s8.bf16 %v2070
        %v3049 = vunpack.c.l.s8.bf16 %v2071
        %v3050 = vunpack.c.l.s8.bf16 %v2072
        %v3051 = vunpack.c.h.s8.bf16 %v2065
        %v3052 = vunpack.c.h.s8.bf16 %v2066
        %v3053 = vunpack.c.h.s8.bf16 %v2067
        %v3054 = vunpack.c.h.s8.bf16 %v2068
        %v3055 = vunpack.c.h.s8.bf16 %v2069
        %v3056 = vunpack.c.h.s8.bf16 %v2070
        %v3057 = vunpack.c.h.s8.bf16 %v2071
        %v3058 = vunpack.c.h.s8.bf16 %v2072
        %v3059 = vunpack.c.l.s8.bf16 %v2073
        %v3060 = vunpack.c.l.s8.bf16 %v2074
        %v3061 = vunpack.c.l.s8.bf16 %v2075
        %v3062 = vunpack.c.l.s8.bf16 %v2076
        %v3063 = vunpack.c.l.s8.bf16 %v2077
        %v3064 = vunpack.c.l.s8.bf16 %v2078
        %v3065 = vunpack.c.l.s8.bf16 %v2079
        %v3066 = vunpack.c.l.s8.bf16 %v2080
        %v3067 = vunpack.c.h.s8.bf16 %v2073
        %v3068 = vunpack.c.h.s8.bf16 %v2074
        %v3069 = vunpack.c.h.s8.bf16 %v2075
        %v3070 = vunpack.c.h.s8.bf16 %v2076
        %v3071 = vunpack.c.h.s8.bf16 %v2077
        %v3072 = vunpack.c.h.s8.bf16 %v2078
        %v3073 = vunpack.c.h.s8.bf16 %v2079
        %v3074 = vunpack.c.h.s8.bf16 %v2080
        %v3075 = vunpack.c.l.s8.bf16 %v2081
        %v3076 = vunpack.c.l.s8.bf16 %v2082
        %v3077 = vunpack.c.l.s8.bf16 %v2083
        %v3078 = vunpack.c.l.s8.bf16 %v2084
        %v3079 = vunpack.c.l.s8.bf16 %v2085
        %v3080 = vunpack.c.l.s8.bf16 %v2086
        %v3081 = vunpack.c.l.s8.bf16 %v2087
        %v3082 = vunpack.c.l.s8.bf16 %v2088
        %v3083 = vunpack.c.h.s8.bf16 %v2081
        %v3084 = vunpack.c.h.s8.bf16 %v2082
        %v3085 = vunpack.c.h.s8.bf16 %v2083
        %v3086 = vunpack.c.h.s8.bf16 %v2084
        %v3087 = vunpack.c.h.s8.bf16 %v2085
        %v3088 = vunpack.c.h.s8.bf16 %v2086
        %v3089 = vunpack.c.h.s8.bf16 %v2087
        %v3090 = vunpack.c.h.s8.bf16 %v2088
        %v3091 = vunpack.c.l.s8.bf16 %v2089
        %v3092 = vunpack.c.l.s8.bf16 %v2090
        %v3093 = vunpack.c.l.s8.bf16 %v2091
        %v3094 = vunpack.c.l.s8.bf16 %v2092
        %v3095 = vunpack.c.l.s8.bf16 %v2093
        %v3096 = vunpack.c.l.s8.bf16 %v2094
        %v3097 = vunpack.c.l.s8.bf16 %v2095
        %v3098 = vunpack.c.l.s8.bf16 %v2096
        %v3099 = vunpack.c.h.s8.bf16 %v2089
        %v3100 = vunpack.c.h.s8.bf16 %v2090
        %v3101 = vunpack.c.h.s8.bf16 %v2091
        %v3102 = vunpack.c.h.s8.bf16 %v2092
        %v3103 = vunpack.c.h.s8.bf16 %v2093
        %v3104 = vunpack.c.h.s8.bf16 %v2094
        %v3105 = vunpack.c.h.s8.bf16 %v2095
        %v3106 = vunpack.c.h.s8.bf16 %v2096
        %v3107 = vunpack.c.l.s8.bf16 %v2097
        %v3108 = vunpack.c.l.s8.bf16 %v2098
        %v3109 = vunpack.c.l.s8.bf16 %v2099
        %v3110 = vunpack.c.l.s8.bf16 %v2100
        %v3111 = vunpack.c.l.s8.bf16 %v2101
        %v3112 = vunpack.c.l.s8.bf16 %v2102
        %v3113 = vunpack.c.l.s8.bf16 %v2103
        %v3114 = vunpack.c.l.s8.bf16 %v2104
        %v3115 = vunpack.c.h.s8.bf16 %v2097
        %v3116 = vunpack.c.h.s8.bf16 %v2098
        %v3117 = vunpack.c.h.s8.bf16 %v2099
        %v3118 = vunpack.c.h.s8.bf16 %v2100
        %v3119 = vunpack.c.h.s8.bf16 %v2101
        %v3120 = vunpack.c.h.s8.bf16 %v2102
        %v3121 = vunpack.c.h.s8.bf16 %v2103
        %v3122 = vunpack.c.h.s8.bf16 %v2104
        %v3123 = vunpack.c.l.s8.bf16 %v2105
        %v3124 = vunpack.c.l.s8.bf16 %v2106
        %v3125 = vunpack.c.l.s8.bf16 %v2107
        %v3126 = vunpack.c.l.s8.bf16 %v2108
        %v3127 = vunpack.c.l.s8.bf16 %v2109
        %v3128 = vunpack.c.l.s8.bf16 %v2110
        %v3129 = vunpack.c.l.s8.bf16 %v2111
        %v3130 = vunpack.c.l.s8.bf16 %v2112
        %v3131 = vunpack.c.h.s8.bf16 %v2105
        %v3132 = vunpack.c.h.s8.bf16 %v2106
        %v3133 = vunpack.c.h.s8.bf16 %v2107
        %v3134 = vunpack.c.h.s8.bf16 %v2108
        %v3135 = vunpack.c.h.s8.bf16 %v2109
        %v3136 = vunpack.c.h.s8.bf16 %v2110
        %v3137 = vunpack.c.h.s8.bf16 %v2111
        %v3138 = vunpack.c.h.s8.bf16 %v2112
        %v3141 = vcombine.high %v1599, %v1599
        %v3143 = vunpack.c.l.s4 1966171168
        %v3144 = vunpack.c.0.s8 %v3143
        %v3145 = vlaneseq
        %v3146 = vshrl.u32 %v3145, 7
        %v3147 = vsub.s32 %v3144, %v3146
        %v3148 = vrot.slane %v1599, %v3147
        %v3150 = vunpack.c.l.s4 1966171168
        %v3151 = vunpack.c.0.s8 %v3150
        %v3152 = vlaneseq
        %v3153 = vshrl.u32 %v3152, 7
        %v3154 = vsub.s32 %v3151, %v3153
        %v3155 = vrot.slane %v3141, %v3154
        %v3156 = vcombine.high %v3148, %v3148
        %v3157 = vcombine.high %v3155, %v3155
        %v3159 = vunpack.c.l.s4 1966171168
        %v3160 = vunpack.c.0.s8 %v3159
        %v3161 = vlaneseq
        %v3162 = vshrl.u32 %v3161, 7
        %v3163 = vsub.s32 %v3160, %v3162
        %v3164 = vrot.slane %v3148, %v3163
        %v3166 = vunpack.c.l.s4 1966171168
        %v3167 = vunpack.c.0.s8 %v3166
        %v3168 = vlaneseq
        %v3169 = vshrl.u32 %v3168, 7
        %v3170 = vsub.s32 %v3167, %v3169
        %v3171 = vrot.slane %v3155, %v3170
        %v3173 = vunpack.c.l.s4 1966171168
        %v3174 = vunpack.c.0.s8 %v3173
        %v3175 = vlaneseq
        %v3176 = vshrl.u32 %v3175, 7
        %v3177 = vsub.s32 %v3174, %v3176
        %v3178 = vrot.slane %v3156, %v3177
        %v3180 = vunpack.c.l.s4 1966171168
        %v3181 = vunpack.c.0.s8 %v3180
        %v3182 = vlaneseq
        %v3183 = vshrl.u32 %v3182, 7
        %v3184 = vsub.s32 %v3181, %v3183
        %v3185 = vrot.slane %v3157, %v3184
        %v3186 = vcombine.high %v3164, %v3164
        %v3187 = vcombine.high %v3171, %v3171
        %v3188 = vcombine.high %v3178, %v3178
        %v3189 = vcombine.high %v3185, %v3185
        %v3190 = vcombine.high %v1600, %v1600
        %v3192 = vunpack.c.l.s4 1966171168
        %v3193 = vunpack.c.0.s8 %v3192
        %v3194 = vlaneseq
        %v3195 = vshrl.u32 %v3194, 7
        %v3196 = vsub.s32 %v3193, %v3195
        %v3197 = vrot.slane %v1600, %v3196
        %v3199 = vunpack.c.l.s4 1966171168
        %v3200 = vunpack.c.0.s8 %v3199
        %v3201 = vlaneseq
        %v3202 = vshrl.u32 %v3201, 7
        %v3203 = vsub.s32 %v3200, %v3202
        %v3204 = vrot.slane %v3190, %v3203
        %v3205 = vcombine.high %v3197, %v3197
        %v3206 = vcombine.high %v3204, %v3204
        %v3208 = vunpack.c.l.s4 1966171168
        %v3209 = vunpack.c.0.s8 %v3208
        %v3210 = vlaneseq
        %v3211 = vshrl.u32 %v3210, 7
        %v3212 = vsub.s32 %v3209, %v3211
        %v3213 = vrot.slane %v3197, %v3212
        %v3215 = vunpack.c.l.s4 1966171168
        %v3216 = vunpack.c.0.s8 %v3215
        %v3217 = vlaneseq
        %v3218 = vshrl.u32 %v3217, 7
        %v3219 = vsub.s32 %v3216, %v3218
        %v3220 = vrot.slane %v3204, %v3219
        %v3222 = vunpack.c.l.s4 1966171168
        %v3223 = vunpack.c.0.s8 %v3222
        %v3224 = vlaneseq
        %v3225 = vshrl.u32 %v3224, 7
        %v3226 = vsub.s32 %v3223, %v3225
        %v3227 = vrot.slane %v3205, %v3226
        %v3229 = vunpack.c.l.s4 1966171168
        %v3230 = vunpack.c.0.s8 %v3229
        %v3231 = vlaneseq
        %v3232 = vshrl.u32 %v3231, 7
        %v3233 = vsub.s32 %v3230, %v3232
        %v3234 = vrot.slane %v3206, %v3233
        %v3235 = vcombine.high %v3213, %v3213
        %v3236 = vcombine.high %v3220, %v3220
        %v3237 = vcombine.high %v3227, %v3227
        %v3238 = vcombine.high %v3234, %v3234
        %3255 = vmatprep.subr.bf16.mxu0 %v2116
        %3256 = vmatpush1.bf16.msra.mxu0 %v2115
        %3257 = vmatprep.subr.bf16.mxu0 %v2124
        %3258 = vmatpush1.bf16.msra.mxu0 %v2123
        %3259 = vmatprep.subr.bf16.mxu0 %v2132
        %3260 = vmatpush1.bf16.msra.mxu0 %v2131
        %3261 = vmatprep.subr.bf16.mxu0 %v2140
        %3262 = vmatpush1.bf16.msra.mxu0 %v2139
        %3263 = vmatprep.subr.bf16.mxu0 %v2148
        %3264 = vmatpush1.bf16.msra.mxu0 %v2147
        %3265 = vmatprep.subr.bf16.mxu0 %v2156
        %3266 = vmatpush1.bf16.msra.mxu0 %v2155
        %3267 = vmatprep.subr.bf16.mxu0 %v2164
        %3268 = vmatpush1.bf16.msra.mxu0 %v2163
        %3269 = vmatprep.subr.bf16.mxu0 %v2172
        %3270 = vmatpush1.bf16.msra.mxu0 %v2171
        %3271 = vmatprep.subr.bf16.mxu0 %v2180
        %3272 = vmatpush1.bf16.msra.mxu0 %v2179
        %3273 = vmatprep.subr.bf16.mxu0 %v2188
        %3274 = vmatpush1.bf16.msra.mxu0 %v2187
        %3275 = vmatprep.subr.bf16.mxu0 %v2196
        %3276 = vmatpush1.bf16.msra.mxu0 %v2195
        %3277 = vmatprep.subr.bf16.mxu0 %v2204
        %3278 = vmatpush1.bf16.msra.mxu0 %v2203
        %3279 = vmatprep.subr.bf16.mxu0 %v2212
        %3280 = vmatpush1.bf16.msra.mxu0 %v2211
        %3281 = vmatprep.subr.bf16.mxu0 %v2220
        %3282 = vmatpush1.bf16.msra.mxu0 %v2219
        %3283 = vmatprep.subr.bf16.mxu0 %v2228
        %3284 = vmatpush1.bf16.msra.mxu0 %v2227
        %3285 = vmatprep.subr.bf16.mxu0 %v2236
        %3286 = vmatpush1.bf16.msra.mxu0 %v2235
        %3287 = vmatprep.mubr.bf16.mxu0 %v3178
        %3288 = vmatmul.mubr.bf16.gmra.mrb[0].mxu0 %v3164
        %v3289 = vpop.f32.mrb[0].mxu0
        %v3290 = vadd.f32 0.0, %v3289
        %v3291 = vpop.f32.mrb[0].mxu0
        %v3292 = vadd.f32 0.0, %v3291
        %v3293 = vpop.f32.mrb[0].mxu0
        %v3294 = vpop.f32.mrb[0].mxu0
        %3295 = vdwg.mxu0
        %3296 = vmatprep.subr.bf16.mxu0 %v2244
        %3297 = vmatpush1.bf16.msra.mxu0 %v2243
        %3298 = vmatprep.subr.bf16.mxu0 %v2252
        %3299 = vmatpush1.bf16.msra.mxu0 %v2251
        %3300 = vmatprep.subr.bf16.mxu0 %v2260
        %3301 = vmatpush1.bf16.msra.mxu0 %v2259
        %3302 = vmatprep.subr.bf16.mxu0 %v2268
        %3303 = vmatpush1.bf16.msra.mxu0 %v2267
        %3304 = vmatprep.subr.bf16.mxu0 %v2276
        %3305 = vmatpush1.bf16.msra.mxu0 %v2275
        %3306 = vmatprep.subr.bf16.mxu0 %v2284
        %3307 = vmatpush1.bf16.msra.mxu0 %v2283
        %3308 = vmatprep.subr.bf16.mxu0 %v2292
        %3309 = vmatpush1.bf16.msra.mxu0 %v2291
        %3310 = vmatprep.subr.bf16.mxu0 %v2300
        %3311 = vmatpush1.bf16.msra.mxu0 %v2299
        %3312 = vmatprep.subr.bf16.mxu0 %v2308
        %3313 = vmatpush1.bf16.msra.mxu0 %v2307
        %3314 = vmatprep.subr.bf16.mxu0 %v2316
        %3315 = vmatpush1.bf16.msra.mxu0 %v2315
        %3316 = vmatprep.subr.bf16.mxu0 %v2324
        %3317 = vmatpush1.bf16.msra.mxu0 %v2323
        %3318 = vmatprep.subr.bf16.mxu0 %v2332
        %3319 = vmatpush1.bf16.msra.mxu0 %v2331
        %3320 = vmatprep.subr.bf16.mxu0 %v2340
        %3321 = vmatpush1.bf16.msra.mxu0 %v2339
        %3322 = vmatprep.subr.bf16.mxu0 %v2348
        %3323 = vmatpush1.bf16.msra.mxu0 %v2347
        %3324 = vmatprep.subr.bf16.mxu0 %v2356
        %3325 = vmatpush1.bf16.msra.mxu0 %v2355
        %3326 = vmatprep.subr.bf16.mxu0 %v2364
        %3327 = vmatpush1.bf16.msra.mxu0 %v2363
        %3328 = vmatprep.mubr.bf16.mxu0 %v3188
        %3329 = vmatmul.mubr.bf16.gmra.mrb[0].mxu0 %v3186
        %v3330 = vpop.f32.mrb[0].mxu0
        %v3331 = vadd.f32 %v3290, %v3330
        %v3332 = vpop.f32.mrb[0].mxu0
        %v3333 = vadd.f32 %v3292, %v3332
        %v3334 = vpop.f32.mrb[0].mxu0
        %v3335 = vpop.f32.mrb[0].mxu0
        %3336 = vdwg.mxu0
        %3337 = vmatprep.subr.bf16.mxu0 %v2372
        %3338 = vmatpush1.bf16.msra.mxu0 %v2371
        %3339 = vmatprep.subr.bf16.mxu0 %v2380
        %3340 = vmatpush1.bf16.msra.mxu0 %v2379
        %3341 = vmatprep.subr.bf16.mxu0 %v2388
        %3342 = vmatpush1.bf16.msra.mxu0 %v2387
        %3343 = vmatprep.subr.bf16.mxu0 %v2396
        %3344 = vmatpush1.bf16.msra.mxu0 %v2395
        %3345 = vmatprep.subr.bf16.mxu0 %v2404
        %3346 = vmatpush1.bf16.msra.mxu0 %v2403
        %3347 = vmatprep.subr.bf16.mxu0 %v2412
        %3348 = vmatpush1.bf16.msra.mxu0 %v2411
        %3349 = vmatprep.subr.bf16.mxu0 %v2420
        %3350 = vmatpush1.bf16.msra.mxu0 %v2419
        %3351 = vmatprep.subr.bf16.mxu0 %v2428
        %3352 = vmatpush1.bf16.msra.mxu0 %v2427
        %3353 = vmatprep.subr.bf16.mxu0 %v2436
        %3354 = vmatpush1.bf16.msra.mxu0 %v2435
        %3355 = vmatprep.subr.bf16.mxu0 %v2444
        %3356 = vmatpush1.bf16.msra.mxu0 %v2443
        %3357 = vmatprep.subr.bf16.mxu0 %v2452
        %3358 = vmatpush1.bf16.msra.mxu0 %v2451
        %3359 = vmatprep.subr.bf16.mxu0 %v2460
        %3360 = vmatpush1.bf16.msra.mxu0 %v2459
        %3361 = vmatprep.subr.bf16.mxu0 %v2468
        %3362 = vmatpush1.bf16.msra.mxu0 %v2467
        %3363 = vmatprep.subr.bf16.mxu0 %v2476
        %3364 = vmatpush1.bf16.msra.mxu0 %v2475
        %3365 = vmatprep.subr.bf16.mxu0 %v2484
        %3366 = vmatpush1.bf16.msra.mxu0 %v2483
        %3367 = vmatprep.subr.bf16.mxu0 %v2492
        %3368 = vmatpush1.bf16.msra.mxu0 %v2491
        %3369 = vmatprep.mubr.bf16.mxu0 %v3185
        %3370 = vmatmul.mubr.bf16.gmra.mrb[0].mxu0 %v3171
        %v3371 = vpop.f32.mrb[0].mxu0
        %v3372 = vadd.f32 %v3331, %v3371
        %v3373 = vpop.f32.mrb[0].mxu0
        %v3374 = vadd.f32 %v3333, %v3373
        %v3375 = vpop.f32.mrb[0].mxu0
        %v3376 = vpop.f32.mrb[0].mxu0
        %3377 = vdwg.mxu0
        %3378 = vmatprep.subr.bf16.mxu0 %v2500
        %3379 = vmatpush1.bf16.msra.mxu0 %v2499
        %3380 = vmatprep.subr.bf16.mxu0 %v2508
        %3381 = vmatpush1.bf16.msra.mxu0 %v2507
        %3382 = vmatprep.subr.bf16.mxu0 %v2516
        %3383 = vmatpush1.bf16.msra.mxu0 %v2515
        %3384 = vmatprep.subr.bf16.mxu0 %v2524
        %3385 = vmatpush1.bf16.msra.mxu0 %v2523
        %3386 = vmatprep.subr.bf16.mxu0 %v2532
        %3387 = vmatpush1.bf16.msra.mxu0 %v2531
        %3388 = vmatprep.subr.bf16.mxu0 %v2540
        %3389 = vmatpush1.bf16.msra.mxu0 %v2539
        %3390 = vmatprep.subr.bf16.mxu0 %v2548
        %3391 = vmatpush1.bf16.msra.mxu0 %v2547
        %3392 = vmatprep.subr.bf16.mxu0 %v2556
        %3393 = vmatpush1.bf16.msra.mxu0 %v2555
        %3394 = vmatprep.subr.bf16.mxu0 %v2564
        %3395 = vmatpush1.bf16.msra.mxu0 %v2563
        %3396 = vmatprep.subr.bf16.mxu0 %v2572
        %3397 = vmatpush1.bf16.msra.mxu0 %v2571
        %3398 = vmatprep.subr.bf16.mxu0 %v2580
        %3399 = vmatpush1.bf16.msra.mxu0 %v2579
        %3400 = vmatprep.subr.bf16.mxu0 %v2588
        %3401 = vmatpush1.bf16.msra.mxu0 %v2587
        %3402 = vmatprep.subr.bf16.mxu0 %v2596
        %3403 = vmatpush1.bf16.msra.mxu0 %v2595
        %3404 = vmatprep.subr.bf16.mxu0 %v2604
        %3405 = vmatpush1.bf16.msra.mxu0 %v2603
        %3406 = vmatprep.subr.bf16.mxu0 %v2612
        %3407 = vmatpush1.bf16.msra.mxu0 %v2611
        %3408 = vmatprep.subr.bf16.mxu0 %v2620
        %3409 = vmatpush1.bf16.msra.mxu0 %v2619
        %3410 = vmatprep.mubr.bf16.mxu0 %v3189
        %3411 = vmatmul.mubr.bf16.gmra.mrb[0].mxu0 %v3187
        %v3412 = vpop.f32.mrb[0].mxu0
        %v3413 = vadd.f32 %v3372, %v3412
        %v3414 = vpop.f32.mrb[0].mxu0
        %v3415 = vadd.f32 %v3374, %v3414
        %v3416 = vpop.f32.mrb[0].mxu0
        %v3417 = vpop.f32.mrb[0].mxu0
        %3418 = vdwg.mxu0
        %3419 = vmatprep.subr.bf16.mxu0 %v2628
        %3420 = vmatpush1.bf16.msra.mxu0 %v2627
        %3421 = vmatprep.subr.bf16.mxu0 %v2636
        %3422 = vmatpush1.bf16.msra.mxu0 %v2635
        %3423 = vmatprep.subr.bf16.mxu0 %v2644
        %3424 = vmatpush1.bf16.msra.mxu0 %v2643
        %3425 = vmatprep.subr.bf16.mxu0 %v2652
        %3426 = vmatpush1.bf16.msra.mxu0 %v2651
        %3427 = vmatprep.subr.bf16.mxu0 %v2660
        %3428 = vmatpush1.bf16.msra.mxu0 %v2659
        %3429 = vmatprep.subr.bf16.mxu0 %v2668
        %3430 = vmatpush1.bf16.msra.mxu0 %v2667
        %3431 = vmatprep.subr.bf16.mxu0 %v2676
        %3432 = vmatpush1.bf16.msra.mxu0 %v2675
        %3433 = vmatprep.subr.bf16.mxu0 %v2684
        %3434 = vmatpush1.bf16.msra.mxu0 %v2683
        %3435 = vmatprep.subr.bf16.mxu0 %v2692
        %3436 = vmatpush1.bf16.msra.mxu0 %v2691
        %3437 = vmatprep.subr.bf16.mxu0 %v2700
        %3438 = vmatpush1.bf16.msra.mxu0 %v2699
        %3439 = vmatprep.subr.bf16.mxu0 %v2708
        %3440 = vmatpush1.bf16.msra.mxu0 %v2707
        %3441 = vmatprep.subr.bf16.mxu0 %v2716
        %3442 = vmatpush1.bf16.msra.mxu0 %v2715
        %3443 = vmatprep.subr.bf16.mxu0 %v2724
        %3444 = vmatpush1.bf16.msra.mxu0 %v2723
        %3445 = vmatprep.subr.bf16.mxu0 %v2732
        %3446 = vmatpush1.bf16.msra.mxu0 %v2731
        %3447 = vmatprep.subr.bf16.mxu0 %v2740
        %3448 = vmatpush1.bf16.msra.mxu0 %v2739
        %3449 = vmatprep.subr.bf16.mxu0 %v2748
        %3450 = vmatpush1.bf16.msra.mxu0 %v2747
        %3451 = vmatprep.mubr.bf16.mxu0 %v3227
        %3452 = vmatmul.mubr.bf16.gmra.mrb[0].mxu0 %v3213
        %v3453 = vpop.f32.mrb[0].mxu0
        %v3454 = vadd.f32 %v3413, %v3453
        %v3455 = vpop.f32.mrb[0].mxu0
        %v3456 = vadd.f32 %v3415, %v3455
        %v3457 = vpop.f32.mrb[0].mxu0
        %v3458 = vpop.f32.mrb[0].mxu0
        %3459 = vdwg.mxu0
        %3460 = vmatprep.subr.bf16.mxu0 %v2756
        %3461 = vmatpush1.bf16.msra.mxu0 %v2755
        %3462 = vmatprep.subr.bf16.mxu0 %v2764
        %3463 = vmatpush1.bf16.msra.mxu0 %v2763
        %3464 = vmatprep.subr.bf16.mxu0 %v2772
        %3465 = vmatpush1.bf16.msra.mxu0 %v2771
        %3466 = vmatprep.subr.bf16.mxu0 %v2780
        %3467 = vmatpush1.bf16.msra.mxu0 %v2779
        %3468 = vmatprep.subr.bf16.mxu0 %v2788
        %3469 = vmatpush1.bf16.msra.mxu0 %v2787
        %3470 = vmatprep.subr.bf16.mxu0 %v2796
        %3471 = vmatpush1.bf16.msra.mxu0 %v2795
        %3472 = vmatprep.subr.bf16.mxu0 %v2804
        %3473 = vmatpush1.bf16.msra.mxu0 %v2803
        %3474 = vmatprep.subr.bf16.mxu0 %v2812
        %3475 = vmatpush1.bf16.msra.mxu0 %v2811
        %3476 = vmatprep.subr.bf16.mxu0 %v2820
        %3477 = vmatpush1.bf16.msra.mxu0 %v2819
        %3478 = vmatprep.subr.bf16.mxu0 %v2828
        %3479 = vmatpush1.bf16.msra.mxu0 %v2827
        %3480 = vmatprep.subr.bf16.mxu0 %v2836
        %3481 = vmatpush1.bf16.msra.mxu0 %v2835
        %3482 = vmatprep.subr.bf16.mxu0 %v2844
        %3483 = vmatpush1.bf16.msra.mxu0 %v2843
        %3484 = vmatprep.subr.bf16.mxu0 %v2852
        %3485 = vmatpush1.bf16.msra.mxu0 %v2851
        %3486 = vmatprep.subr.bf16.mxu0 %v2860
        %3487 = vmatpush1.bf16.msra.mxu0 %v2859
        %3488 = vmatprep.subr.bf16.mxu0 %v2868
        %3489 = vmatpush1.bf16.msra.mxu0 %v2867
        %3490 = vmatprep.subr.bf16.mxu0 %v2876
        %3491 = vmatpush1.bf16.msra.mxu0 %v2875
        %3492 = vmatprep.mubr.bf16.mxu0 %v3237
        %3493 = vmatmul.mubr.bf16.gmra.mrb[0].mxu0 %v3235
        %v3494 = vpop.f32.mrb[0].mxu0
        %v3495 = vadd.f32 %v3454, %v3494
        %v3496 = vpop.f32.mrb[0].mxu0
        %v3497 = vadd.f32 %v3456, %v3496
        %v3498 = vpop.f32.mrb[0].mxu0
        %v3499 = vpop.f32.mrb[0].mxu0
        %3500 = vdwg.mxu0
        %3501 = vmatprep.subr.bf16.mxu0 %v2884
        %3502 = vmatpush1.bf16.msra.mxu0 %v2883
        %3503 = vmatprep.subr.bf16.mxu0 %v2892
        %3504 = vmatpush1.bf16.msra.mxu0 %v2891
        %3505 = vmatprep.subr.bf16.mxu0 %v2900
        %3506 = vmatpush1.bf16.msra.mxu0 %v2899
        %3507 = vmatprep.subr.bf16.mxu0 %v2908
        %3508 = vmatpush1.bf16.msra.mxu0 %v2907
        %3509 = vmatprep.subr.bf16.mxu0 %v2916
        %3510 = vmatpush1.bf16.msra.mxu0 %v2915
        %3511 = vmatprep.subr.bf16.mxu0 %v2924
        %3512 = vmatpush1.bf16.msra.mxu0 %v2923
        %3513 = vmatprep.subr.bf16.mxu0 %v2932
        %3514 = vmatpush1.bf16.msra.mxu0 %v2931
        %3515 = vmatprep.subr.bf16.mxu0 %v2940
        %3516 = vmatpush1.bf16.msra.mxu0 %v2939
        %3517 = vmatprep.subr.bf16.mxu0 %v2948
        %3518 = vmatpush1.bf16.msra.mxu0 %v2947
        %3519 = vmatprep.subr.bf16.mxu0 %v2956
        %3520 = vmatpush1.bf16.msra.mxu0 %v2955
        %3521 = vmatprep.subr.bf16.mxu0 %v2964
        %3522 = vmatpush1.bf16.msra.mxu0 %v2963
        %3523 = vmatprep.subr.bf16.mxu0 %v2972
        %3524 = vmatpush1.bf16.msra.mxu0 %v2971
        %3525 = vmatprep.subr.bf16.mxu0 %v2980
        %3526 = vmatpush1.bf16.msra.mxu0 %v2979
        %3527 = vmatprep.subr.bf16.mxu0 %v2988
        %3528 = vmatpush1.bf16.msra.mxu0 %v2987
        %3529 = vmatprep.subr.bf16.mxu0 %v2996
        %3530 = vmatpush1.bf16.msra.mxu0 %v2995
        %3531 = vmatprep.subr.bf16.mxu0 %v3004
        %3532 = vmatpush1.bf16.msra.mxu0 %v3003
        %3533 = vmatprep.mubr.bf16.mxu0 %v3234
        %3534 = vmatmul.mubr.bf16.gmra.mrb[0].mxu0 %v3220
        %v3535 = vpop.f32.mrb[0].mxu0
        %v3536 = vadd.f32 %v3495, %v3535
        %v3537 = vpop.f32.mrb[0].mxu0
        %v3538 = vadd.f32 %v3497, %v3537
        %v3539 = vpop.f32.mrb[0].mxu0
        %v3540 = vpop.f32.mrb[0].mxu0
        %3541 = vdwg.mxu0
        %3542 = vmatprep.subr.bf16.mxu0 %v3012
        %3543 = vmatpush1.bf16.msra.mxu0 %v3011
        %3544 = vmatprep.subr.bf16.mxu0 %v3020
        %3545 = vmatpush1.bf16.msra.mxu0 %v3019
        %3546 = vmatprep.subr.bf16.mxu0 %v3028
        %3547 = vmatpush1.bf16.msra.mxu0 %v3027
        %3548 = vmatprep.subr.bf16.mxu0 %v3036
        %3549 = vmatpush1.bf16.msra.mxu0 %v3035
        %3550 = vmatprep.subr.bf16.mxu0 %v3044
        %3551 = vmatpush1.bf16.msra.mxu0 %v3043
        %3552 = vmatprep.subr.bf16.mxu0 %v3052
        %3553 = vmatpush1.bf16.msra.mxu0 %v3051
        %3554 = vmatprep.subr.bf16.mxu0 %v3060
        %3555 = vmatpush1.bf16.msra.mxu0 %v3059
        %3556 = vmatprep.subr.bf16.mxu0 %v3068
        %3557 = vmatpush1.bf16.msra.mxu0 %v3067
        %3558 = vmatprep.subr.bf16.mxu0 %v3076
        %3559 = vmatpush1.bf16.msra.mxu0 %v3075
        %3560 = vmatprep.subr.bf16.mxu0 %v3084
        %3561 = vmatpush1.bf16.msra.mxu0 %v3083
        %3562 = vmatprep.subr.bf16.mxu0 %v3092
        %3563 = vmatpush1.bf16.msra.mxu0 %v3091
        %3564 = vmatprep.subr.bf16.mxu0 %v3100
        %3565 = vmatpush1.bf16.msra.mxu0 %v3099
        %3566 = vmatprep.subr.bf16.mxu0 %v3108
        %3567 = vmatpush1.bf16.msra.mxu0 %v3107
        %3568 = vmatprep.subr.bf16.mxu0 %v3116
        %3569 = vmatpush1.bf16.msra.mxu0 %v3115
        %3570 = vmatprep.subr.bf16.mxu0 %v3124
        %3571 = vmatpush1.bf16.msra.mxu0 %v3123
        %3572 = vmatprep.subr.bf16.mxu0 %v3132
        %3573 = vmatpush1.bf16.msra.mxu0 %v3131
        %3574 = vmatprep.mubr.bf16.mxu0 %v3238
        %3575 = vmatmul.mubr.bf16.gmra.mrb[0].mxu0 %v3236
        %v3576 = vpop.f32.mrb[0].mxu0
        %v3577 = vadd.f32 %v3536, %v3576
        %v3578 = vpop.f32.mrb[0].mxu0
        %v3579 = vadd.f32 %v3538, %v3578
        %v3580 = vpop.f32.mrb[0].mxu0
        %v3581 = vpop.f32.mrb[0].mxu0
        %3582 = vdwg.mxu0
        %3583 = vmatprep.subr.bf16.mxu0 %v2118
        %3584 = vmatpush1.bf16.msra.mxu0 %v2117
        %3585 = vmatprep.subr.bf16.mxu0 %v2126
        %3586 = vmatpush1.bf16.msra.mxu0 %v2125
        %3587 = vmatprep.subr.bf16.mxu0 %v2134
        %3588 = vmatpush1.bf16.msra.mxu0 %v2133
        %3589 = vmatprep.subr.bf16.mxu0 %v2142
        %3590 = vmatpush1.bf16.msra.mxu0 %v2141
        %3591 = vmatprep.subr.bf16.mxu0 %v2150
        %3592 = vmatpush1.bf16.msra.mxu0 %v2149
        %3593 = vmatprep.subr.bf16.mxu0 %v2158
        %3594 = vmatpush1.bf16.msra.mxu0 %v2157
        %3595 = vmatprep.subr.bf16.mxu0 %v2166
        %3596 = vmatpush1.bf16.msra.mxu0 %v2165
        %3597 = vmatprep.subr.bf16.mxu0 %v2174
        %3598 = vmatpush1.bf16.msra.mxu0 %v2173
        %3599 = vmatprep.subr.bf16.mxu0 %v2182
        %3600 = vmatpush1.bf16.msra.mxu0 %v2181
        %3601 = vmatprep.subr.bf16.mxu0 %v2190
        %3602 = vmatpush1.bf16.msra.mxu0 %v2189
        %3603 = vmatprep.subr.bf16.mxu0 %v2198
        %3604 = vmatpush1.bf16.msra.mxu0 %v2197
        %3605 = vmatprep.subr.bf16.mxu0 %v2206
        %3606 = vmatpush1.bf16.msra.mxu0 %v2205
        %3607 = vmatprep.subr.bf16.mxu0 %v2214
        %3608 = vmatpush1.bf16.msra.mxu0 %v2213
        %3609 = vmatprep.subr.bf16.mxu0 %v2222
        %3610 = vmatpush1.bf16.msra.mxu0 %v2221
        %3611 = vmatprep.subr.bf16.mxu0 %v2230
        %3612 = vmatpush1.bf16.msra.mxu0 %v2229
        %3613 = vmatprep.subr.bf16.mxu0 %v2238
        %3614 = vmatpush1.bf16.msra.mxu0 %v2237
        %3615 = vmatprep.mubr.bf16.mxu0 %v3178
        %3616 = vmatmul.mubr.bf16.gmra.mrb[0].mxu0 %v3164
        %v3617 = vpop.f32.mrb[0].mxu0
        %v3618 = vadd.f32 0.0, %v3617
        %v3619 = vpop.f32.mrb[0].mxu0
        %v3620 = vadd.f32 0.0, %v3619
        %v3621 = vpop.f32.mrb[0].mxu0
        %v3622 = vpop.f32.mrb[0].mxu0
        %3623 = vdwg.mxu0
        %3624 = vmatprep.subr.bf16.mxu0 %v2246
        %3625 = vmatpush1.bf16.msra.mxu0 %v2245
        %3626 = vmatprep.subr.bf16.mxu0 %v2254
        %3627 = vmatpush1.bf16.msra.mxu0 %v2253
        %3628 = vmatprep.subr.bf16.mxu0 %v2262
        %3629 = vmatpush1.bf16.msra.mxu0 %v2261
        %3630 = vmatprep.subr.bf16.mxu0 %v2270
        %3631 = vmatpush1.bf16.msra.mxu0 %v2269
        %3632 = vmatprep.subr.bf16.mxu0 %v2278
        %3633 = vmatpush1.bf16.msra.mxu0 %v2277
        %3634 = vmatprep.subr.bf16.mxu0 %v2286
        %3635 = vmatpush1.bf16.msra.mxu0 %v2285
        %3636 = vmatprep.subr.bf16.mxu0 %v2294
        %3637 = vmatpush1.bf16.msra.mxu0 %v2293
        %3638 = vmatprep.subr.bf16.mxu0 %v2302
        %3639 = vmatpush1.bf16.msra.mxu0 %v2301
        %3640 = vmatprep.subr.bf16.mxu0 %v2310
        %3641 = vmatpush1.bf16.msra.mxu0 %v2309
        %3642 = vmatprep.subr.bf16.mxu0 %v2318
        %3643 = vmatpush1.bf16.msra.mxu0 %v2317
        %3644 = vmatprep.subr.bf16.mxu0 %v2326
        %3645 = vmatpush1.bf16.msra.mxu0 %v2325
        %3646 = vmatprep.subr.bf16.mxu0 %v2334
        %3647 = vmatpush1.bf16.msra.mxu0 %v2333
        %3648 = vmatprep.subr.bf16.mxu0 %v2342
        %3649 = vmatpush1.bf16.msra.mxu0 %v2341
        %3650 = vmatprep.subr.bf16.mxu0 %v2350
        %3651 = vmatpush1.bf16.msra.mxu0 %v2349
        %3652 = vmatprep.subr.bf16.mxu0 %v2358
        %3653 = vmatpush1.bf16.msra.mxu0 %v2357
        %3654 = vmatprep.subr.bf16.mxu0 %v2366
        %3655 = vmatpush1.bf16.msra.mxu0 %v2365
        %3656 = vmatprep.mubr.bf16.mxu0 %v3188
        %3657 = vmatmul.mubr.bf16.gmra.mrb[0].mxu0 %v3186
        %v3658 = vpop.f32.mrb[0].mxu0
        %v3659 = vadd.f32 %v3618, %v3658
        %v3660 = vpop.f32.mrb[0].mxu0
        %v3661 = vadd.f32 %v3620, %v3660
        %v3662 = vpop.f32.mrb[0].mxu0
        %v3663 = vpop.f32.mrb[0].mxu0
        %3664 = vdwg.mxu0
        %3665 = vmatprep.subr.bf16.mxu0 %v2374
        %3666 = vmatpush1.bf16.msra.mxu0 %v2373
        %3667 = vmatprep.subr.bf16.mxu0 %v2382
        %3668 = vmatpush1.bf16.msra.mxu0 %v2381
        %3669 = vmatprep.subr.bf16.mxu0 %v2390
        %3670 = vmatpush1.bf16.msra.mxu0 %v2389
        %3671 = vmatprep.subr.bf16.mxu0 %v2398
        %3672 = vmatpush1.bf16.msra.mxu0 %v2397
        %3673 = vmatprep.subr.bf16.mxu0 %v2406
        %3674 = vmatpush1.bf16.msra.mxu0 %v2405
        %3675 = vmatprep.subr.bf16.mxu0 %v2414
        %3676 = vmatpush1.bf16.msra.mxu0 %v2413
        %3677 = vmatprep.subr.bf16.mxu0 %v2422
        %3678 = vmatpush1.bf16.msra.mxu0 %v2421
        %3679 = vmatprep.subr.bf16.mxu0 %v2430
        %3680 = vmatpush1.bf16.msra.mxu0 %v2429
        %3681 = vmatprep.subr.bf16.mxu0 %v2438
        %3682 = vmatpush1.bf16.msra.mxu0 %v2437
        %3683 = vmatprep.subr.bf16.mxu0 %v2446
        %3684 = vmatpush1.bf16.msra.mxu0 %v2445
        %3685 = vmatprep.subr.bf16.mxu0 %v2454
        %3686 = vmatpush1.bf16.msra.mxu0 %v2453
        %3687 = vmatprep.subr.bf16.mxu0 %v2462
        %3688 = vmatpush1.bf16.msra.mxu0 %v2461
        %3689 = vmatprep.subr.bf16.mxu0 %v2470
        %3690 = vmatpush1.bf16.msra.mxu0 %v2469
        %3691 = vmatprep.subr.bf16.mxu0 %v2478
        %3692 = vmatpush1.bf16.msra.mxu0 %v2477
        %3693 = vmatprep.subr.bf16.mxu0 %v2486
        %3694 = vmatpush1.bf16.msra.mxu0 %v2485
        %3695 = vmatprep.subr.bf16.mxu0 %v2494
        %3696 = vmatpush1.bf16.msra.mxu0 %v2493
        %3697 = vmatprep.mubr.bf16.mxu0 %v3185
        %3698 = vmatmul.mubr.bf16.gmra.mrb[0].mxu0 %v3171
        %v3699 = vpop.f32.mrb[0].mxu0
        %v3700 = vadd.f32 %v3659, %v3699
        %v3701 = vpop.f32.mrb[0].mxu0
        %v3702 = vadd.f32 %v3661, %v3701
        %v3703 = vpop.f32.mrb[0].mxu0
        %v3704 = vpop.f32.mrb[0].mxu0
        %3705 = vdwg.mxu0
        %3706 = vmatprep.subr.bf16.mxu0 %v2502
        %3707 = vmatpush1.bf16.msra.mxu0 %v2501
        %3708 = vmatprep.subr.bf16.mxu0 %v2510
        %3709 = vmatpush1.bf16.msra.mxu0 %v2509
        %3710 = vmatprep.subr.bf16.mxu0 %v2518
        %3711 = vmatpush1.bf16.msra.mxu0 %v2517
        %3712 = vmatprep.subr.bf16.mxu0 %v2526
        %3713 = vmatpush1.bf16.msra.mxu0 %v2525
        %3714 = vmatprep.subr.bf16.mxu0 %v2534
        %3715 = vmatpush1.bf16.msra.mxu0 %v2533
        %3716 = vmatprep.subr.bf16.mxu0 %v2542
        %3717 = vmatpush1.bf16.msra.mxu0 %v2541
        %3718 = vmatprep.subr.bf16.mxu0 %v2550
        %3719 = vmatpush1.bf16.msra.mxu0 %v2549
        %3720 = vmatprep.subr.bf16.mxu0 %v2558
        %3721 = vmatpush1.bf16.msra.mxu0 %v2557
        %3722 = vmatprep.subr.bf16.mxu0 %v2566
        %3723 = vmatpush1.bf16.msra.mxu0 %v2565
        %3724 = vmatprep.subr.bf16.mxu0 %v2574
        %3725 = vmatpush1.bf16.msra.mxu0 %v2573
        %3726 = vmatprep.subr.bf16.mxu0 %v2582
        %3727 = vmatpush1.bf16.msra.mxu0 %v2581
        %3728 = vmatprep.subr.bf16.mxu0 %v2590
        %3729 = vmatpush1.bf16.msra.mxu0 %v2589
        %3730 = vmatprep.subr.bf16.mxu0 %v2598
        %3731 = vmatpush1.bf16.msra.mxu0 %v2597
        %3732 = vmatprep.subr.bf16.mxu0 %v2606
        %3733 = vmatpush1.bf16.msra.mxu0 %v2605
        %3734 = vmatprep.subr.bf16.mxu0 %v2614
        %3735 = vmatpush1.bf16.msra.mxu0 %v2613
        %3736 = vmatprep.subr.bf16.mxu0 %v2622
        %3737 = vmatpush1.bf16.msra.mxu0 %v2621
        %3738 = vmatprep.mubr.bf16.mxu0 %v3189
        %3739 = vmatmul.mubr.bf16.gmra.mrb[0].mxu0 %v3187
        %v3740 = vpop.f32.mrb[0].mxu0
        %v3741 = vadd.f32 %v3700, %v3740
        %v3742 = vpop.f32.mrb[0].mxu0
        %v3743 = vadd.f32 %v3702, %v3742
        %v3744 = vpop.f32.mrb[0].mxu0
        %v3745 = vpop.f32.mrb[0].mxu0
        %3746 = vdwg.mxu0
        %3747 = vmatprep.subr.bf16.mxu0 %v2630
        %3748 = vmatpush1.bf16.msra.mxu0 %v2629
        %3749 = vmatprep.subr.bf16.mxu0 %v2638
        %3750 = vmatpush1.bf16.msra.mxu0 %v2637
        %3751 = vmatprep.subr.bf16.mxu0 %v2646
        %3752 = vmatpush1.bf16.msra.mxu0 %v2645
        %3753 = vmatprep.subr.bf16.mxu0 %v2654
        %3754 = vmatpush1.bf16.msra.mxu0 %v2653
        %3755 = vmatprep.subr.bf16.mxu0 %v2662
        %3756 = vmatpush1.bf16.msra.mxu0 %v2661
        %3757 = vmatprep.subr.bf16.mxu0 %v2670
        %3758 = vmatpush1.bf16.msra.mxu0 %v2669
        %3759 = vmatprep.subr.bf16.mxu0 %v2678
        %3760 = vmatpush1.bf16.msra.mxu0 %v2677
        %3761 = vmatprep.subr.bf16.mxu0 %v2686
        %3762 = vmatpush1.bf16.msra.mxu0 %v2685
        %3763 = vmatprep.subr.bf16.mxu0 %v2694
        %3764 = vmatpush1.bf16.msra.mxu0 %v2693
        %3765 = vmatprep.subr.bf16.mxu0 %v2702
        %3766 = vmatpush1.bf16.msra.mxu0 %v2701
        %3767 = vmatprep.subr.bf16.mxu0 %v2710
        %3768 = vmatpush1.bf16.msra.mxu0 %v2709
        %3769 = vmatprep.subr.bf16.mxu0 %v2718
        %3770 = vmatpush1.bf16.msra.mxu0 %v2717
        %3771 = vmatprep.subr.bf16.mxu0 %v2726
        %3772 = vmatpush1.bf16.msra.mxu0 %v2725
        %3773 = vmatprep.subr.bf16.mxu0 %v2734
        %3774 = vmatpush1.bf16.msra.mxu0 %v2733
        %3775 = vmatprep.subr.bf16.mxu0 %v2742
        %3776 = vmatpush1.bf16.msra.mxu0 %v2741
        %3777 = vmatprep.subr.bf16.mxu0 %v2750
        %3778 = vmatpush1.bf16.msra.mxu0 %v2749
        %3779 = vmatprep.mubr.bf16.mxu0 %v3227
        %3780 = vmatmul.mubr.bf16.gmra.mrb[0].mxu0 %v3213
        %v3781 = vpop.f32.mrb[0].mxu0
        %v3782 = vadd.f32 %v3741, %v3781
        %v3783 = vpop.f32.mrb[0].mxu0
        %v3784 = vadd.f32 %v3743, %v3783
        %v3785 = vpop.f32.mrb[0].mxu0
        %v3786 = vpop.f32.mrb[0].mxu0
        %3787 = vdwg.mxu0
        %3788 = vmatprep.subr.bf16.mxu0 %v2758
        %3789 = vmatpush1.bf16.msra.mxu0 %v2757
        %3790 = vmatprep.subr.bf16.mxu0 %v2766
        %3791 = vmatpush1.bf16.msra.mxu0 %v2765
        %3792 = vmatprep.subr.bf16.mxu0 %v2774
        %3793 = vmatpush1.bf16.msra.mxu0 %v2773
        %3794 = vmatprep.subr.bf16.mxu0 %v2782
        %3795 = vmatpush1.bf16.msra.mxu0 %v2781
        %3796 = vmatprep.subr.bf16.mxu0 %v2790
        %3797 = vmatpush1.bf16.msra.mxu0 %v2789
        %3798 = vmatprep.subr.bf16.mxu0 %v2798
        %3799 = vmatpush1.bf16.msra.mxu0 %v2797
        %3800 = vmatprep.subr.bf16.mxu0 %v2806
        %3801 = vmatpush1.bf16.msra.mxu0 %v2805
        %3802 = vmatprep.subr.bf16.mxu0 %v2814
        %3803 = vmatpush1.bf16.msra.mxu0 %v2813
        %3804 = vmatprep.subr.bf16.mxu0 %v2822
        %3805 = vmatpush1.bf16.msra.mxu0 %v2821
        %3806 = vmatprep.subr.bf16.mxu0 %v2830
        %3807 = vmatpush1.bf16.msra.mxu0 %v2829
        %3808 = vmatprep.subr.bf16.mxu0 %v2838
        %3809 = vmatpush1.bf16.msra.mxu0 %v2837
        %3810 = vmatprep.subr.bf16.mxu0 %v2846
        %3811 = vmatpush1.bf16.msra.mxu0 %v2845
        %3812 = vmatprep.subr.bf16.mxu0 %v2854
        %3813 = vmatpush1.bf16.msra.mxu0 %v2853
        %3814 = vmatprep.subr.bf16.mxu0 %v2862
        %3815 = vmatpush1.bf16.msra.mxu0 %v2861
        %3816 = vmatprep.subr.bf16.mxu0 %v2870
        %3817 = vmatpush1.bf16.msra.mxu0 %v2869
        %3818 = vmatprep.subr.bf16.mxu0 %v2878
        %3819 = vmatpush1.bf16.msra.mxu0 %v2877
        %3820 = vmatprep.mubr.bf16.mxu0 %v3237
        %3821 = vmatmul.mubr.bf16.gmra.mrb[0].mxu0 %v3235
        %v3822 = vpop.f32.mrb[0].mxu0
        %v3823 = vadd.f32 %v3782, %v3822
        %v3824 = vpop.f32.mrb[0].mxu0
        %v3825 = vadd.f32 %v3784, %v3824
        %v3826 = vpop.f32.mrb[0].mxu0
        %v3827 = vpop.f32.mrb[0].mxu0
        %3828 = vdwg.mxu0
        %3829 = vmatprep.subr.bf16.mxu0 %v2886
        %3830 = vmatpush1.bf16.msra.mxu0 %v2885
        %3831 = vmatprep.subr.bf16.mxu0 %v2894
        %3832 = vmatpush1.bf16.msra.mxu0 %v2893
        %3833 = vmatprep.subr.bf16.mxu0 %v2902
        %3834 = vmatpush1.bf16.msra.mxu0 %v2901
        %3835 = vmatprep.subr.bf16.mxu0 %v2910
        %3836 = vmatpush1.bf16.msra.mxu0 %v2909
        %3837 = vmatprep.subr.bf16.mxu0 %v2918
        %3838 = vmatpush1.bf16.msra.mxu0 %v2917
        %3839 = vmatprep.subr.bf16.mxu0 %v2926
        %3840 = vmatpush1.bf16.msra.mxu0 %v2925
        %3841 = vmatprep.subr.bf16.mxu0 %v2934
        %3842 = vmatpush1.bf16.msra.mxu0 %v2933
        %3843 = vmatprep.subr.bf16.mxu0 %v2942
        %3844 = vmatpush1.bf16.msra.mxu0 %v2941
        %3845 = vmatprep.subr.bf16.mxu0 %v2950
        %3846 = vmatpush1.bf16.msra.mxu0 %v2949
        %3847 = vmatprep.subr.bf16.mxu0 %v2958
        %3848 = vmatpush1.bf16.msra.mxu0 %v2957
        %3849 = vmatprep.subr.bf16.mxu0 %v2966
        %3850 = vmatpush1.bf16.msra.mxu0 %v2965
        %3851 = vmatprep.subr.bf16.mxu0 %v2974
        %3852 = vmatpush1.bf16.msra.mxu0 %v2973
        %3853 = vmatprep.subr.bf16.mxu0 %v2982
        %3854 = vmatpush1.bf16.msra.mxu0 %v2981
        %3855 = vmatprep.subr.bf16.mxu0 %v2990
        %3856 = vmatpush1.bf16.msra.mxu0 %v2989
        %3857 = vmatprep.subr.bf16.mxu0 %v2998
        %3858 = vmatpush1.bf16.msra.mxu0 %v2997
        %3859 = vmatprep.subr.bf16.mxu0 %v3006
        %3860 = vmatpush1.bf16.msra.mxu0 %v3005
        %3861 = vmatprep.mubr.bf16.mxu0 %v3234
        %3862 = vmatmul.mubr.bf16.gmra.mrb[0].mxu0 %v3220
        %v3863 = vpop.f32.mrb[0].mxu0
        %v3864 = vadd.f32 %v3823, %v3863
        %v3865 = vpop.f32.mrb[0].mxu0
        %v3866 = vadd.f32 %v3825, %v3865
        %v3867 = vpop.f32.mrb[0].mxu0
        %v3868 = vpop.f32.mrb[0].mxu0
        %3869 = vdwg.mxu0
        %3870 = vmatprep.subr.bf16.mxu0 %v3014
        %3871 = vmatpush1.bf16.msra.mxu0 %v3013
        %3872 = vmatprep.subr.bf16.mxu0 %v3022
        %3873 = vmatpush1.bf16.msra.mxu0 %v3021
        %3874 = vmatprep.subr.bf16.mxu0 %v3030
        %3875 = vmatpush1.bf16.msra.mxu0 %v3029
        %3876 = vmatprep.subr.bf16.mxu0 %v3038
        %3877 = vmatpush1.bf16.msra.mxu0 %v3037
        %3878 = vmatprep.subr.bf16.mxu0 %v3046
        %3879 = vmatpush1.bf16.msra.mxu0 %v3045
        %3880 = vmatprep.subr.bf16.mxu0 %v3054
        %3881 = vmatpush1.bf16.msra.mxu0 %v3053
        %3882 = vmatprep.subr.bf16.mxu0 %v3062
        %3883 = vmatpush1.bf16.msra.mxu0 %v3061
        %3884 = vmatprep.subr.bf16.mxu0 %v3070
        %3885 = vmatpush1.bf16.msra.mxu0 %v3069
        %3886 = vmatprep.subr.bf16.mxu0 %v3078
        %3887 = vmatpush1.bf16.msra.mxu0 %v3077
        %3888 = vmatprep.subr.bf16.mxu0 %v3086
        %3889 = vmatpush1.bf16.msra.mxu0 %v3085
        %3890 = vmatprep.subr.bf16.mxu0 %v3094
        %3891 = vmatpush1.bf16.msra.mxu0 %v3093
        %3892 = vmatprep.subr.bf16.mxu0 %v3102
        %3893 = vmatpush1.bf16.msra.mxu0 %v3101
        %3894 = vmatprep.subr.bf16.mxu0 %v3110
        %3895 = vmatpush1.bf16.msra.mxu0 %v3109
        %3896 = vmatprep.subr.bf16.mxu0 %v3118
        %3897 = vmatpush1.bf16.msra.mxu0 %v3117
        %3898 = vmatprep.subr.bf16.mxu0 %v3126
        %3899 = vmatpush1.bf16.msra.mxu0 %v3125
        %3900 = vmatprep.subr.bf16.mxu0 %v3134
        %3901 = vmatpush1.bf16.msra.mxu0 %v3133
        %3902 = vmatprep.mubr.bf16.mxu0 %v3238
        %3903 = vmatmul.mubr.bf16.gmra.mrb[0].mxu0 %v3236
        %v3904 = vpop.f32.mrb[0].mxu0
        %v3905 = vadd.f32 %v3864, %v3904
        %v3906 = vpop.f32.mrb[0].mxu0
        %v3907 = vadd.f32 %v3866, %v3906
        %v3908 = vpop.f32.mrb[0].mxu0
        %v3909 = vpop.f32.mrb[0].mxu0
        %3910 = vdwg.mxu0
        %3911 = vmatprep.subr.bf16.mxu0 %v2120
        %3912 = vmatpush1.bf16.msra.mxu0 %v2119
        %3913 = vmatprep.subr.bf16.mxu0 %v2128
        %3914 = vmatpush1.bf16.msra.mxu0 %v2127
        %3915 = vmatprep.subr.bf16.mxu0 %v2136
        %3916 = vmatpush1.bf16.msra.mxu0 %v2135
        %3917 = vmatprep.subr.bf16.mxu0 %v2144
        %3918 = vmatpush1.bf16.msra.mxu0 %v2143
        %3919 = vmatprep.subr.bf16.mxu0 %v2152
        %3920 = vmatpush1.bf16.msra.mxu0 %v2151
        %3921 = vmatprep.subr.bf16.mxu0 %v2160
        %3922 = vmatpush1.bf16.msra.mxu0 %v2159
        %3923 = vmatprep.subr.bf16.mxu0 %v2168
        %3924 = vmatpush1.bf16.msra.mxu0 %v2167
        %3925 = vmatprep.subr.bf16.mxu0 %v2176
        %3926 = vmatpush1.bf16.msra.mxu0 %v2175
        %3927 = vmatprep.subr.bf16.mxu0 %v2184
        %3928 = vmatpush1.bf16.msra.mxu0 %v2183
        %3929 = vmatprep.subr.bf16.mxu0 %v2192
        %3930 = vmatpush1.bf16.msra.mxu0 %v2191
        %3931 = vmatprep.subr.bf16.mxu0 %v2200
        %3932 = vmatpush1.bf16.msra.mxu0 %v2199
        %3933 = vmatprep.subr.bf16.mxu0 %v2208
        %3934 = vmatpush1.bf16.msra.mxu0 %v2207
        %3935 = vmatprep.subr.bf16.mxu0 %v2216
        %3936 = vmatpush1.bf16.msra.mxu0 %v2215
        %3937 = vmatprep.subr.bf16.mxu0 %v2224
        %3938 = vmatpush1.bf16.msra.mxu0 %v2223
        %3939 = vmatprep.subr.bf16.mxu0 %v2232
        %3940 = vmatpush1.bf16.msra.mxu0 %v2231
        %3941 = vmatprep.subr.bf16.mxu0 %v2240
        %3942 = vmatpush1.bf16.msra.mxu0 %v2239
        %3943 = vmatprep.mubr.bf16.mxu0 %v3178
        %3944 = vmatmul.mubr.bf16.gmra.mrb[0].mxu0 %v3164
        %v3945 = vpop.f32.mrb[0].mxu0
        %v3946 = vadd.f32 0.0, %v3945
        %v3947 = vpop.f32.mrb[0].mxu0
        %v3948 = vadd.f32 0.0, %v3947
        %v3949 = vpop.f32.mrb[0].mxu0
        %v3950 = vpop.f32.mrb[0].mxu0
        %3951 = vdwg.mxu0
        %3952 = vmatprep.subr.bf16.mxu0 %v2248
        %3953 = vmatpush1.bf16.msra.mxu0 %v2247
        %3954 = vmatprep.subr.bf16.mxu0 %v2256
        %3955 = vmatpush1.bf16.msra.mxu0 %v2255
        %3956 = vmatprep.subr.bf16.mxu0 %v2264
        %3957 = vmatpush1.bf16.msra.mxu0 %v2263
        %3958 = vmatprep.subr.bf16.mxu0 %v2272
        %3959 = vmatpush1.bf16.msra.mxu0 %v2271
        %3960 = vmatprep.subr.bf16.mxu0 %v2280
        %3961 = vmatpush1.bf16.msra.mxu0 %v2279
        %3962 = vmatprep.subr.bf16.mxu0 %v2288
        %3963 = vmatpush1.bf16.msra.mxu0 %v2287
        %3964 = vmatprep.subr.bf16.mxu0 %v2296
        %3965 = vmatpush1.bf16.msra.mxu0 %v2295
        %3966 = vmatprep.subr.bf16.mxu0 %v2304
        %3967 = vmatpush1.bf16.msra.mxu0 %v2303
        %3968 = vmatprep.subr.bf16.mxu0 %v2312
        %3969 = vmatpush1.bf16.msra.mxu0 %v2311
        %3970 = vmatprep.subr.bf16.mxu0 %v2320
        %3971 = vmatpush1.bf16.msra.mxu0 %v2319
        %3972 = vmatprep.subr.bf16.mxu0 %v2328
        %3973 = vmatpush1.bf16.msra.mxu0 %v2327
        %3974 = vmatprep.subr.bf16.mxu0 %v2336
        %3975 = vmatpush1.bf16.msra.mxu0 %v2335
        %3976 = vmatprep.subr.bf16.mxu0 %v2344
        %3977 = vmatpush1.bf16.msra.mxu0 %v2343
        %3978 = vmatprep.subr.bf16.mxu0 %v2352
        %3979 = vmatpush1.bf16.msra.mxu0 %v2351
        %3980 = vmatprep.subr.bf16.mxu0 %v2360
        %3981 = vmatpush1.bf16.msra.mxu0 %v2359
        %3982 = vmatprep.subr.bf16.mxu0 %v2368
        %3983 = vmatpush1.bf16.msra.mxu0 %v2367
        %3984 = vmatprep.mubr.bf16.mxu0 %v3188
        %3985 = vmatmul.mubr.bf16.gmra.mrb[0].mxu0 %v3186
        %v3986 = vpop.f32.mrb[0].mxu0
        %v3987 = vadd.f32 %v3946, %v3986
        %v3988 = vpop.f32.mrb[0].mxu0
        %v3989 = vadd.f32 %v3948, %v3988
        %v3990 = vpop.f32.mrb[0].mxu0
        %v3991 = vpop.f32.mrb[0].mxu0
        %3992 = vdwg.mxu0
        %3993 = vmatprep.subr.bf16.mxu0 %v2376
        %3994 = vmatpush1.bf16.msra.mxu0 %v2375
        %3995 = vmatprep.subr.bf16.mxu0 %v2384
        %3996 = vmatpush1.bf16.msra.mxu0 %v2383
        %3997 = vmatprep.subr.bf16.mxu0 %v2392
        %3998 = vmatpush1.bf16.msra.mxu0 %v2391
        %3999 = vmatprep.subr.bf16.mxu0 %v2400
        %4000 = vmatpush1.bf16.msra.mxu0 %v2399
        %4001 = vmatprep.subr.bf16.mxu0 %v2408
        %4002 = vmatpush1.bf16.msra.mxu0 %v2407
        %4003 = vmatprep.subr.bf16.mxu0 %v2416
        %4004 = vmatpush1.bf16.msra.mxu0 %v2415
        %4005 = vmatprep.subr.bf16.mxu0 %v2424
        %4006 = vmatpush1.bf16.msra.mxu0 %v2423
        %4007 = vmatprep.subr.bf16.mxu0 %v2432
        %4008 = vmatpush1.bf16.msra.mxu0 %v2431
        %4009 = vmatprep.subr.bf16.mxu0 %v2440
        %4010 = vmatpush1.bf16.msra.mxu0 %v2439
        %4011 = vmatprep.subr.bf16.mxu0 %v2448
        %4012 = vmatpush1.bf16.msra.mxu0 %v2447
        %4013 = vmatprep.subr.bf16.mxu0 %v2456
        %4014 = vmatpush1.bf16.msra.mxu0 %v2455
        %4015 = vmatprep.subr.bf16.mxu0 %v2464
        %4016 = vmatpush1.bf16.msra.mxu0 %v2463
        %4017 = vmatprep.subr.bf16.mxu0 %v2472
        %4018 = vmatpush1.bf16.msra.mxu0 %v2471
        %4019 = vmatprep.subr.bf16.mxu0 %v2480
        %4020 = vmatpush1.bf16.msra.mxu0 %v2479
        %4021 = vmatprep.subr.bf16.mxu0 %v2488
        %4022 = vmatpush1.bf16.msra.mxu0 %v2487
        %4023 = vmatprep.subr.bf16.mxu0 %v2496
        %4024 = vmatpush1.bf16.msra.mxu0 %v2495
        %4025 = vmatprep.mubr.bf16.mxu0 %v3185
        %4026 = vmatmul.mubr.bf16.gmra.mrb[0].mxu0 %v3171
        %v4027 = vpop.f32.mrb[0].mxu0
        %v4028 = vadd.f32 %v3987, %v4027
        %v4029 = vpop.f32.mrb[0].mxu0
        %v4030 = vadd.f32 %v3989, %v4029
        %v4031 = vpop.f32.mrb[0].mxu0
        %v4032 = vpop.f32.mrb[0].mxu0
        %4033 = vdwg.mxu0
        %4034 = vmatprep.subr.bf16.mxu0 %v2504
        %4035 = vmatpush1.bf16.msra.mxu0 %v2503
        %4036 = vmatprep.subr.bf16.mxu0 %v2512
        %4037 = vmatpush1.bf16.msra.mxu0 %v2511
        %4038 = vmatprep.subr.bf16.mxu0 %v2520
        %4039 = vmatpush1.bf16.msra.mxu0 %v2519
        %4040 = vmatprep.subr.bf16.mxu0 %v2528
        %4041 = vmatpush1.bf16.msra.mxu0 %v2527
        %4042 = vmatprep.subr.bf16.mxu0 %v2536
        %4043 = vmatpush1.bf16.msra.mxu0 %v2535
        %4044 = vmatprep.subr.bf16.mxu0 %v2544
        %4045 = vmatpush1.bf16.msra.mxu0 %v2543
        %4046 = vmatprep.subr.bf16.mxu0 %v2552
        %4047 = vmatpush1.bf16.msra.mxu0 %v2551
        %4048 = vmatprep.subr.bf16.mxu0 %v2560
        %4049 = vmatpush1.bf16.msra.mxu0 %v2559
        %4050 = vmatprep.subr.bf16.mxu0 %v2568
        %4051 = vmatpush1.bf16.msra.mxu0 %v2567
        %4052 = vmatprep.subr.bf16.mxu0 %v2576
        %4053 = vmatpush1.bf16.msra.mxu0 %v2575
        %4054 = vmatprep.subr.bf16.mxu0 %v2584
        %4055 = vmatpush1.bf16.msra.mxu0 %v2583
        %4056 = vmatprep.subr.bf16.mxu0 %v2592
        %4057 = vmatpush1.bf16.msra.mxu0 %v2591
        %4058 = vmatprep.subr.bf16.mxu0 %v2600
        %4059 = vmatpush1.bf16.msra.mxu0 %v2599
        %4060 = vmatprep.subr.bf16.mxu0 %v2608
        %4061 = vmatpush1.bf16.msra.mxu0 %v2607
        %4062 = vmatprep.subr.bf16.mxu0 %v2616
        %4063 = vmatpush1.bf16.msra.mxu0 %v2615
        %4064 = vmatprep.subr.bf16.mxu0 %v2624
        %4065 = vmatpush1.bf16.msra.mxu0 %v2623
        %4066 = vmatprep.mubr.bf16.mxu0 %v3189
        %4067 = vmatmul.mubr.bf16.gmra.mrb[0].mxu0 %v3187
        %v4068 = vpop.f32.mrb[0].mxu0
        %v4069 = vadd.f32 %v4028, %v4068
        %v4070 = vpop.f32.mrb[0].mxu0
        %v4071 = vadd.f32 %v4030, %v4070
        %v4072 = vpop.f32.mrb[0].mxu0
        %v4073 = vpop.f32.mrb[0].mxu0
        %4074 = vdwg.mxu0
        %4075 = vmatprep.subr.bf16.mxu0 %v2632
        %4076 = vmatpush1.bf16.msra.mxu0 %v2631
        %4077 = vmatprep.subr.bf16.mxu0 %v2640
        %4078 = vmatpush1.bf16.msra.mxu0 %v2639
        %4079 = vmatprep.subr.bf16.mxu0 %v2648
        %4080 = vmatpush1.bf16.msra.mxu0 %v2647
        %4081 = vmatprep.subr.bf16.mxu0 %v2656
        %4082 = vmatpush1.bf16.msra.mxu0 %v2655
        %4083 = vmatprep.subr.bf16.mxu0 %v2664
        %4084 = vmatpush1.bf16.msra.mxu0 %v2663
        %4085 = vmatprep.subr.bf16.mxu0 %v2672
        %4086 = vmatpush1.bf16.msra.mxu0 %v2671
        %4087 = vmatprep.subr.bf16.mxu0 %v2680
        %4088 = vmatpush1.bf16.msra.mxu0 %v2679
        %4089 = vmatprep.subr.bf16.mxu0 %v2688
        %4090 = vmatpush1.bf16.msra.mxu0 %v2687
        %4091 = vmatprep.subr.bf16.mxu0 %v2696
        %4092 = vmatpush1.bf16.msra.mxu0 %v2695
        %4093 = vmatprep.subr.bf16.mxu0 %v2704
        %4094 = vmatpush1.bf16.msra.mxu0 %v2703
        %4095 = vmatprep.subr.bf16.mxu0 %v2712
        %4096 = vmatpush1.bf16.msra.mxu0 %v2711
        %4097 = vmatprep.subr.bf16.mxu0 %v2720
        %4098 = vmatpush1.bf16.msra.mxu0 %v2719
        %4099 = vmatprep.subr.bf16.mxu0 %v2728
        %4100 = vmatpush1.bf16.msra.mxu0 %v2727
        %4101 = vmatprep.subr.bf16.mxu0 %v2736
        %4102 = vmatpush1.bf16.msra.mxu0 %v2735
        %4103 = vmatprep.subr.bf16.mxu0 %v2744
        %4104 = vmatpush1.bf16.msra.mxu0 %v2743
        %4105 = vmatprep.subr.bf16.mxu0 %v2752
        %4106 = vmatpush1.bf16.msra.mxu0 %v2751
        %4107 = vmatprep.mubr.bf16.mxu0 %v3227
        %4108 = vmatmul.mubr.bf16.gmra.mrb[0].mxu0 %v3213
        %v4109 = vpop.f32.mrb[0].mxu0
        %v4110 = vadd.f32 %v4069, %v4109
        %v4111 = vpop.f32.mrb[0].mxu0
        %v4112 = vadd.f32 %v4071, %v4111
        %v4113 = vpop.f32.mrb[0].mxu0
        %v4114 = vpop.f32.mrb[0].mxu0
        %4115 = vdwg.mxu0
        %4116 = vmatprep.subr.bf16.mxu0 %v2760
        %4117 = vmatpush1.bf16.msra.mxu0 %v2759
        %4118 = vmatprep.subr.bf16.mxu0 %v2768
        %4119 = vmatpush1.bf16.msra.mxu0 %v2767
        %4120 = vmatprep.subr.bf16.mxu0 %v2776
        %4121 = vmatpush1.bf16.msra.mxu0 %v2775
        %4122 = vmatprep.subr.bf16.mxu0 %v2784
        %4123 = vmatpush1.bf16.msra.mxu0 %v2783
        %4124 = vmatprep.subr.bf16.mxu0 %v2792
        %4125 = vmatpush1.bf16.msra.mxu0 %v2791
        %4126 = vmatprep.subr.bf16.mxu0 %v2800
        %4127 = vmatpush1.bf16.msra.mxu0 %v2799
        %4128 = vmatprep.subr.bf16.mxu0 %v2808
        %4129 = vmatpush1.bf16.msra.mxu0 %v2807
        %4130 = vmatprep.subr.bf16.mxu0 %v2816
        %4131 = vmatpush1.bf16.msra.mxu0 %v2815
        %4132 = vmatprep.subr.bf16.mxu0 %v2824
        %4133 = vmatpush1.bf16.msra.mxu0 %v2823
        %4134 = vmatprep.subr.bf16.mxu0 %v2832
        %4135 = vmatpush1.bf16.msra.mxu0 %v2831
        %4136 = vmatprep.subr.bf16.mxu0 %v2840
        %4137 = vmatpush1.bf16.msra.mxu0 %v2839
        %4138 = vmatprep.subr.bf16.mxu0 %v2848
        %4139 = vmatpush1.bf16.msra.mxu0 %v2847
        %4140 = vmatprep.subr.bf16.mxu0 %v2856
        %4141 = vmatpush1.bf16.msra.mxu0 %v2855
        %4142 = vmatprep.subr.bf16.mxu0 %v2864
        %4143 = vmatpush1.bf16.msra.mxu0 %v2863
        %4144 = vmatprep.subr.bf16.mxu0 %v2872
        %4145 = vmatpush1.bf16.msra.mxu0 %v2871
        %4146 = vmatprep.subr.bf16.mxu0 %v2880
        %4147 = vmatpush1.bf16.msra.mxu0 %v2879
        %4148 = vmatprep.mubr.bf16.mxu0 %v3237
        %4149 = vmatmul.mubr.bf16.gmra.mrb[0].mxu0 %v3235
        %v4150 = vpop.f32.mrb[0].mxu0
        %v4151 = vadd.f32 %v4110, %v4150
        %v4152 = vpop.f32.mrb[0].mxu0
        %v4153 = vadd.f32 %v4112, %v4152
        %v4154 = vpop.f32.mrb[0].mxu0
        %v4155 = vpop.f32.mrb[0].mxu0
        %4156 = vdwg.mxu0
        %4157 = vmatprep.subr.bf16.mxu0 %v2888
        %4158 = vmatpush1.bf16.msra.mxu0 %v2887
        %4159 = vmatprep.subr.bf16.mxu0 %v2896
        %4160 = vmatpush1.bf16.msra.mxu0 %v2895
        %4161 = vmatprep.subr.bf16.mxu0 %v2904
        %4162 = vmatpush1.bf16.msra.mxu0 %v2903
        %4163 = vmatprep.subr.bf16.mxu0 %v2912
        %4164 = vmatpush1.bf16.msra.mxu0 %v2911
        %4165 = vmatprep.subr.bf16.mxu0 %v2920
        %4166 = vmatpush1.bf16.msra.mxu0 %v2919
        %4167 = vmatprep.subr.bf16.mxu0 %v2928
        %4168 = vmatpush1.bf16.msra.mxu0 %v2927
        %4169 = vmatprep.subr.bf16.mxu0 %v2936
        %4170 = vmatpush1.bf16.msra.mxu0 %v2935
        %4171 = vmatprep.subr.bf16.mxu0 %v2944
        %4172 = vmatpush1.bf16.msra.mxu0 %v2943
        %4173 = vmatprep.subr.bf16.mxu0 %v2952
        %4174 = vmatpush1.bf16.msra.mxu0 %v2951
        %4175 = vmatprep.subr.bf16.mxu0 %v2960
        %4176 = vmatpush1.bf16.msra.mxu0 %v2959
        %4177 = vmatprep.subr.bf16.mxu0 %v2968
        %4178 = vmatpush1.bf16.msra.mxu0 %v2967
        %4179 = vmatprep.subr.bf16.mxu0 %v2976
        %4180 = vmatpush1.bf16.msra.mxu0 %v2975
        %4181 = vmatprep.subr.bf16.mxu0 %v2984
        %4182 = vmatpush1.bf16.msra.mxu0 %v2983
        %4183 = vmatprep.subr.bf16.mxu0 %v2992
        %4184 = vmatpush1.bf16.msra.mxu0 %v2991
        %4185 = vmatprep.subr.bf16.mxu0 %v3000
        %4186 = vmatpush1.bf16.msra.mxu0 %v2999
        %4187 = vmatprep.subr.bf16.mxu0 %v3008
        %4188 = vmatpush1.bf16.msra.mxu0 %v3007
        %4189 = vmatprep.mubr.bf16.mxu0 %v3234
        %4190 = vmatmul.mubr.bf16.gmra.mrb[0].mxu0 %v3220
        %v4191 = vpop.f32.mrb[0].mxu0
        %v4192 = vadd.f32 %v4151, %v4191
        %v4193 = vpop.f32.mrb[0].mxu0
        %v4194 = vadd.f32 %v4153, %v4193
        %v4195 = vpop.f32.mrb[0].mxu0
        %v4196 = vpop.f32.mrb[0].mxu0
        %4197 = vdwg.mxu0
        %4198 = vmatprep.subr.bf16.mxu0 %v3016
        %4199 = vmatpush1.bf16.msra.mxu0 %v3015
        %4200 = vmatprep.subr.bf16.mxu0 %v3024
        %4201 = vmatpush1.bf16.msra.mxu0 %v3023
        %4202 = vmatprep.subr.bf16.mxu0 %v3032
        %4203 = vmatpush1.bf16.msra.mxu0 %v3031
        %4204 = vmatprep.subr.bf16.mxu0 %v3040
        %4205 = vmatpush1.bf16.msra.mxu0 %v3039
        %4206 = vmatprep.subr.bf16.mxu0 %v3048
        %4207 = vmatpush1.bf16.msra.mxu0 %v3047
        %4208 = vmatprep.subr.bf16.mxu0 %v3056
        %4209 = vmatpush1.bf16.msra.mxu0 %v3055
        %4210 = vmatprep.subr.bf16.mxu0 %v3064
        %4211 = vmatpush1.bf16.msra.mxu0 %v3063
        %4212 = vmatprep.subr.bf16.mxu0 %v3072
        %4213 = vmatpush1.bf16.msra.mxu0 %v3071
        %4214 = vmatprep.subr.bf16.mxu0 %v3080
        %4215 = vmatpush1.bf16.msra.mxu0 %v3079
        %4216 = vmatprep.subr.bf16.mxu0 %v3088
        %4217 = vmatpush1.bf16.msra.mxu0 %v3087
        %4218 = vmatprep.subr.bf16.mxu0 %v3096
        %4219 = vmatpush1.bf16.msra.mxu0 %v3095
        %4220 = vmatprep.subr.bf16.mxu0 %v3104
        %4221 = vmatpush1.bf16.msra.mxu0 %v3103
        %4222 = vmatprep.subr.bf16.mxu0 %v3112
        %4223 = vmatpush1.bf16.msra.mxu0 %v3111
        %4224 = vmatprep.subr.bf16.mxu0 %v3120
        %4225 = vmatpush1.bf16.msra.mxu0 %v3119
        %4226 = vmatprep.subr.bf16.mxu0 %v3128
        %4227 = vmatpush1.bf16.msra.mxu0 %v3127
        %4228 = vmatprep.subr.bf16.mxu0 %v3136
        %4229 = vmatpush1.bf16.msra.mxu0 %v3135
        %4230 = vmatprep.mubr.bf16.mxu0 %v3238
        %4231 = vmatmul.mubr.bf16.gmra.mrb[0].mxu0 %v3236
        %v4232 = vpop.f32.mrb[0].mxu0
        %v4233 = vadd.f32 %v4192, %v4232
        %v4234 = vpop.f32.mrb[0].mxu0
        %v4235 = vadd.f32 %v4194, %v4234
        %v4236 = vpop.f32.mrb[0].mxu0
        %v4237 = vpop.f32.mrb[0].mxu0
        %4238 = vdwg.mxu0
        %4239 = vmatprep.subr.bf16.mxu0 %v2122
        %4240 = vmatpush1.bf16.msra.mxu0 %v2121
        %4241 = vmatprep.subr.bf16.mxu0 %v2130
        %4242 = vmatpush1.bf16.msra.mxu0 %v2129
        %4243 = vmatprep.subr.bf16.mxu0 %v2138
        %4244 = vmatpush1.bf16.msra.mxu0 %v2137
        %4245 = vmatprep.subr.bf16.mxu0 %v2146
        %4246 = vmatpush1.bf16.msra.mxu0 %v2145
        %4247 = vmatprep.subr.bf16.mxu0 %v2154
        %4248 = vmatpush1.bf16.msra.mxu0 %v2153
        %4249 = vmatprep.subr.bf16.mxu0 %v2162
        %4250 = vmatpush1.bf16.msra.mxu0 %v2161
        %4251 = vmatprep.subr.bf16.mxu0 %v2170
        %4252 = vmatpush1.bf16.msra.mxu0 %v2169
        %4253 = vmatprep.subr.bf16.mxu0 %v2178
        %4254 = vmatpush1.bf16.msra.mxu0 %v2177
        %4255 = vmatprep.subr.bf16.mxu0 %v2186
        %4256 = vmatpush1.bf16.msra.mxu0 %v2185
        %4257 = vmatprep.subr.bf16.mxu0 %v2194
        %4258 = vmatpush1.bf16.msra.mxu0 %v2193
        %4259 = vmatprep.subr.bf16.mxu0 %v2202
        %4260 = vmatpush1.bf16.msra.mxu0 %v2201
        %4261 = vmatprep.subr.bf16.mxu0 %v2210
        %4262 = vmatpush1.bf16.msra.mxu0 %v2209
        %4263 = vmatprep.subr.bf16.mxu0 %v2218
        %4264 = vmatpush1.bf16.msra.mxu0 %v2217
        %4265 = vmatprep.subr.bf16.mxu0 %v2226
        %4266 = vmatpush1.bf16.msra.mxu0 %v2225
        %4267 = vmatprep.subr.bf16.mxu0 %v2234
        %4268 = vmatpush1.bf16.msra.mxu0 %v2233
        %4269 = vmatprep.subr.bf16.mxu0 %v2242
        %4270 = vmatpush1.bf16.msra.mxu0 %v2241
        %4271 = vmatprep.mubr.bf16.mxu0 %v3178
        %4272 = vmatmul.mubr.bf16.gmra.mrb[0].mxu0 %v3164
        %v4273 = vpop.f32.mrb[0].mxu0
        %v4274 = vadd.f32 0.0, %v4273
        %v4275 = vpop.f32.mrb[0].mxu0
        %v4276 = vadd.f32 0.0, %v4275
        %v4277 = vpop.f32.mrb[0].mxu0
        %v4278 = vpop.f32.mrb[0].mxu0
        %4279 = vdwg.mxu0
        %4280 = vmatprep.subr.bf16.mxu0 %v2250
        %4281 = vmatpush1.bf16.msra.mxu0 %v2249
        %4282 = vmatprep.subr.bf16.mxu0 %v2258
        %4283 = vmatpush1.bf16.msra.mxu0 %v2257
        %4284 = vmatprep.subr.bf16.mxu0 %v2266
        %4285 = vmatpush1.bf16.msra.mxu0 %v2265
        %4286 = vmatprep.subr.bf16.mxu0 %v2274
        %4287 = vmatpush1.bf16.msra.mxu0 %v2273
        %4288 = vmatprep.subr.bf16.mxu0 %v2282
        %4289 = vmatpush1.bf16.msra.mxu0 %v2281
        %4290 = vmatprep.subr.bf16.mxu0 %v2290
        %4291 = vmatpush1.bf16.msra.mxu0 %v2289
        %4292 = vmatprep.subr.bf16.mxu0 %v2298
        %4293 = vmatpush1.bf16.msra.mxu0 %v2297
        %4294 = vmatprep.subr.bf16.mxu0 %v2306
        %4295 = vmatpush1.bf16.msra.mxu0 %v2305
        %4296 = vmatprep.subr.bf16.mxu0 %v2314
        %4297 = vmatpush1.bf16.msra.mxu0 %v2313
        %4298 = vmatprep.subr.bf16.mxu0 %v2322
        %4299 = vmatpush1.bf16.msra.mxu0 %v2321
        %4300 = vmatprep.subr.bf16.mxu0 %v2330
        %4301 = vmatpush1.bf16.msra.mxu0 %v2329
        %4302 = vmatprep.subr.bf16.mxu0 %v2338
        %4303 = vmatpush1.bf16.msra.mxu0 %v2337
        %4304 = vmatprep.subr.bf16.mxu0 %v2346
        %4305 = vmatpush1.bf16.msra.mxu0 %v2345
        %4306 = vmatprep.subr.bf16.mxu0 %v2354
        %4307 = vmatpush1.bf16.msra.mxu0 %v2353
        %4308 = vmatprep.subr.bf16.mxu0 %v2362
        %4309 = vmatpush1.bf16.msra.mxu0 %v2361
        %4310 = vmatprep.subr.bf16.mxu0 %v2370
        %4311 = vmatpush1.bf16.msra.mxu0 %v2369
        %4312 = vmatprep.mubr.bf16.mxu0 %v3188
        %4313 = vmatmul.mubr.bf16.gmra.mrb[0].mxu0 %v3186
        %v4314 = vpop.f32.mrb[0].mxu0
        %v4315 = vadd.f32 %v4274, %v4314
        %v4316 = vpop.f32.mrb[0].mxu0
        %v4317 = vadd.f32 %v4276, %v4316
        %v4318 = vpop.f32.mrb[0].mxu0
        %v4319 = vpop.f32.mrb[0].mxu0
        %4320 = vdwg.mxu0
        %4321 = vmatprep.subr.bf16.mxu0 %v2378
        %4322 = vmatpush1.bf16.msra.mxu0 %v2377
        %4323 = vmatprep.subr.bf16.mxu0 %v2386
        %4324 = vmatpush1.bf16.msra.mxu0 %v2385
        %4325 = vmatprep.subr.bf16.mxu0 %v2394
        %4326 = vmatpush1.bf16.msra.mxu0 %v2393
        %4327 = vmatprep.subr.bf16.mxu0 %v2402
        %4328 = vmatpush1.bf16.msra.mxu0 %v2401
        %4329 = vmatprep.subr.bf16.mxu0 %v2410
        %4330 = vmatpush1.bf16.msra.mxu0 %v2409
        %4331 = vmatprep.subr.bf16.mxu0 %v2418
        %4332 = vmatpush1.bf16.msra.mxu0 %v2417
        %4333 = vmatprep.subr.bf16.mxu0 %v2426
        %4334 = vmatpush1.bf16.msra.mxu0 %v2425
        %4335 = vmatprep.subr.bf16.mxu0 %v2434
        %4336 = vmatpush1.bf16.msra.mxu0 %v2433
        %4337 = vmatprep.subr.bf16.mxu0 %v2442
        %4338 = vmatpush1.bf16.msra.mxu0 %v2441
        %4339 = vmatprep.subr.bf16.mxu0 %v2450
        %4340 = vmatpush1.bf16.msra.mxu0 %v2449
        %4341 = vmatprep.subr.bf16.mxu0 %v2458
        %4342 = vmatpush1.bf16.msra.mxu0 %v2457
        %4343 = vmatprep.subr.bf16.mxu0 %v2466
        %4344 = vmatpush1.bf16.msra.mxu0 %v2465
        %4345 = vmatprep.subr.bf16.mxu0 %v2474
        %4346 = vmatpush1.bf16.msra.mxu0 %v2473
        %4347 = vmatprep.subr.bf16.mxu0 %v2482
        %4348 = vmatpush1.bf16.msra.mxu0 %v2481
        %4349 = vmatprep.subr.bf16.mxu0 %v2490
        %4350 = vmatpush1.bf16.msra.mxu0 %v2489
        %4351 = vmatprep.subr.bf16.mxu0 %v2498
        %4352 = vmatpush1.bf16.msra.mxu0 %v2497
        %4353 = vmatprep.mubr.bf16.mxu0 %v3185
        %4354 = vmatmul.mubr.bf16.gmra.mrb[0].mxu0 %v3171
        %v4355 = vpop.f32.mrb[0].mxu0
        %v4356 = vadd.f32 %v4315, %v4355
        %v4357 = vpop.f32.mrb[0].mxu0
        %v4358 = vadd.f32 %v4317, %v4357
        %v4359 = vpop.f32.mrb[0].mxu0
        %v4360 = vpop.f32.mrb[0].mxu0
        %4361 = vdwg.mxu0
        %4362 = vmatprep.subr.bf16.mxu0 %v2506
        %4363 = vmatpush1.bf16.msra.mxu0 %v2505
        %4364 = vmatprep.subr.bf16.mxu0 %v2514
        %4365 = vmatpush1.bf16.msra.mxu0 %v2513
        %4366 = vmatprep.subr.bf16.mxu0 %v2522
        %4367 = vmatpush1.bf16.msra.mxu0 %v2521
        %4368 = vmatprep.subr.bf16.mxu0 %v2530
        %4369 = vmatpush1.bf16.msra.mxu0 %v2529
        %4370 = vmatprep.subr.bf16.mxu0 %v2538
        %4371 = vmatpush1.bf16.msra.mxu0 %v2537
        %4372 = vmatprep.subr.bf16.mxu0 %v2546
        %4373 = vmatpush1.bf16.msra.mxu0 %v2545
        %4374 = vmatprep.subr.bf16.mxu0 %v2554
        %4375 = vmatpush1.bf16.msra.mxu0 %v2553
        %4376 = vmatprep.subr.bf16.mxu0 %v2562
        %4377 = vmatpush1.bf16.msra.mxu0 %v2561
        %4378 = vmatprep.subr.bf16.mxu0 %v2570
        %4379 = vmatpush1.bf16.msra.mxu0 %v2569
        %4380 = vmatprep.subr.bf16.mxu0 %v2578
        %4381 = vmatpush1.bf16.msra.mxu0 %v2577
        %4382 = vmatprep.subr.bf16.mxu0 %v2586
        %4383 = vmatpush1.bf16.msra.mxu0 %v2585
        %4384 = vmatprep.subr.bf16.mxu0 %v2594
        %4385 = vmatpush1.bf16.msra.mxu0 %v2593
        %4386 = vmatprep.subr.bf16.mxu0 %v2602
        %4387 = vmatpush1.bf16.msra.mxu0 %v2601
        %4388 = vmatprep.subr.bf16.mxu0 %v2610
        %4389 = vmatpush1.bf16.msra.mxu0 %v2609
        %4390 = vmatprep.subr.bf16.mxu0 %v2618
        %4391 = vmatpush1.bf16.msra.mxu0 %v2617
        %4392 = vmatprep.subr.bf16.mxu0 %v2626
        %4393 = vmatpush1.bf16.msra.mxu0 %v2625
        %4394 = vmatprep.mubr.bf16.mxu0 %v3189
        %4395 = vmatmul.mubr.bf16.gmra.mrb[0].mxu0 %v3187
        %v4396 = vpop.f32.mrb[0].mxu0
        %v4397 = vadd.f32 %v4356, %v4396
        %v4398 = vpop.f32.mrb[0].mxu0
        %v4399 = vadd.f32 %v4358, %v4398
        %v4400 = vpop.f32.mrb[0].mxu0
        %v4401 = vpop.f32.mrb[0].mxu0
        %4402 = vdwg.mxu0
        %4403 = vmatprep.subr.bf16.mxu0 %v2634
        %4404 = vmatpush1.bf16.msra.mxu0 %v2633
        %4405 = vmatprep.subr.bf16.mxu0 %v2642
        %4406 = vmatpush1.bf16.msra.mxu0 %v2641
        %4407 = vmatprep.subr.bf16.mxu0 %v2650
        %4408 = vmatpush1.bf16.msra.mxu0 %v2649
        %4409 = vmatprep.subr.bf16.mxu0 %v2658
        %4410 = vmatpush1.bf16.msra.mxu0 %v2657
        %4411 = vmatprep.subr.bf16.mxu0 %v2666
        %4412 = vmatpush1.bf16.msra.mxu0 %v2665
        %4413 = vmatprep.subr.bf16.mxu0 %v2674
        %4414 = vmatpush1.bf16.msra.mxu0 %v2673
        %4415 = vmatprep.subr.bf16.mxu0 %v2682
        %4416 = vmatpush1.bf16.msra.mxu0 %v2681
        %4417 = vmatprep.subr.bf16.mxu0 %v2690
        %4418 = vmatpush1.bf16.msra.mxu0 %v2689
        %4419 = vmatprep.subr.bf16.mxu0 %v2698
        %4420 = vmatpush1.bf16.msra.mxu0 %v2697
        %4421 = vmatprep.subr.bf16.mxu0 %v2706
        %4422 = vmatpush1.bf16.msra.mxu0 %v2705
        %4423 = vmatprep.subr.bf16.mxu0 %v2714
        %4424 = vmatpush1.bf16.msra.mxu0 %v2713
        %4425 = vmatprep.subr.bf16.mxu0 %v2722
        %4426 = vmatpush1.bf16.msra.mxu0 %v2721
        %4427 = vmatprep.subr.bf16.mxu0 %v2730
        %4428 = vmatpush1.bf16.msra.mxu0 %v2729
        %4429 = vmatprep.subr.bf16.mxu0 %v2738
        %4430 = vmatpush1.bf16.msra.mxu0 %v2737
        %4431 = vmatprep.subr.bf16.mxu0 %v2746
        %4432 = vmatpush1.bf16.msra.mxu0 %v2745
        %4433 = vmatprep.subr.bf16.mxu0 %v2754
        %4434 = vmatpush1.bf16.msra.mxu0 %v2753
        %4435 = vmatprep.mubr.bf16.mxu0 %v3227
        %4436 = vmatmul.mubr.bf16.gmra.mrb[0].mxu0 %v3213
        %v4437 = vpop.f32.mrb[0].mxu0
        %v4438 = vadd.f32 %v4397, %v4437
        %v4439 = vpop.f32.mrb[0].mxu0
        %v4440 = vadd.f32 %v4399, %v4439
        %v4441 = vpop.f32.mrb[0].mxu0
        %v4442 = vpop.f32.mrb[0].mxu0
        %4443 = vdwg.mxu0
        %4444 = vmatprep.subr.bf16.mxu0 %v2762
        %4445 = vmatpush1.bf16.msra.mxu0 %v2761
        %4446 = vmatprep.subr.bf16.mxu0 %v2770
        %4447 = vmatpush1.bf16.msra.mxu0 %v2769
        %4448 = vmatprep.subr.bf16.mxu0 %v2778
        %4449 = vmatpush1.bf16.msra.mxu0 %v2777
        %4450 = vmatprep.subr.bf16.mxu0 %v2786
        %4451 = vmatpush1.bf16.msra.mxu0 %v2785
        %4452 = vmatprep.subr.bf16.mxu0 %v2794
        %4453 = vmatpush1.bf16.msra.mxu0 %v2793
        %4454 = vmatprep.subr.bf16.mxu0 %v2802
        %4455 = vmatpush1.bf16.msra.mxu0 %v2801
        %4456 = vmatprep.subr.bf16.mxu0 %v2810
        %4457 = vmatpush1.bf16.msra.mxu0 %v2809
        %4458 = vmatprep.subr.bf16.mxu0 %v2818
        %4459 = vmatpush1.bf16.msra.mxu0 %v2817
        %4460 = vmatprep.subr.bf16.mxu0 %v2826
        %4461 = vmatpush1.bf16.msra.mxu0 %v2825
        %4462 = vmatprep.subr.bf16.mxu0 %v2834
        %4463 = vmatpush1.bf16.msra.mxu0 %v2833
        %4464 = vmatprep.subr.bf16.mxu0 %v2842
        %4465 = vmatpush1.bf16.msra.mxu0 %v2841
        %4466 = vmatprep.subr.bf16.mxu0 %v2850
        %4467 = vmatpush1.bf16.msra.mxu0 %v2849
        %4468 = vmatprep.subr.bf16.mxu0 %v2858
        %4469 = vmatpush1.bf16.msra.mxu0 %v2857
        %4470 = vmatprep.subr.bf16.mxu0 %v2866
        %4471 = vmatpush1.bf16.msra.mxu0 %v2865
        %4472 = vmatprep.subr.bf16.mxu0 %v2874
        %4473 = vmatpush1.bf16.msra.mxu0 %v2873
        %4474 = vmatprep.subr.bf16.mxu0 %v2882
        %4475 = vmatpush1.bf16.msra.mxu0 %v2881
        %4476 = vmatprep.mubr.bf16.mxu0 %v3237
        %4477 = vmatmul.mubr.bf16.gmra.mrb[0].mxu0 %v3235
        %v4478 = vpop.f32.mrb[0].mxu0
        %v4479 = vadd.f32 %v4438, %v4478
        %v4480 = vpop.f32.mrb[0].mxu0
        %v4481 = vadd.f32 %v4440, %v4480
        %v4482 = vpop.f32.mrb[0].mxu0
        %v4483 = vpop.f32.mrb[0].mxu0
        %4484 = vdwg.mxu0
        %4485 = vmatprep.subr.bf16.mxu0 %v2890
        %4486 = vmatpush1.bf16.msra.mxu0 %v2889
        %4487 = vmatprep.subr.bf16.mxu0 %v2898
        %4488 = vmatpush1.bf16.msra.mxu0 %v2897
        %4489 = vmatprep.subr.bf16.mxu0 %v2906
        %4490 = vmatpush1.bf16.msra.mxu0 %v2905
        %4491 = vmatprep.subr.bf16.mxu0 %v2914
        %4492 = vmatpush1.bf16.msra.mxu0 %v2913
        %4493 = vmatprep.subr.bf16.mxu0 %v2922
        %4494 = vmatpush1.bf16.msra.mxu0 %v2921
        %4495 = vmatprep.subr.bf16.mxu0 %v2930
        %4496 = vmatpush1.bf16.msra.mxu0 %v2929
        %4497 = vmatprep.subr.bf16.mxu0 %v2938
        %4498 = vmatpush1.bf16.msra.mxu0 %v2937
        %4499 = vmatprep.subr.bf16.mxu0 %v2946
        %4500 = vmatpush1.bf16.msra.mxu0 %v2945
        %4501 = vmatprep.subr.bf16.mxu0 %v2954
        %4502 = vmatpush1.bf16.msra.mxu0 %v2953
        %4503 = vmatprep.subr.bf16.mxu0 %v2962
        %4504 = vmatpush1.bf16.msra.mxu0 %v2961
        %4505 = vmatprep.subr.bf16.mxu0 %v2970
        %4506 = vmatpush1.bf16.msra.mxu0 %v2969
        %4507 = vmatprep.subr.bf16.mxu0 %v2978
        %4508 = vmatpush1.bf16.msra.mxu0 %v2977
        %4509 = vmatprep.subr.bf16.mxu0 %v2986
        %4510 = vmatpush1.bf16.msra.mxu0 %v2985
        %4511 = vmatprep.subr.bf16.mxu0 %v2994
        %4512 = vmatpush1.bf16.msra.mxu0 %v2993
        %4513 = vmatprep.subr.bf16.mxu0 %v3002
        %4514 = vmatpush1.bf16.msra.mxu0 %v3001
        %4515 = vmatprep.subr.bf16.mxu0 %v3010
        %4516 = vmatpush1.bf16.msra.mxu0 %v3009
        %4517 = vmatprep.mubr.bf16.mxu0 %v3234
        %4518 = vmatmul.mubr.bf16.gmra.mrb[0].mxu0 %v3220
        %v4519 = vpop.f32.mrb[0].mxu0
        %v4520 = vadd.f32 %v4479, %v4519
        %v4521 = vpop.f32.mrb[0].mxu0
        %v4522 = vadd.f32 %v4481, %v4521
        %v4523 = vpop.f32.mrb[0].mxu0
        %v4524 = vpop.f32.mrb[0].mxu0
        %4525 = vdwg.mxu0
        %4526 = vmatprep.subr.bf16.mxu0 %v3018
        %4527 = vmatpush1.bf16.msra.mxu0 %v3017
        %4528 = vmatprep.subr.bf16.mxu0 %v3026
        %4529 = vmatpush1.bf16.msra.mxu0 %v3025
        %4530 = vmatprep.subr.bf16.mxu0 %v3034
        %4531 = vmatpush1.bf16.msra.mxu0 %v3033
        %4532 = vmatprep.subr.bf16.mxu0 %v3042
        %4533 = vmatpush1.bf16.msra.mxu0 %v3041
        %4534 = vmatprep.subr.bf16.mxu0 %v3050
        %4535 = vmatpush1.bf16.msra.mxu0 %v3049
        %4536 = vmatprep.subr.bf16.mxu0 %v3058
        %4537 = vmatpush1.bf16.msra.mxu0 %v3057
        %4538 = vmatprep.subr.bf16.mxu0 %v3066
        %4539 = vmatpush1.bf16.msra.mxu0 %v3065
        %4540 = vmatprep.subr.bf16.mxu0 %v3074
        %4541 = vmatpush1.bf16.msra.mxu0 %v3073
        %4542 = vmatprep.subr.bf16.mxu0 %v3082
        %4543 = vmatpush1.bf16.msra.mxu0 %v3081
        %4544 = vmatprep.subr.bf16.mxu0 %v3090
        %4545 = vmatpush1.bf16.msra.mxu0 %v3089
        %4546 = vmatprep.subr.bf16.mxu0 %v3098
        %4547 = vmatpush1.bf16.msra.mxu0 %v3097
        %4548 = vmatprep.subr.bf16.mxu0 %v3106
        %4549 = vmatpush1.bf16.msra.mxu0 %v3105
        %4550 = vmatprep.subr.bf16.mxu0 %v3114
        %4551 = vmatpush1.bf16.msra.mxu0 %v3113
        %4552 = vmatprep.subr.bf16.mxu0 %v3122
        %4553 = vmatpush1.bf16.msra.mxu0 %v3121
        %4554 = vmatprep.subr.bf16.mxu0 %v3130
        %4555 = vmatpush1.bf16.msra.mxu0 %v3129
        %4556 = vmatprep.subr.bf16.mxu0 %v3138
        %4557 = vmatpush1.bf16.msra.mxu0 %v3137
        %4558 = vmatprep.mubr.bf16.mxu0 %v3238
        %4559 = vmatmul.mubr.bf16.gmra.mrb[0].mxu0 %v3236
        %v4560 = vpop.f32.mrb[0].mxu0
        %v4561 = vadd.f32 %v4520, %v4560
        %v4562 = vpop.f32.mrb[0].mxu0
        %v4563 = vadd.f32 %v4522, %v4562
        %v4564 = vpop.f32.mrb[0].mxu0
        %v4565 = vpop.f32.mrb[0].mxu0
        %4566 = vdwg.mxu0
        %v4568 = vlaneseq
        %v4569 = vshrl.u32 %v4568, 7
        %v4570 = vsub.s32 0, %v4569
        %v4571 = vrot.slane %v2113, %v4570
        %v4572 = vlaneseq
        %v4573 = vshrl.u32 %v4572, 7
        %v4574 = vsub.s32 1, %v4573
        %v4575 = vrot.slane %v2113, %v4574
        %v4576 = vlaneseq
        %v4577 = vshrl.u32 %v4576, 7
        %v4578 = vsub.s32 2, %v4577
        %v4579 = vrot.slane %v2113, %v4578
        %v4580 = vlaneseq
        %v4581 = vshrl.u32 %v4580, 7
        %v4582 = vsub.s32 3, %v4581
        %v4583 = vrot.slane %v2113, %v4582
        %v4584 = vlaneseq
        %v4585 = vshrl.u32 %v4584, 7
        %v4586 = vsub.s32 4, %v4585
        %v4587 = vrot.slane %v2113, %v4586
        %v4588 = vlaneseq
        %v4589 = vshrl.u32 %v4588, 7
        %v4590 = vsub.s32 5, %v4589
        %v4591 = vrot.slane %v2113, %v4590
        %v4592 = vlaneseq
        %v4593 = vshrl.u32 %v4592, 7
        %v4594 = vsub.s32 6, %v4593
        %v4595 = vrot.slane %v2113, %v4594
        %v4596 = vlaneseq
        %v4597 = vshrl.u32 %v4596, 7
        %v4598 = vsub.s32 7, %v4597
        %v4599 = vrot.slane %v2113, %v4598
        %v4608 = vmul.f32 %v3577, %v4571
        %v4609 = vmul.f32 %v3579, %v4575
        %v4610 = vmul.f32 %v3905, %v4579
        %v4611 = vmul.f32 %v3907, %v4583
        %v4612 = vmul.f32 %v4233, %v4587
        %v4613 = vmul.f32 %v4235, %v4591
        %v4614 = vmul.f32 %v4561, %v4595
        %v4615 = vmul.f32 %v4563, %v4599
        %v4617 = vlaneseq
        %v4618 = vshrl.u32 %v4617, 7
        %v4619 = vsub.s32 0, %v4618
        %v4620 = vrot.slane %v2114, %v4619
        %v4621 = vlaneseq
        %v4622 = vshrl.u32 %v4621, 7
        %v4623 = vsub.s32 1, %v4622
        %v4624 = vrot.slane %v2114, %v4623
        %v4625 = vlaneseq
        %v4626 = vshrl.u32 %v4625, 7
        %v4627 = vsub.s32 2, %v4626
        %v4628 = vrot.slane %v2114, %v4627
        %v4629 = vlaneseq
        %v4630 = vshrl.u32 %v4629, 7
        %v4631 = vsub.s32 3, %v4630
        %v4632 = vrot.slane %v2114, %v4631
        %v4633 = vlaneseq
        %v4634 = vshrl.u32 %v4633, 7
        %v4635 = vsub.s32 4, %v4634
        %v4636 = vrot.slane %v2114, %v4635
        %v4637 = vlaneseq
        %v4638 = vshrl.u32 %v4637, 7
        %v4639 = vsub.s32 5, %v4638
        %v4640 = vrot.slane %v2114, %v4639
        %v4641 = vlaneseq
        %v4642 = vshrl.u32 %v4641, 7
        %v4643 = vsub.s32 6, %v4642
        %v4644 = vrot.slane %v2114, %v4643
        %v4645 = vlaneseq
        %v4646 = vshrl.u32 %v4645, 7
        %v4647 = vsub.s32 7, %v4646
        %v4648 = vrot.slane %v2114, %v4647
        %v4657 = vadd.f32 %v4608, %v4620
        %v4658 = vadd.f32 %v4609, %v4624
        %v4659 = vadd.f32 %v4610, %v4628
        %v4660 = vadd.f32 %v4611, %v4632
        %v4661 = vadd.f32 %v4612, %v4636
        %v4662 = vadd.f32 %v4613, %v4640
        %v4663 = vadd.f32 %v4614, %v4644
        %v4664 = vadd.f32 %v4615, %v4648
        %vm4665 = vcmp.gt.f32.partialorder %v4657, 0.0
        %vm4666 = vcmp.gt.f32.partialorder %v4658, 0.0
        %vm4667 = vcmp.gt.f32.partialorder %v4659, 0.0
        %vm4668 = vcmp.gt.f32.partialorder %v4660, 0.0
        %vm4669 = vcmp.gt.f32.partialorder %v4661, 0.0
        %vm4670 = vcmp.gt.f32.partialorder %v4662, 0.0
        %vm4671 = vcmp.gt.f32.partialorder %v4663, 0.0
        %vm4672 = vcmp.gt.f32.partialorder %v4664, 0.0
        %v4673 = vmul.f32 %v4657, 0.01
        %v4674 = vmul.f32 %v4658, 0.01
        %v4675 = vmul.f32 %v4659, 0.01
        %v4676 = vmul.f32 %v4660, 0.01
        %v4677 = vmul.f32 %v4661, 0.01
        %v4678 = vmul.f32 %v4662, 0.01
        %v4679 = vmul.f32 %v4663, 0.01
        %v4680 = vmul.f32 %v4664, 0.01
        %v4681 = vsel %vm4665, %v4657, %v4673
        %v4682 = vsel %vm4666, %v4658, %v4674
        %v4683 = vsel %vm4667, %v4659, %v4675
        %v4684 = vsel %vm4668, %v4660, %v4676
        %v4685 = vsel %vm4669, %v4661, %v4677
        %v4686 = vsel %vm4670, %v4662, %v4678
        %v4687 = vsel %vm4671, %v4663, %v4679
        %v4688 = vsel %vm4672, %v4664, %v4680
        %v4689 = vpack.c.bf16 %v4681, %v4681
        %v4690 = vpack.c.bf16 %v4682, %v4682
        %v4691 = vpack.c.bf16 %v4683, %v4683
        %v4692 = vpack.c.bf16 %v4684, %v4684
        %v4693 = vpack.c.bf16 %v4685, %v4685
        %v4694 = vpack.c.bf16 %v4686, %v4686
        %v4695 = vpack.c.bf16 %v4687, %v4687
        %v4696 = vpack.c.bf16 %v4688, %v4688
        %v4697 = vld [vmem:[%s1253] sm:$0xff]
        %v4698 = vld [vmem:[%s1253 + $0x8] sm:$0xff]
        %v4699 = vld [vmem:[%s1253 + $0x10] sm:$0xff]
        %v4700 = vld [vmem:[%s1253 + $0x18] sm:$0xff]
        %v4701 = vld [vmem:[%s1253 + $0x20] sm:$0xff]
        %v4702 = vld [vmem:[%s1253 + $0x28] sm:$0xff]
        %v4703 = vld [vmem:[%s1253 + $0x30] sm:$0xff]
        %v4704 = vld [vmem:[%s1253 + $0x38] sm:$0xff]
        %v4705 = vld [vmem:[%s1253 + $0x40] sm:$0xff]
        %v4706 = vld [vmem:[%s1253 + $0x48] sm:$0xff]
        %v4707 = vld [vmem:[%s1253 + $0x50] sm:$0xff]
        %v4708 = vld [vmem:[%s1253 + $0x58] sm:$0xff]
        %v4709 = vld [vmem:[%s1253 + $0x60] sm:$0xff]
        %v4710 = vld [vmem:[%s1253 + $0x68] sm:$0xff]
        %v4711 = vld [vmem:[%s1253 + $0x70] sm:$0xff]
        %v4712 = vld [vmem:[%s1253 + $0x78] sm:$0xff]
        %v4713 = vld [vmem:[%s1253 + $0x80] sm:$0xff]
        %v4714 = vld [vmem:[%s1253 + $0x88] sm:$0xff]
        %v4715 = vld [vmem:[%s1253 + $0x90] sm:$0xff]
        %v4716 = vld [vmem:[%s1253 + $0x98] sm:$0xff]
        %v4717 = vld [vmem:[%s1253 + $0xa0] sm:$0xff]
        %v4718 = vld [vmem:[%s1253 + $0xa8] sm:$0xff]
        %v4719 = vld [vmem:[%s1253 + $0xb0] sm:$0xff]
        %v4720 = vld [vmem:[%s1253 + $0xb8] sm:$0xff]
        %v4721 = vld [vmem:[%s1253 + $0xc0] sm:$0xff]
        %v4722 = vld [vmem:[%s1253 + $0xc8] sm:$0xff]
        %v4723 = vld [vmem:[%s1253 + $0xd0] sm:$0xff]
        %v4724 = vld [vmem:[%s1253 + $0xd8] sm:$0xff]
        %v4725 = vld [vmem:[%s1253 + $0xe0] sm:$0xff]
        %v4726 = vld [vmem:[%s1253 + $0xe8] sm:$0xff]
        %v4727 = vld [vmem:[%s1253 + $0xf0] sm:$0xff]
        %v4728 = vld [vmem:[%s1253 + $0xf8] sm:$0xff]
        %v4729 = vld [vmem:[%s1253 + $0x100] sm:$0xff]
        %v4730 = vld [vmem:[%s1253 + $0x108] sm:$0xff]
        %v4731 = vld [vmem:[%s1253 + $0x110] sm:$0xff]
        %v4732 = vld [vmem:[%s1253 + $0x118] sm:$0xff]
        %v4733 = vld [vmem:[%s1253 + $0x120] sm:$0xff]
        %v4734 = vld [vmem:[%s1253 + $0x128] sm:$0xff]
        %v4735 = vld [vmem:[%s1253 + $0x130] sm:$0xff]
        %v4736 = vld [vmem:[%s1253 + $0x138] sm:$0xff]
        %v4737 = vld [vmem:[%s1253 + $0x140] sm:$0xff]
        %v4738 = vld [vmem:[%s1253 + $0x148] sm:$0xff]
        %v4739 = vld [vmem:[%s1253 + $0x150] sm:$0xff]
        %v4740 = vld [vmem:[%s1253 + $0x158] sm:$0xff]
        %v4741 = vld [vmem:[%s1253 + $0x160] sm:$0xff]
        %v4742 = vld [vmem:[%s1253 + $0x168] sm:$0xff]
        %v4743 = vld [vmem:[%s1253 + $0x170] sm:$0xff]
        %v4744 = vld [vmem:[%s1253 + $0x178] sm:$0xff]
        %v4745 = vld [vmem:[%s1253 + $0x180] sm:$0xff]
        %v4746 = vld [vmem:[%s1253 + $0x188] sm:$0xff]
        %v4747 = vld [vmem:[%s1253 + $0x190] sm:$0xff]
        %v4748 = vld [vmem:[%s1253 + $0x198] sm:$0xff]
        %v4749 = vld [vmem:[%s1253 + $0x1a0] sm:$0xff]
        %v4750 = vld [vmem:[%s1253 + $0x1a8] sm:$0xff]
        %v4751 = vld [vmem:[%s1253 + $0x1b0] sm:$0xff]
        %v4752 = vld [vmem:[%s1253 + $0x1b8] sm:$0xff]
        %v4753 = vld [vmem:[%s1253 + $0x1c0] sm:$0xff]
        %v4754 = vld [vmem:[%s1253 + $0x1c8] sm:$0xff]
        %v4755 = vld [vmem:[%s1253 + $0x1d0] sm:$0xff]
        %v4756 = vld [vmem:[%s1253 + $0x1d8] sm:$0xff]
        %v4757 = vld [vmem:[%s1253 + $0x1e0] sm:$0xff]
        %v4758 = vld [vmem:[%s1253 + $0x1e8] sm:$0xff]
        %v4759 = vld [vmem:[%s1253 + $0x1f0] sm:$0xff]
        %v4760 = vld [vmem:[%s1253 + $0x1f8] sm:$0xff]
        %v4761 = vld [vmem:[%s1253 + $0x200] sm:$0xff]
        %v4762 = vld [vmem:[%s1253 + $0x208] sm:$0xff]
        %v4763 = vld [vmem:[%s1253 + $0x210] sm:$0xff]
        %v4764 = vld [vmem:[%s1253 + $0x218] sm:$0xff]
        %v4765 = vld [vmem:[%s1253 + $0x220] sm:$0xff]
        %v4766 = vld [vmem:[%s1253 + $0x228] sm:$0xff]
        %v4767 = vld [vmem:[%s1253 + $0x230] sm:$0xff]
        %v4768 = vld [vmem:[%s1253 + $0x238] sm:$0xff]
        %v4769 = vld [vmem:[%s1253 + $0x240] sm:$0xff]
        %v4770 = vld [vmem:[%s1253 + $0x248] sm:$0xff]
        %v4771 = vld [vmem:[%s1253 + $0x250] sm:$0xff]
        %v4772 = vld [vmem:[%s1253 + $0x258] sm:$0xff]
        %v4773 = vld [vmem:[%s1253 + $0x260] sm:$0xff]
        %v4774 = vld [vmem:[%s1253 + $0x268] sm:$0xff]
        %v4775 = vld [vmem:[%s1253 + $0x270] sm:$0xff]
        %v4776 = vld [vmem:[%s1253 + $0x278] sm:$0xff]
        %v4777 = vld [vmem:[%s1253 + $0x280] sm:$0xff]
        %v4778 = vld [vmem:[%s1253 + $0x288] sm:$0xff]
        %v4779 = vld [vmem:[%s1253 + $0x290] sm:$0xff]
        %v4780 = vld [vmem:[%s1253 + $0x298] sm:$0xff]
        %v4781 = vld [vmem:[%s1253 + $0x2a0] sm:$0xff]
        %v4782 = vld [vmem:[%s1253 + $0x2a8] sm:$0xff]
        %v4783 = vld [vmem:[%s1253 + $0x2b0] sm:$0xff]
        %v4784 = vld [vmem:[%s1253 + $0x2b8] sm:$0xff]
        %v4785 = vld [vmem:[%s1253 + $0x2c0] sm:$0xff]
        %v4786 = vld [vmem:[%s1253 + $0x2c8] sm:$0xff]
        %v4787 = vld [vmem:[%s1253 + $0x2d0] sm:$0xff]
        %v4788 = vld [vmem:[%s1253 + $0x2d8] sm:$0xff]
        %v4789 = vld [vmem:[%s1253 + $0x2e0] sm:$0xff]
        %v4790 = vld [vmem:[%s1253 + $0x2e8] sm:$0xff]
        %v4791 = vld [vmem:[%s1253 + $0x2f0] sm:$0xff]
        %v4792 = vld [vmem:[%s1253 + $0x2f8] sm:$0xff]
        %v4793 = vld [vmem:[%s1253 + $0x300] sm:$0xff]
        %v4794 = vld [vmem:[%s1253 + $0x308] sm:$0xff]
        %v4795 = vld [vmem:[%s1253 + $0x310] sm:$0xff]
        %v4796 = vld [vmem:[%s1253 + $0x318] sm:$0xff]
        %v4797 = vld [vmem:[%s1253 + $0x320] sm:$0xff]
        %v4798 = vld [vmem:[%s1253 + $0x328] sm:$0xff]
        %v4799 = vld [vmem:[%s1253 + $0x330] sm:$0xff]
        %v4800 = vld [vmem:[%s1253 + $0x338] sm:$0xff]
        %v4801 = vld [vmem:[%s1253 + $0x340] sm:$0xff]
        %v4802 = vld [vmem:[%s1253 + $0x348] sm:$0xff]
        %v4803 = vld [vmem:[%s1253 + $0x350] sm:$0xff]
        %v4804 = vld [vmem:[%s1253 + $0x358] sm:$0xff]
        %v4805 = vld [vmem:[%s1253 + $0x360] sm:$0xff]
        %v4806 = vld [vmem:[%s1253 + $0x368] sm:$0xff]
        %v4807 = vld [vmem:[%s1253 + $0x370] sm:$0xff]
        %v4808 = vld [vmem:[%s1253 + $0x378] sm:$0xff]
        %v4809 = vld [vmem:[%s1253 + $0x380] sm:$0xff]
        %v4810 = vld [vmem:[%s1253 + $0x388] sm:$0xff]
        %v4811 = vld [vmem:[%s1253 + $0x390] sm:$0xff]
        %v4812 = vld [vmem:[%s1253 + $0x398] sm:$0xff]
        %v4813 = vld [vmem:[%s1253 + $0x3a0] sm:$0xff]
        %v4814 = vld [vmem:[%s1253 + $0x3a8] sm:$0xff]
        %v4815 = vld [vmem:[%s1253 + $0x3b0] sm:$0xff]
        %v4816 = vld [vmem:[%s1253 + $0x3b8] sm:$0xff]
        %v4817 = vld [vmem:[%s1253 + $0x3c0] sm:$0xff]
        %v4818 = vld [vmem:[%s1253 + $0x3c8] sm:$0xff]
        %v4819 = vld [vmem:[%s1253 + $0x3d0] sm:$0xff]
        %v4820 = vld [vmem:[%s1253 + $0x3d8] sm:$0xff]
        %v4821 = vld [vmem:[%s1253 + $0x3e0] sm:$0xff]
        %v4822 = vld [vmem:[%s1253 + $0x3e8] sm:$0xff]
        %v4823 = vld [vmem:[%s1253 + $0x3f0] sm:$0xff]
        %v4824 = vld [vmem:[%s1253 + $0x3f8] sm:$0xff]
        %v4825 = vld [vmem:[%s1262] sm:$0xf]
        %v4826 = vld [vmem:[%s1271] sm:$0xf]
        %v4827 = vunpack.c.l.s8.bf16 %v4697
        %v4828 = vunpack.c.l.s8.bf16 %v4698
        %v4829 = vunpack.c.l.s8.bf16 %v4699
        %v4830 = vunpack.c.l.s8.bf16 %v4700
        %v4831 = vunpack.c.h.s8.bf16 %v4697
        %v4832 = vunpack.c.h.s8.bf16 %v4698
        %v4833 = vunpack.c.h.s8.bf16 %v4699
        %v4834 = vunpack.c.h.s8.bf16 %v4700
        %v4835 = vunpack.c.l.s8.bf16 %v4701
        %v4836 = vunpack.c.l.s8.bf16 %v4702
        %v4837 = vunpack.c.l.s8.bf16 %v4703
        %v4838 = vunpack.c.l.s8.bf16 %v4704
        %v4839 = vunpack.c.h.s8.bf16 %v4701
        %v4840 = vunpack.c.h.s8.bf16 %v4702
        %v4841 = vunpack.c.h.s8.bf16 %v4703
        %v4842 = vunpack.c.h.s8.bf16 %v4704
        %v4843 = vunpack.c.l.s8.bf16 %v4705
        %v4844 = vunpack.c.l.s8.bf16 %v4706
        %v4845 = vunpack.c.l.s8.bf16 %v4707
        %v4846 = vunpack.c.l.s8.bf16 %v4708
        %v4847 = vunpack.c.h.s8.bf16 %v4705
        %v4848 = vunpack.c.h.s8.bf16 %v4706
        %v4849 = vunpack.c.h.s8.bf16 %v4707
        %v4850 = vunpack.c.h.s8.bf16 %v4708
        %v4851 = vunpack.c.l.s8.bf16 %v4709
        %v4852 = vunpack.c.l.s8.bf16 %v4710
        %v4853 = vunpack.c.l.s8.bf16 %v4711
        %v4854 = vunpack.c.l.s8.bf16 %v4712
        %v4855 = vunpack.c.h.s8.bf16 %v4709
        %v4856 = vunpack.c.h.s8.bf16 %v4710
        %v4857 = vunpack.c.h.s8.bf16 %v4711
        %v4858 = vunpack.c.h.s8.bf16 %v4712
        %v4859 = vunpack.c.l.s8.bf16 %v4713
        %v4860 = vunpack.c.l.s8.bf16 %v4714
        %v4861 = vunpack.c.l.s8.bf16 %v4715
        %v4862 = vunpack.c.l.s8.bf16 %v4716
        %v4863 = vunpack.c.h.s8.bf16 %v4713
        %v4864 = vunpack.c.h.s8.bf16 %v4714
        %v4865 = vunpack.c.h.s8.bf16 %v4715
        %v4866 = vunpack.c.h.s8.bf16 %v4716
        %v4867 = vunpack.c.l.s8.bf16 %v4717
        %v4868 = vunpack.c.l.s8.bf16 %v4718
        %v4869 = vunpack.c.l.s8.bf16 %v4719
        %v4870 = vunpack.c.l.s8.bf16 %v4720
        %v4871 = vunpack.c.h.s8.bf16 %v4717
        %v4872 = vunpack.c.h.s8.bf16 %v4718
        %v4873 = vunpack.c.h.s8.bf16 %v4719
        %v4874 = vunpack.c.h.s8.bf16 %v4720
        %v4875 = vunpack.c.l.s8.bf16 %v4721
        %v4876 = vunpack.c.l.s8.bf16 %v4722
        %v4877 = vunpack.c.l.s8.bf16 %v4723
        %v4878 = vunpack.c.l.s8.bf16 %v4724
        %v4879 = vunpack.c.h.s8.bf16 %v4721
        %v4880 = vunpack.c.h.s8.bf16 %v4722
        %v4881 = vunpack.c.h.s8.bf16 %v4723
        %v4882 = vunpack.c.h.s8.bf16 %v4724
        %v4883 = vunpack.c.l.s8.bf16 %v4725
        %v4884 = vunpack.c.l.s8.bf16 %v4726
        %v4885 = vunpack.c.l.s8.bf16 %v4727
        %v4886 = vunpack.c.l.s8.bf16 %v4728
        %v4887 = vunpack.c.h.s8.bf16 %v4725
        %v4888 = vunpack.c.h.s8.bf16 %v4726
        %v4889 = vunpack.c.h.s8.bf16 %v4727
        %v4890 = vunpack.c.h.s8.bf16 %v4728
        %v4891 = vunpack.c.l.s8.bf16 %v4729
        %v4892 = vunpack.c.l.s8.bf16 %v4730
        %v4893 = vunpack.c.l.s8.bf16 %v4731
        %v4894 = vunpack.c.l.s8.bf16 %v4732
        %v4895 = vunpack.c.h.s8.bf16 %v4729
        %v4896 = vunpack.c.h.s8.bf16 %v4730
        %v4897 = vunpack.c.h.s8.bf16 %v4731
        %v4898 = vunpack.c.h.s8.bf16 %v4732
        %v4899 = vunpack.c.l.s8.bf16 %v4733
        %v4900 = vunpack.c.l.s8.bf16 %v4734
        %v4901 = vunpack.c.l.s8.bf16 %v4735
        %v4902 = vunpack.c.l.s8.bf16 %v4736
        %v4903 = vunpack.c.h.s8.bf16 %v4733
        %v4904 = vunpack.c.h.s8.bf16 %v4734
        %v4905 = vunpack.c.h.s8.bf16 %v4735
        %v4906 = vunpack.c.h.s8.bf16 %v4736
        %v4907 = vunpack.c.l.s8.bf16 %v4737
        %v4908 = vunpack.c.l.s8.bf16 %v4738
        %v4909 = vunpack.c.l.s8.bf16 %v4739
        %v4910 = vunpack.c.l.s8.bf16 %v4740
        %v4911 = vunpack.c.h.s8.bf16 %v4737
        %v4912 = vunpack.c.h.s8.bf16 %v4738
        %v4913 = vunpack.c.h.s8.bf16 %v4739
        %v4914 = vunpack.c.h.s8.bf16 %v4740
        %v4915 = vunpack.c.l.s8.bf16 %v4741
        %v4916 = vunpack.c.l.s8.bf16 %v4742
        %v4917 = vunpack.c.l.s8.bf16 %v4743
        %v4918 = vunpack.c.l.s8.bf16 %v4744
        %v4919 = vunpack.c.h.s8.bf16 %v4741
        %v4920 = vunpack.c.h.s8.bf16 %v4742
        %v4921 = vunpack.c.h.s8.bf16 %v4743
        %v4922 = vunpack.c.h.s8.bf16 %v4744
        %v4923 = vunpack.c.l.s8.bf16 %v4745
        %v4924 = vunpack.c.l.s8.bf16 %v4746
        %v4925 = vunpack.c.l.s8.bf16 %v4747
        %v4926 = vunpack.c.l.s8.bf16 %v4748
        %v4927 = vunpack.c.h.s8.bf16 %v4745
        %v4928 = vunpack.c.h.s8.bf16 %v4746
        %v4929 = vunpack.c.h.s8.bf16 %v4747
        %v4930 = vunpack.c.h.s8.bf16 %v4748
        %v4931 = vunpack.c.l.s8.bf16 %v4749
        %v4932 = vunpack.c.l.s8.bf16 %v4750
        %v4933 = vunpack.c.l.s8.bf16 %v4751
        %v4934 = vunpack.c.l.s8.bf16 %v4752
        %v4935 = vunpack.c.h.s8.bf16 %v4749
        %v4936 = vunpack.c.h.s8.bf16 %v4750
        %v4937 = vunpack.c.h.s8.bf16 %v4751
        %v4938 = vunpack.c.h.s8.bf16 %v4752
        %v4939 = vunpack.c.l.s8.bf16 %v4753
        %v4940 = vunpack.c.l.s8.bf16 %v4754
        %v4941 = vunpack.c.l.s8.bf16 %v4755
        %v4942 = vunpack.c.l.s8.bf16 %v4756
        %v4943 = vunpack.c.h.s8.bf16 %v4753
        %v4944 = vunpack.c.h.s8.bf16 %v4754
        %v4945 = vunpack.c.h.s8.bf16 %v4755
        %v4946 = vunpack.c.h.s8.bf16 %v4756
        %v4947 = vunpack.c.l.s8.bf16 %v4757
        %v4948 = vunpack.c.l.s8.bf16 %v4758
        %v4949 = vunpack.c.l.s8.bf16 %v4759
        %v4950 = vunpack.c.l.s8.bf16 %v4760
        %v4951 = vunpack.c.h.s8.bf16 %v4757
        %v4952 = vunpack.c.h.s8.bf16 %v4758
        %v4953 = vunpack.c.h.s8.bf16 %v4759
        %v4954 = vunpack.c.h.s8.bf16 %v4760
        %v4955 = vunpack.c.l.s8.bf16 %v4761
        %v4956 = vunpack.c.l.s8.bf16 %v4762
        %v4957 = vunpack.c.l.s8.bf16 %v4763
        %v4958 = vunpack.c.l.s8.bf16 %v4764
        %v4959 = vunpack.c.h.s8.bf16 %v4761
        %v4960 = vunpack.c.h.s8.bf16 %v4762
        %v4961 = vunpack.c.h.s8.bf16 %v4763
        %v4962 = vunpack.c.h.s8.bf16 %v4764
        %v4963 = vunpack.c.l.s8.bf16 %v4765
        %v4964 = vunpack.c.l.s8.bf16 %v4766
        %v4965 = vunpack.c.l.s8.bf16 %v4767
        %v4966 = vunpack.c.l.s8.bf16 %v4768
        %v4967 = vunpack.c.h.s8.bf16 %v4765
        %v4968 = vunpack.c.h.s8.bf16 %v4766
        %v4969 = vunpack.c.h.s8.bf16 %v4767
        %v4970 = vunpack.c.h.s8.bf16 %v4768
        %v4971 = vunpack.c.l.s8.bf16 %v4769
        %v4972 = vunpack.c.l.s8.bf16 %v4770
        %v4973 = vunpack.c.l.s8.bf16 %v4771
        %v4974 = vunpack.c.l.s8.bf16 %v4772
        %v4975 = vunpack.c.h.s8.bf16 %v4769
        %v4976 = vunpack.c.h.s8.bf16 %v4770
        %v4977 = vunpack.c.h.s8.bf16 %v4771
        %v4978 = vunpack.c.h.s8.bf16 %v4772
        %v4979 = vunpack.c.l.s8.bf16 %v4773
        %v4980 = vunpack.c.l.s8.bf16 %v4774
        %v4981 = vunpack.c.l.s8.bf16 %v4775
        %v4982 = vunpack.c.l.s8.bf16 %v4776
        %v4983 = vunpack.c.h.s8.bf16 %v4773
        %v4984 = vunpack.c.h.s8.bf16 %v4774
        %v4985 = vunpack.c.h.s8.bf16 %v4775
        %v4986 = vunpack.c.h.s8.bf16 %v4776
        %v4987 = vunpack.c.l.s8.bf16 %v4777
        %v4988 = vunpack.c.l.s8.bf16 %v4778
        %v4989 = vunpack.c.l.s8.bf16 %v4779
        %v4990 = vunpack.c.l.s8.bf16 %v4780
        %v4991 = vunpack.c.h.s8.bf16 %v4777
        %v4992 = vunpack.c.h.s8.bf16 %v4778
        %v4993 = vunpack.c.h.s8.bf16 %v4779
        %v4994 = vunpack.c.h.s8.bf16 %v4780
        %v4995 = vunpack.c.l.s8.bf16 %v4781
        %v4996 = vunpack.c.l.s8.bf16 %v4782
        %v4997 = vunpack.c.l.s8.bf16 %v4783
        %v4998 = vunpack.c.l.s8.bf16 %v4784
        %v4999 = vunpack.c.h.s8.bf16 %v4781
        %v5000 = vunpack.c.h.s8.bf16 %v4782
        %v5001 = vunpack.c.h.s8.bf16 %v4783
        %v5002 = vunpack.c.h.s8.bf16 %v4784
        %v5003 = vunpack.c.l.s8.bf16 %v4785
        %v5004 = vunpack.c.l.s8.bf16 %v4786
        %v5005 = vunpack.c.l.s8.bf16 %v4787
        %v5006 = vunpack.c.l.s8.bf16 %v4788
        %v5007 = vunpack.c.h.s8.bf16 %v4785
        %v5008 = vunpack.c.h.s8.bf16 %v4786
        %v5009 = vunpack.c.h.s8.bf16 %v4787
        %v5010 = vunpack.c.h.s8.bf16 %v4788
        %v5011 = vunpack.c.l.s8.bf16 %v4789
        %v5012 = vunpack.c.l.s8.bf16 %v4790
        %v5013 = vunpack.c.l.s8.bf16 %v4791
        %v5014 = vunpack.c.l.s8.bf16 %v4792
        %v5015 = vunpack.c.h.s8.bf16 %v4789
        %v5016 = vunpack.c.h.s8.bf16 %v4790
        %v5017 = vunpack.c.h.s8.bf16 %v4791
        %v5018 = vunpack.c.h.s8.bf16 %v4792
        %v5019 = vunpack.c.l.s8.bf16 %v4793
        %v5020 = vunpack.c.l.s8.bf16 %v4794
        %v5021 = vunpack.c.l.s8.bf16 %v4795
        %v5022 = vunpack.c.l.s8.bf16 %v4796
        %v5023 = vunpack.c.h.s8.bf16 %v4793
        %v5024 = vunpack.c.h.s8.bf16 %v4794
        %v5025 = vunpack.c.h.s8.bf16 %v4795
        %v5026 = vunpack.c.h.s8.bf16 %v4796
        %v5027 = vunpack.c.l.s8.bf16 %v4797
        %v5028 = vunpack.c.l.s8.bf16 %v4798
        %v5029 = vunpack.c.l.s8.bf16 %v4799
        %v5030 = vunpack.c.l.s8.bf16 %v4800
        %v5031 = vunpack.c.h.s8.bf16 %v4797
        %v5032 = vunpack.c.h.s8.bf16 %v4798
        %v5033 = vunpack.c.h.s8.bf16 %v4799
        %v5034 = vunpack.c.h.s8.bf16 %v4800
        %v5035 = vunpack.c.l.s8.bf16 %v4801
        %v5036 = vunpack.c.l.s8.bf16 %v4802
        %v5037 = vunpack.c.l.s8.bf16 %v4803
        %v5038 = vunpack.c.l.s8.bf16 %v4804
        %v5039 = vunpack.c.h.s8.bf16 %v4801
        %v5040 = vunpack.c.h.s8.bf16 %v4802
        %v5041 = vunpack.c.h.s8.bf16 %v4803
        %v5042 = vunpack.c.h.s8.bf16 %v4804
        %v5043 = vunpack.c.l.s8.bf16 %v4805
        %v5044 = vunpack.c.l.s8.bf16 %v4806
        %v5045 = vunpack.c.l.s8.bf16 %v4807
        %v5046 = vunpack.c.l.s8.bf16 %v4808
        %v5047 = vunpack.c.h.s8.bf16 %v4805
        %v5048 = vunpack.c.h.s8.bf16 %v4806
        %v5049 = vunpack.c.h.s8.bf16 %v4807
        %v5050 = vunpack.c.h.s8.bf16 %v4808
        %v5051 = vunpack.c.l.s8.bf16 %v4809
        %v5052 = vunpack.c.l.s8.bf16 %v4810
        %v5053 = vunpack.c.l.s8.bf16 %v4811
        %v5054 = vunpack.c.l.s8.bf16 %v4812
        %v5055 = vunpack.c.h.s8.bf16 %v4809
        %v5056 = vunpack.c.h.s8.bf16 %v4810
        %v5057 = vunpack.c.h.s8.bf16 %v4811
        %v5058 = vunpack.c.h.s8.bf16 %v4812
        %v5059 = vunpack.c.l.s8.bf16 %v4813
        %v5060 = vunpack.c.l.s8.bf16 %v4814
        %v5061 = vunpack.c.l.s8.bf16 %v4815
        %v5062 = vunpack.c.l.s8.bf16 %v4816
        %v5063 = vunpack.c.h.s8.bf16 %v4813
        %v5064 = vunpack.c.h.s8.bf16 %v4814
        %v5065 = vunpack.c.h.s8.bf16 %v4815
        %v5066 = vunpack.c.h.s8.bf16 %v4816
        %v5067 = vunpack.c.l.s8.bf16 %v4817
        %v5068 = vunpack.c.l.s8.bf16 %v4818
        %v5069 = vunpack.c.l.s8.bf16 %v4819
        %v5070 = vunpack.c.l.s8.bf16 %v4820
        %v5071 = vunpack.c.h.s8.bf16 %v4817
        %v5072 = vunpack.c.h.s8.bf16 %v4818
        %v5073 = vunpack.c.h.s8.bf16 %v4819
        %v5074 = vunpack.c.h.s8.bf16 %v4820
        %v5075 = vunpack.c.l.s8.bf16 %v4821
        %v5076 = vunpack.c.l.s8.bf16 %v4822
        %v5077 = vunpack.c.l.s8.bf16 %v4823
        %v5078 = vunpack.c.l.s8.bf16 %v4824
        %v5079 = vunpack.c.h.s8.bf16 %v4821
        %v5080 = vunpack.c.h.s8.bf16 %v4822
        %v5081 = vunpack.c.h.s8.bf16 %v4823
        %v5082 = vunpack.c.h.s8.bf16 %v4824
        %5083 = vmatprep.subr.bf16.mxu0 %v4828
        %5084 = vmatpush1.bf16.msra.mxu0 %v4827
        %5085 = vmatprep.subr.bf16.mxu0 %v4832
        %5086 = vmatpush1.bf16.msra.mxu0 %v4831
        %5087 = vmatprep.subr.bf16.mxu0 %v4836
        %5088 = vmatpush1.bf16.msra.mxu0 %v4835
        %5089 = vmatprep.subr.bf16.mxu0 %v4840
        %5090 = vmatpush1.bf16.msra.mxu0 %v4839
        %5091 = vmatprep.subr.bf16.mxu0 %v4844
        %5092 = vmatpush1.bf16.msra.mxu0 %v4843
        %5093 = vmatprep.subr.bf16.mxu0 %v4848
        %5094 = vmatpush1.bf16.msra.mxu0 %v4847
        %5095 = vmatprep.subr.bf16.mxu0 %v4852
        %5096 = vmatpush1.bf16.msra.mxu0 %v4851
        %5097 = vmatprep.subr.bf16.mxu0 %v4856
        %5098 = vmatpush1.bf16.msra.mxu0 %v4855
        %5099 = vmatprep.subr.bf16.mxu0 %v4860
        %5100 = vmatpush1.bf16.msra.mxu0 %v4859
        %5101 = vmatprep.subr.bf16.mxu0 %v4864
        %5102 = vmatpush1.bf16.msra.mxu0 %v4863
        %5103 = vmatprep.subr.bf16.mxu0 %v4868
        %5104 = vmatpush1.bf16.msra.mxu0 %v4867
        %5105 = vmatprep.subr.bf16.mxu0 %v4872
        %5106 = vmatpush1.bf16.msra.mxu0 %v4871
        %5107 = vmatprep.subr.bf16.mxu0 %v4876
        %5108 = vmatpush1.bf16.msra.mxu0 %v4875
        %5109 = vmatprep.subr.bf16.mxu0 %v4880
        %5110 = vmatpush1.bf16.msra.mxu0 %v4879
        %5111 = vmatprep.subr.bf16.mxu0 %v4884
        %5112 = vmatpush1.bf16.msra.mxu0 %v4883
        %5113 = vmatprep.subr.bf16.mxu0 %v4888
        %5114 = vmatpush1.bf16.msra.mxu0 %v4887
        %5115 = vmatprep.mubr.bf16.mxu0 %v4690
        %5116 = vmatmul.mubr.bf16.gmra.mrb[0].mxu0 %v4689
        %v5117 = vpop.f32.mrb[0].mxu0
        %v5118 = vadd.f32 0.0, %v5117
        %v5119 = vpop.f32.mrb[0].mxu0
        %v5120 = vadd.f32 0.0, %v5119
        %v5121 = vpop.f32.mrb[0].mxu0
        %v5122 = vpop.f32.mrb[0].mxu0
        %5123 = vdwg.mxu0
        %5124 = vmatprep.subr.bf16.mxu0 %v4892
        %5125 = vmatpush1.bf16.msra.mxu0 %v4891
        %5126 = vmatprep.subr.bf16.mxu0 %v4896
        %5127 = vmatpush1.bf16.msra.mxu0 %v4895
        %5128 = vmatprep.subr.bf16.mxu0 %v4900
        %5129 = vmatpush1.bf16.msra.mxu0 %v4899
        %5130 = vmatprep.subr.bf16.mxu0 %v4904
        %5131 = vmatpush1.bf16.msra.mxu0 %v4903
        %5132 = vmatprep.subr.bf16.mxu0 %v4908
        %5133 = vmatpush1.bf16.msra.mxu0 %v4907
        %5134 = vmatprep.subr.bf16.mxu0 %v4912
        %5135 = vmatpush1.bf16.msra.mxu0 %v4911
        %5136 = vmatprep.subr.bf16.mxu0 %v4916
        %5137 = vmatpush1.bf16.msra.mxu0 %v4915
        %5138 = vmatprep.subr.bf16.mxu0 %v4920
        %5139 = vmatpush1.bf16.msra.mxu0 %v4919
        %5140 = vmatprep.subr.bf16.mxu0 %v4924
        %5141 = vmatpush1.bf16.msra.mxu0 %v4923
        %5142 = vmatprep.subr.bf16.mxu0 %v4928
        %5143 = vmatpush1.bf16.msra.mxu0 %v4927
        %5144 = vmatprep.subr.bf16.mxu0 %v4932
        %5145 = vmatpush1.bf16.msra.mxu0 %v4931
        %5146 = vmatprep.subr.bf16.mxu0 %v4936
        %5147 = vmatpush1.bf16.msra.mxu0 %v4935
        %5148 = vmatprep.subr.bf16.mxu0 %v4940
        %5149 = vmatpush1.bf16.msra.mxu0 %v4939
        %5150 = vmatprep.subr.bf16.mxu0 %v4944
        %5151 = vmatpush1.bf16.msra.mxu0 %v4943
        %5152 = vmatprep.subr.bf16.mxu0 %v4948
        %5153 = vmatpush1.bf16.msra.mxu0 %v4947
        %5154 = vmatprep.subr.bf16.mxu0 %v4952
        %5155 = vmatpush1.bf16.msra.mxu0 %v4951
        %5156 = vmatprep.mubr.bf16.mxu0 %v4692
        %5157 = vmatmul.mubr.bf16.gmra.mrb[0].mxu0 %v4691
        %v5158 = vpop.f32.mrb[0].mxu0
        %v5159 = vadd.f32 %v5118, %v5158
        %v5160 = vpop.f32.mrb[0].mxu0
        %v5161 = vadd.f32 %v5120, %v5160
        %v5162 = vpop.f32.mrb[0].mxu0
        %v5163 = vpop.f32.mrb[0].mxu0
        %5164 = vdwg.mxu0
        %5165 = vmatprep.subr.bf16.mxu0 %v4956
        %5166 = vmatpush1.bf16.msra.mxu0 %v4955
        %5167 = vmatprep.subr.bf16.mxu0 %v4960
        %5168 = vmatpush1.bf16.msra.mxu0 %v4959
        %5169 = vmatprep.subr.bf16.mxu0 %v4964
        %5170 = vmatpush1.bf16.msra.mxu0 %v4963
        %5171 = vmatprep.subr.bf16.mxu0 %v4968
        %5172 = vmatpush1.bf16.msra.mxu0 %v4967
        %5173 = vmatprep.subr.bf16.mxu0 %v4972
        %5174 = vmatpush1.bf16.msra.mxu0 %v4971
        %5175 = vmatprep.subr.bf16.mxu0 %v4976
        %5176 = vmatpush1.bf16.msra.mxu0 %v4975
        %5177 = vmatprep.subr.bf16.mxu0 %v4980
        %5178 = vmatpush1.bf16.msra.mxu0 %v4979
        %5179 = vmatprep.subr.bf16.mxu0 %v4984
        %5180 = vmatpush1.bf16.msra.mxu0 %v4983
        %5181 = vmatprep.subr.bf16.mxu0 %v4988
        %5182 = vmatpush1.bf16.msra.mxu0 %v4987
        %5183 = vmatprep.subr.bf16.mxu0 %v4992
        %5184 = vmatpush1.bf16.msra.mxu0 %v4991
        %5185 = vmatprep.subr.bf16.mxu0 %v4996
        %5186 = vmatpush1.bf16.msra.mxu0 %v4995
        %5187 = vmatprep.subr.bf16.mxu0 %v5000
        %5188 = vmatpush1.bf16.msra.mxu0 %v4999
        %5189 = vmatprep.subr.bf16.mxu0 %v5004
        %5190 = vmatpush1.bf16.msra.mxu0 %v5003
        %5191 = vmatprep.subr.bf16.mxu0 %v5008
        %5192 = vmatpush1.bf16.msra.mxu0 %v5007
        %5193 = vmatprep.subr.bf16.mxu0 %v5012
        %5194 = vmatpush1.bf16.msra.mxu0 %v5011
        %5195 = vmatprep.subr.bf16.mxu0 %v5016
        %5196 = vmatpush1.bf16.msra.mxu0 %v5015
        %5197 = vmatprep.mubr.bf16.mxu0 %v4694
        %5198 = vmatmul.mubr.bf16.gmra.mrb[0].mxu0 %v4693
        %v5199 = vpop.f32.mrb[0].mxu0
        %v5200 = vadd.f32 %v5159, %v5199
        %v5201 = vpop.f32.mrb[0].mxu0
        %v5202 = vadd.f32 %v5161, %v5201
        %v5203 = vpop.f32.mrb[0].mxu0
        %v5204 = vpop.f32.mrb[0].mxu0
        %5205 = vdwg.mxu0
        %5206 = vmatprep.subr.bf16.mxu0 %v5020
        %5207 = vmatpush1.bf16.msra.mxu0 %v5019
        %5208 = vmatprep.subr.bf16.mxu0 %v5024
        %5209 = vmatpush1.bf16.msra.mxu0 %v5023
        %5210 = vmatprep.subr.bf16.mxu0 %v5028
        %5211 = vmatpush1.bf16.msra.mxu0 %v5027
        %5212 = vmatprep.subr.bf16.mxu0 %v5032
        %5213 = vmatpush1.bf16.msra.mxu0 %v5031
        %5214 = vmatprep.subr.bf16.mxu0 %v5036
        %5215 = vmatpush1.bf16.msra.mxu0 %v5035
        %5216 = vmatprep.subr.bf16.mxu0 %v5040
        %5217 = vmatpush1.bf16.msra.mxu0 %v5039
        %5218 = vmatprep.subr.bf16.mxu0 %v5044
        %5219 = vmatpush1.bf16.msra.mxu0 %v5043
        %5220 = vmatprep.subr.bf16.mxu0 %v5048
        %5221 = vmatpush1.bf16.msra.mxu0 %v5047
        %5222 = vmatprep.subr.bf16.mxu0 %v5052
        %5223 = vmatpush1.bf16.msra.mxu0 %v5051
        %5224 = vmatprep.subr.bf16.mxu0 %v5056
        %5225 = vmatpush1.bf16.msra.mxu0 %v5055
        %5226 = vmatprep.subr.bf16.mxu0 %v5060
        %5227 = vmatpush1.bf16.msra.mxu0 %v5059
        %5228 = vmatprep.subr.bf16.mxu0 %v5064
        %5229 = vmatpush1.bf16.msra.mxu0 %v5063
        %5230 = vmatprep.subr.bf16.mxu0 %v5068
        %5231 = vmatpush1.bf16.msra.mxu0 %v5067
        %5232 = vmatprep.subr.bf16.mxu0 %v5072
        %5233 = vmatpush1.bf16.msra.mxu0 %v5071
        %5234 = vmatprep.subr.bf16.mxu0 %v5076
        %5235 = vmatpush1.bf16.msra.mxu0 %v5075
        %5236 = vmatprep.subr.bf16.mxu0 %v5080
        %5237 = vmatpush1.bf16.msra.mxu0 %v5079
        %5238 = vmatprep.mubr.bf16.mxu0 %v4696
        %5239 = vmatmul.mubr.bf16.gmra.mrb[0].mxu0 %v4695
        %v5240 = vpop.f32.mrb[0].mxu0
        %v5241 = vadd.f32 %v5200, %v5240
        %v5242 = vpop.f32.mrb[0].mxu0
        %v5243 = vadd.f32 %v5202, %v5242
        %v5244 = vpop.f32.mrb[0].mxu0
        %v5245 = vpop.f32.mrb[0].mxu0
        %5246 = vdwg.mxu0
        %5247 = vmatprep.subr.bf16.mxu0 %v4830
        %5248 = vmatpush1.bf16.msra.mxu0 %v4829
        %5249 = vmatprep.subr.bf16.mxu0 %v4834
        %5250 = vmatpush1.bf16.msra.mxu0 %v4833
        %5251 = vmatprep.subr.bf16.mxu0 %v4838
        %5252 = vmatpush1.bf16.msra.mxu0 %v4837
        %5253 = vmatprep.subr.bf16.mxu0 %v4842
        %5254 = vmatpush1.bf16.msra.mxu0 %v4841
        %5255 = vmatprep.subr.bf16.mxu0 %v4846
        %5256 = vmatpush1.bf16.msra.mxu0 %v4845
        %5257 = vmatprep.subr.bf16.mxu0 %v4850
        %5258 = vmatpush1.bf16.msra.mxu0 %v4849
        %5259 = vmatprep.subr.bf16.mxu0 %v4854
        %5260 = vmatpush1.bf16.msra.mxu0 %v4853
        %5261 = vmatprep.subr.bf16.mxu0 %v4858
        %5262 = vmatpush1.bf16.msra.mxu0 %v4857
        %5263 = vmatprep.subr.bf16.mxu0 %v4862
        %5264 = vmatpush1.bf16.msra.mxu0 %v4861
        %5265 = vmatprep.subr.bf16.mxu0 %v4866
        %5266 = vmatpush1.bf16.msra.mxu0 %v4865
        %5267 = vmatprep.subr.bf16.mxu0 %v4870
        %5268 = vmatpush1.bf16.msra.mxu0 %v4869
        %5269 = vmatprep.subr.bf16.mxu0 %v4874
        %5270 = vmatpush1.bf16.msra.mxu0 %v4873
        %5271 = vmatprep.subr.bf16.mxu0 %v4878
        %5272 = vmatpush1.bf16.msra.mxu0 %v4877
        %5273 = vmatprep.subr.bf16.mxu0 %v4882
        %5274 = vmatpush1.bf16.msra.mxu0 %v4881
        %5275 = vmatprep.subr.bf16.mxu0 %v4886
        %5276 = vmatpush1.bf16.msra.mxu0 %v4885
        %5277 = vmatprep.subr.bf16.mxu0 %v4890
        %5278 = vmatpush1.bf16.msra.mxu0 %v4889
        %5279 = vmatprep.mubr.bf16.mxu0 %v4690
        %5280 = vmatmul.mubr.bf16.gmra.mrb[0].mxu0 %v4689
        %v5281 = vpop.f32.mrb[0].mxu0
        %v5282 = vadd.f32 0.0, %v5281
        %v5283 = vpop.f32.mrb[0].mxu0
        %v5284 = vadd.f32 0.0, %v5283
        %v5285 = vpop.f32.mrb[0].mxu0
        %v5286 = vpop.f32.mrb[0].mxu0
        %5287 = vdwg.mxu0
        %5288 = vmatprep.subr.bf16.mxu0 %v4894
        %5289 = vmatpush1.bf16.msra.mxu0 %v4893
        %5290 = vmatprep.subr.bf16.mxu0 %v4898
        %5291 = vmatpush1.bf16.msra.mxu0 %v4897
        %5292 = vmatprep.subr.bf16.mxu0 %v4902
        %5293 = vmatpush1.bf16.msra.mxu0 %v4901
        %5294 = vmatprep.subr.bf16.mxu0 %v4906
        %5295 = vmatpush1.bf16.msra.mxu0 %v4905
        %5296 = vmatprep.subr.bf16.mxu0 %v4910
        %5297 = vmatpush1.bf16.msra.mxu0 %v4909
        %5298 = vmatprep.subr.bf16.mxu0 %v4914
        %5299 = vmatpush1.bf16.msra.mxu0 %v4913
        %5300 = vmatprep.subr.bf16.mxu0 %v4918
        %5301 = vmatpush1.bf16.msra.mxu0 %v4917
        %5302 = vmatprep.subr.bf16.mxu0 %v4922
        %5303 = vmatpush1.bf16.msra.mxu0 %v4921
        %5304 = vmatprep.subr.bf16.mxu0 %v4926
        %5305 = vmatpush1.bf16.msra.mxu0 %v4925
        %5306 = vmatprep.subr.bf16.mxu0 %v4930
        %5307 = vmatpush1.bf16.msra.mxu0 %v4929
        %5308 = vmatprep.subr.bf16.mxu0 %v4934
        %5309 = vmatpush1.bf16.msra.mxu0 %v4933
        %5310 = vmatprep.subr.bf16.mxu0 %v4938
        %5311 = vmatpush1.bf16.msra.mxu0 %v4937
        %5312 = vmatprep.subr.bf16.mxu0 %v4942
        %5313 = vmatpush1.bf16.msra.mxu0 %v4941
        %5314 = vmatprep.subr.bf16.mxu0 %v4946
        %5315 = vmatpush1.bf16.msra.mxu0 %v4945
        %5316 = vmatprep.subr.bf16.mxu0 %v4950
        %5317 = vmatpush1.bf16.msra.mxu0 %v4949
        %5318 = vmatprep.subr.bf16.mxu0 %v4954
        %5319 = vmatpush1.bf16.msra.mxu0 %v4953
        %5320 = vmatprep.mubr.bf16.mxu0 %v4692
        %5321 = vmatmul.mubr.bf16.gmra.mrb[0].mxu0 %v4691
        %v5322 = vpop.f32.mrb[0].mxu0
        %v5323 = vadd.f32 %v5282, %v5322
        %v5324 = vpop.f32.mrb[0].mxu0
        %v5325 = vadd.f32 %v5284, %v5324
        %v5326 = vpop.f32.mrb[0].mxu0
        %v5327 = vpop.f32.mrb[0].mxu0
        %5328 = vdwg.mxu0
        %5329 = vmatprep.subr.bf16.mxu0 %v4958
        %5330 = vmatpush1.bf16.msra.mxu0 %v4957
        %5331 = vmatprep.subr.bf16.mxu0 %v4962
        %5332 = vmatpush1.bf16.msra.mxu0 %v4961
        %5333 = vmatprep.subr.bf16.mxu0 %v4966
        %5334 = vmatpush1.bf16.msra.mxu0 %v4965
        %5335 = vmatprep.subr.bf16.mxu0 %v4970
        %5336 = vmatpush1.bf16.msra.mxu0 %v4969
        %5337 = vmatprep.subr.bf16.mxu0 %v4974
        %5338 = vmatpush1.bf16.msra.mxu0 %v4973
        %5339 = vmatprep.subr.bf16.mxu0 %v4978
        %5340 = vmatpush1.bf16.msra.mxu0 %v4977
        %5341 = vmatprep.subr.bf16.mxu0 %v4982
        %5342 = vmatpush1.bf16.msra.mxu0 %v4981
        %5343 = vmatprep.subr.bf16.mxu0 %v4986
        %5344 = vmatpush1.bf16.msra.mxu0 %v4985
        %5345 = vmatprep.subr.bf16.mxu0 %v4990
        %5346 = vmatpush1.bf16.msra.mxu0 %v4989
        %5347 = vmatprep.subr.bf16.mxu0 %v4994
        %5348 = vmatpush1.bf16.msra.mxu0 %v4993
        %5349 = vmatprep.subr.bf16.mxu0 %v4998
        %5350 = vmatpush1.bf16.msra.mxu0 %v4997
        %5351 = vmatprep.subr.bf16.mxu0 %v5002
        %5352 = vmatpush1.bf16.msra.mxu0 %v5001
        %5353 = vmatprep.subr.bf16.mxu0 %v5006
        %5354 = vmatpush1.bf16.msra.mxu0 %v5005
        %5355 = vmatprep.subr.bf16.mxu0 %v5010
        %5356 = vmatpush1.bf16.msra.mxu0 %v5009
        %5357 = vmatprep.subr.bf16.mxu0 %v5014
        %5358 = vmatpush1.bf16.msra.mxu0 %v5013
        %5359 = vmatprep.subr.bf16.mxu0 %v5018
        %5360 = vmatpush1.bf16.msra.mxu0 %v5017
        %5361 = vmatprep.mubr.bf16.mxu0 %v4694
        %5362 = vmatmul.mubr.bf16.gmra.mrb[0].mxu0 %v4693
        %v5363 = vpop.f32.mrb[0].mxu0
        %v5364 = vadd.f32 %v5323, %v5363
        %v5365 = vpop.f32.mrb[0].mxu0
        %v5366 = vadd.f32 %v5325, %v5365
        %v5367 = vpop.f32.mrb[0].mxu0
        %v5368 = vpop.f32.mrb[0].mxu0
        %5369 = vdwg.mxu0
        %5370 = vmatprep.subr.bf16.mxu0 %v5022
        %5371 = vmatpush1.bf16.msra.mxu0 %v5021
        %5372 = vmatprep.subr.bf16.mxu0 %v5026
        %5373 = vmatpush1.bf16.msra.mxu0 %v5025
        %5374 = vmatprep.subr.bf16.mxu0 %v5030
        %5375 = vmatpush1.bf16.msra.mxu0 %v5029
        %5376 = vmatprep.subr.bf16.mxu0 %v5034
        %5377 = vmatpush1.bf16.msra.mxu0 %v5033
        %5378 = vmatprep.subr.bf16.mxu0 %v5038
        %5379 = vmatpush1.bf16.msra.mxu0 %v5037
        %5380 = vmatprep.subr.bf16.mxu0 %v5042
        %5381 = vmatpush1.bf16.msra.mxu0 %v5041
        %5382 = vmatprep.subr.bf16.mxu0 %v5046
        %5383 = vmatpush1.bf16.msra.mxu0 %v5045
        %5384 = vmatprep.subr.bf16.mxu0 %v5050
        %5385 = vmatpush1.bf16.msra.mxu0 %v5049
        %5386 = vmatprep.subr.bf16.mxu0 %v5054
        %5387 = vmatpush1.bf16.msra.mxu0 %v5053
        %5388 = vmatprep.subr.bf16.mxu0 %v5058
        %5389 = vmatpush1.bf16.msra.mxu0 %v5057
        %5390 = vmatprep.subr.bf16.mxu0 %v5062
        %5391 = vmatpush1.bf16.msra.mxu0 %v5061
        %5392 = vmatprep.subr.bf16.mxu0 %v5066
        %5393 = vmatpush1.bf16.msra.mxu0 %v5065
        %5394 = vmatprep.subr.bf16.mxu0 %v5070
        %5395 = vmatpush1.bf16.msra.mxu0 %v5069
        %5396 = vmatprep.subr.bf16.mxu0 %v5074
        %5397 = vmatpush1.bf16.msra.mxu0 %v5073
        %5398 = vmatprep.subr.bf16.mxu0 %v5078
        %5399 = vmatpush1.bf16.msra.mxu0 %v5077
        %5400 = vmatprep.subr.bf16.mxu0 %v5082
        %5401 = vmatpush1.bf16.msra.mxu0 %v5081
        %5402 = vmatprep.mubr.bf16.mxu0 %v4696
        %5403 = vmatmul.mubr.bf16.gmra.mrb[0].mxu0 %v4695
        %v5404 = vpop.f32.mrb[0].mxu0
        %v5405 = vadd.f32 %v5364, %v5404
        %v5406 = vpop.f32.mrb[0].mxu0
        %v5407 = vadd.f32 %v5366, %v5406
        %v5408 = vpop.f32.mrb[0].mxu0
        %v5409 = vpop.f32.mrb[0].mxu0
        %5410 = vdwg.mxu0
        %v5412 = vlaneseq
        %v5413 = vshrl.u32 %v5412, 7
        %v5414 = vsub.s32 0, %v5413
        %v5415 = vrot.slane %v4825, %v5414
        %v5416 = vlaneseq
        %v5417 = vshrl.u32 %v5416, 7
        %v5418 = vsub.s32 1, %v5417
        %v5419 = vrot.slane %v4825, %v5418
        %v5420 = vlaneseq
        %v5421 = vshrl.u32 %v5420, 7
        %v5422 = vsub.s32 2, %v5421
        %v5423 = vrot.slane %v4825, %v5422
        %v5424 = vlaneseq
        %v5425 = vshrl.u32 %v5424, 7
        %v5426 = vsub.s32 3, %v5425
        %v5427 = vrot.slane %v4825, %v5426
        %v5432 = vmul.f32 %v5241, %v5415
        %v5433 = vmul.f32 %v5243, %v5419
        %v5434 = vmul.f32 %v5405, %v5423
        %v5435 = vmul.f32 %v5407, %v5427
        %v5437 = vlaneseq
        %v5438 = vshrl.u32 %v5437, 7
        %v5439 = vsub.s32 0, %v5438
        %v5440 = vrot.slane %v4826, %v5439
        %v5441 = vlaneseq
        %v5442 = vshrl.u32 %v5441, 7
        %v5443 = vsub.s32 1, %v5442
        %v5444 = vrot.slane %v4826, %v5443
        %v5445 = vlaneseq
        %v5446 = vshrl.u32 %v5445, 7
        %v5447 = vsub.s32 2, %v5446
        %v5448 = vrot.slane %v4826, %v5447
        %v5449 = vlaneseq
        %v5450 = vshrl.u32 %v5449, 7
        %v5451 = vsub.s32 3, %v5450
        %v5452 = vrot.slane %v4826, %v5451
        %v5457 = vadd.f32 %v5432, %v5440
        %v5458 = vadd.f32 %v5433, %v5444
        %v5459 = vadd.f32 %v5434, %v5448
        %v5460 = vadd.f32 %v5435, %v5452
        %vm5461 = vcmp.gt.f32.partialorder %v5457, 0.0
        %vm5462 = vcmp.gt.f32.partialorder %v5458, 0.0
        %vm5463 = vcmp.gt.f32.partialorder %v5459, 0.0
        %vm5464 = vcmp.gt.f32.partialorder %v5460, 0.0
        %v5465 = vmul.f32 %v5457, 0.01
        %v5466 = vmul.f32 %v5458, 0.01
        %v5467 = vmul.f32 %v5459, 0.01
        %v5468 = vmul.f32 %v5460, 0.01
        %v5469 = vsel %vm5461, %v5457, %v5465
        %v5470 = vsel %vm5462, %v5458, %v5466
        %v5471 = vsel %vm5463, %v5459, %v5467
        %v5472 = vsel %vm5464, %v5460, %v5468
        %v5473 = vpack.c.bf16 %v5469, %v5469
        %v5474 = vpack.c.bf16 %v5470, %v5470
        %v5475 = vpack.c.bf16 %v5471, %v5471
        %v5476 = vpack.c.bf16 %v5472, %v5472
        %v5477 = vld [vmem:[%s1280] sm:$0xff]
        %v5478 = vld [vmem:[%s1280 + $0x8] sm:$0xff]
        %v5479 = vld [vmem:[%s1280 + $0x10] sm:$0xff]
        %v5480 = vld [vmem:[%s1280 + $0x18] sm:$0xff]
        %v5481 = vld [vmem:[%s1280 + $0x20] sm:$0xff]
        %v5482 = vld [vmem:[%s1280 + $0x28] sm:$0xff]
        %v5483 = vld [vmem:[%s1280 + $0x30] sm:$0xff]
        %v5484 = vld [vmem:[%s1280 + $0x38] sm:$0xff]
        %v5485 = vld [vmem:[%s1280 + $0x40] sm:$0xff]
        %v5486 = vld [vmem:[%s1280 + $0x48] sm:$0xff]
        %v5487 = vld [vmem:[%s1280 + $0x50] sm:$0xff]
        %v5488 = vld [vmem:[%s1280 + $0x58] sm:$0xff]
        %v5489 = vld [vmem:[%s1280 + $0x60] sm:$0xff]
        %v5490 = vld [vmem:[%s1280 + $0x68] sm:$0xff]
        %v5491 = vld [vmem:[%s1280 + $0x70] sm:$0xff]
        %v5492 = vld [vmem:[%s1280 + $0x78] sm:$0xff]
        %v5493 = vld [vmem:[%s1280 + $0x80] sm:$0xff]
        %v5494 = vld [vmem:[%s1280 + $0x88] sm:$0xff]
        %v5495 = vld [vmem:[%s1280 + $0x90] sm:$0xff]
        %v5496 = vld [vmem:[%s1280 + $0x98] sm:$0xff]
        %v5497 = vld [vmem:[%s1280 + $0xa0] sm:$0xff]
        %v5498 = vld [vmem:[%s1280 + $0xa8] sm:$0xff]
        %v5499 = vld [vmem:[%s1280 + $0xb0] sm:$0xff]
        %v5500 = vld [vmem:[%s1280 + $0xb8] sm:$0xff]
        %v5501 = vld [vmem:[%s1280 + $0xc0] sm:$0xff]
        %v5502 = vld [vmem:[%s1280 + $0xc8] sm:$0xff]
        %v5503 = vld [vmem:[%s1280 + $0xd0] sm:$0xff]
        %v5504 = vld [vmem:[%s1280 + $0xd8] sm:$0xff]
        %v5505 = vld [vmem:[%s1280 + $0xe0] sm:$0xff]
        %v5506 = vld [vmem:[%s1280 + $0xe8] sm:$0xff]
        %v5507 = vld [vmem:[%s1280 + $0xf0] sm:$0xff]
        %v5508 = vld [vmem:[%s1280 + $0xf8] sm:$0xff]
        %v5509 = vld [vmem:[%s1289] sm:$0x3]
        %v5510 = vld [vmem:[%s1298] sm:$0x3]
        %v5511 = vunpack.c.l.s8.bf16 %v5477
        %v5512 = vunpack.c.l.s8.bf16 %v5478
        %v5513 = vunpack.c.h.s8.bf16 %v5477
        %v5514 = vunpack.c.h.s8.bf16 %v5478
        %v5515 = vunpack.c.l.s8.bf16 %v5479
        %v5516 = vunpack.c.l.s8.bf16 %v5480
        %v5517 = vunpack.c.h.s8.bf16 %v5479
        %v5518 = vunpack.c.h.s8.bf16 %v5480
        %v5519 = vunpack.c.l.s8.bf16 %v5481
        %v5520 = vunpack.c.l.s8.bf16 %v5482
        %v5521 = vunpack.c.h.s8.bf16 %v5481
        %v5522 = vunpack.c.h.s8.bf16 %v5482
        %v5523 = vunpack.c.l.s8.bf16 %v5483
        %v5524 = vunpack.c.l.s8.bf16 %v5484
        %v5525 = vunpack.c.h.s8.bf16 %v5483
        %v5526 = vunpack.c.h.s8.bf16 %v5484
        %v5527 = vunpack.c.l.s8.bf16 %v5485
        %v5528 = vunpack.c.l.s8.bf16 %v5486
        %v5529 = vunpack.c.h.s8.bf16 %v5485
        %v5530 = vunpack.c.h.s8.bf16 %v5486
        %v5531 = vunpack.c.l.s8.bf16 %v5487
        %v5532 = vunpack.c.l.s8.bf16 %v5488
        %v5533 = vunpack.c.h.s8.bf16 %v5487
        %v5534 = vunpack.c.h.s8.bf16 %v5488
        %v5535 = vunpack.c.l.s8.bf16 %v5489
        %v5536 = vunpack.c.l.s8.bf16 %v5490
        %v5537 = vunpack.c.h.s8.bf16 %v5489
        %v5538 = vunpack.c.h.s8.bf16 %v5490
        %v5539 = vunpack.c.l.s8.bf16 %v5491
        %v5540 = vunpack.c.l.s8.bf16 %v5492
        %v5541 = vunpack.c.h.s8.bf16 %v5491
        %v5542 = vunpack.c.h.s8.bf16 %v5492
        %v5543 = vunpack.c.l.s8.bf16 %v5493
        %v5544 = vunpack.c.l.s8.bf16 %v5494
        %v5545 = vunpack.c.h.s8.bf16 %v5493
        %v5546 = vunpack.c.h.s8.bf16 %v5494
        %v5547 = vunpack.c.l.s8.bf16 %v5495
        %v5548 = vunpack.c.l.s8.bf16 %v5496
        %v5549 = vunpack.c.h.s8.bf16 %v5495
        %v5550 = vunpack.c.h.s8.bf16 %v5496
        %v5551 = vunpack.c.l.s8.bf16 %v5497
        %v5552 = vunpack.c.l.s8.bf16 %v5498
        %v5553 = vunpack.c.h.s8.bf16 %v5497
        %v5554 = vunpack.c.h.s8.bf16 %v5498
        %v5555 = vunpack.c.l.s8.bf16 %v5499
        %v5556 = vunpack.c.l.s8.bf16 %v5500
        %v5557 = vunpack.c.h.s8.bf16 %v5499
        %v5558 = vunpack.c.h.s8.bf16 %v5500
        %v5559 = vunpack.c.l.s8.bf16 %v5501
        %v5560 = vunpack.c.l.s8.bf16 %v5502
        %v5561 = vunpack.c.h.s8.bf16 %v5501
        %v5562 = vunpack.c.h.s8.bf16 %v5502
        %v5563 = vunpack.c.l.s8.bf16 %v5503
        %v5564 = vunpack.c.l.s8.bf16 %v5504
        %v5565 = vunpack.c.h.s8.bf16 %v5503
        %v5566 = vunpack.c.h.s8.bf16 %v5504
        %v5567 = vunpack.c.l.s8.bf16 %v5505
        %v5568 = vunpack.c.l.s8.bf16 %v5506
        %v5569 = vunpack.c.h.s8.bf16 %v5505
        %v5570 = vunpack.c.h.s8.bf16 %v5506
        %v5571 = vunpack.c.l.s8.bf16 %v5507
        %v5572 = vunpack.c.l.s8.bf16 %v5508
        %v5573 = vunpack.c.h.s8.bf16 %v5507
        %v5574 = vunpack.c.h.s8.bf16 %v5508
        %5575 = vmatprep.subr.bf16.mxu0 %v5512
        %5576 = vmatpush1.bf16.msra.mxu0 %v5511
        %5577 = vmatprep.subr.bf16.mxu0 %v5514
        %5578 = vmatpush1.bf16.msra.mxu0 %v5513
        %5579 = vmatprep.subr.bf16.mxu0 %v5516
        %5580 = vmatpush1.bf16.msra.mxu0 %v5515
        %5581 = vmatprep.subr.bf16.mxu0 %v5518
        %5582 = vmatpush1.bf16.msra.mxu0 %v5517
        %5583 = vmatprep.subr.bf16.mxu0 %v5520
        %5584 = vmatpush1.bf16.msra.mxu0 %v5519
        %5585 = vmatprep.subr.bf16.mxu0 %v5522
        %5586 = vmatpush1.bf16.msra.mxu0 %v5521
        %5587 = vmatprep.subr.bf16.mxu0 %v5524
        %5588 = vmatpush1.bf16.msra.mxu0 %v5523
        %5589 = vmatprep.subr.bf16.mxu0 %v5526
        %5590 = vmatpush1.bf16.msra.mxu0 %v5525
        %5591 = vmatprep.subr.bf16.mxu0 %v5528
        %5592 = vmatpush1.bf16.msra.mxu0 %v5527
        %5593 = vmatprep.subr.bf16.mxu0 %v5530
        %5594 = vmatpush1.bf16.msra.mxu0 %v5529
        %5595 = vmatprep.subr.bf16.mxu0 %v5532
        %5596 = vmatpush1.bf16.msra.mxu0 %v5531
        %5597 = vmatprep.subr.bf16.mxu0 %v5534
        %5598 = vmatpush1.bf16.msra.mxu0 %v5533
        %5599 = vmatprep.subr.bf16.mxu0 %v5536
        %5600 = vmatpush1.bf16.msra.mxu0 %v5535
        %5601 = vmatprep.subr.bf16.mxu0 %v5538
        %5602 = vmatpush1.bf16.msra.mxu0 %v5537
        %5603 = vmatprep.subr.bf16.mxu0 %v5540
        %5604 = vmatpush1.bf16.msra.mxu0 %v5539
        %5605 = vmatprep.subr.bf16.mxu0 %v5542
        %5606 = vmatpush1.bf16.msra.mxu0 %v5541
        %5607 = vmatprep.mubr.bf16.mxu0 %v5474
        %5608 = vmatmul.mubr.bf16.gmra.mrb[0].mxu0 %v5473
        %v5609 = vpop.f32.mrb[0].mxu0
        %v5610 = vadd.f32 0.0, %v5609
        %v5611 = vpop.f32.mrb[0].mxu0
        %v5612 = vadd.f32 0.0, %v5611
        %v5613 = vpop.f32.mrb[0].mxu0
        %v5614 = vpop.f32.mrb[0].mxu0
        %5615 = vdwg.mxu0
        %5616 = vmatprep.subr.bf16.mxu0 %v5544
        %5617 = vmatpush1.bf16.msra.mxu0 %v5543
        %5618 = vmatprep.subr.bf16.mxu0 %v5546
        %5619 = vmatpush1.bf16.msra.mxu0 %v5545
        %5620 = vmatprep.subr.bf16.mxu0 %v5548
        %5621 = vmatpush1.bf16.msra.mxu0 %v5547
        %5622 = vmatprep.subr.bf16.mxu0 %v5550
        %5623 = vmatpush1.bf16.msra.mxu0 %v5549
        %5624 = vmatprep.subr.bf16.mxu0 %v5552
        %5625 = vmatpush1.bf16.msra.mxu0 %v5551
        %5626 = vmatprep.subr.bf16.mxu0 %v5554
        %5627 = vmatpush1.bf16.msra.mxu0 %v5553
        %5628 = vmatprep.subr.bf16.mxu0 %v5556
        %5629 = vmatpush1.bf16.msra.mxu0 %v5555
        %5630 = vmatprep.subr.bf16.mxu0 %v5558
        %5631 = vmatpush1.bf16.msra.mxu0 %v5557
        %5632 = vmatprep.subr.bf16.mxu0 %v5560
        %5633 = vmatpush1.bf16.msra.mxu0 %v5559
        %5634 = vmatprep.subr.bf16.mxu0 %v5562
        %5635 = vmatpush1.bf16.msra.mxu0 %v5561
        %5636 = vmatprep.subr.bf16.mxu0 %v5564
        %5637 = vmatpush1.bf16.msra.mxu0 %v5563
        %5638 = vmatprep.subr.bf16.mxu0 %v5566
        %5639 = vmatpush1.bf16.msra.mxu0 %v5565
        %5640 = vmatprep.subr.bf16.mxu0 %v5568
        %5641 = vmatpush1.bf16.msra.mxu0 %v5567
        %5642 = vmatprep.subr.bf16.mxu0 %v5570
        %5643 = vmatpush1.bf16.msra.mxu0 %v5569
        %5644 = vmatprep.subr.bf16.mxu0 %v5572
        %5645 = vmatpush1.bf16.msra.mxu0 %v5571
        %5646 = vmatprep.subr.bf16.mxu0 %v5574
        %5647 = vmatpush1.bf16.msra.mxu0 %v5573
        %5648 = vmatprep.mubr.bf16.mxu0 %v5476
        %5649 = vmatmul.mubr.bf16.gmra.mrb[0].mxu0 %v5475
        %v5650 = vpop.f32.mrb[0].mxu0
        %v5651 = vadd.f32 %v5610, %v5650
        %v5652 = vpop.f32.mrb[0].mxu0
        %v5653 = vadd.f32 %v5612, %v5652
        %v5654 = vpop.f32.mrb[0].mxu0
        %v5655 = vpop.f32.mrb[0].mxu0
        %5656 = vdwg.mxu0
        %v5658 = vlaneseq
        %v5659 = vshrl.u32 %v5658, 7
        %v5660 = vsub.s32 0, %v5659
        %v5661 = vrot.slane %v5509, %v5660
        %v5662 = vlaneseq
        %v5663 = vshrl.u32 %v5662, 7
        %v5664 = vsub.s32 1, %v5663
        %v5665 = vrot.slane %v5509, %v5664
        %v5668 = vmul.f32 %v5651, %v5661
        %v5669 = vmul.f32 %v5653, %v5665
        %v5671 = vlaneseq
        %v5672 = vshrl.u32 %v5671, 7
        %v5673 = vsub.s32 0, %v5672
        %v5674 = vrot.slane %v5510, %v5673
        %v5675 = vlaneseq
        %v5676 = vshrl.u32 %v5675, 7
        %v5677 = vsub.s32 1, %v5676
        %v5678 = vrot.slane %v5510, %v5677
        %v5681 = vadd.f32 %v5668, %v5674
        %v5682 = vadd.f32 %v5669, %v5678
        %vm5683 = vcmp.gt.f32.partialorder %v5681, 0.0
        %vm5684 = vcmp.gt.f32.partialorder %v5682, 0.0
        %v5685 = vmul.f32 %v5681, 0.01
        %v5686 = vmul.f32 %v5682, 0.01
        %v5687 = vsel %vm5683, %v5681, %v5685
        %v5688 = vsel %vm5684, %v5682, %v5686
        %v5689 = vpack.c.bf16 %v5687, %v5687
        %v5690 = vpack.c.bf16 %v5688, %v5688
        %v5691 = vld [vmem:[%s1307] sm:$0xff]
        %v5692 = vld [vmem:[%s1307 + $0x8] sm:$0xff]
        %v5693 = vld [vmem:[%s1307 + $0x10] sm:$0xff]
        %v5694 = vld [vmem:[%s1307 + $0x18] sm:$0xff]
        %v5695 = vld [vmem:[%s1307 + $0x20] sm:$0xff]
        %v5696 = vld [vmem:[%s1307 + $0x28] sm:$0xff]
        %v5697 = vld [vmem:[%s1307 + $0x30] sm:$0xff]
        %v5698 = vld [vmem:[%s1307 + $0x38] sm:$0xff]
        %v5699 = vld [vmem:[%s1315] sm:$0x1]
        %v5700 = vld [vmem:[%s1323] sm:$0x1]
        %v5701 = vunpack.c.l.s8.bf16 %v5691
        %v5702 = vunpack.c.h.s8.bf16 %v5691
        %v5703 = vunpack.c.l.s8.bf16 %v5692
        %v5704 = vunpack.c.h.s8.bf16 %v5692
        %v5705 = vunpack.c.l.s8.bf16 %v5693
        %v5706 = vunpack.c.h.s8.bf16 %v5693
        %v5707 = vunpack.c.l.s8.bf16 %v5694
        %v5708 = vunpack.c.h.s8.bf16 %v5694
        %v5709 = vunpack.c.l.s8.bf16 %v5695
        %v5710 = vunpack.c.h.s8.bf16 %v5695
        %v5711 = vunpack.c.l.s8.bf16 %v5696
        %v5712 = vunpack.c.h.s8.bf16 %v5696
        %v5713 = vunpack.c.l.s8.bf16 %v5697
        %v5714 = vunpack.c.h.s8.bf16 %v5697
        %v5715 = vunpack.c.l.s8.bf16 %v5698
        %v5716 = vunpack.c.h.s8.bf16 %v5698
        %5717 = vmatprep.subr.bf16.mxu0 0
        %5718 = vmatpush1.bf16.msra.mxu0 %v5701
        %5719 = vmatprep.subr.bf16.mxu0 0
        %5720 = vmatpush1.bf16.msra.mxu0 %v5702
        %5721 = vmatprep.subr.bf16.mxu0 0
        %5722 = vmatpush1.bf16.msra.mxu0 %v5703
        %5723 = vmatprep.subr.bf16.mxu0 0
        %5724 = vmatpush1.bf16.msra.mxu0 %v5704
        %5725 = vmatprep.subr.bf16.mxu0 0
        %5726 = vmatpush1.bf16.msra.mxu0 %v5705
        %5727 = vmatprep.subr.bf16.mxu0 0
        %5728 = vmatpush1.bf16.msra.mxu0 %v5706
        %5729 = vmatprep.subr.bf16.mxu0 0
        %5730 = vmatpush1.bf16.msra.mxu0 %v5707
        %5731 = vmatprep.subr.bf16.mxu0 0
        %5732 = vmatpush1.bf16.msra.mxu0 %v5708
        %5733 = vmatprep.subr.bf16.mxu0 0
        %5734 = vmatpush1.bf16.msra.mxu0 %v5709
        %5735 = vmatprep.subr.bf16.mxu0 0
        %5736 = vmatpush1.bf16.msra.mxu0 %v5710
        %5737 = vmatprep.subr.bf16.mxu0 0
        %5738 = vmatpush1.bf16.msra.mxu0 %v5711
        %5739 = vmatprep.subr.bf16.mxu0 0
        %5740 = vmatpush1.bf16.msra.mxu0 %v5712
        %5741 = vmatprep.subr.bf16.mxu0 0
        %5742 = vmatpush1.bf16.msra.mxu0 %v5713
        %5743 = vmatprep.subr.bf16.mxu0 0
        %5744 = vmatpush1.bf16.msra.mxu0 %v5714
        %5745 = vmatprep.subr.bf16.mxu0 0
        %5746 = vmatpush1.bf16.msra.mxu0 %v5715
        %5747 = vmatprep.subr.bf16.mxu0 0
        %5748 = vmatpush1.bf16.msra.mxu0 %v5716
        %5749 = vmatprep.mubr.bf16.mxu0 %v5690
        %5750 = vmatmul.mubr.bf16.gmra.mrb[0].mxu0 %v5689
        %v5751 = vpop.f32.mrb[0].mxu0
        %v5752 = vadd.f32 0.0, %v5751
        %v5753 = vpop.f32.mrb[0].mxu0
        %v5754 = vpop.f32.mrb[0].mxu0
        %v5755 = vpop.f32.mrb[0].mxu0
        %5756 = vdwg.mxu0
        %v5758 = vlaneseq
        %v5759 = vshrl.u32 %v5758, 7
        %v5760 = vsub.s32 0, %v5759
        %v5761 = vrot.slane %v5699, %v5760
        %v5763 = vmul.f32 %v5752, %v5761
        %v5765 = vlaneseq
        %v5766 = vshrl.u32 %v5765, 7
        %v5767 = vsub.s32 0, %v5766
        %v5768 = vrot.slane %v5700, %v5767
        %v5770 = vadd.f32 %v5763, %v5768
        %vm5771 = vcmp.gt.f32.partialorder %v5770, 0.0
        %v5772 = vmul.f32 %v5770, 0.01
        %v5773 = vsel %vm5771, %v5770, %v5772
        %v5774 = vpack.c.bf16 %v5773, %v5773
        %v5775 = vld [vmem:[%s1332] sm:$0xff]
        %v5776 = vld [vmem:[%s1332 + $0x8] sm:$0xff]
        %v5777 = vld [vmem:[%s1332 + $0x10] sm:$0xff]
        %v5778 = vld [vmem:[%s1332 + $0x18] sm:$0xff]
        %v5779 = vld [vmem:[%s1340] sm:$0x1]
        %v5780 = vld [vmem:[%s1348] sm:$0x1]
        %v5781 = vunpack.c.l.s8.bf16 %v5775
        %v5782 = vunpack.c.h.s8.bf16 %v5775
        %v5783 = vunpack.c.l.s8.bf16 %v5776
        %v5784 = vunpack.c.h.s8.bf16 %v5776
        %v5785 = vunpack.c.l.s8.bf16 %v5777
        %v5786 = vunpack.c.h.s8.bf16 %v5777
        %v5787 = vunpack.c.l.s8.bf16 %v5778
        %v5788 = vunpack.c.h.s8.bf16 %v5778
        %5789 = vmatprep.subr.bf16.mxu0 0
        %5790 = vmatpush1.bf16.msra.mxu0 %v5781
        %5791 = vmatprep.subr.bf16.mxu0 0
        %5792 = vmatpush1.bf16.msra.mxu0 %v5782
        %5793 = vmatprep.subr.bf16.mxu0 0
        %5794 = vmatpush1.bf16.msra.mxu0 %v5783
        %5795 = vmatprep.subr.bf16.mxu0 0
        %5796 = vmatpush1.bf16.msra.mxu0 %v5784
        %5797 = vmatprep.subr.bf16.mxu0 0
        %5798 = vmatpush1.bf16.msra.mxu0 %v5785
        %5799 = vmatprep.subr.bf16.mxu0 0
        %5800 = vmatpush1.bf16.msra.mxu0 %v5786
        %5801 = vmatprep.subr.bf16.mxu0 0
        %5802 = vmatpush1.bf16.msra.mxu0 %v5787
        %5803 = vmatprep.subr.bf16.mxu0 0
        %5804 = vmatpush1.bf16.msra.mxu0 %v5788
        %5805 = vmatprep.subr.bf16.mxu0 0
        %5806 = vmatpush1.bf16.msra.mxu0 0
        %5807 = vmatprep.subr.bf16.mxu0 0
        %5808 = vmatpush1.bf16.msra.mxu0 0
        %5809 = vmatprep.subr.bf16.mxu0 0
        %5810 = vmatpush1.bf16.msra.mxu0 0
        %5811 = vmatprep.subr.bf16.mxu0 0
        %5812 = vmatpush1.bf16.msra.mxu0 0
        %5813 = vmatprep.subr.bf16.mxu0 0
        %5814 = vmatpush1.bf16.msra.mxu0 0
        %5815 = vmatprep.subr.bf16.mxu0 0
        %5816 = vmatpush1.bf16.msra.mxu0 0
        %5817 = vmatprep.subr.bf16.mxu0 0
        %5818 = vmatpush1.bf16.msra.mxu0 0
        %5819 = vmatprep.subr.bf16.mxu0 0
        %5820 = vmatpush1.bf16.msra.mxu0 0
        %5821 = vmatprep.mubr.bf16.mxu0 0
        %5822 = vmatmul.mubr.bf16.gmra.mrb[0].mxu0 %v5774
        %v5823 = vpop.f32.mrb[0].mxu0
        %v5824 = vadd.f32 0.0, %v5823
        %v5825 = vpop.f32.mrb[0].mxu0
        %v5826 = vpop.f32.mrb[0].mxu0
        %v5827 = vpop.f32.mrb[0].mxu0
        %5828 = vdwg.mxu0
        %v5830 = vlaneseq
        %v5831 = vshrl.u32 %v5830, 7
        %v5832 = vsub.s32 0, %v5831
        %v5833 = vrot.slane %v5779, %v5832
        %v5835 = vmul.f32 %v5824, %v5833
        %v5837 = vlaneseq
        %v5838 = vshrl.u32 %v5837, 7
        %v5839 = vsub.s32 0, %v5838
        %v5840 = vrot.slane %v5780, %v5839
        %v5842 = vadd.f32 %v5835, %v5840
        %vm5843 = vcmp.gt.f32.partialorder %v5842, 0.0
        %v5844 = vmul.f32 %v5842, 0.01
        %v5845 = vsel %vm5843, %v5842, %v5844
        %v5846 = vpack.c.bf16 %v5845, %v5845
        %v5847 = vld [vmem:[%s1357] sm:$0xff]
        %v5848 = vld [vmem:[%s1357 + $0x8] sm:$0xff]
        %v5849 = vld [vmem:[%s1357 + $0x10] sm:$0xff]
        %v5850 = vld [vmem:[%s1357 + $0x18] sm:$0xff]
        %v5851 = vld [vmem:[%s1365] sm:$0x1]
        %v5852 = vld [vmem:[%s1373] sm:$0x1]
        %v5853 = vunpack.c.l.s8.bf16 %v5847
        %v5854 = vunpack.c.h.s8.bf16 %v5847
        %v5855 = vunpack.c.l.s8.bf16 %v5848
        %v5856 = vunpack.c.h.s8.bf16 %v5848
        %v5857 = vunpack.c.l.s8.bf16 %v5849
        %v5858 = vunpack.c.h.s8.bf16 %v5849
        %v5859 = vunpack.c.l.s8.bf16 %v5850
        %v5860 = vunpack.c.h.s8.bf16 %v5850
        %5861 = vmatprep.subr.bf16.mxu0 0
        %5862 = vmatpush1.bf16.msra.mxu0 %v5853
        %5863 = vmatprep.subr.bf16.mxu0 0
        %5864 = vmatpush1.bf16.msra.mxu0 %v5854
        %5865 = vmatprep.subr.bf16.mxu0 0
        %5866 = vmatpush1.bf16.msra.mxu0 %v5855
        %5867 = vmatprep.subr.bf16.mxu0 0
        %5868 = vmatpush1.bf16.msra.mxu0 %v5856
        %5869 = vmatprep.subr.bf16.mxu0 0
        %5870 = vmatpush1.bf16.msra.mxu0 %v5857
        %5871 = vmatprep.subr.bf16.mxu0 0
        %5872 = vmatpush1.bf16.msra.mxu0 %v5858
        %5873 = vmatprep.subr.bf16.mxu0 0
        %5874 = vmatpush1.bf16.msra.mxu0 %v5859
        %5875 = vmatprep.subr.bf16.mxu0 0
        %5876 = vmatpush1.bf16.msra.mxu0 %v5860
        %5877 = vmatprep.subr.bf16.mxu0 0
        %5878 = vmatpush1.bf16.msra.mxu0 0
        %5879 = vmatprep.subr.bf16.mxu0 0
        %5880 = vmatpush1.bf16.msra.mxu0 0
        %5881 = vmatprep.subr.bf16.mxu0 0
        %5882 = vmatpush1.bf16.msra.mxu0 0
        %5883 = vmatprep.subr.bf16.mxu0 0
        %5884 = vmatpush1.bf16.msra.mxu0 0
        %5885 = vmatprep.subr.bf16.mxu0 0
        %5886 = vmatpush1.bf16.msra.mxu0 0
        %5887 = vmatprep.subr.bf16.mxu0 0
        %5888 = vmatpush1.bf16.msra.mxu0 0
        %5889 = vmatprep.subr.bf16.mxu0 0
        %5890 = vmatpush1.bf16.msra.mxu0 0
        %5891 = vmatprep.subr.bf16.mxu0 0
        %5892 = vmatpush1.bf16.msra.mxu0 0
        %5893 = vmatprep.mubr.bf16.mxu0 0
        %5894 = vmatmul.mubr.bf16.gmra.mrb[0].mxu0 %v5846
        %v5895 = vpop.f32.mrb[0].mxu0
        %v5896 = vadd.f32 0.0, %v5895
        %v5897 = vpop.f32.mrb[0].mxu0
        %v5898 = vpop.f32.mrb[0].mxu0
        %v5899 = vpop.f32.mrb[0].mxu0
        %5900 = vdwg.mxu0
        %v5902 = vlaneseq
        %v5903 = vshrl.u32 %v5902, 7
        %v5904 = vsub.s32 0, %v5903
        %v5905 = vrot.slane %v5851, %v5904
        %v5907 = vmul.f32 %v5896, %v5905
        %v5909 = vlaneseq
        %v5910 = vshrl.u32 %v5909, 7
        %v5911 = vsub.s32 0, %v5910
        %v5912 = vrot.slane %v5852, %v5911
        %v5914 = vadd.f32 %v5907, %v5912
        %vm5915 = vcmp.gt.f32.partialorder %v5914, 0.0
        %v5916 = vmul.f32 %v5914, 0.01
        %v5917 = vsel %vm5915, %v5914, %v5916
        %v5918 = vpack.c.bf16 %v5917, %v5917
        %v5919 = vld [vmem:[%s1382] sm:$0xff]
        %v5920 = vld [vmem:[%s1382 + $0x8] sm:$0xff]
        %v5921 = vld [vmem:[%s1382 + $0x10] sm:$0xff]
        %v5922 = vld [vmem:[%s1382 + $0x18] sm:$0xff]
        %v5923 = vld [vmem:[%s1390] sm:$0x1]
        %v5924 = vld [vmem:[%s1398] sm:$0x1]
        %v5925 = vunpack.c.l.s8.bf16 %v5919
        %v5926 = vunpack.c.h.s8.bf16 %v5919
        %v5927 = vunpack.c.l.s8.bf16 %v5920
        %v5928 = vunpack.c.h.s8.bf16 %v5920
        %v5929 = vunpack.c.l.s8.bf16 %v5921
        %v5930 = vunpack.c.h.s8.bf16 %v5921
        %v5931 = vunpack.c.l.s8.bf16 %v5922
        %v5932 = vunpack.c.h.s8.bf16 %v5922
        %5933 = vmatprep.subr.bf16.mxu0 0
        %5934 = vmatpush1.bf16.msra.mxu0 %v5925
        %5935 = vmatprep.subr.bf16.mxu0 0
        %5936 = vmatpush1.bf16.msra.mxu0 %v5926
        %5937 = vmatprep.subr.bf16.mxu0 0
        %5938 = vmatpush1.bf16.msra.mxu0 %v5927
        %5939 = vmatprep.subr.bf16.mxu0 0
        %5940 = vmatpush1.bf16.msra.mxu0 %v5928
        %5941 = vmatprep.subr.bf16.mxu0 0
        %5942 = vmatpush1.bf16.msra.mxu0 %v5929
        %5943 = vmatprep.subr.bf16.mxu0 0
        %5944 = vmatpush1.bf16.msra.mxu0 %v5930
        %5945 = vmatprep.subr.bf16.mxu0 0
        %5946 = vmatpush1.bf16.msra.mxu0 %v5931
        %5947 = vmatprep.subr.bf16.mxu0 0
        %5948 = vmatpush1.bf16.msra.mxu0 %v5932
        %5949 = vmatprep.subr.bf16.mxu0 0
        %5950 = vmatpush1.bf16.msra.mxu0 0
        %5951 = vmatprep.subr.bf16.mxu0 0
        %5952 = vmatpush1.bf16.msra.mxu0 0
        %5953 = vmatprep.subr.bf16.mxu0 0
        %5954 = vmatpush1.bf16.msra.mxu0 0
        %5955 = vmatprep.subr.bf16.mxu0 0
        %5956 = vmatpush1.bf16.msra.mxu0 0
        %5957 = vmatprep.subr.bf16.mxu0 0
        %5958 = vmatpush1.bf16.msra.mxu0 0
        %5959 = vmatprep.subr.bf16.mxu0 0
        %5960 = vmatpush1.bf16.msra.mxu0 0
        %5961 = vmatprep.subr.bf16.mxu0 0
        %5962 = vmatpush1.bf16.msra.mxu0 0
        %5963 = vmatprep.subr.bf16.mxu0 0
        %5964 = vmatpush1.bf16.msra.mxu0 0
        %5965 = vmatprep.mubr.bf16.mxu0 0
        %5966 = vmatmul.mubr.bf16.gmra.mrb[0].mxu0 %v5918
        %v5967 = vpop.f32.mrb[0].mxu0
        %v5968 = vadd.f32 0.0, %v5967
        %v5969 = vpop.f32.mrb[0].mxu0
        %v5970 = vpop.f32.mrb[0].mxu0
        %v5971 = vpop.f32.mrb[0].mxu0
        %5972 = vdwg.mxu0
        %v5974 = vlaneseq
        %v5975 = vshrl.u32 %v5974, 7
        %v5976 = vsub.s32 0, %v5975
        %v5977 = vrot.slane %v5923, %v5976
        %v5979 = vmul.f32 %v5968, %v5977
        %v5981 = vlaneseq
        %v5982 = vshrl.u32 %v5981, 7
        %v5983 = vsub.s32 0, %v5982
        %v5984 = vrot.slane %v5924, %v5983
        %v5986 = vadd.f32 %v5979, %v5984
        %vm5987 = vcmp.gt.f32.partialorder %v5986, 0.0
        %v5988 = vmul.f32 %v5986, 0.01
        %v5989 = vsel %vm5987, %v5986, %v5988
        %v5990 = vpack.c.bf16 %v5989, %v5989
        %v5991 = vld [vmem:[%s1407] sm:$0xff]
        %v5992 = vld [vmem:[%s1407 + $0x8] sm:$0xff]
        %v5993 = vld [vmem:[%s1407 + $0x10] sm:$0xff]
        %v5994 = vld [vmem:[%s1407 + $0x18] sm:$0xff]
        %v5995 = vld [vmem:[%s1415] sm:$0x1]
        %v5996 = vld [vmem:[%s1423] sm:$0x1]
        %v5997 = vunpack.c.l.s8.bf16 %v5991
        %v5998 = vunpack.c.h.s8.bf16 %v5991
        %v5999 = vunpack.c.l.s8.bf16 %v5992
        %v6000 = vunpack.c.h.s8.bf16 %v5992
        %v6001 = vunpack.c.l.s8.bf16 %v5993
        %v6002 = vunpack.c.h.s8.bf16 %v5993
        %v6003 = vunpack.c.l.s8.bf16 %v5994
        %v6004 = vunpack.c.h.s8.bf16 %v5994
        %6005 = vmatprep.subr.bf16.mxu0 0
        %6006 = vmatpush1.bf16.msra.mxu0 %v5997
        %6007 = vmatprep.subr.bf16.mxu0 0
        %6008 = vmatpush1.bf16.msra.mxu0 %v5998
        %6009 = vmatprep.subr.bf16.mxu0 0
        %6010 = vmatpush1.bf16.msra.mxu0 %v5999
        %6011 = vmatprep.subr.bf16.mxu0 0
        %6012 = vmatpush1.bf16.msra.mxu0 %v6000
        %6013 = vmatprep.subr.bf16.mxu0 0
        %6014 = vmatpush1.bf16.msra.mxu0 %v6001
        %6015 = vmatprep.subr.bf16.mxu0 0
        %6016 = vmatpush1.bf16.msra.mxu0 %v6002
        %6017 = vmatprep.subr.bf16.mxu0 0
        %6018 = vmatpush1.bf16.msra.mxu0 %v6003
        %6019 = vmatprep.subr.bf16.mxu0 0
        %6020 = vmatpush1.bf16.msra.mxu0 %v6004
        %6021 = vmatprep.subr.bf16.mxu0 0
        %6022 = vmatpush1.bf16.msra.mxu0 0
        %6023 = vmatprep.subr.bf16.mxu0 0
        %6024 = vmatpush1.bf16.msra.mxu0 0
        %6025 = vmatprep.subr.bf16.mxu0 0
        %6026 = vmatpush1.bf16.msra.mxu0 0
        %6027 = vmatprep.subr.bf16.mxu0 0
        %6028 = vmatpush1.bf16.msra.mxu0 0
        %6029 = vmatprep.subr.bf16.mxu0 0
        %6030 = vmatpush1.bf16.msra.mxu0 0
        %6031 = vmatprep.subr.bf16.mxu0 0
        %6032 = vmatpush1.bf16.msra.mxu0 0
        %6033 = vmatprep.subr.bf16.mxu0 0
        %6034 = vmatpush1.bf16.msra.mxu0 0
        %6035 = vmatprep.subr.bf16.mxu0 0
        %6036 = vmatpush1.bf16.msra.mxu0 0
        %6037 = vmatprep.mubr.bf16.mxu0 0
        %6038 = vmatmul.mubr.bf16.gmra.mrb[0].mxu0 %v5990
        %v6039 = vpop.f32.mrb[0].mxu0
        %v6040 = vadd.f32 0.0, %v6039
        %v6041 = vpop.f32.mrb[0].mxu0
        %v6042 = vpop.f32.mrb[0].mxu0
        %v6043 = vpop.f32.mrb[0].mxu0
        %6044 = vdwg.mxu0
        %v6046 = vlaneseq
        %v6047 = vshrl.u32 %v6046, 7
        %v6048 = vsub.s32 0, %v6047
        %v6049 = vrot.slane %v5995, %v6048
        %v6051 = vmul.f32 %v6040, %v6049
        %v6053 = vlaneseq
        %v6054 = vshrl.u32 %v6053, 7
        %v6055 = vsub.s32 0, %v6054
        %v6056 = vrot.slane %v5996, %v6055
        %v6058 = vadd.f32 %v6051, %v6056
        %6059 = vst [vmem:[%s1597] sm:$0x3] %v6058
        %p6060 = scmp.lt.s32.totalorder %s75, 1
        %s6061 = scalar_select %p6060, %s75, 1
        %s6062 = smul.addr %s6061, 2
        %s6063 = scalar_lea.vmem %s25, %s6062
        // Predicated region
        $region217: #{mpilope_forward.1} parent=119 // pred_check
          %p6064 = pneg %p738
        $region218: #{mpilope_forward.1} parent=119 // pred_check_branch
          %6066 = sbr.rel (%p6064) target = $region220
        $region219: #{mpilope_forward.1} parent=119 // pred_region
          _
        $region220: #{mpilope_forward.1} parent=119 // pred_fallthru
          _
      $region120: #{mpilope_forward.1} parent=5 // pred_fallthru
        _
      %p6067 = scmp.le.s32.totalorder 2, %s70
      // Predicated region
      $region221: #{mpilope_forward.1} parent=5 // pred_check
        %p6068 = pneg %p6067
      $region222: #{mpilope_forward.1} parent=5 // pred_check_branch
        %6070 = sbr.rel (%p6068) target = $region224
      $region223: #{mpilope_forward.1} parent=5 // pred_region
        %s6071 = ssub.s32 %s70, 2
        // Predicated region
        $region225: #{mpilope_forward.1} parent=223 // pred_check
          %p6072 = pneg %p744
        $region226: #{mpilope_forward.1} parent=223 // pred_check_branch
          %6074 = sbr.rel (%p6072) target = $region228
        $region227: #{mpilope_forward.1} parent=223 // pred_region
          %p6075 = scmp.lt.s32.totalorder %s76, 1
          %s6076 = scalar_select %p6075, %s76, 1
          %s6077 = smul.addr %s6076, 2
          %s6078 = scalar_lea.vmem %s25, %s6077
        $region228: #{mpilope_forward.1} parent=223 // pred_fallthru
          _
      $region224: #{mpilope_forward.1} parent=5 // pred_fallthru
        _
    $region6: #{mpilope_forward.1} parent=1 // loop_footer
      %s74 = sadd.s32 1, %s70
    $region7: #{mpilope_forward.1} parent=1 // loop_footer_branch
      %69 = sbr.rel target = $region3
    $region8: #{mpilope_forward.1} parent=1 // loop_exit
      _
    %6079 = vsyncpa [#allocation3], 1
    %s6080 = scalar_lea.sflag [#allocation3], 1
    %6081 = vsyncpa %s6080, 1
    %6082 = vsyncpa [#allocation5], 1
    %s6083 = scalar_lea.sflag [#allocation5], 1
    %6084 = vsyncpa %s6083, 1
    %6085 = vsyncpa [#allocation8], 1
    %s6086 = scalar_lea.sflag [#allocation8], 1
    %6087 = vsyncpa %s6086, 1
    %6088 = vsyncpa [#allocation11], 1
    %s6089 = scalar_lea.sflag [#allocation11], 1
    %6090 = vsyncpa %s6089, 1
    %6091 = vsyncpa [#allocation14], 1
    %s6092 = scalar_lea.sflag [#allocation14], 1
    %6093 = vsyncpa %s6092, 1
    %6094 = vsyncpa [#allocation17], 1
    %s6095 = scalar_lea.sflag [#allocation17], 1
    %6096 = vsyncpa %s6095, 1
    %6097 = vsyncpa [#allocation20], 1
    %s6098 = scalar_lea.sflag [#allocation20], 1
    %6099 = vsyncpa %s6098, 1
    %6100 = vsyncpa [#allocation23], 1
    %s6101 = scalar_lea.sflag [#allocation23], 1
    %6102 = vsyncpa %s6101, 1
    %6103 = vsyncpa [#allocation26], 1
    %s6104 = scalar_lea.sflag [#allocation26], 1
    %6105 = vsyncpa %s6104, 1
    %6106 = vsyncpa [#allocation29], 1
    %s6107 = scalar_lea.sflag [#allocation29], 1
    %6108 = vsyncpa %s6107, 1
    %6109 = vsyncpa [#allocation32], 1
    %s6110 = scalar_lea.sflag [#allocation32], 1
    %6111 = vsyncpa %s6110, 1
    %6112 = vsyncpa [#allocation35], 1
    %s6113 = scalar_lea.sflag [#allocation35], 1
    %6114 = vsyncpa %s6113, 1
    %6115 = vsyncpa [#allocation38], 1
    %s6116 = scalar_lea.sflag [#allocation38], 1
    %6117 = vsyncpa %s6116, 1

</llo_original>
